<compile_context>
chip_gen: v7x
topology: tpu7x:2x2x1
jax: 0.10.0
libtpu: 0.0.40
codegen_flags: <defaults>
</compile_context>

<pallas_src>
import functools

import jax
import jax.numpy as jnp
from jax import lax
from jax.experimental import pallas as pl
from jax.experimental.pallas import tpu as pltpu


# ------------------------------ fused kernel -------------------------------

def _fused_forward_kernel(*refs, num_layers, H, S_real):
    """refs = (51 input refs ..., out_ref). One program = one batch element."""
    out_ref = refs[-1]
    it = iter(refs[:-1])

    def nxt():
        return next(it)

    f32 = jnp.float32
    eps = 1e-5

    def ln(x, g_ref, b_ref):
        mu = jnp.mean(x, axis=-1, keepdims=True)
        var = jnp.mean(jnp.square(x - mu), axis=-1, keepdims=True)
        return (x - mu) * lax.rsqrt(var + eps) * g_ref[...] + b_ref[...]

    def mm(x, w_ref, b_ref, relu=False):
        y = jnp.dot(x, w_ref[...], preferred_element_type=f32) + b_ref[...]
        if relu:
            y = jnp.maximum(y, 0.0)
        return y

    # --- patch embedding (convs as matmuls, BatchNorm folded, eval mode) ---
    patches = nxt()[0]                                   # (S_pad, C*ps*ps)
    S_pad = patches.shape[0]
    h = mm(patches, nxt(), nxt(), relu=True)             # Conv1 + BN1 + ReLU
    h = mm(h, nxt(), nxt(), relu=True)                   # Conv2 + BN2 + ReLU
    h = mm(h, nxt(), nxt())                              # Conv3 (+ Dropout=id)

    # --- cls token + positional embedding ---
    cls_ref, pos_ref = nxt(), nxt()
    D = h.shape[-1]
    row = lax.broadcasted_iota(jnp.int32, (S_pad, D), 0)
    x = jnp.where(row == 0, jnp.broadcast_to(cls_ref[...], (S_pad, D)), h)
    x = x + pos_ref[...]

    # --- input LayerNorm ---
    x = ln(x, nxt(), nxt())

    Dh = D // H
    scale = 1.0 / (Dh ** 0.5)
    neg_big = jnp.float32(-1e30)
    key_ok = lax.broadcasted_iota(jnp.int32, (S_pad, S_pad), 1) < S_real

    # --- transformer encoder layers (post-norm, relu FFN, eval mode) ---
    for _ in range(num_layers):
        wq, bq = nxt(), nxt()          # (H, D, Dh), (H, 1, Dh)
        wk, bk = nxt(), nxt()
        wv, bv = nxt(), nxt()
        wo, bo = nxt(), nxt()          # (H, Dh, D), (1, D)
        n1_g, n1_b = nxt(), nxt()
        wff1, bff1 = nxt(), nxt()
        wff2, bff2 = nxt(), nxt()
        n2_g, n2_b = nxt(), nxt()

        attn = jnp.zeros((S_pad, D), f32)
        for hh in range(H):            # statically unrolled over heads
            q = jnp.dot(x, wq[hh], preferred_element_type=f32) + bq[hh]
            k = jnp.dot(x, wk[hh], preferred_element_type=f32) + bk[hh]
            v = jnp.dot(x, wv[hh], preferred_element_type=f32) + bv[hh]
            s = lax.dot_general(q, k, (((1,), (1,)), ((), ())),
                                preferred_element_type=f32) * scale
            s = jnp.where(key_ok, s, neg_big)
            m = jnp.max(s, axis=-1, keepdims=True)
            p = jnp.exp(s - m)
            p = p * pl.reciprocal(jnp.sum(p, axis=-1, keepdims=True),
                                  approx=True)
            o_h = jnp.dot(p, v, preferred_element_type=f32)        # (S_pad, Dh)
            # fold the per-head output projection into the accumulation
            attn = attn + jnp.dot(o_h, wo[hh], preferred_element_type=f32)
        attn = attn + bo[...]

        x = ln(x + attn, n1_g, n1_b)
        ff = mm(x, wff1, bff1, relu=True)
        ff = mm(ff, wff2, bff2)
        x = ln(x + ff, n2_g, n2_b)

    # --- classifier on CLS row (Dropout = identity) ---
    y = ln(x[0:1, :], nxt(), nxt())                      # (1, D)
    y = mm(y, nxt(), nxt(), relu=True)
    y = mm(y, nxt(), nxt(), relu=True)
    y = mm(y, nxt(), nxt())                              # (1, num_classes)
    out_ref[0] = y.astype(out_ref.dtype)


# ------------------------------- glue / model ------------------------------

def fold_bn(w2d, b, gamma, beta, rm, rv, eps=1e-5):
    """Fold eval-mode BatchNorm (per output channel) into the conv matmul."""
    s = gamma / jnp.sqrt(rv + eps)
    return w2d * s[None, :], b * s + (beta - rm * s)


def forward(params, x, cfg):
    B, C, Himg, Wimg = x.shape
    ps = cfg['patch_size']
    D = cfg['d_model']
    H = cfg['nhead']
    d4, d2 = D // 4, D // 2
    Hp, Wp = Himg // ps, Wimg // ps
    nP = Hp * Wp
    assert nP == cfg['num_patches']
    Cp = C * ps * ps
    Dh = D // H
    nC = cfg['num_classes']
    S_real = nP + 1
    S_pad = ((S_real + 7) // 8) * 8          # pad sequence to sublane multiple

    # im2col: (B,C,Hp,ps,Wp,ps) -> (B,Hp,Wp,C,ps,ps) -> (B, nP, C*ps*ps)
    patches = x.reshape(B, C, Hp, ps, Wp, ps).transpose(0, 2, 4, 1, 3, 5)
    patches = patches.reshape(B, nP, Cp)
    # row 0 becomes the cls-token slot (overwritten in-kernel), tail rows pad S
    patches = jnp.pad(patches, ((0, 0), (1, S_pad - 1 - nP), (0, 0)))

    pos = jnp.pad(params['pos_embedding'][0], ((0, S_pad - S_real), (0, 0)))

    # conv weights as matmuls, BatchNorm folded (eval semantics)
    w1 = params['conv1_w'].reshape(d4, Cp).T
    w1, b1 = fold_bn(w1, params['conv1_b'], *params['bn1'])
    w2 = params['conv2_w'].reshape(d2, d4).T
    w2, b2 = fold_bn(w2, params['conv2_b'], *params['bn2'])
    w3 = params['conv3_w'].reshape(D, d2).T
    b3 = params['conv3_b']

    def row(v):
        return v.reshape(1, -1)

    inputs = [patches,
              w1, row(b1), w2, row(b2), w3, row(b3),
              params['cls_token'].reshape(1, D), pos,
              row(params['in_g']), row(params['in_b'])]

    for lp in params['layers']:
        ipw, ipb = lp['in_proj_w'], lp['in_proj_b']      # (3D, D), (3D,)
        wq = ipw[0:D].reshape(H, Dh, D).transpose(0, 2, 1)        # (H, D, Dh)
        wk = ipw[D:2 * D].reshape(H, Dh, D).transpose(0, 2, 1)
        wv = ipw[2 * D:].reshape(H, Dh, D).transpose(0, 2, 1)
        bq = ipb[0:D].reshape(H, 1, Dh)
        bk = ipb[D:2 * D].reshape(H, 1, Dh)
        bv = ipb[2 * D:].reshape(H, 1, Dh)
        wo = lp['out_proj_w'].T.reshape(H, Dh, D)                 # (H, Dh, D)
        inputs += [wq, bq, wk, bk, wv, bv, wo, row(lp['out_proj_b']),
                   row(lp['n1_g']), row(lp['n1_b']),
                   lp['lin1_w'].T, row(lp['lin1_b']),
                   lp['lin2_w'].T, row(lp['lin2_b']),
                   row(lp['n2_g']), row(lp['n2_b'])]

    inputs += [row(params['cls_ln_g']), row(params['cls_ln_b']),
               params['fc1_w'].T, row(params['fc1_b']),
               params['fc2_w'].T, row(params['fc2_b']),
               params['fc3_w'].T, row(params['fc3_b'])]

    def full_spec(arr):
        return pl.BlockSpec(arr.shape, lambda b, _nd=arr.ndim: (0,) * _nd)

    in_specs = [pl.BlockSpec((1, S_pad, Cp), lambda b: (b, 0, 0))]
    in_specs += [full_spec(a) for a in inputs[1:]]

    out = pl.pallas_call(
        functools.partial(_fused_forward_kernel,
                          num_layers=cfg['num_layers'], H=H, S_real=S_real),
        out_shape=jax.ShapeDtypeStruct((B, 1, nC), jnp.float32),
        grid=(B,),
        in_specs=in_specs,
        out_specs=pl.BlockSpec((1, 1, nC), lambda b: (b, 0, 0)),
        compiler_params=pltpu.CompilerParams(
            dimension_semantics=("parallel",)),
    )(*inputs)
    return out.reshape(B, nC)


def init_params(key, cfg):
    C = cfg['channels']
    D = cfg['d_model']
    ps = cfg['patch_size']
    d4, d2 = D // 4, D // 2
    nP = cfg['num_patches']
    dff = cfg['dim_feedforward']
    nC = cfg['num_classes']

    keys = iter(jax.random.split(key, 64))

    def n(shape, s=0.02):
        return s * jax.random.normal(next(keys), shape, jnp.float32)

    params = {
        'conv1_w': n((d4, C, ps, ps)), 'conv1_b': n((d4,)),
        'bn1': (1.0 + n((d4,), 0.1), n((d4,), 0.1),
                n((d4,), 0.05), 1.0 + jnp.abs(n((d4,), 0.1))),
        'conv2_w': n((d2, d4, 1, 1)), 'conv2_b': n((d2,)),
        'bn2': (1.0 + n((d2,), 0.1), n((d2,), 0.1),
                n((d2,), 0.05), 1.0 + jnp.abs(n((d2,), 0.1))),
        'conv3_w': n((D, d2, 1, 1)), 'conv3_b': n((D,)),
        'pos_embedding': n((1, nP + 1, D), 1.0),
        'cls_token': n((1, 1, D), 1.0),
        'in_g': jnp.ones((D,), jnp.float32), 'in_b': jnp.zeros((D,), jnp.float32),
        'cls_ln_g': jnp.ones((D,), jnp.float32), 'cls_ln_b': jnp.zeros((D,), jnp.float32),
        'fc1_w': n((D // 2, D)), 'fc1_b': n((D // 2,)),
        'fc2_w': n((D // 4, D // 2)), 'fc2_b': n((D // 4,)),
        'fc3_w': n((nC, D // 4)), 'fc3_b': n((nC,)),
        'layers': [],
    }
    for _ in range(cfg['num_layers']):
        params['layers'].append({
            'in_proj_w': n((3 * D, D)), 'in_proj_b': n((3 * D,)),
            'out_proj_w': n((D, D)), 'out_proj_b': n((D,)),
            'lin1_w': n((dff, D)), 'lin1_b': n((dff,)),
            'lin2_w': n((D, dff)), 'lin2_b': n((D,)),
            'n1_g': jnp.ones((D,), jnp.float32), 'n1_b': jnp.zeros((D,), jnp.float32),
            'n2_g': jnp.ones((D,), jnp.float32), 'n2_b': jnp.zeros((D,), jnp.float32),
        })
    return params


if __name__ == "__main__":
    cfg = dict(channels=4, d_model=32, patch_size=4, num_patches=16,
               nhead=4, dim_feedforward=64, num_layers=2, num_classes=10,
               dropout=0.1)
    key = jax.random.PRNGKey(0)
    pkey, xkey = jax.random.split(key)
    params = init_params(pkey, cfg)
    x = jax.random.normal(xkey, (2, cfg['channels'], 16, 16), jnp.float32)  # NCHW

    fwd = jax.jit(lambda p, xx: forward(p, xx, cfg))
    out = jax.block_until_ready(fwd(params, x))
    assert out.shape == (2, cfg['num_classes'])
    assert bool(jnp.all(jnp.isfinite(out)))
    print("KERNEL_OK")
</pallas_src>

<mosaic_0001>
module attributes {stable_mosaic.version = 11 : i64} {
  func.func @_fused_forward_kernel(%arg0: i32, %arg1: memref<1x24x64xf32, #tpu.memory_space<vmem>>, %arg2: memref<64x8xf32, #tpu.memory_space<vmem>>, %arg3: memref<1x8xf32, #tpu.memory_space<vmem>>, %arg4: memref<8x16xf32, #tpu.memory_space<vmem>>, %arg5: memref<1x16xf32, #tpu.memory_space<vmem>>, %arg6: memref<16x32xf32, #tpu.memory_space<vmem>>, %arg7: memref<1x32xf32, #tpu.memory_space<vmem>>, %arg8: memref<1x32xf32, #tpu.memory_space<vmem>>, %arg9: memref<24x32xf32, #tpu.memory_space<vmem>>, %arg10: memref<1x32xf32, #tpu.memory_space<vmem>>, %arg11: memref<1x32xf32, #tpu.memory_space<vmem>>, %arg12: memref<4x32x8xf32, #tpu.memory_space<vmem>>, %arg13: memref<4x1x8xf32, #tpu.memory_space<vmem>>, %arg14: memref<4x32x8xf32, #tpu.memory_space<vmem>>, %arg15: memref<4x1x8xf32, #tpu.memory_space<vmem>>, %arg16: memref<4x32x8xf32, #tpu.memory_space<vmem>>, %arg17: memref<4x1x8xf32, #tpu.memory_space<vmem>>, %arg18: memref<4x8x32xf32, #tpu.memory_space<vmem>>, %arg19: memref<1x32xf32, #tpu.memory_space<vmem>>, %arg20: memref<1x32xf32, #tpu.memory_space<vmem>>, %arg21: memref<1x32xf32, #tpu.memory_space<vmem>>, %arg22: memref<32x64xf32, #tpu.memory_space<vmem>>, %arg23: memref<1x64xf32, #tpu.memory_space<vmem>>, %arg24: memref<64x32xf32, #tpu.memory_space<vmem>>, %arg25: memref<1x32xf32, #tpu.memory_space<vmem>>, %arg26: memref<1x32xf32, #tpu.memory_space<vmem>>, %arg27: memref<1x32xf32, #tpu.memory_space<vmem>>, %arg28: memref<4x32x8xf32, #tpu.memory_space<vmem>>, %arg29: memref<4x1x8xf32, #tpu.memory_space<vmem>>, %arg30: memref<4x32x8xf32, #tpu.memory_space<vmem>>, %arg31: memref<4x1x8xf32, #tpu.memory_space<vmem>>, %arg32: memref<4x32x8xf32, #tpu.memory_space<vmem>>, %arg33: memref<4x1x8xf32, #tpu.memory_space<vmem>>, %arg34: memref<4x8x32xf32, #tpu.memory_space<vmem>>, %arg35: memref<1x32xf32, #tpu.memory_space<vmem>>, %arg36: memref<1x32xf32, #tpu.memory_space<vmem>>, %arg37: memref<1x32xf32, #tpu.memory_space<vmem>>, %arg38: memref<32x64xf32, #tpu.memory_space<vmem>>, %arg39: memref<1x64xf32, #tpu.memory_space<vmem>>, %arg40: memref<64x32xf32, #tpu.memory_space<vmem>>, %arg41: memref<1x32xf32, #tpu.memory_space<vmem>>, %arg42: memref<1x32xf32, #tpu.memory_space<vmem>>, %arg43: memref<1x32xf32, #tpu.memory_space<vmem>>, %arg44: memref<1x32xf32, #tpu.memory_space<vmem>>, %arg45: memref<1x32xf32, #tpu.memory_space<vmem>>, %arg46: memref<32x16xf32, #tpu.memory_space<vmem>>, %arg47: memref<1x16xf32, #tpu.memory_space<vmem>>, %arg48: memref<16x8xf32, #tpu.memory_space<vmem>>, %arg49: memref<1x8xf32, #tpu.memory_space<vmem>>, %arg50: memref<8x10xf32, #tpu.memory_space<vmem>>, %arg51: memref<1x10xf32, #tpu.memory_space<vmem>>, %arg52: memref<1x1x10xf32, #tpu.memory_space<vmem>>) attributes {dimension_semantics = [#tpu.dimension_semantics<parallel>], iteration_bounds = array<i64: 2>, scalar_prefetch = 0 : i64, scratch_operands = 0 : i64, tpu.core_type = #tpu.core_type<tc>, window_params = [{transform_indices = @transform_0, window_bounds = array<i64: 1, 24, 64>}, {pipeline_mode = #tpu.pipeline_mode<synchronous>, transform_indices = @transform_1, window_bounds = array<i64: 64, 8>}, {pipeline_mode = #tpu.pipeline_mode<synchronous>, transform_indices = @transform_2, window_bounds = array<i64: 1, 8>}, {pipeline_mode = #tpu.pipeline_mode<synchronous>, transform_indices = @transform_3, window_bounds = array<i64: 8, 16>}, {pipeline_mode = #tpu.pipeline_mode<synchronous>, transform_indices = @transform_4, window_bounds = array<i64: 1, 16>}, {pipeline_mode = #tpu.pipeline_mode<synchronous>, transform_indices = @transform_5, window_bounds = array<i64: 16, 32>}, {pipeline_mode = #tpu.pipeline_mode<synchronous>, transform_indices = @transform_6, window_bounds = array<i64: 1, 32>}, {pipeline_mode = #tpu.pipeline_mode<synchronous>, transform_indices = @transform_7, window_bounds = array<i64: 1, 32>}, {pipeline_mode = #tpu.pipeline_mode<synchronous>, transform_indices = @transform_8, window_bounds = array<i64: 24, 32>}, {pipeline_mode = #tpu.pipeline_mode<synchronous>, transform_indices = @transform_9, window_bounds = array<i64: 1, 32>}, {pipeline_mode = #tpu.pipeline_mode<synchronous>, transform_indices = @transform_10, window_bounds = array<i64: 1, 32>}, {pipeline_mode = #tpu.pipeline_mode<synchronous>, transform_indices = @transform_11, window_bounds = array<i64: 4, 32, 8>}, {pipeline_mode = #tpu.pipeline_mode<synchronous>, transform_indices = @transform_12, window_bounds = array<i64: 4, 1, 8>}, {pipeline_mode = #tpu.pipeline_mode<synchronous>, transform_indices = @transform_13, window_bounds = array<i64: 4, 32, 8>}, {pipeline_mode = #tpu.pipeline_mode<synchronous>, transform_indices = @transform_14, window_bounds = array<i64: 4, 1, 8>}, {pipeline_mode = #tpu.pipeline_mode<synchronous>, transform_indices = @transform_15, window_bounds = array<i64: 4, 32, 8>}, {pipeline_mode = #tpu.pipeline_mode<synchronous>, transform_indices = @transform_16, window_bounds = array<i64: 4, 1, 8>}, {pipeline_mode = #tpu.pipeline_mode<synchronous>, transform_indices = @transform_17, window_bounds = array<i64: 4, 8, 32>}, {pipeline_mode = #tpu.pipeline_mode<synchronous>, transform_indices = @transform_18, window_bounds = array<i64: 1, 32>}, {pipeline_mode = #tpu.pipeline_mode<synchronous>, transform_indices = @transform_19, window_bounds = array<i64: 1, 32>}, {pipeline_mode = #tpu.pipeline_mode<synchronous>, transform_indices = @transform_20, window_bounds = array<i64: 1, 32>}, {pipeline_mode = #tpu.pipeline_mode<synchronous>, transform_indices = @transform_21, window_bounds = array<i64: 32, 64>}, {pipeline_mode = #tpu.pipeline_mode<synchronous>, transform_indices = @transform_22, window_bounds = array<i64: 1, 64>}, {pipeline_mode = #tpu.pipeline_mode<synchronous>, transform_indices = @transform_23, window_bounds = array<i64: 64, 32>}, {pipeline_mode = #tpu.pipeline_mode<synchronous>, transform_indices = @transform_24, window_bounds = array<i64: 1, 32>}, {pipeline_mode = #tpu.pipeline_mode<synchronous>, transform_indices = @transform_25, window_bounds = array<i64: 1, 32>}, {pipeline_mode = #tpu.pipeline_mode<synchronous>, transform_indices = @transform_26, window_bounds = array<i64: 1, 32>}, {pipeline_mode = #tpu.pipeline_mode<synchronous>, transform_indices = @transform_27, window_bounds = array<i64: 4, 32, 8>}, {pipeline_mode = #tpu.pipeline_mode<synchronous>, transform_indices = @transform_28, window_bounds = array<i64: 4, 1, 8>}, {pipeline_mode = #tpu.pipeline_mode<synchronous>, transform_indices = @transform_29, window_bounds = array<i64: 4, 32, 8>}, {pipeline_mode = #tpu.pipeline_mode<synchronous>, transform_indices = @transform_30, window_bounds = array<i64: 4, 1, 8>}, {pipeline_mode = #tpu.pipeline_mode<synchronous>, transform_indices = @transform_31, window_bounds = array<i64: 4, 32, 8>}, {pipeline_mode = #tpu.pipeline_mode<synchronous>, transform_indices = @transform_32, window_bounds = array<i64: 4, 1, 8>}, {pipeline_mode = #tpu.pipeline_mode<synchronous>, transform_indices = @transform_33, window_bounds = array<i64: 4, 8, 32>}, {pipeline_mode = #tpu.pipeline_mode<synchronous>, transform_indices = @transform_34, window_bounds = array<i64: 1, 32>}, {pipeline_mode = #tpu.pipeline_mode<synchronous>, transform_indices = @transform_35, window_bounds = array<i64: 1, 32>}, {pipeline_mode = #tpu.pipeline_mode<synchronous>, transform_indices = @transform_36, window_bounds = array<i64: 1, 32>}, {pipeline_mode = #tpu.pipeline_mode<synchronous>, transform_indices = @transform_37, window_bounds = array<i64: 32, 64>}, {pipeline_mode = #tpu.pipeline_mode<synchronous>, transform_indices = @transform_38, window_bounds = array<i64: 1, 64>}, {pipeline_mode = #tpu.pipeline_mode<synchronous>, transform_indices = @transform_39, window_bounds = array<i64: 64, 32>}, {pipeline_mode = #tpu.pipeline_mode<synchronous>, transform_indices = @transform_40, window_bounds = array<i64: 1, 32>}, {pipeline_mode = #tpu.pipeline_mode<synchronous>, transform_indices = @transform_41, window_bounds = array<i64: 1, 32>}, {pipeline_mode = #tpu.pipeline_mode<synchronous>, transform_indices = @transform_42, window_bounds = array<i64: 1, 32>}, {pipeline_mode = #tpu.pipeline_mode<synchronous>, transform_indices = @transform_43, window_bounds = array<i64: 1, 32>}, {pipeline_mode = #tpu.pipeline_mode<synchronous>, transform_indices = @transform_44, window_bounds = array<i64: 1, 32>}, {pipeline_mode = #tpu.pipeline_mode<synchronous>, transform_indices = @transform_45, window_bounds = array<i64: 32, 16>}, {pipeline_mode = #tpu.pipeline_mode<synchronous>, transform_indices = @transform_46, window_bounds = array<i64: 1, 16>}, {pipeline_mode = #tpu.pipeline_mode<synchronous>, transform_indices = @transform_47, window_bounds = array<i64: 16, 8>}, {pipeline_mode = #tpu.pipeline_mode<synchronous>, transform_indices = @transform_48, window_bounds = array<i64: 1, 8>}, {pipeline_mode = #tpu.pipeline_mode<synchronous>, transform_indices = @transform_49, window_bounds = array<i64: 8, 10>}, {pipeline_mode = #tpu.pipeline_mode<synchronous>, transform_indices = @transform_50, window_bounds = array<i64: 1, 10>}, {transform_indices = @transform_51, window_bounds = array<i64: 1, 1, 10>}]} {
    %c0 = arith.constant 0 : index
    %c0_0 = arith.constant 0 : index
    %c0_1 = arith.constant 0 : index
    %0 = vector.load %arg1[%c0, %c0_0, %c0_1] : memref<1x24x64xf32, #tpu.memory_space<vmem>>, vector<1x24x64xf32>
    %1 = vector.shape_cast %0 : vector<1x24x64xf32> to vector<24x64xf32>
    %c0_2 = arith.constant 0 : index
    %c0_3 = arith.constant 0 : index
    %2 = vector.load %arg2[%c0_2, %c0_3] : memref<64x8xf32, #tpu.memory_space<vmem>>, vector<64x8xf32>
    %cst = arith.constant dense<0.000000e+00> : vector<24x8xf32>
    %3 = tpu.matmul %1, %2, %cst {dimension_numbers = #tpu.dot_dimension_numbers<[1], [0], [0], [1], [0, 0, 1, 1], [], []>} : vector<24x64xf32>, vector<64x8xf32>, vector<24x8xf32> -> vector<24x8xf32>
    %c0_4 = arith.constant 0 : index
    %c0_5 = arith.constant 0 : index
    %4 = vector.load %arg3[%c0_4, %c0_5] : memref<1x8xf32, #tpu.memory_space<vmem>>, vector<1x8xf32>
    %5 = vector.broadcast %4 : vector<1x8xf32> to vector<24x8xf32>
    %6 = arith.addf %3, %5 : vector<24x8xf32>
    %cst_6 = arith.constant 0.000000e+00 : f32
    %7 = vector.broadcast %cst_6 : f32 to vector<24x8xf32>
    %8 = arith.maximumf %6, %7 : vector<24x8xf32>
    %c0_7 = arith.constant 0 : index
    %c0_8 = arith.constant 0 : index
    %9 = vector.load %arg4[%c0_7, %c0_8] : memref<8x16xf32, #tpu.memory_space<vmem>>, vector<8x16xf32>
    %cst_9 = arith.constant dense<0.000000e+00> : vector<24x16xf32>
    %10 = tpu.matmul %8, %9, %cst_9 {dimension_numbers = #tpu.dot_dimension_numbers<[1], [0], [0], [1], [0, 0, 1, 1], [], []>} : vector<24x8xf32>, vector<8x16xf32>, vector<24x16xf32> -> vector<24x16xf32>
    %c0_10 = arith.constant 0 : index
    %c0_11 = arith.constant 0 : index
    %11 = vector.load %arg5[%c0_10, %c0_11] : memref<1x16xf32, #tpu.memory_space<vmem>>, vector<1x16xf32>
    %12 = vector.broadcast %11 : vector<1x16xf32> to vector<24x16xf32>
    %13 = arith.addf %10, %12 : vector<24x16xf32>
    %cst_12 = arith.constant 0.000000e+00 : f32
    %14 = vector.broadcast %cst_12 : f32 to vector<24x16xf32>
    %15 = arith.maximumf %13, %14 : vector<24x16xf32>
    %c0_13 = arith.constant 0 : index
    %c0_14 = arith.constant 0 : index
    %16 = vector.load %arg6[%c0_13, %c0_14] : memref<16x32xf32, #tpu.memory_space<vmem>>, vector<16x32xf32>
    %cst_15 = arith.constant dense<0.000000e+00> : vector<24x32xf32>
    %17 = tpu.matmul %15, %16, %cst_15 {dimension_numbers = #tpu.dot_dimension_numbers<[1], [0], [0], [1], [0, 0, 1, 1], [], []>} : vector<24x16xf32>, vector<16x32xf32>, vector<24x32xf32> -> vector<24x32xf32>
    %c0_16 = arith.constant 0 : index
    %c0_17 = arith.constant 0 : index
    %18 = vector.load %arg7[%c0_16, %c0_17] : memref<1x32xf32, #tpu.memory_space<vmem>>, vector<1x32xf32>
    %19 = vector.broadcast %18 : vector<1x32xf32> to vector<24x32xf32>
    %20 = arith.addf %17, %19 : vector<24x32xf32>
    %21 = tpu.iota {dimensions = array<i32: 0>} : vector<24x32xi32>
    %c0_i32 = arith.constant 0 : i32
    %22 = vector.broadcast %c0_i32 : i32 to vector<24x32xi32>
    %23 = arith.cmpi eq, %21, %22 : vector<24x32xi32>
    %c0_18 = arith.constant 0 : index
    %c0_19 = arith.constant 0 : index
    %24 = vector.load %arg8[%c0_18, %c0_19] : memref<1x32xf32, #tpu.memory_space<vmem>>, vector<1x32xf32>
    %25 = vector.shape_cast %24 : vector<1x32xf32> to vector<1x32xf32>
    %26 = vector.broadcast %25 : vector<1x32xf32> to vector<24x32xf32>
    %27 = arith.select %23, %26, %20 : vector<24x32xi1>, vector<24x32xf32>
    %c0_20 = arith.constant 0 : index
    %c0_21 = arith.constant 0 : index
    %28 = vector.load %arg9[%c0_20, %c0_21] : memref<24x32xf32, #tpu.memory_space<vmem>>, vector<24x32xf32>
    %29 = arith.addf %27, %28 : vector<24x32xf32>
    %cst_22 = arith.constant dense<0.000000e+00> : vector<24xf32>
    %30 = vector.multi_reduction <add>, %29, %cst_22 [1] : vector<24x32xf32> to vector<24xf32>
    %31 = vector.shape_cast %30 : vector<24xf32> to vector<24x1xf32>
    %cst_23 = arith.constant 3.200000e+01 : f32
    %32 = vector.broadcast %cst_23 : f32 to vector<24x1xf32>
    %33 = arith.divf %31, %32 : vector<24x1xf32>
    %34 = vector.broadcast %33 : vector<24x1xf32> to vector<24x32xf32>
    %35 = arith.subf %29, %34 : vector<24x32xf32>
    %36 = arith.mulf %35, %35 : vector<24x32xf32>
    %cst_24 = arith.constant dense<0.000000e+00> : vector<24xf32>
    %37 = vector.multi_reduction <add>, %36, %cst_24 [1] : vector<24x32xf32> to vector<24xf32>
    %38 = vector.shape_cast %37 : vector<24xf32> to vector<24x1xf32>
    %cst_25 = arith.constant 3.200000e+01 : f32
    %39 = vector.broadcast %cst_25 : f32 to vector<24x1xf32>
    %40 = arith.divf %38, %39 : vector<24x1xf32>
    %41 = vector.broadcast %33 : vector<24x1xf32> to vector<24x32xf32>
    %42 = arith.subf %29, %41 : vector<24x32xf32>
    %cst_26 = arith.constant 9.99999974E-6 : f32
    %43 = vector.broadcast %cst_26 : f32 to vector<24x1xf32>
    %44 = arith.addf %40, %43 : vector<24x1xf32>
    %45 = math.rsqrt %44 : vector<24x1xf32>
    %46 = vector.broadcast %45 : vector<24x1xf32> to vector<24x32xf32>
    %47 = arith.mulf %42, %46 : vector<24x32xf32>
    %c0_27 = arith.constant 0 : index
    %c0_28 = arith.constant 0 : index
    %48 = vector.load %arg10[%c0_27, %c0_28] : memref<1x32xf32, #tpu.memory_space<vmem>>, vector<1x32xf32>
    %49 = vector.broadcast %48 : vector<1x32xf32> to vector<24x32xf32>
    %50 = arith.mulf %47, %49 : vector<24x32xf32>
    %c0_29 = arith.constant 0 : index
    %c0_30 = arith.constant 0 : index
    %51 = vector.load %arg11[%c0_29, %c0_30] : memref<1x32xf32, #tpu.memory_space<vmem>>, vector<1x32xf32>
    %52 = vector.broadcast %51 : vector<1x32xf32> to vector<24x32xf32>
    %53 = arith.addf %50, %52 : vector<24x32xf32>
    %54 = tpu.iota {dimensions = array<i32: 1>} : vector<24x24xi32>
    %c17_i32 = arith.constant 17 : i32
    %55 = vector.broadcast %c17_i32 : i32 to vector<24x24xi32>
    %56 = arith.cmpi slt, %54, %55 : vector<24x24xi32>
    %cst_31 = arith.constant 0.000000e+00 : f32
    %57 = vector.broadcast %cst_31 : f32 to vector<24x32xf32>
    %c0_32 = arith.constant 0 : index
    %c0_33 = arith.constant 0 : index
    %c0_34 = arith.constant 0 : index
    %58 = vector.load %arg12[%c0_32, %c0_33, %c0_34] : memref<4x32x8xf32, #tpu.memory_space<vmem>>, vector<1x32x8xf32>
    %59 = vector.shape_cast %58 : vector<1x32x8xf32> to vector<32x8xf32>
    %cst_35 = arith.constant dense<0.000000e+00> : vector<24x8xf32>
    %60 = tpu.matmul %53, %59, %cst_35 {dimension_numbers = #tpu.dot_dimension_numbers<[1], [0], [0], [1], [0, 0, 1, 1], [], []>} : vector<24x32xf32>, vector<32x8xf32>, vector<24x8xf32> -> vector<24x8xf32>
    %c0_36 = arith.constant 0 : index
    %c0_37 = arith.constant 0 : index
    %c0_38 = arith.constant 0 : index
    %61 = vector.load %arg13[%c0_36, %c0_37, %c0_38] : memref<4x1x8xf32, #tpu.memory_space<vmem>>, vector<1x1x8xf32>
    %62 = vector.shape_cast %61 : vector<1x1x8xf32> to vector<1x8xf32>
    %63 = vector.broadcast %62 : vector<1x8xf32> to vector<24x8xf32>
    %64 = arith.addf %60, %63 : vector<24x8xf32>
    %c0_39 = arith.constant 0 : index
    %c0_40 = arith.constant 0 : index
    %c0_41 = arith.constant 0 : index
    %65 = vector.load %arg14[%c0_39, %c0_40, %c0_41] : memref<4x32x8xf32, #tpu.memory_space<vmem>>, vector<1x32x8xf32>
    %66 = vector.shape_cast %65 : vector<1x32x8xf32> to vector<32x8xf32>
    %cst_42 = arith.constant dense<0.000000e+00> : vector<24x8xf32>
    %67 = tpu.matmul %53, %66, %cst_42 {dimension_numbers = #tpu.dot_dimension_numbers<[1], [0], [0], [1], [0, 0, 1, 1], [], []>} : vector<24x32xf32>, vector<32x8xf32>, vector<24x8xf32> -> vector<24x8xf32>
    %c0_43 = arith.constant 0 : index
    %c0_44 = arith.constant 0 : index
    %c0_45 = arith.constant 0 : index
    %68 = vector.load %arg15[%c0_43, %c0_44, %c0_45] : memref<4x1x8xf32, #tpu.memory_space<vmem>>, vector<1x1x8xf32>
    %69 = vector.shape_cast %68 : vector<1x1x8xf32> to vector<1x8xf32>
    %70 = vector.broadcast %69 : vector<1x8xf32> to vector<24x8xf32>
    %71 = arith.addf %67, %70 : vector<24x8xf32>
    %c0_46 = arith.constant 0 : index
    %c0_47 = arith.constant 0 : index
    %c0_48 = arith.constant 0 : index
    %72 = vector.load %arg16[%c0_46, %c0_47, %c0_48] : memref<4x32x8xf32, #tpu.memory_space<vmem>>, vector<1x32x8xf32>
    %73 = vector.shape_cast %72 : vector<1x32x8xf32> to vector<32x8xf32>
    %cst_49 = arith.constant dense<0.000000e+00> : vector<24x8xf32>
    %74 = tpu.matmul %53, %73, %cst_49 {dimension_numbers = #tpu.dot_dimension_numbers<[1], [0], [0], [1], [0, 0, 1, 1], [], []>} : vector<24x32xf32>, vector<32x8xf32>, vector<24x8xf32> -> vector<24x8xf32>
    %c0_50 = arith.constant 0 : index
    %c0_51 = arith.constant 0 : index
    %c0_52 = arith.constant 0 : index
    %75 = vector.load %arg17[%c0_50, %c0_51, %c0_52] : memref<4x1x8xf32, #tpu.memory_space<vmem>>, vector<1x1x8xf32>
    %76 = vector.shape_cast %75 : vector<1x1x8xf32> to vector<1x8xf32>
    %77 = vector.broadcast %76 : vector<1x8xf32> to vector<24x8xf32>
    %78 = arith.addf %74, %77 : vector<24x8xf32>
    %cst_53 = arith.constant dense<0.000000e+00> : vector<24x24xf32>
    %79 = tpu.matmul %64, %71, %cst_53 {dimension_numbers = #tpu.dot_dimension_numbers<[1], [1], [0], [0], [0, 0, 1, 0], [], []>} : vector<24x8xf32>, vector<24x8xf32>, vector<24x24xf32> -> vector<24x24xf32>
    %cst_54 = arith.constant 0.353553385 : f32
    %80 = vector.broadcast %cst_54 : f32 to vector<24x24xf32>
    %81 = arith.mulf %79, %80 : vector<24x24xf32>
    %cst_55 = arith.constant -1.000000e+30 : f32
    %82 = vector.broadcast %cst_55 : f32 to vector<24x24xf32>
    %83 = arith.select %56, %81, %82 : vector<24x24xi1>, vector<24x24xf32>
    %cst_56 = arith.constant dense<0xFF800000> : vector<24xf32>
    %84 = vector.multi_reduction <maximumf>, %83, %cst_56 [1] : vector<24x24xf32> to vector<24xf32>
    %85 = vector.shape_cast %84 : vector<24xf32> to vector<24x1xf32>
    %86 = vector.broadcast %85 : vector<24x1xf32> to vector<24x24xf32>
    %87 = arith.subf %83, %86 : vector<24x24xf32>
    %88 = math.exp %87 : vector<24x24xf32>
    %cst_57 = arith.constant dense<0.000000e+00> : vector<24xf32>
    %89 = vector.multi_reduction <add>, %88, %cst_57 [1] : vector<24x24xf32> to vector<24xf32>
    %90 = vector.shape_cast %89 : vector<24xf32> to vector<24x1xf32>
    %91 = tpu.reciprocal %90 {approx = true} : vector<24x1xf32> -> vector<24x1xf32>
    %92 = vector.broadcast %91 : vector<24x1xf32> to vector<24x24xf32>
    %93 = arith.mulf %88, %92 : vector<24x24xf32>
    %cst_58 = arith.constant dense<0.000000e+00> : vector<24x8xf32>
    %94 = tpu.matmul %93, %78, %cst_58 {dimension_numbers = #tpu.dot_dimension_numbers<[1], [0], [0], [1], [0, 0, 1, 1], [], []>} : vector<24x24xf32>, vector<24x8xf32>, vector<24x8xf32> -> vector<24x8xf32>
    %c0_59 = arith.constant 0 : index
    %c0_60 = arith.constant 0 : index
    %c0_61 = arith.constant 0 : index
    %95 = vector.load %arg18[%c0_59, %c0_60, %c0_61] : memref<4x8x32xf32, #tpu.memory_space<vmem>>, vector<1x8x32xf32>
    %96 = vector.shape_cast %95 : vector<1x8x32xf32> to vector<8x32xf32>
    %cst_62 = arith.constant dense<0.000000e+00> : vector<24x32xf32>
    %97 = tpu.matmul %94, %96, %cst_62 {dimension_numbers = #tpu.dot_dimension_numbers<[1], [0], [0], [1], [0, 0, 1, 1], [], []>} : vector<24x8xf32>, vector<8x32xf32>, vector<24x32xf32> -> vector<24x32xf32>
    %98 = arith.addf %57, %97 : vector<24x32xf32>
    %c1 = arith.constant 1 : index
    %c0_63 = arith.constant 0 : index
    %c0_64 = arith.constant 0 : index
    %99 = vector.load %arg12[%c1, %c0_63, %c0_64] : memref<4x32x8xf32, #tpu.memory_space<vmem>>, vector<1x32x8xf32>
    %100 = vector.shape_cast %99 : vector<1x32x8xf32> to vector<32x8xf32>
    %cst_65 = arith.constant dense<0.000000e+00> : vector<24x8xf32>
    %101 = tpu.matmul %53, %100, %cst_65 {dimension_numbers = #tpu.dot_dimension_numbers<[1], [0], [0], [1], [0, 0, 1, 1], [], []>} : vector<24x32xf32>, vector<32x8xf32>, vector<24x8xf32> -> vector<24x8xf32>
    %c1_66 = arith.constant 1 : index
    %c0_67 = arith.constant 0 : index
    %c0_68 = arith.constant 0 : index
    %102 = vector.load %arg13[%c1_66, %c0_67, %c0_68] : memref<4x1x8xf32, #tpu.memory_space<vmem>>, vector<1x1x8xf32>
    %103 = vector.shape_cast %102 : vector<1x1x8xf32> to vector<1x8xf32>
    %104 = vector.broadcast %103 : vector<1x8xf32> to vector<24x8xf32>
    %105 = arith.addf %101, %104 : vector<24x8xf32>
    %c1_69 = arith.constant 1 : index
    %c0_70 = arith.constant 0 : index
    %c0_71 = arith.constant 0 : index
    %106 = vector.load %arg14[%c1_69, %c0_70, %c0_71] : memref<4x32x8xf32, #tpu.memory_space<vmem>>, vector<1x32x8xf32>
    %107 = vector.shape_cast %106 : vector<1x32x8xf32> to vector<32x8xf32>
    %cst_72 = arith.constant dense<0.000000e+00> : vector<24x8xf32>
    %108 = tpu.matmul %53, %107, %cst_72 {dimension_numbers = #tpu.dot_dimension_numbers<[1], [0], [0], [1], [0, 0, 1, 1], [], []>} : vector<24x32xf32>, vector<32x8xf32>, vector<24x8xf32> -> vector<24x8xf32>
    %c1_73 = arith.constant 1 : index
    %c0_74 = arith.constant 0 : index
    %c0_75 = arith.constant 0 : index
    %109 = vector.load %arg15[%c1_73, %c0_74, %c0_75] : memref<4x1x8xf32, #tpu.memory_space<vmem>>, vector<1x1x8xf32>
    %110 = vector.shape_cast %109 : vector<1x1x8xf32> to vector<1x8xf32>
    %111 = vector.broadcast %110 : vector<1x8xf32> to vector<24x8xf32>
    %112 = arith.addf %108, %111 : vector<24x8xf32>
    %c1_76 = arith.constant 1 : index
    %c0_77 = arith.constant 0 : index
    %c0_78 = arith.constant 0 : index
    %113 = vector.load %arg16[%c1_76, %c0_77, %c0_78] : memref<4x32x8xf32, #tpu.memory_space<vmem>>, vector<1x32x8xf32>
    %114 = vector.shape_cast %113 : vector<1x32x8xf32> to vector<32x8xf32>
    %cst_79 = arith.constant dense<0.000000e+00> : vector<24x8xf32>
    %115 = tpu.matmul %53, %114, %cst_79 {dimension_numbers = #tpu.dot_dimension_numbers<[1], [0], [0], [1], [0, 0, 1, 1], [], []>} : vector<24x32xf32>, vector<32x8xf32>, vector<24x8xf32> -> vector<24x8xf32>
    %c1_80 = arith.constant 1 : index
    %c0_81 = arith.constant 0 : index
    %c0_82 = arith.constant 0 : index
    %116 = vector.load %arg17[%c1_80, %c0_81, %c0_82] : memref<4x1x8xf32, #tpu.memory_space<vmem>>, vector<1x1x8xf32>
    %117 = vector.shape_cast %116 : vector<1x1x8xf32> to vector<1x8xf32>
    %118 = vector.broadcast %117 : vector<1x8xf32> to vector<24x8xf32>
    %119 = arith.addf %115, %118 : vector<24x8xf32>
    %cst_83 = arith.constant dense<0.000000e+00> : vector<24x24xf32>
    %120 = tpu.matmul %105, %112, %cst_83 {dimension_numbers = #tpu.dot_dimension_numbers<[1], [1], [0], [0], [0, 0, 1, 0], [], []>} : vector<24x8xf32>, vector<24x8xf32>, vector<24x24xf32> -> vector<24x24xf32>
    %cst_84 = arith.constant 0.353553385 : f32
    %121 = vector.broadcast %cst_84 : f32 to vector<24x24xf32>
    %122 = arith.mulf %120, %121 : vector<24x24xf32>
    %cst_85 = arith.constant -1.000000e+30 : f32
    %123 = vector.broadcast %cst_85 : f32 to vector<24x24xf32>
    %124 = arith.select %56, %122, %123 : vector<24x24xi1>, vector<24x24xf32>
    %cst_86 = arith.constant dense<0xFF800000> : vector<24xf32>
    %125 = vector.multi_reduction <maximumf>, %124, %cst_86 [1] : vector<24x24xf32> to vector<24xf32>
    %126 = vector.shape_cast %125 : vector<24xf32> to vector<24x1xf32>
    %127 = vector.broadcast %126 : vector<24x1xf32> to vector<24x24xf32>
    %128 = arith.subf %124, %127 : vector<24x24xf32>
    %129 = math.exp %128 : vector<24x24xf32>
    %cst_87 = arith.constant dense<0.000000e+00> : vector<24xf32>
    %130 = vector.multi_reduction <add>, %129, %cst_87 [1] : vector<24x24xf32> to vector<24xf32>
    %131 = vector.shape_cast %130 : vector<24xf32> to vector<24x1xf32>
    %132 = tpu.reciprocal %131 {approx = true} : vector<24x1xf32> -> vector<24x1xf32>
    %133 = vector.broadcast %132 : vector<24x1xf32> to vector<24x24xf32>
    %134 = arith.mulf %129, %133 : vector<24x24xf32>
    %cst_88 = arith.constant dense<0.000000e+00> : vector<24x8xf32>
    %135 = tpu.matmul %134, %119, %cst_88 {dimension_numbers = #tpu.dot_dimension_numbers<[1], [0], [0], [1], [0, 0, 1, 1], [], []>} : vector<24x24xf32>, vector<24x8xf32>, vector<24x8xf32> -> vector<24x8xf32>
    %c1_89 = arith.constant 1 : index
    %c0_90 = arith.constant 0 : index
    %c0_91 = arith.constant 0 : index
    %136 = vector.load %arg18[%c1_89, %c0_90, %c0_91] : memref<4x8x32xf32, #tpu.memory_space<vmem>>, vector<1x8x32xf32>
    %137 = vector.shape_cast %136 : vector<1x8x32xf32> to vector<8x32xf32>
    %cst_92 = arith.constant dense<0.000000e+00> : vector<24x32xf32>
    %138 = tpu.matmul %135, %137, %cst_92 {dimension_numbers = #tpu.dot_dimension_numbers<[1], [0], [0], [1], [0, 0, 1, 1], [], []>} : vector<24x8xf32>, vector<8x32xf32>, vector<24x32xf32> -> vector<24x32xf32>
    %139 = arith.addf %98, %138 : vector<24x32xf32>
    %c2 = arith.constant 2 : index
    %c0_93 = arith.constant 0 : index
    %c0_94 = arith.constant 0 : index
    %140 = vector.load %arg12[%c2, %c0_93, %c0_94] : memref<4x32x8xf32, #tpu.memory_space<vmem>>, vector<1x32x8xf32>
    %141 = vector.shape_cast %140 : vector<1x32x8xf32> to vector<32x8xf32>
    %cst_95 = arith.constant dense<0.000000e+00> : vector<24x8xf32>
    %142 = tpu.matmul %53, %141, %cst_95 {dimension_numbers = #tpu.dot_dimension_numbers<[1], [0], [0], [1], [0, 0, 1, 1], [], []>} : vector<24x32xf32>, vector<32x8xf32>, vector<24x8xf32> -> vector<24x8xf32>
    %c2_96 = arith.constant 2 : index
    %c0_97 = arith.constant 0 : index
    %c0_98 = arith.constant 0 : index
    %143 = vector.load %arg13[%c2_96, %c0_97, %c0_98] : memref<4x1x8xf32, #tpu.memory_space<vmem>>, vector<1x1x8xf32>
    %144 = vector.shape_cast %143 : vector<1x1x8xf32> to vector<1x8xf32>
    %145 = vector.broadcast %144 : vector<1x8xf32> to vector<24x8xf32>
    %146 = arith.addf %142, %145 : vector<24x8xf32>
    %c2_99 = arith.constant 2 : index
    %c0_100 = arith.constant 0 : index
    %c0_101 = arith.constant 0 : index
    %147 = vector.load %arg14[%c2_99, %c0_100, %c0_101] : memref<4x32x8xf32, #tpu.memory_space<vmem>>, vector<1x32x8xf32>
    %148 = vector.shape_cast %147 : vector<1x32x8xf32> to vector<32x8xf32>
    %cst_102 = arith.constant dense<0.000000e+00> : vector<24x8xf32>
    %149 = tpu.matmul %53, %148, %cst_102 {dimension_numbers = #tpu.dot_dimension_numbers<[1], [0], [0], [1], [0, 0, 1, 1], [], []>} : vector<24x32xf32>, vector<32x8xf32>, vector<24x8xf32> -> vector<24x8xf32>
    %c2_103 = arith.constant 2 : index
    %c0_104 = arith.constant 0 : index
    %c0_105 = arith.constant 0 : index
    %150 = vector.load %arg15[%c2_103, %c0_104, %c0_105] : memref<4x1x8xf32, #tpu.memory_space<vmem>>, vector<1x1x8xf32>
    %151 = vector.shape_cast %150 : vector<1x1x8xf32> to vector<1x8xf32>
    %152 = vector.broadcast %151 : vector<1x8xf32> to vector<24x8xf32>
    %153 = arith.addf %149, %152 : vector<24x8xf32>
    %c2_106 = arith.constant 2 : index
    %c0_107 = arith.constant 0 : index
    %c0_108 = arith.constant 0 : index
    %154 = vector.load %arg16[%c2_106, %c0_107, %c0_108] : memref<4x32x8xf32, #tpu.memory_space<vmem>>, vector<1x32x8xf32>
    %155 = vector.shape_cast %154 : vector<1x32x8xf32> to vector<32x8xf32>
    %cst_109 = arith.constant dense<0.000000e+00> : vector<24x8xf32>
    %156 = tpu.matmul %53, %155, %cst_109 {dimension_numbers = #tpu.dot_dimension_numbers<[1], [0], [0], [1], [0, 0, 1, 1], [], []>} : vector<24x32xf32>, vector<32x8xf32>, vector<24x8xf32> -> vector<24x8xf32>
    %c2_110 = arith.constant 2 : index
    %c0_111 = arith.constant 0 : index
    %c0_112 = arith.constant 0 : index
    %157 = vector.load %arg17[%c2_110, %c0_111, %c0_112] : memref<4x1x8xf32, #tpu.memory_space<vmem>>, vector<1x1x8xf32>
    %158 = vector.shape_cast %157 : vector<1x1x8xf32> to vector<1x8xf32>
    %159 = vector.broadcast %158 : vector<1x8xf32> to vector<24x8xf32>
    %160 = arith.addf %156, %159 : vector<24x8xf32>
    %cst_113 = arith.constant dense<0.000000e+00> : vector<24x24xf32>
    %161 = tpu.matmul %146, %153, %cst_113 {dimension_numbers = #tpu.dot_dimension_numbers<[1], [1], [0], [0], [0, 0, 1, 0], [], []>} : vector<24x8xf32>, vector<24x8xf32>, vector<24x24xf32> -> vector<24x24xf32>
    %cst_114 = arith.constant 0.353553385 : f32
    %162 = vector.broadcast %cst_114 : f32 to vector<24x24xf32>
    %163 = arith.mulf %161, %162 : vector<24x24xf32>
    %cst_115 = arith.constant -1.000000e+30 : f32
    %164 = vector.broadcast %cst_115 : f32 to vector<24x24xf32>
    %165 = arith.select %56, %163, %164 : vector<24x24xi1>, vector<24x24xf32>
    %cst_116 = arith.constant dense<0xFF800000> : vector<24xf32>
    %166 = vector.multi_reduction <maximumf>, %165, %cst_116 [1] : vector<24x24xf32> to vector<24xf32>
    %167 = vector.shape_cast %166 : vector<24xf32> to vector<24x1xf32>
    %168 = vector.broadcast %167 : vector<24x1xf32> to vector<24x24xf32>
    %169 = arith.subf %165, %168 : vector<24x24xf32>
    %170 = math.exp %169 : vector<24x24xf32>
    %cst_117 = arith.constant dense<0.000000e+00> : vector<24xf32>
    %171 = vector.multi_reduction <add>, %170, %cst_117 [1] : vector<24x24xf32> to vector<24xf32>
    %172 = vector.shape_cast %171 : vector<24xf32> to vector<24x1xf32>
    %173 = tpu.reciprocal %172 {approx = true} : vector<24x1xf32> -> vector<24x1xf32>
    %174 = vector.broadcast %173 : vector<24x1xf32> to vector<24x24xf32>
    %175 = arith.mulf %170, %174 : vector<24x24xf32>
    %cst_118 = arith.constant dense<0.000000e+00> : vector<24x8xf32>
    %176 = tpu.matmul %175, %160, %cst_118 {dimension_numbers = #tpu.dot_dimension_numbers<[1], [0], [0], [1], [0, 0, 1, 1], [], []>} : vector<24x24xf32>, vector<24x8xf32>, vector<24x8xf32> -> vector<24x8xf32>
    %c2_119 = arith.constant 2 : index
    %c0_120 = arith.constant 0 : index
    %c0_121 = arith.constant 0 : index
    %177 = vector.load %arg18[%c2_119, %c0_120, %c0_121] : memref<4x8x32xf32, #tpu.memory_space<vmem>>, vector<1x8x32xf32>
    %178 = vector.shape_cast %177 : vector<1x8x32xf32> to vector<8x32xf32>
    %cst_122 = arith.constant dense<0.000000e+00> : vector<24x32xf32>
    %179 = tpu.matmul %176, %178, %cst_122 {dimension_numbers = #tpu.dot_dimension_numbers<[1], [0], [0], [1], [0, 0, 1, 1], [], []>} : vector<24x8xf32>, vector<8x32xf32>, vector<24x32xf32> -> vector<24x32xf32>
    %180 = arith.addf %139, %179 : vector<24x32xf32>
    %c3 = arith.constant 3 : index
    %c0_123 = arith.constant 0 : index
    %c0_124 = arith.constant 0 : index
    %181 = vector.load %arg12[%c3, %c0_123, %c0_124] : memref<4x32x8xf32, #tpu.memory_space<vmem>>, vector<1x32x8xf32>
    %182 = vector.shape_cast %181 : vector<1x32x8xf32> to vector<32x8xf32>
    %cst_125 = arith.constant dense<0.000000e+00> : vector<24x8xf32>
    %183 = tpu.matmul %53, %182, %cst_125 {dimension_numbers = #tpu.dot_dimension_numbers<[1], [0], [0], [1], [0, 0, 1, 1], [], []>} : vector<24x32xf32>, vector<32x8xf32>, vector<24x8xf32> -> vector<24x8xf32>
    %c3_126 = arith.constant 3 : index
    %c0_127 = arith.constant 0 : index
    %c0_128 = arith.constant 0 : index
    %184 = vector.load %arg13[%c3_126, %c0_127, %c0_128] : memref<4x1x8xf32, #tpu.memory_space<vmem>>, vector<1x1x8xf32>
    %185 = vector.shape_cast %184 : vector<1x1x8xf32> to vector<1x8xf32>
    %186 = vector.broadcast %185 : vector<1x8xf32> to vector<24x8xf32>
    %187 = arith.addf %183, %186 : vector<24x8xf32>
    %c3_129 = arith.constant 3 : index
    %c0_130 = arith.constant 0 : index
    %c0_131 = arith.constant 0 : index
    %188 = vector.load %arg14[%c3_129, %c0_130, %c0_131] : memref<4x32x8xf32, #tpu.memory_space<vmem>>, vector<1x32x8xf32>
    %189 = vector.shape_cast %188 : vector<1x32x8xf32> to vector<32x8xf32>
    %cst_132 = arith.constant dense<0.000000e+00> : vector<24x8xf32>
    %190 = tpu.matmul %53, %189, %cst_132 {dimension_numbers = #tpu.dot_dimension_numbers<[1], [0], [0], [1], [0, 0, 1, 1], [], []>} : vector<24x32xf32>, vector<32x8xf32>, vector<24x8xf32> -> vector<24x8xf32>
    %c3_133 = arith.constant 3 : index
    %c0_134 = arith.constant 0 : index
    %c0_135 = arith.constant 0 : index
    %191 = vector.load %arg15[%c3_133, %c0_134, %c0_135] : memref<4x1x8xf32, #tpu.memory_space<vmem>>, vector<1x1x8xf32>
    %192 = vector.shape_cast %191 : vector<1x1x8xf32> to vector<1x8xf32>
    %193 = vector.broadcast %192 : vector<1x8xf32> to vector<24x8xf32>
    %194 = arith.addf %190, %193 : vector<24x8xf32>
    %c3_136 = arith.constant 3 : index
    %c0_137 = arith.constant 0 : index
    %c0_138 = arith.constant 0 : index
    %195 = vector.load %arg16[%c3_136, %c0_137, %c0_138] : memref<4x32x8xf32, #tpu.memory_space<vmem>>, vector<1x32x8xf32>
    %196 = vector.shape_cast %195 : vector<1x32x8xf32> to vector<32x8xf32>
    %cst_139 = arith.constant dense<0.000000e+00> : vector<24x8xf32>
    %197 = tpu.matmul %53, %196, %cst_139 {dimension_numbers = #tpu.dot_dimension_numbers<[1], [0], [0], [1], [0, 0, 1, 1], [], []>} : vector<24x32xf32>, vector<32x8xf32>, vector<24x8xf32> -> vector<24x8xf32>
    %c3_140 = arith.constant 3 : index
    %c0_141 = arith.constant 0 : index
    %c0_142 = arith.constant 0 : index
    %198 = vector.load %arg17[%c3_140, %c0_141, %c0_142] : memref<4x1x8xf32, #tpu.memory_space<vmem>>, vector<1x1x8xf32>
    %199 = vector.shape_cast %198 : vector<1x1x8xf32> to vector<1x8xf32>
    %200 = vector.broadcast %199 : vector<1x8xf32> to vector<24x8xf32>
    %201 = arith.addf %197, %200 : vector<24x8xf32>
    %cst_143 = arith.constant dense<0.000000e+00> : vector<24x24xf32>
    %202 = tpu.matmul %187, %194, %cst_143 {dimension_numbers = #tpu.dot_dimension_numbers<[1], [1], [0], [0], [0, 0, 1, 0], [], []>} : vector<24x8xf32>, vector<24x8xf32>, vector<24x24xf32> -> vector<24x24xf32>
    %cst_144 = arith.constant 0.353553385 : f32
    %203 = vector.broadcast %cst_144 : f32 to vector<24x24xf32>
    %204 = arith.mulf %202, %203 : vector<24x24xf32>
    %cst_145 = arith.constant -1.000000e+30 : f32
    %205 = vector.broadcast %cst_145 : f32 to vector<24x24xf32>
    %206 = arith.select %56, %204, %205 : vector<24x24xi1>, vector<24x24xf32>
    %cst_146 = arith.constant dense<0xFF800000> : vector<24xf32>
    %207 = vector.multi_reduction <maximumf>, %206, %cst_146 [1] : vector<24x24xf32> to vector<24xf32>
    %208 = vector.shape_cast %207 : vector<24xf32> to vector<24x1xf32>
    %209 = vector.broadcast %208 : vector<24x1xf32> to vector<24x24xf32>
    %210 = arith.subf %206, %209 : vector<24x24xf32>
    %211 = math.exp %210 : vector<24x24xf32>
    %cst_147 = arith.constant dense<0.000000e+00> : vector<24xf32>
    %212 = vector.multi_reduction <add>, %211, %cst_147 [1] : vector<24x24xf32> to vector<24xf32>
    %213 = vector.shape_cast %212 : vector<24xf32> to vector<24x1xf32>
    %214 = tpu.reciprocal %213 {approx = true} : vector<24x1xf32> -> vector<24x1xf32>
    %215 = vector.broadcast %214 : vector<24x1xf32> to vector<24x24xf32>
    %216 = arith.mulf %211, %215 : vector<24x24xf32>
    %cst_148 = arith.constant dense<0.000000e+00> : vector<24x8xf32>
    %217 = tpu.matmul %216, %201, %cst_148 {dimension_numbers = #tpu.dot_dimension_numbers<[1], [0], [0], [1], [0, 0, 1, 1], [], []>} : vector<24x24xf32>, vector<24x8xf32>, vector<24x8xf32> -> vector<24x8xf32>
    %c3_149 = arith.constant 3 : index
    %c0_150 = arith.constant 0 : index
    %c0_151 = arith.constant 0 : index
    %218 = vector.load %arg18[%c3_149, %c0_150, %c0_151] : memref<4x8x32xf32, #tpu.memory_space<vmem>>, vector<1x8x32xf32>
    %219 = vector.shape_cast %218 : vector<1x8x32xf32> to vector<8x32xf32>
    %cst_152 = arith.constant dense<0.000000e+00> : vector<24x32xf32>
    %220 = tpu.matmul %217, %219, %cst_152 {dimension_numbers = #tpu.dot_dimension_numbers<[1], [0], [0], [1], [0, 0, 1, 1], [], []>} : vector<24x8xf32>, vector<8x32xf32>, vector<24x32xf32> -> vector<24x32xf32>
    %221 = arith.addf %180, %220 : vector<24x32xf32>
    %c0_153 = arith.constant 0 : index
    %c0_154 = arith.constant 0 : index
    %222 = vector.load %arg19[%c0_153, %c0_154] : memref<1x32xf32, #tpu.memory_space<vmem>>, vector<1x32xf32>
    %223 = vector.broadcast %222 : vector<1x32xf32> to vector<24x32xf32>
    %224 = arith.addf %221, %223 : vector<24x32xf32>
    %225 = arith.addf %53, %224 : vector<24x32xf32>
    %cst_155 = arith.constant dense<0.000000e+00> : vector<24xf32>
    %226 = vector.multi_reduction <add>, %225, %cst_155 [1] : vector<24x32xf32> to vector<24xf32>
    %227 = vector.shape_cast %226 : vector<24xf32> to vector<24x1xf32>
    %cst_156 = arith.constant 3.200000e+01 : f32
    %228 = vector.broadcast %cst_156 : f32 to vector<24x1xf32>
    %229 = arith.divf %227, %228 : vector<24x1xf32>
    %230 = vector.broadcast %229 : vector<24x1xf32> to vector<24x32xf32>
    %231 = arith.subf %225, %230 : vector<24x32xf32>
    %232 = arith.mulf %231, %231 : vector<24x32xf32>
    %cst_157 = arith.constant dense<0.000000e+00> : vector<24xf32>
    %233 = vector.multi_reduction <add>, %232, %cst_157 [1] : vector<24x32xf32> to vector<24xf32>
    %234 = vector.shape_cast %233 : vector<24xf32> to vector<24x1xf32>
    %cst_158 = arith.constant 3.200000e+01 : f32
    %235 = vector.broadcast %cst_158 : f32 to vector<24x1xf32>
    %236 = arith.divf %234, %235 : vector<24x1xf32>
    %237 = vector.broadcast %229 : vector<24x1xf32> to vector<24x32xf32>
    %238 = arith.subf %225, %237 : vector<24x32xf32>
    %cst_159 = arith.constant 9.99999974E-6 : f32
    %239 = vector.broadcast %cst_159 : f32 to vector<24x1xf32>
    %240 = arith.addf %236, %239 : vector<24x1xf32>
    %241 = math.rsqrt %240 : vector<24x1xf32>
    %242 = vector.broadcast %241 : vector<24x1xf32> to vector<24x32xf32>
    %243 = arith.mulf %238, %242 : vector<24x32xf32>
    %c0_160 = arith.constant 0 : index
    %c0_161 = arith.constant 0 : index
    %244 = vector.load %arg20[%c0_160, %c0_161] : memref<1x32xf32, #tpu.memory_space<vmem>>, vector<1x32xf32>
    %245 = vector.broadcast %244 : vector<1x32xf32> to vector<24x32xf32>
    %246 = arith.mulf %243, %245 : vector<24x32xf32>
    %c0_162 = arith.constant 0 : index
    %c0_163 = arith.constant 0 : index
    %247 = vector.load %arg21[%c0_162, %c0_163] : memref<1x32xf32, #tpu.memory_space<vmem>>, vector<1x32xf32>
    %248 = vector.broadcast %247 : vector<1x32xf32> to vector<24x32xf32>
    %249 = arith.addf %246, %248 : vector<24x32xf32>
    %c0_164 = arith.constant 0 : index
    %c0_165 = arith.constant 0 : index
    %250 = vector.load %arg22[%c0_164, %c0_165] : memref<32x64xf32, #tpu.memory_space<vmem>>, vector<32x64xf32>
    %cst_166 = arith.constant dense<0.000000e+00> : vector<24x64xf32>
    %251 = tpu.matmul %249, %250, %cst_166 {dimension_numbers = #tpu.dot_dimension_numbers<[1], [0], [0], [1], [0, 0, 1, 1], [], []>} : vector<24x32xf32>, vector<32x64xf32>, vector<24x64xf32> -> vector<24x64xf32>
    %c0_167 = arith.constant 0 : index
    %c0_168 = arith.constant 0 : index
    %252 = vector.load %arg23[%c0_167, %c0_168] : memref<1x64xf32, #tpu.memory_space<vmem>>, vector<1x64xf32>
    %253 = vector.broadcast %252 : vector<1x64xf32> to vector<24x64xf32>
    %254 = arith.addf %251, %253 : vector<24x64xf32>
    %cst_169 = arith.constant 0.000000e+00 : f32
    %255 = vector.broadcast %cst_169 : f32 to vector<24x64xf32>
    %256 = arith.maximumf %254, %255 : vector<24x64xf32>
    %c0_170 = arith.constant 0 : index
    %c0_171 = arith.constant 0 : index
    %257 = vector.load %arg24[%c0_170, %c0_171] : memref<64x32xf32, #tpu.memory_space<vmem>>, vector<64x32xf32>
    %cst_172 = arith.constant dense<0.000000e+00> : vector<24x32xf32>
    %258 = tpu.matmul %256, %257, %cst_172 {dimension_numbers = #tpu.dot_dimension_numbers<[1], [0], [0], [1], [0, 0, 1, 1], [], []>} : vector<24x64xf32>, vector<64x32xf32>, vector<24x32xf32> -> vector<24x32xf32>
    %c0_173 = arith.constant 0 : index
    %c0_174 = arith.constant 0 : index
    %259 = vector.load %arg25[%c0_173, %c0_174] : memref<1x32xf32, #tpu.memory_space<vmem>>, vector<1x32xf32>
    %260 = vector.broadcast %259 : vector<1x32xf32> to vector<24x32xf32>
    %261 = arith.addf %258, %260 : vector<24x32xf32>
    %262 = arith.addf %249, %261 : vector<24x32xf32>
    %cst_175 = arith.constant dense<0.000000e+00> : vector<24xf32>
    %263 = vector.multi_reduction <add>, %262, %cst_175 [1] : vector<24x32xf32> to vector<24xf32>
    %264 = vector.shape_cast %263 : vector<24xf32> to vector<24x1xf32>
    %cst_176 = arith.constant 3.200000e+01 : f32
    %265 = vector.broadcast %cst_176 : f32 to vector<24x1xf32>
    %266 = arith.divf %264, %265 : vector<24x1xf32>
    %267 = vector.broadcast %266 : vector<24x1xf32> to vector<24x32xf32>
    %268 = arith.subf %262, %267 : vector<24x32xf32>
    %269 = arith.mulf %268, %268 : vector<24x32xf32>
    %cst_177 = arith.constant dense<0.000000e+00> : vector<24xf32>
    %270 = vector.multi_reduction <add>, %269, %cst_177 [1] : vector<24x32xf32> to vector<24xf32>
    %271 = vector.shape_cast %270 : vector<24xf32> to vector<24x1xf32>
    %cst_178 = arith.constant 3.200000e+01 : f32
    %272 = vector.broadcast %cst_178 : f32 to vector<24x1xf32>
    %273 = arith.divf %271, %272 : vector<24x1xf32>
    %274 = vector.broadcast %266 : vector<24x1xf32> to vector<24x32xf32>
    %275 = arith.subf %262, %274 : vector<24x32xf32>
    %cst_179 = arith.constant 9.99999974E-6 : f32
    %276 = vector.broadcast %cst_179 : f32 to vector<24x1xf32>
    %277 = arith.addf %273, %276 : vector<24x1xf32>
    %278 = math.rsqrt %277 : vector<24x1xf32>
    %279 = vector.broadcast %278 : vector<24x1xf32> to vector<24x32xf32>
    %280 = arith.mulf %275, %279 : vector<24x32xf32>
    %c0_180 = arith.constant 0 : index
    %c0_181 = arith.constant 0 : index
    %281 = vector.load %arg26[%c0_180, %c0_181] : memref<1x32xf32, #tpu.memory_space<vmem>>, vector<1x32xf32>
    %282 = vector.broadcast %281 : vector<1x32xf32> to vector<24x32xf32>
    %283 = arith.mulf %280, %282 : vector<24x32xf32>
    %c0_182 = arith.constant 0 : index
    %c0_183 = arith.constant 0 : index
    %284 = vector.load %arg27[%c0_182, %c0_183] : memref<1x32xf32, #tpu.memory_space<vmem>>, vector<1x32xf32>
    %285 = vector.broadcast %284 : vector<1x32xf32> to vector<24x32xf32>
    %286 = arith.addf %283, %285 : vector<24x32xf32>
    %cst_184 = arith.constant 0.000000e+00 : f32
    %287 = vector.broadcast %cst_184 : f32 to vector<24x32xf32>
    %c0_185 = arith.constant 0 : index
    %c0_186 = arith.constant 0 : index
    %c0_187 = arith.constant 0 : index
    %288 = vector.load %arg28[%c0_185, %c0_186, %c0_187] : memref<4x32x8xf32, #tpu.memory_space<vmem>>, vector<1x32x8xf32>
    %289 = vector.shape_cast %288 : vector<1x32x8xf32> to vector<32x8xf32>
    %cst_188 = arith.constant dense<0.000000e+00> : vector<24x8xf32>
    %290 = tpu.matmul %286, %289, %cst_188 {dimension_numbers = #tpu.dot_dimension_numbers<[1], [0], [0], [1], [0, 0, 1, 1], [], []>} : vector<24x32xf32>, vector<32x8xf32>, vector<24x8xf32> -> vector<24x8xf32>
    %c0_189 = arith.constant 0 : index
    %c0_190 = arith.constant 0 : index
    %c0_191 = arith.constant 0 : index
    %291 = vector.load %arg29[%c0_189, %c0_190, %c0_191] : memref<4x1x8xf32, #tpu.memory_space<vmem>>, vector<1x1x8xf32>
    %292 = vector.shape_cast %291 : vector<1x1x8xf32> to vector<1x8xf32>
    %293 = vector.broadcast %292 : vector<1x8xf32> to vector<24x8xf32>
    %294 = arith.addf %290, %293 : vector<24x8xf32>
    %c0_192 = arith.constant 0 : index
    %c0_193 = arith.constant 0 : index
    %c0_194 = arith.constant 0 : index
    %295 = vector.load %arg30[%c0_192, %c0_193, %c0_194] : memref<4x32x8xf32, #tpu.memory_space<vmem>>, vector<1x32x8xf32>
    %296 = vector.shape_cast %295 : vector<1x32x8xf32> to vector<32x8xf32>
    %cst_195 = arith.constant dense<0.000000e+00> : vector<24x8xf32>
    %297 = tpu.matmul %286, %296, %cst_195 {dimension_numbers = #tpu.dot_dimension_numbers<[1], [0], [0], [1], [0, 0, 1, 1], [], []>} : vector<24x32xf32>, vector<32x8xf32>, vector<24x8xf32> -> vector<24x8xf32>
    %c0_196 = arith.constant 0 : index
    %c0_197 = arith.constant 0 : index
    %c0_198 = arith.constant 0 : index
    %298 = vector.load %arg31[%c0_196, %c0_197, %c0_198] : memref<4x1x8xf32, #tpu.memory_space<vmem>>, vector<1x1x8xf32>
    %299 = vector.shape_cast %298 : vector<1x1x8xf32> to vector<1x8xf32>
    %300 = vector.broadcast %299 : vector<1x8xf32> to vector<24x8xf32>
    %301 = arith.addf %297, %300 : vector<24x8xf32>
    %c0_199 = arith.constant 0 : index
    %c0_200 = arith.constant 0 : index
    %c0_201 = arith.constant 0 : index
    %302 = vector.load %arg32[%c0_199, %c0_200, %c0_201] : memref<4x32x8xf32, #tpu.memory_space<vmem>>, vector<1x32x8xf32>
    %303 = vector.shape_cast %302 : vector<1x32x8xf32> to vector<32x8xf32>
    %cst_202 = arith.constant dense<0.000000e+00> : vector<24x8xf32>
    %304 = tpu.matmul %286, %303, %cst_202 {dimension_numbers = #tpu.dot_dimension_numbers<[1], [0], [0], [1], [0, 0, 1, 1], [], []>} : vector<24x32xf32>, vector<32x8xf32>, vector<24x8xf32> -> vector<24x8xf32>
    %c0_203 = arith.constant 0 : index
    %c0_204 = arith.constant 0 : index
    %c0_205 = arith.constant 0 : index
    %305 = vector.load %arg33[%c0_203, %c0_204, %c0_205] : memref<4x1x8xf32, #tpu.memory_space<vmem>>, vector<1x1x8xf32>
    %306 = vector.shape_cast %305 : vector<1x1x8xf32> to vector<1x8xf32>
    %307 = vector.broadcast %306 : vector<1x8xf32> to vector<24x8xf32>
    %308 = arith.addf %304, %307 : vector<24x8xf32>
    %cst_206 = arith.constant dense<0.000000e+00> : vector<24x24xf32>
    %309 = tpu.matmul %294, %301, %cst_206 {dimension_numbers = #tpu.dot_dimension_numbers<[1], [1], [0], [0], [0, 0, 1, 0], [], []>} : vector<24x8xf32>, vector<24x8xf32>, vector<24x24xf32> -> vector<24x24xf32>
    %cst_207 = arith.constant 0.353553385 : f32
    %310 = vector.broadcast %cst_207 : f32 to vector<24x24xf32>
    %311 = arith.mulf %309, %310 : vector<24x24xf32>
    %cst_208 = arith.constant -1.000000e+30 : f32
    %312 = vector.broadcast %cst_208 : f32 to vector<24x24xf32>
    %313 = arith.select %56, %311, %312 : vector<24x24xi1>, vector<24x24xf32>
    %cst_209 = arith.constant dense<0xFF800000> : vector<24xf32>
    %314 = vector.multi_reduction <maximumf>, %313, %cst_209 [1] : vector<24x24xf32> to vector<24xf32>
    %315 = vector.shape_cast %314 : vector<24xf32> to vector<24x1xf32>
    %316 = vector.broadcast %315 : vector<24x1xf32> to vector<24x24xf32>
    %317 = arith.subf %313, %316 : vector<24x24xf32>
    %318 = math.exp %317 : vector<24x24xf32>
    %cst_210 = arith.constant dense<0.000000e+00> : vector<24xf32>
    %319 = vector.multi_reduction <add>, %318, %cst_210 [1] : vector<24x24xf32> to vector<24xf32>
    %320 = vector.shape_cast %319 : vector<24xf32> to vector<24x1xf32>
    %321 = tpu.reciprocal %320 {approx = true} : vector<24x1xf32> -> vector<24x1xf32>
    %322 = vector.broadcast %321 : vector<24x1xf32> to vector<24x24xf32>
    %323 = arith.mulf %318, %322 : vector<24x24xf32>
    %cst_211 = arith.constant dense<0.000000e+00> : vector<24x8xf32>
    %324 = tpu.matmul %323, %308, %cst_211 {dimension_numbers = #tpu.dot_dimension_numbers<[1], [0], [0], [1], [0, 0, 1, 1], [], []>} : vector<24x24xf32>, vector<24x8xf32>, vector<24x8xf32> -> vector<24x8xf32>
    %c0_212 = arith.constant 0 : index
    %c0_213 = arith.constant 0 : index
    %c0_214 = arith.constant 0 : index
    %325 = vector.load %arg34[%c0_212, %c0_213, %c0_214] : memref<4x8x32xf32, #tpu.memory_space<vmem>>, vector<1x8x32xf32>
    %326 = vector.shape_cast %325 : vector<1x8x32xf32> to vector<8x32xf32>
    %cst_215 = arith.constant dense<0.000000e+00> : vector<24x32xf32>
    %327 = tpu.matmul %324, %326, %cst_215 {dimension_numbers = #tpu.dot_dimension_numbers<[1], [0], [0], [1], [0, 0, 1, 1], [], []>} : vector<24x8xf32>, vector<8x32xf32>, vector<24x32xf32> -> vector<24x32xf32>
    %328 = arith.addf %287, %327 : vector<24x32xf32>
    %c1_216 = arith.constant 1 : index
    %c0_217 = arith.constant 0 : index
    %c0_218 = arith.constant 0 : index
    %329 = vector.load %arg28[%c1_216, %c0_217, %c0_218] : memref<4x32x8xf32, #tpu.memory_space<vmem>>, vector<1x32x8xf32>
    %330 = vector.shape_cast %329 : vector<1x32x8xf32> to vector<32x8xf32>
    %cst_219 = arith.constant dense<0.000000e+00> : vector<24x8xf32>
    %331 = tpu.matmul %286, %330, %cst_219 {dimension_numbers = #tpu.dot_dimension_numbers<[1], [0], [0], [1], [0, 0, 1, 1], [], []>} : vector<24x32xf32>, vector<32x8xf32>, vector<24x8xf32> -> vector<24x8xf32>
    %c1_220 = arith.constant 1 : index
    %c0_221 = arith.constant 0 : index
    %c0_222 = arith.constant 0 : index
    %332 = vector.load %arg29[%c1_220, %c0_221, %c0_222] : memref<4x1x8xf32, #tpu.memory_space<vmem>>, vector<1x1x8xf32>
    %333 = vector.shape_cast %332 : vector<1x1x8xf32> to vector<1x8xf32>
    %334 = vector.broadcast %333 : vector<1x8xf32> to vector<24x8xf32>
    %335 = arith.addf %331, %334 : vector<24x8xf32>
    %c1_223 = arith.constant 1 : index
    %c0_224 = arith.constant 0 : index
    %c0_225 = arith.constant 0 : index
    %336 = vector.load %arg30[%c1_223, %c0_224, %c0_225] : memref<4x32x8xf32, #tpu.memory_space<vmem>>, vector<1x32x8xf32>
    %337 = vector.shape_cast %336 : vector<1x32x8xf32> to vector<32x8xf32>
    %cst_226 = arith.constant dense<0.000000e+00> : vector<24x8xf32>
    %338 = tpu.matmul %286, %337, %cst_226 {dimension_numbers = #tpu.dot_dimension_numbers<[1], [0], [0], [1], [0, 0, 1, 1], [], []>} : vector<24x32xf32>, vector<32x8xf32>, vector<24x8xf32> -> vector<24x8xf32>
    %c1_227 = arith.constant 1 : index
    %c0_228 = arith.constant 0 : index
    %c0_229 = arith.constant 0 : index
    %339 = vector.load %arg31[%c1_227, %c0_228, %c0_229] : memref<4x1x8xf32, #tpu.memory_space<vmem>>, vector<1x1x8xf32>
    %340 = vector.shape_cast %339 : vector<1x1x8xf32> to vector<1x8xf32>
    %341 = vector.broadcast %340 : vector<1x8xf32> to vector<24x8xf32>
    %342 = arith.addf %338, %341 : vector<24x8xf32>
    %c1_230 = arith.constant 1 : index
    %c0_231 = arith.constant 0 : index
    %c0_232 = arith.constant 0 : index
    %343 = vector.load %arg32[%c1_230, %c0_231, %c0_232] : memref<4x32x8xf32, #tpu.memory_space<vmem>>, vector<1x32x8xf32>
    %344 = vector.shape_cast %343 : vector<1x32x8xf32> to vector<32x8xf32>
    %cst_233 = arith.constant dense<0.000000e+00> : vector<24x8xf32>
    %345 = tpu.matmul %286, %344, %cst_233 {dimension_numbers = #tpu.dot_dimension_numbers<[1], [0], [0], [1], [0, 0, 1, 1], [], []>} : vector<24x32xf32>, vector<32x8xf32>, vector<24x8xf32> -> vector<24x8xf32>
    %c1_234 = arith.constant 1 : index
    %c0_235 = arith.constant 0 : index
    %c0_236 = arith.constant 0 : index
    %346 = vector.load %arg33[%c1_234, %c0_235, %c0_236] : memref<4x1x8xf32, #tpu.memory_space<vmem>>, vector<1x1x8xf32>
    %347 = vector.shape_cast %346 : vector<1x1x8xf32> to vector<1x8xf32>
    %348 = vector.broadcast %347 : vector<1x8xf32> to vector<24x8xf32>
    %349 = arith.addf %345, %348 : vector<24x8xf32>
    %cst_237 = arith.constant dense<0.000000e+00> : vector<24x24xf32>
    %350 = tpu.matmul %335, %342, %cst_237 {dimension_numbers = #tpu.dot_dimension_numbers<[1], [1], [0], [0], [0, 0, 1, 0], [], []>} : vector<24x8xf32>, vector<24x8xf32>, vector<24x24xf32> -> vector<24x24xf32>
    %cst_238 = arith.constant 0.353553385 : f32
    %351 = vector.broadcast %cst_238 : f32 to vector<24x24xf32>
    %352 = arith.mulf %350, %351 : vector<24x24xf32>
    %cst_239 = arith.constant -1.000000e+30 : f32
    %353 = vector.broadcast %cst_239 : f32 to vector<24x24xf32>
    %354 = arith.select %56, %352, %353 : vector<24x24xi1>, vector<24x24xf32>
    %cst_240 = arith.constant dense<0xFF800000> : vector<24xf32>
    %355 = vector.multi_reduction <maximumf>, %354, %cst_240 [1] : vector<24x24xf32> to vector<24xf32>
    %356 = vector.shape_cast %355 : vector<24xf32> to vector<24x1xf32>
    %357 = vector.broadcast %356 : vector<24x1xf32> to vector<24x24xf32>
    %358 = arith.subf %354, %357 : vector<24x24xf32>
    %359 = math.exp %358 : vector<24x24xf32>
    %cst_241 = arith.constant dense<0.000000e+00> : vector<24xf32>
    %360 = vector.multi_reduction <add>, %359, %cst_241 [1] : vector<24x24xf32> to vector<24xf32>
    %361 = vector.shape_cast %360 : vector<24xf32> to vector<24x1xf32>
    %362 = tpu.reciprocal %361 {approx = true} : vector<24x1xf32> -> vector<24x1xf32>
    %363 = vector.broadcast %362 : vector<24x1xf32> to vector<24x24xf32>
    %364 = arith.mulf %359, %363 : vector<24x24xf32>
    %cst_242 = arith.constant dense<0.000000e+00> : vector<24x8xf32>
    %365 = tpu.matmul %364, %349, %cst_242 {dimension_numbers = #tpu.dot_dimension_numbers<[1], [0], [0], [1], [0, 0, 1, 1], [], []>} : vector<24x24xf32>, vector<24x8xf32>, vector<24x8xf32> -> vector<24x8xf32>
    %c1_243 = arith.constant 1 : index
    %c0_244 = arith.constant 0 : index
    %c0_245 = arith.constant 0 : index
    %366 = vector.load %arg34[%c1_243, %c0_244, %c0_245] : memref<4x8x32xf32, #tpu.memory_space<vmem>>, vector<1x8x32xf32>
    %367 = vector.shape_cast %366 : vector<1x8x32xf32> to vector<8x32xf32>
    %cst_246 = arith.constant dense<0.000000e+00> : vector<24x32xf32>
    %368 = tpu.matmul %365, %367, %cst_246 {dimension_numbers = #tpu.dot_dimension_numbers<[1], [0], [0], [1], [0, 0, 1, 1], [], []>} : vector<24x8xf32>, vector<8x32xf32>, vector<24x32xf32> -> vector<24x32xf32>
    %369 = arith.addf %328, %368 : vector<24x32xf32>
    %c2_247 = arith.constant 2 : index
    %c0_248 = arith.constant 0 : index
    %c0_249 = arith.constant 0 : index
    %370 = vector.load %arg28[%c2_247, %c0_248, %c0_249] : memref<4x32x8xf32, #tpu.memory_space<vmem>>, vector<1x32x8xf32>
    %371 = vector.shape_cast %370 : vector<1x32x8xf32> to vector<32x8xf32>
    %cst_250 = arith.constant dense<0.000000e+00> : vector<24x8xf32>
    %372 = tpu.matmul %286, %371, %cst_250 {dimension_numbers = #tpu.dot_dimension_numbers<[1], [0], [0], [1], [0, 0, 1, 1], [], []>} : vector<24x32xf32>, vector<32x8xf32>, vector<24x8xf32> -> vector<24x8xf32>
    %c2_251 = arith.constant 2 : index
    %c0_252 = arith.constant 0 : index
    %c0_253 = arith.constant 0 : index
    %373 = vector.load %arg29[%c2_251, %c0_252, %c0_253] : memref<4x1x8xf32, #tpu.memory_space<vmem>>, vector<1x1x8xf32>
    %374 = vector.shape_cast %373 : vector<1x1x8xf32> to vector<1x8xf32>
    %375 = vector.broadcast %374 : vector<1x8xf32> to vector<24x8xf32>
    %376 = arith.addf %372, %375 : vector<24x8xf32>
    %c2_254 = arith.constant 2 : index
    %c0_255 = arith.constant 0 : index
    %c0_256 = arith.constant 0 : index
    %377 = vector.load %arg30[%c2_254, %c0_255, %c0_256] : memref<4x32x8xf32, #tpu.memory_space<vmem>>, vector<1x32x8xf32>
    %378 = vector.shape_cast %377 : vector<1x32x8xf32> to vector<32x8xf32>
    %cst_257 = arith.constant dense<0.000000e+00> : vector<24x8xf32>
    %379 = tpu.matmul %286, %378, %cst_257 {dimension_numbers = #tpu.dot_dimension_numbers<[1], [0], [0], [1], [0, 0, 1, 1], [], []>} : vector<24x32xf32>, vector<32x8xf32>, vector<24x8xf32> -> vector<24x8xf32>
    %c2_258 = arith.constant 2 : index
    %c0_259 = arith.constant 0 : index
    %c0_260 = arith.constant 0 : index
    %380 = vector.load %arg31[%c2_258, %c0_259, %c0_260] : memref<4x1x8xf32, #tpu.memory_space<vmem>>, vector<1x1x8xf32>
    %381 = vector.shape_cast %380 : vector<1x1x8xf32> to vector<1x8xf32>
    %382 = vector.broadcast %381 : vector<1x8xf32> to vector<24x8xf32>
    %383 = arith.addf %379, %382 : vector<24x8xf32>
    %c2_261 = arith.constant 2 : index
    %c0_262 = arith.constant 0 : index
    %c0_263 = arith.constant 0 : index
    %384 = vector.load %arg32[%c2_261, %c0_262, %c0_263] : memref<4x32x8xf32, #tpu.memory_space<vmem>>, vector<1x32x8xf32>
    %385 = vector.shape_cast %384 : vector<1x32x8xf32> to vector<32x8xf32>
    %cst_264 = arith.constant dense<0.000000e+00> : vector<24x8xf32>
    %386 = tpu.matmul %286, %385, %cst_264 {dimension_numbers = #tpu.dot_dimension_numbers<[1], [0], [0], [1], [0, 0, 1, 1], [], []>} : vector<24x32xf32>, vector<32x8xf32>, vector<24x8xf32> -> vector<24x8xf32>
    %c2_265 = arith.constant 2 : index
    %c0_266 = arith.constant 0 : index
    %c0_267 = arith.constant 0 : index
    %387 = vector.load %arg33[%c2_265, %c0_266, %c0_267] : memref<4x1x8xf32, #tpu.memory_space<vmem>>, vector<1x1x8xf32>
    %388 = vector.shape_cast %387 : vector<1x1x8xf32> to vector<1x8xf32>
    %389 = vector.broadcast %388 : vector<1x8xf32> to vector<24x8xf32>
    %390 = arith.addf %386, %389 : vector<24x8xf32>
    %cst_268 = arith.constant dense<0.000000e+00> : vector<24x24xf32>
    %391 = tpu.matmul %376, %383, %cst_268 {dimension_numbers = #tpu.dot_dimension_numbers<[1], [1], [0], [0], [0, 0, 1, 0], [], []>} : vector<24x8xf32>, vector<24x8xf32>, vector<24x24xf32> -> vector<24x24xf32>
    %cst_269 = arith.constant 0.353553385 : f32
    %392 = vector.broadcast %cst_269 : f32 to vector<24x24xf32>
    %393 = arith.mulf %391, %392 : vector<24x24xf32>
    %cst_270 = arith.constant -1.000000e+30 : f32
    %394 = vector.broadcast %cst_270 : f32 to vector<24x24xf32>
    %395 = arith.select %56, %393, %394 : vector<24x24xi1>, vector<24x24xf32>
    %cst_271 = arith.constant dense<0xFF800000> : vector<24xf32>
    %396 = vector.multi_reduction <maximumf>, %395, %cst_271 [1] : vector<24x24xf32> to vector<24xf32>
    %397 = vector.shape_cast %396 : vector<24xf32> to vector<24x1xf32>
    %398 = vector.broadcast %397 : vector<24x1xf32> to vector<24x24xf32>
    %399 = arith.subf %395, %398 : vector<24x24xf32>
    %400 = math.exp %399 : vector<24x24xf32>
    %cst_272 = arith.constant dense<0.000000e+00> : vector<24xf32>
    %401 = vector.multi_reduction <add>, %400, %cst_272 [1] : vector<24x24xf32> to vector<24xf32>
    %402 = vector.shape_cast %401 : vector<24xf32> to vector<24x1xf32>
    %403 = tpu.reciprocal %402 {approx = true} : vector<24x1xf32> -> vector<24x1xf32>
    %404 = vector.broadcast %403 : vector<24x1xf32> to vector<24x24xf32>
    %405 = arith.mulf %400, %404 : vector<24x24xf32>
    %cst_273 = arith.constant dense<0.000000e+00> : vector<24x8xf32>
    %406 = tpu.matmul %405, %390, %cst_273 {dimension_numbers = #tpu.dot_dimension_numbers<[1], [0], [0], [1], [0, 0, 1, 1], [], []>} : vector<24x24xf32>, vector<24x8xf32>, vector<24x8xf32> -> vector<24x8xf32>
    %c2_274 = arith.constant 2 : index
    %c0_275 = arith.constant 0 : index
    %c0_276 = arith.constant 0 : index
    %407 = vector.load %arg34[%c2_274, %c0_275, %c0_276] : memref<4x8x32xf32, #tpu.memory_space<vmem>>, vector<1x8x32xf32>
    %408 = vector.shape_cast %407 : vector<1x8x32xf32> to vector<8x32xf32>
    %cst_277 = arith.constant dense<0.000000e+00> : vector<24x32xf32>
    %409 = tpu.matmul %406, %408, %cst_277 {dimension_numbers = #tpu.dot_dimension_numbers<[1], [0], [0], [1], [0, 0, 1, 1], [], []>} : vector<24x8xf32>, vector<8x32xf32>, vector<24x32xf32> -> vector<24x32xf32>
    %410 = arith.addf %369, %409 : vector<24x32xf32>
    %c3_278 = arith.constant 3 : index
    %c0_279 = arith.constant 0 : index
    %c0_280 = arith.constant 0 : index
    %411 = vector.load %arg28[%c3_278, %c0_279, %c0_280] : memref<4x32x8xf32, #tpu.memory_space<vmem>>, vector<1x32x8xf32>
    %412 = vector.shape_cast %411 : vector<1x32x8xf32> to vector<32x8xf32>
    %cst_281 = arith.constant dense<0.000000e+00> : vector<24x8xf32>
    %413 = tpu.matmul %286, %412, %cst_281 {dimension_numbers = #tpu.dot_dimension_numbers<[1], [0], [0], [1], [0, 0, 1, 1], [], []>} : vector<24x32xf32>, vector<32x8xf32>, vector<24x8xf32> -> vector<24x8xf32>
    %c3_282 = arith.constant 3 : index
    %c0_283 = arith.constant 0 : index
    %c0_284 = arith.constant 0 : index
    %414 = vector.load %arg29[%c3_282, %c0_283, %c0_284] : memref<4x1x8xf32, #tpu.memory_space<vmem>>, vector<1x1x8xf32>
    %415 = vector.shape_cast %414 : vector<1x1x8xf32> to vector<1x8xf32>
    %416 = vector.broadcast %415 : vector<1x8xf32> to vector<24x8xf32>
    %417 = arith.addf %413, %416 : vector<24x8xf32>
    %c3_285 = arith.constant 3 : index
    %c0_286 = arith.constant 0 : index
    %c0_287 = arith.constant 0 : index
    %418 = vector.load %arg30[%c3_285, %c0_286, %c0_287] : memref<4x32x8xf32, #tpu.memory_space<vmem>>, vector<1x32x8xf32>
    %419 = vector.shape_cast %418 : vector<1x32x8xf32> to vector<32x8xf32>
    %cst_288 = arith.constant dense<0.000000e+00> : vector<24x8xf32>
    %420 = tpu.matmul %286, %419, %cst_288 {dimension_numbers = #tpu.dot_dimension_numbers<[1], [0], [0], [1], [0, 0, 1, 1], [], []>} : vector<24x32xf32>, vector<32x8xf32>, vector<24x8xf32> -> vector<24x8xf32>
    %c3_289 = arith.constant 3 : index
    %c0_290 = arith.constant 0 : index
    %c0_291 = arith.constant 0 : index
    %421 = vector.load %arg31[%c3_289, %c0_290, %c0_291] : memref<4x1x8xf32, #tpu.memory_space<vmem>>, vector<1x1x8xf32>
    %422 = vector.shape_cast %421 : vector<1x1x8xf32> to vector<1x8xf32>
    %423 = vector.broadcast %422 : vector<1x8xf32> to vector<24x8xf32>
    %424 = arith.addf %420, %423 : vector<24x8xf32>
    %c3_292 = arith.constant 3 : index
    %c0_293 = arith.constant 0 : index
    %c0_294 = arith.constant 0 : index
    %425 = vector.load %arg32[%c3_292, %c0_293, %c0_294] : memref<4x32x8xf32, #tpu.memory_space<vmem>>, vector<1x32x8xf32>
    %426 = vector.shape_cast %425 : vector<1x32x8xf32> to vector<32x8xf32>
    %cst_295 = arith.constant dense<0.000000e+00> : vector<24x8xf32>
    %427 = tpu.matmul %286, %426, %cst_295 {dimension_numbers = #tpu.dot_dimension_numbers<[1], [0], [0], [1], [0, 0, 1, 1], [], []>} : vector<24x32xf32>, vector<32x8xf32>, vector<24x8xf32> -> vector<24x8xf32>
    %c3_296 = arith.constant 3 : index
    %c0_297 = arith.constant 0 : index
    %c0_298 = arith.constant 0 : index
    %428 = vector.load %arg33[%c3_296, %c0_297, %c0_298] : memref<4x1x8xf32, #tpu.memory_space<vmem>>, vector<1x1x8xf32>
    %429 = vector.shape_cast %428 : vector<1x1x8xf32> to vector<1x8xf32>
    %430 = vector.broadcast %429 : vector<1x8xf32> to vector<24x8xf32>
    %431 = arith.addf %427, %430 : vector<24x8xf32>
    %cst_299 = arith.constant dense<0.000000e+00> : vector<24x24xf32>
    %432 = tpu.matmul %417, %424, %cst_299 {dimension_numbers = #tpu.dot_dimension_numbers<[1], [1], [0], [0], [0, 0, 1, 0], [], []>} : vector<24x8xf32>, vector<24x8xf32>, vector<24x24xf32> -> vector<24x24xf32>
    %cst_300 = arith.constant 0.353553385 : f32
    %433 = vector.broadcast %cst_300 : f32 to vector<24x24xf32>
    %434 = arith.mulf %432, %433 : vector<24x24xf32>
    %cst_301 = arith.constant -1.000000e+30 : f32
    %435 = vector.broadcast %cst_301 : f32 to vector<24x24xf32>
    %436 = arith.select %56, %434, %435 : vector<24x24xi1>, vector<24x24xf32>
    %cst_302 = arith.constant dense<0xFF800000> : vector<24xf32>
    %437 = vector.multi_reduction <maximumf>, %436, %cst_302 [1] : vector<24x24xf32> to vector<24xf32>
    %438 = vector.shape_cast %437 : vector<24xf32> to vector<24x1xf32>
    %439 = vector.broadcast %438 : vector<24x1xf32> to vector<24x24xf32>
    %440 = arith.subf %436, %439 : vector<24x24xf32>
    %441 = math.exp %440 : vector<24x24xf32>
    %cst_303 = arith.constant dense<0.000000e+00> : vector<24xf32>
    %442 = vector.multi_reduction <add>, %441, %cst_303 [1] : vector<24x24xf32> to vector<24xf32>
    %443 = vector.shape_cast %442 : vector<24xf32> to vector<24x1xf32>
    %444 = tpu.reciprocal %443 {approx = true} : vector<24x1xf32> -> vector<24x1xf32>
    %445 = vector.broadcast %444 : vector<24x1xf32> to vector<24x24xf32>
    %446 = arith.mulf %441, %445 : vector<24x24xf32>
    %cst_304 = arith.constant dense<0.000000e+00> : vector<24x8xf32>
    %447 = tpu.matmul %446, %431, %cst_304 {dimension_numbers = #tpu.dot_dimension_numbers<[1], [0], [0], [1], [0, 0, 1, 1], [], []>} : vector<24x24xf32>, vector<24x8xf32>, vector<24x8xf32> -> vector<24x8xf32>
    %c3_305 = arith.constant 3 : index
    %c0_306 = arith.constant 0 : index
    %c0_307 = arith.constant 0 : index
    %448 = vector.load %arg34[%c3_305, %c0_306, %c0_307] : memref<4x8x32xf32, #tpu.memory_space<vmem>>, vector<1x8x32xf32>
    %449 = vector.shape_cast %448 : vector<1x8x32xf32> to vector<8x32xf32>
    %cst_308 = arith.constant dense<0.000000e+00> : vector<24x32xf32>
    %450 = tpu.matmul %447, %449, %cst_308 {dimension_numbers = #tpu.dot_dimension_numbers<[1], [0], [0], [1], [0, 0, 1, 1], [], []>} : vector<24x8xf32>, vector<8x32xf32>, vector<24x32xf32> -> vector<24x32xf32>
    %451 = arith.addf %410, %450 : vector<24x32xf32>
    %c0_309 = arith.constant 0 : index
    %c0_310 = arith.constant 0 : index
    %452 = vector.load %arg35[%c0_309, %c0_310] : memref<1x32xf32, #tpu.memory_space<vmem>>, vector<1x32xf32>
    %453 = vector.broadcast %452 : vector<1x32xf32> to vector<24x32xf32>
    %454 = arith.addf %451, %453 : vector<24x32xf32>
    %455 = arith.addf %286, %454 : vector<24x32xf32>
    %cst_311 = arith.constant dense<0.000000e+00> : vector<24xf32>
    %456 = vector.multi_reduction <add>, %455, %cst_311 [1] : vector<24x32xf32> to vector<24xf32>
    %457 = vector.shape_cast %456 : vector<24xf32> to vector<24x1xf32>
    %cst_312 = arith.constant 3.200000e+01 : f32
    %458 = vector.broadcast %cst_312 : f32 to vector<24x1xf32>
    %459 = arith.divf %457, %458 : vector<24x1xf32>
    %460 = vector.broadcast %459 : vector<24x1xf32> to vector<24x32xf32>
    %461 = arith.subf %455, %460 : vector<24x32xf32>
    %462 = arith.mulf %461, %461 : vector<24x32xf32>
    %cst_313 = arith.constant dense<0.000000e+00> : vector<24xf32>
    %463 = vector.multi_reduction <add>, %462, %cst_313 [1] : vector<24x32xf32> to vector<24xf32>
    %464 = vector.shape_cast %463 : vector<24xf32> to vector<24x1xf32>
    %cst_314 = arith.constant 3.200000e+01 : f32
    %465 = vector.broadcast %cst_314 : f32 to vector<24x1xf32>
    %466 = arith.divf %464, %465 : vector<24x1xf32>
    %467 = vector.broadcast %459 : vector<24x1xf32> to vector<24x32xf32>
    %468 = arith.subf %455, %467 : vector<24x32xf32>
    %cst_315 = arith.constant 9.99999974E-6 : f32
    %469 = vector.broadcast %cst_315 : f32 to vector<24x1xf32>
    %470 = arith.addf %466, %469 : vector<24x1xf32>
    %471 = math.rsqrt %470 : vector<24x1xf32>
    %472 = vector.broadcast %471 : vector<24x1xf32> to vector<24x32xf32>
    %473 = arith.mulf %468, %472 : vector<24x32xf32>
    %c0_316 = arith.constant 0 : index
    %c0_317 = arith.constant 0 : index
    %474 = vector.load %arg36[%c0_316, %c0_317] : memref<1x32xf32, #tpu.memory_space<vmem>>, vector<1x32xf32>
    %475 = vector.broadcast %474 : vector<1x32xf32> to vector<24x32xf32>
    %476 = arith.mulf %473, %475 : vector<24x32xf32>
    %c0_318 = arith.constant 0 : index
    %c0_319 = arith.constant 0 : index
    %477 = vector.load %arg37[%c0_318, %c0_319] : memref<1x32xf32, #tpu.memory_space<vmem>>, vector<1x32xf32>
    %478 = vector.broadcast %477 : vector<1x32xf32> to vector<24x32xf32>
    %479 = arith.addf %476, %478 : vector<24x32xf32>
    %c0_320 = arith.constant 0 : index
    %c0_321 = arith.constant 0 : index
    %480 = vector.load %arg38[%c0_320, %c0_321] : memref<32x64xf32, #tpu.memory_space<vmem>>, vector<32x64xf32>
    %cst_322 = arith.constant dense<0.000000e+00> : vector<24x64xf32>
    %481 = tpu.matmul %479, %480, %cst_322 {dimension_numbers = #tpu.dot_dimension_numbers<[1], [0], [0], [1], [0, 0, 1, 1], [], []>} : vector<24x32xf32>, vector<32x64xf32>, vector<24x64xf32> -> vector<24x64xf32>
    %c0_323 = arith.constant 0 : index
    %c0_324 = arith.constant 0 : index
    %482 = vector.load %arg39[%c0_323, %c0_324] : memref<1x64xf32, #tpu.memory_space<vmem>>, vector<1x64xf32>
    %483 = vector.broadcast %482 : vector<1x64xf32> to vector<24x64xf32>
    %484 = arith.addf %481, %483 : vector<24x64xf32>
    %cst_325 = arith.constant 0.000000e+00 : f32
    %485 = vector.broadcast %cst_325 : f32 to vector<24x64xf32>
    %486 = arith.maximumf %484, %485 : vector<24x64xf32>
    %c0_326 = arith.constant 0 : index
    %c0_327 = arith.constant 0 : index
    %487 = vector.load %arg40[%c0_326, %c0_327] : memref<64x32xf32, #tpu.memory_space<vmem>>, vector<64x32xf32>
    %cst_328 = arith.constant dense<0.000000e+00> : vector<24x32xf32>
    %488 = tpu.matmul %486, %487, %cst_328 {dimension_numbers = #tpu.dot_dimension_numbers<[1], [0], [0], [1], [0, 0, 1, 1], [], []>} : vector<24x64xf32>, vector<64x32xf32>, vector<24x32xf32> -> vector<24x32xf32>
    %c0_329 = arith.constant 0 : index
    %c0_330 = arith.constant 0 : index
    %489 = vector.load %arg41[%c0_329, %c0_330] : memref<1x32xf32, #tpu.memory_space<vmem>>, vector<1x32xf32>
    %490 = vector.broadcast %489 : vector<1x32xf32> to vector<24x32xf32>
    %491 = arith.addf %488, %490 : vector<24x32xf32>
    %492 = arith.addf %479, %491 : vector<24x32xf32>
    %cst_331 = arith.constant dense<0.000000e+00> : vector<24xf32>
    %493 = vector.multi_reduction <add>, %492, %cst_331 [1] : vector<24x32xf32> to vector<24xf32>
    %494 = vector.shape_cast %493 : vector<24xf32> to vector<24x1xf32>
    %cst_332 = arith.constant 3.200000e+01 : f32
    %495 = vector.broadcast %cst_332 : f32 to vector<24x1xf32>
    %496 = arith.divf %494, %495 : vector<24x1xf32>
    %497 = vector.broadcast %496 : vector<24x1xf32> to vector<24x32xf32>
    %498 = arith.subf %492, %497 : vector<24x32xf32>
    %499 = arith.mulf %498, %498 : vector<24x32xf32>
    %cst_333 = arith.constant dense<0.000000e+00> : vector<24xf32>
    %500 = vector.multi_reduction <add>, %499, %cst_333 [1] : vector<24x32xf32> to vector<24xf32>
    %501 = vector.shape_cast %500 : vector<24xf32> to vector<24x1xf32>
    %cst_334 = arith.constant 3.200000e+01 : f32
    %502 = vector.broadcast %cst_334 : f32 to vector<24x1xf32>
    %503 = arith.divf %501, %502 : vector<24x1xf32>
    %504 = vector.broadcast %496 : vector<24x1xf32> to vector<24x32xf32>
    %505 = arith.subf %492, %504 : vector<24x32xf32>
    %cst_335 = arith.constant 9.99999974E-6 : f32
    %506 = vector.broadcast %cst_335 : f32 to vector<24x1xf32>
    %507 = arith.addf %503, %506 : vector<24x1xf32>
    %508 = math.rsqrt %507 : vector<24x1xf32>
    %509 = vector.broadcast %508 : vector<24x1xf32> to vector<24x32xf32>
    %510 = arith.mulf %505, %509 : vector<24x32xf32>
    %c0_336 = arith.constant 0 : index
    %c0_337 = arith.constant 0 : index
    %511 = vector.load %arg42[%c0_336, %c0_337] : memref<1x32xf32, #tpu.memory_space<vmem>>, vector<1x32xf32>
    %512 = vector.broadcast %511 : vector<1x32xf32> to vector<24x32xf32>
    %513 = arith.mulf %510, %512 : vector<24x32xf32>
    %c0_338 = arith.constant 0 : index
    %c0_339 = arith.constant 0 : index
    %514 = vector.load %arg43[%c0_338, %c0_339] : memref<1x32xf32, #tpu.memory_space<vmem>>, vector<1x32xf32>
    %515 = vector.broadcast %514 : vector<1x32xf32> to vector<24x32xf32>
    %516 = arith.addf %513, %515 : vector<24x32xf32>
    %517 = vector.extract_strided_slice %516 {offsets = [0, 0], sizes = [1, 32], strides = [1, 1]} : vector<24x32xf32> to vector<1x32xf32>
    %cst_340 = arith.constant dense<0.000000e+00> : vector<1xf32>
    %518 = vector.multi_reduction <add>, %517, %cst_340 [1] : vector<1x32xf32> to vector<1xf32>
    %519 = vector.shape_cast %518 : vector<1xf32> to vector<1x1xf32>
    %cst_341 = arith.constant 3.200000e+01 : f32
    %520 = vector.broadcast %cst_341 : f32 to vector<1x1xf32>
    %521 = arith.divf %519, %520 : vector<1x1xf32>
    %522 = vector.broadcast %521 : vector<1x1xf32> to vector<1x32xf32>
    %523 = arith.subf %517, %522 : vector<1x32xf32>
    %524 = arith.mulf %523, %523 : vector<1x32xf32>
    %cst_342 = arith.constant dense<0.000000e+00> : vector<1xf32>
    %525 = vector.multi_reduction <add>, %524, %cst_342 [1] : vector<1x32xf32> to vector<1xf32>
    %526 = vector.shape_cast %525 : vector<1xf32> to vector<1x1xf32>
    %cst_343 = arith.constant 3.200000e+01 : f32
    %527 = vector.broadcast %cst_343 : f32 to vector<1x1xf32>
    %528 = arith.divf %526, %527 : vector<1x1xf32>
    %529 = vector.broadcast %521 : vector<1x1xf32> to vector<1x32xf32>
    %530 = arith.subf %517, %529 : vector<1x32xf32>
    %cst_344 = arith.constant 9.99999974E-6 : f32
    %531 = vector.broadcast %cst_344 : f32 to vector<1x1xf32>
    %532 = arith.addf %528, %531 : vector<1x1xf32>
    %533 = math.rsqrt %532 : vector<1x1xf32>
    %534 = vector.broadcast %533 : vector<1x1xf32> to vector<1x32xf32>
    %535 = arith.mulf %530, %534 : vector<1x32xf32>
    %c0_345 = arith.constant 0 : index
    %c0_346 = arith.constant 0 : index
    %536 = vector.load %arg44[%c0_345, %c0_346] : memref<1x32xf32, #tpu.memory_space<vmem>>, vector<1x32xf32>
    %537 = arith.mulf %535, %536 : vector<1x32xf32>
    %c0_347 = arith.constant 0 : index
    %c0_348 = arith.constant 0 : index
    %538 = vector.load %arg45[%c0_347, %c0_348] : memref<1x32xf32, #tpu.memory_space<vmem>>, vector<1x32xf32>
    %539 = arith.addf %537, %538 : vector<1x32xf32>
    %c0_349 = arith.constant 0 : index
    %c0_350 = arith.constant 0 : index
    %540 = vector.load %arg46[%c0_349, %c0_350] : memref<32x16xf32, #tpu.memory_space<vmem>>, vector<32x16xf32>
    %cst_351 = arith.constant dense<0.000000e+00> : vector<1x16xf32>
    %541 = tpu.matmul %539, %540, %cst_351 {dimension_numbers = #tpu.dot_dimension_numbers<[1], [0], [0], [1], [0, 0, 1, 1], [], []>} : vector<1x32xf32>, vector<32x16xf32>, vector<1x16xf32> -> vector<1x16xf32>
    %c0_352 = arith.constant 0 : index
    %c0_353 = arith.constant 0 : index
    %542 = vector.load %arg47[%c0_352, %c0_353] : memref<1x16xf32, #tpu.memory_space<vmem>>, vector<1x16xf32>
    %543 = arith.addf %541, %542 : vector<1x16xf32>
    %cst_354 = arith.constant 0.000000e+00 : f32
    %544 = vector.broadcast %cst_354 : f32 to vector<1x16xf32>
    %545 = arith.maximumf %543, %544 : vector<1x16xf32>
    %c0_355 = arith.constant 0 : index
    %c0_356 = arith.constant 0 : index
    %546 = vector.load %arg48[%c0_355, %c0_356] : memref<16x8xf32, #tpu.memory_space<vmem>>, vector<16x8xf32>
    %cst_357 = arith.constant dense<0.000000e+00> : vector<1x8xf32>
    %547 = tpu.matmul %545, %546, %cst_357 {dimension_numbers = #tpu.dot_dimension_numbers<[1], [0], [0], [1], [0, 0, 1, 1], [], []>} : vector<1x16xf32>, vector<16x8xf32>, vector<1x8xf32> -> vector<1x8xf32>
    %c0_358 = arith.constant 0 : index
    %c0_359 = arith.constant 0 : index
    %548 = vector.load %arg49[%c0_358, %c0_359] : memref<1x8xf32, #tpu.memory_space<vmem>>, vector<1x8xf32>
    %549 = arith.addf %547, %548 : vector<1x8xf32>
    %cst_360 = arith.constant 0.000000e+00 : f32
    %550 = vector.broadcast %cst_360 : f32 to vector<1x8xf32>
    %551 = arith.maximumf %549, %550 : vector<1x8xf32>
    %c0_361 = arith.constant 0 : index
    %c0_362 = arith.constant 0 : index
    %552 = vector.load %arg50[%c0_361, %c0_362] : memref<8x10xf32, #tpu.memory_space<vmem>>, vector<8x10xf32>
    %cst_363 = arith.constant dense<0.000000e+00> : vector<1x10xf32>
    %553 = tpu.matmul %551, %552, %cst_363 {dimension_numbers = #tpu.dot_dimension_numbers<[1], [0], [0], [1], [0, 0, 1, 1], [], []>} : vector<1x8xf32>, vector<8x10xf32>, vector<1x10xf32> -> vector<1x10xf32>
    %c0_364 = arith.constant 0 : index
    %c0_365 = arith.constant 0 : index
    %554 = vector.load %arg51[%c0_364, %c0_365] : memref<1x10xf32, #tpu.memory_space<vmem>>, vector<1x10xf32>
    %555 = arith.addf %553, %554 : vector<1x10xf32>
    %c0_366 = arith.constant 0 : index
    %c0_367 = arith.constant 0 : index
    %c0_368 = arith.constant 0 : index
    %556 = vector.load %arg52[%c0_366, %c0_367, %c0_368] : memref<1x1x10xf32, #tpu.memory_space<vmem>>, vector<1x1x10xf32>
    %557 = vector.shape_cast %556 : vector<1x1x10xf32> to vector<1x10xf32>
    %558 = vector.shape_cast %555 : vector<1x10xf32> to vector<1x1x10xf32>
    tpu.vector_store %arg52[%c0_366, %c0_367, %c0_368], %558 {strides = array<i32>} : memref<1x1x10xf32, #tpu.memory_space<vmem>>, vector<1x1x10xf32>,
    return
  }
  func.func @transform_0(%arg0: i32) -> (i32, i32, i32) {
    %c0_i32 = arith.constant 0 : i32
    %c0_i32_0 = arith.constant 0 : i32
    %c0_i32_1 = arith.constant 0 : i32
    return %arg0, %c0_i32, %c0_i32_0 : i32, i32, i32
  }
  func.func @transform_1(%arg0: i32) -> (i32, i32) {
    %c0_i32 = arith.constant 0 : i32
    %c0_i32_0 = arith.constant 0 : i32
    %c0_i32_1 = arith.constant 0 : i32
    return %c0_i32, %c0_i32_0 : i32, i32
  }
  func.func @transform_2(%arg0: i32) -> (i32, i32) {
    %c0_i32 = arith.constant 0 : i32
    %c0_i32_0 = arith.constant 0 : i32
    %c0_i32_1 = arith.constant 0 : i32
    return %c0_i32, %c0_i32_0 : i32, i32
  }
  func.func @transform_3(%arg0: i32) -> (i32, i32) {
    %c0_i32 = arith.constant 0 : i32
    %c0_i32_0 = arith.constant 0 : i32
    %c0_i32_1 = arith.constant 0 : i32
    return %c0_i32, %c0_i32_0 : i32, i32
  }
  func.func @transform_4(%arg0: i32) -> (i32, i32) {
    %c0_i32 = arith.constant 0 : i32
    %c0_i32_0 = arith.constant 0 : i32
    %c0_i32_1 = arith.constant 0 : i32
    return %c0_i32, %c0_i32_0 : i32, i32
  }
  func.func @transform_5(%arg0: i32) -> (i32, i32) {
    %c0_i32 = arith.constant 0 : i32
    %c0_i32_0 = arith.constant 0 : i32
    %c0_i32_1 = arith.constant 0 : i32
    return %c0_i32, %c0_i32_0 : i32, i32
  }
  func.func @transform_6(%arg0: i32) -> (i32, i32) {
    %c0_i32 = arith.constant 0 : i32
    %c0_i32_0 = arith.constant 0 : i32
    %c0_i32_1 = arith.constant 0 : i32
    return %c0_i32, %c0_i32_0 : i32, i32
  }
  func.func @transform_7(%arg0: i32) -> (i32, i32) {
    %c0_i32 = arith.constant 0 : i32
    %c0_i32_0 = arith.constant 0 : i32
    %c0_i32_1 = arith.constant 0 : i32
    return %c0_i32, %c0_i32_0 : i32, i32
  }
  func.func @transform_8(%arg0: i32) -> (i32, i32) {
    %c0_i32 = arith.constant 0 : i32
    %c0_i32_0 = arith.constant 0 : i32
    %c0_i32_1 = arith.constant 0 : i32
    return %c0_i32, %c0_i32_0 : i32, i32
  }
  func.func @transform_9(%arg0: i32) -> (i32, i32) {
    %c0_i32 = arith.constant 0 : i32
    %c0_i32_0 = arith.constant 0 : i32
    %c0_i32_1 = arith.constant 0 : i32
    return %c0_i32, %c0_i32_0 : i32, i32
  }
  func.func @transform_10(%arg0: i32) -> (i32, i32) {
    %c0_i32 = arith.constant 0 : i32
    %c0_i32_0 = arith.constant 0 : i32
    %c0_i32_1 = arith.constant 0 : i32
    return %c0_i32, %c0_i32_0 : i32, i32
  }
  func.func @transform_11(%arg0: i32) -> (i32, i32, i32) {
    %c0_i32 = arith.constant 0 : i32
    %c0_i32_0 = arith.constant 0 : i32
    %c0_i32_1 = arith.constant 0 : i32
    %c0_i32_2 = arith.constant 0 : i32
    return %c0_i32, %c0_i32_0, %c0_i32_1 : i32, i32, i32
  }
  func.func @transform_12(%arg0: i32) -> (i32, i32, i32) {
    %c0_i32 = arith.constant 0 : i32
    %c0_i32_0 = arith.constant 0 : i32
    %c0_i32_1 = arith.constant 0 : i32
    %c0_i32_2 = arith.constant 0 : i32
    return %c0_i32, %c0_i32_0, %c0_i32_1 : i32, i32, i32
  }
  func.func @transform_13(%arg0: i32) -> (i32, i32, i32) {
    %c0_i32 = arith.constant 0 : i32
    %c0_i32_0 = arith.constant 0 : i32
    %c0_i32_1 = arith.constant 0 : i32
    %c0_i32_2 = arith.constant 0 : i32
    return %c0_i32, %c0_i32_0, %c0_i32_1 : i32, i32, i32
  }
  func.func @transform_14(%arg0: i32) -> (i32, i32, i32) {
    %c0_i32 = arith.constant 0 : i32
    %c0_i32_0 = arith.constant 0 : i32
    %c0_i32_1 = arith.constant 0 : i32
    %c0_i32_2 = arith.constant 0 : i32
    return %c0_i32, %c0_i32_0, %c0_i32_1 : i32, i32, i32
  }
  func.func @transform_15(%arg0: i32) -> (i32, i32, i32) {
    %c0_i32 = arith.constant 0 : i32
    %c0_i32_0 = arith.constant 0 : i32
    %c0_i32_1 = arith.constant 0 : i32
    %c0_i32_2 = arith.constant 0 : i32
    return %c0_i32, %c0_i32_0, %c0_i32_1 : i32, i32, i32
  }
  func.func @transform_16(%arg0: i32) -> (i32, i32, i32) {
    %c0_i32 = arith.constant 0 : i32
    %c0_i32_0 = arith.constant 0 : i32
    %c0_i32_1 = arith.constant 0 : i32
    %c0_i32_2 = arith.constant 0 : i32
    return %c0_i32, %c0_i32_0, %c0_i32_1 : i32, i32, i32
  }
  func.func @transform_17(%arg0: i32) -> (i32, i32, i32) {
    %c0_i32 = arith.constant 0 : i32
    %c0_i32_0 = arith.constant 0 : i32
    %c0_i32_1 = arith.constant 0 : i32
    %c0_i32_2 = arith.constant 0 : i32
    return %c0_i32, %c0_i32_0, %c0_i32_1 : i32, i32, i32
  }
  func.func @transform_18(%arg0: i32) -> (i32, i32) {
    %c0_i32 = arith.constant 0 : i32
    %c0_i32_0 = arith.constant 0 : i32
    %c0_i32_1 = arith.constant 0 : i32
    return %c0_i32, %c0_i32_0 : i32, i32
  }
  func.func @transform_19(%arg0: i32) -> (i32, i32) {
    %c0_i32 = arith.constant 0 : i32
    %c0_i32_0 = arith.constant 0 : i32
    %c0_i32_1 = arith.constant 0 : i32
    return %c0_i32, %c0_i32_0 : i32, i32
  }
  func.func @transform_20(%arg0: i32) -> (i32, i32) {
    %c0_i32 = arith.constant 0 : i32
    %c0_i32_0 = arith.constant 0 : i32
    %c0_i32_1 = arith.constant 0 : i32
    return %c0_i32, %c0_i32_0 : i32, i32
  }
  func.func @transform_21(%arg0: i32) -> (i32, i32) {
    %c0_i32 = arith.constant 0 : i32
    %c0_i32_0 = arith.constant 0 : i32
    %c0_i32_1 = arith.constant 0 : i32
    return %c0_i32, %c0_i32_0 : i32, i32
  }
  func.func @transform_22(%arg0: i32) -> (i32, i32) {
    %c0_i32 = arith.constant 0 : i32
    %c0_i32_0 = arith.constant 0 : i32
    %c0_i32_1 = arith.constant 0 : i32
    return %c0_i32, %c0_i32_0 : i32, i32
  }
  func.func @transform_23(%arg0: i32) -> (i32, i32) {
    %c0_i32 = arith.constant 0 : i32
    %c0_i32_0 = arith.constant 0 : i32
    %c0_i32_1 = arith.constant 0 : i32
    return %c0_i32, %c0_i32_0 : i32, i32
  }
  func.func @transform_24(%arg0: i32) -> (i32, i32) {
    %c0_i32 = arith.constant 0 : i32
    %c0_i32_0 = arith.constant 0 : i32
    %c0_i32_1 = arith.constant 0 : i32
    return %c0_i32, %c0_i32_0 : i32, i32
  }
  func.func @transform_25(%arg0: i32) -> (i32, i32) {
    %c0_i32 = arith.constant 0 : i32
    %c0_i32_0 = arith.constant 0 : i32
    %c0_i32_1 = arith.constant 0 : i32
    return %c0_i32, %c0_i32_0 : i32, i32
  }
  func.func @transform_26(%arg0: i32) -> (i32, i32) {
    %c0_i32 = arith.constant 0 : i32
    %c0_i32_0 = arith.constant 0 : i32
    %c0_i32_1 = arith.constant 0 : i32
    return %c0_i32, %c0_i32_0 : i32, i32
  }
  func.func @transform_27(%arg0: i32) -> (i32, i32, i32) {
    %c0_i32 = arith.constant 0 : i32
    %c0_i32_0 = arith.constant 0 : i32
    %c0_i32_1 = arith.constant 0 : i32
    %c0_i32_2 = arith.constant 0 : i32
    return %c0_i32, %c0_i32_0, %c0_i32_1 : i32, i32, i32
  }
  func.func @transform_28(%arg0: i32) -> (i32, i32, i32) {
    %c0_i32 = arith.constant 0 : i32
    %c0_i32_0 = arith.constant 0 : i32
    %c0_i32_1 = arith.constant 0 : i32
    %c0_i32_2 = arith.constant 0 : i32
    return %c0_i32, %c0_i32_0, %c0_i32_1 : i32, i32, i32
  }
  func.func @transform_29(%arg0: i32) -> (i32, i32, i32) {
    %c0_i32 = arith.constant 0 : i32
    %c0_i32_0 = arith.constant 0 : i32
    %c0_i32_1 = arith.constant 0 : i32
    %c0_i32_2 = arith.constant 0 : i32
    return %c0_i32, %c0_i32_0, %c0_i32_1 : i32, i32, i32
  }
  func.func @transform_30(%arg0: i32) -> (i32, i32, i32) {
    %c0_i32 = arith.constant 0 : i32
    %c0_i32_0 = arith.constant 0 : i32
    %c0_i32_1 = arith.constant 0 : i32
    %c0_i32_2 = arith.constant 0 : i32
    return %c0_i32, %c0_i32_0, %c0_i32_1 : i32, i32, i32
  }
  func.func @transform_31(%arg0: i32) -> (i32, i32, i32) {
    %c0_i32 = arith.constant 0 : i32
    %c0_i32_0 = arith.constant 0 : i32
    %c0_i32_1 = arith.constant 0 : i32
    %c0_i32_2 = arith.constant 0 : i32
    return %c0_i32, %c0_i32_0, %c0_i32_1 : i32, i32, i32
  }
  func.func @transform_32(%arg0: i32) -> (i32, i32, i32) {
    %c0_i32 = arith.constant 0 : i32
    %c0_i32_0 = arith.constant 0 : i32
    %c0_i32_1 = arith.constant 0 : i32
    %c0_i32_2 = arith.constant 0 : i32
    return %c0_i32, %c0_i32_0, %c0_i32_1 : i32, i32, i32
  }
  func.func @transform_33(%arg0: i32) -> (i32, i32, i32) {
    %c0_i32 = arith.constant 0 : i32
    %c0_i32_0 = arith.constant 0 : i32
    %c0_i32_1 = arith.constant 0 : i32
    %c0_i32_2 = arith.constant 0 : i32
    return %c0_i32, %c0_i32_0, %c0_i32_1 : i32, i32, i32
  }
  func.func @transform_34(%arg0: i32) -> (i32, i32) {
    %c0_i32 = arith.constant 0 : i32
    %c0_i32_0 = arith.constant 0 : i32
    %c0_i32_1 = arith.constant 0 : i32
    return %c0_i32, %c0_i32_0 : i32, i32
  }
  func.func @transform_35(%arg0: i32) -> (i32, i32) {
    %c0_i32 = arith.constant 0 : i32
    %c0_i32_0 = arith.constant 0 : i32
    %c0_i32_1 = arith.constant 0 : i32
    return %c0_i32, %c0_i32_0 : i32, i32
  }
  func.func @transform_36(%arg0: i32) -> (i32, i32) {
    %c0_i32 = arith.constant 0 : i32
    %c0_i32_0 = arith.constant 0 : i32
    %c0_i32_1 = arith.constant 0 : i32
    return %c0_i32, %c0_i32_0 : i32, i32
  }
  func.func @transform_37(%arg0: i32) -> (i32, i32) {
    %c0_i32 = arith.constant 0 : i32
    %c0_i32_0 = arith.constant 0 : i32
    %c0_i32_1 = arith.constant 0 : i32
    return %c0_i32, %c0_i32_0 : i32, i32
  }
  func.func @transform_38(%arg0: i32) -> (i32, i32) {
    %c0_i32 = arith.constant 0 : i32
    %c0_i32_0 = arith.constant 0 : i32
    %c0_i32_1 = arith.constant 0 : i32
    return %c0_i32, %c0_i32_0 : i32, i32
  }
  func.func @transform_39(%arg0: i32) -> (i32, i32) {
    %c0_i32 = arith.constant 0 : i32
    %c0_i32_0 = arith.constant 0 : i32
    %c0_i32_1 = arith.constant 0 : i32
    return %c0_i32, %c0_i32_0 : i32, i32
  }
  func.func @transform_40(%arg0: i32) -> (i32, i32) {
    %c0_i32 = arith.constant 0 : i32
    %c0_i32_0 = arith.constant 0 : i32
    %c0_i32_1 = arith.constant 0 : i32
    return %c0_i32, %c0_i32_0 : i32, i32
  }
  func.func @transform_41(%arg0: i32) -> (i32, i32) {
    %c0_i32 = arith.constant 0 : i32
    %c0_i32_0 = arith.constant 0 : i32
    %c0_i32_1 = arith.constant 0 : i32
    return %c0_i32, %c0_i32_0 : i32, i32
  }
  func.func @transform_42(%arg0: i32) -> (i32, i32) {
    %c0_i32 = arith.constant 0 : i32
    %c0_i32_0 = arith.constant 0 : i32
    %c0_i32_1 = arith.constant 0 : i32
    return %c0_i32, %c0_i32_0 : i32, i32
  }
  func.func @transform_43(%arg0: i32) -> (i32, i32) {
    %c0_i32 = arith.constant 0 : i32
    %c0_i32_0 = arith.constant 0 : i32
    %c0_i32_1 = arith.constant 0 : i32
    return %c0_i32, %c0_i32_0 : i32, i32
  }
  func.func @transform_44(%arg0: i32) -> (i32, i32) {
    %c0_i32 = arith.constant 0 : i32
    %c0_i32_0 = arith.constant 0 : i32
    %c0_i32_1 = arith.constant 0 : i32
    return %c0_i32, %c0_i32_0 : i32, i32
  }
  func.func @transform_45(%arg0: i32) -> (i32, i32) {
    %c0_i32 = arith.constant 0 : i32
    %c0_i32_0 = arith.constant 0 : i32
    %c0_i32_1 = arith.constant 0 : i32
    return %c0_i32, %c0_i32_0 : i32, i32
  }
  func.func @transform_46(%arg0: i32) -> (i32, i32) {
    %c0_i32 = arith.constant 0 : i32
    %c0_i32_0 = arith.constant 0 : i32
    %c0_i32_1 = arith.constant 0 : i32
    return %c0_i32, %c0_i32_0 : i32, i32
  }
  func.func @transform_47(%arg0: i32) -> (i32, i32) {
    %c0_i32 = arith.constant 0 : i32
    %c0_i32_0 = arith.constant 0 : i32
    %c0_i32_1 = arith.constant 0 : i32
    return %c0_i32, %c0_i32_0 : i32, i32
  }
  func.func @transform_48(%arg0: i32) -> (i32, i32) {
    %c0_i32 = arith.constant 0 : i32
    %c0_i32_0 = arith.constant 0 : i32
    %c0_i32_1 = arith.constant 0 : i32
    return %c0_i32, %c0_i32_0 : i32, i32
  }
  func.func @transform_49(%arg0: i32) -> (i32, i32) {
    %c0_i32 = arith.constant 0 : i32
    %c0_i32_0 = arith.constant 0 : i32
    %c0_i32_1 = arith.constant 0 : i32
    return %c0_i32, %c0_i32_0 : i32, i32
  }
  func.func @transform_50(%arg0: i32) -> (i32, i32) {
    %c0_i32 = arith.constant 0 : i32
    %c0_i32_0 = arith.constant 0 : i32
    %c0_i32_1 = arith.constant 0 : i32
    return %c0_i32, %c0_i32_0 : i32, i32
  }
  func.func @transform_51(%arg0: i32) -> (i32, i32, i32) {
    %c0_i32 = arith.constant 0 : i32
    %c0_i32_0 = arith.constant 0 : i32
    %c0_i32_1 = arith.constant 0 : i32
    return %arg0, %c0_i32, %c0_i32_0 : i32, i32, i32
  }
}

</mosaic_0001>

<llo_original>
// kernel: _lambda_.1
$region0: #{_lambda_.1}
  #allocation0 [shape = 'u32[]', space=smem, size = 0x4, offset = 0x4, fixed_abs, tag = 'smem constant byte address 0x4 - core index']
  #allocation1 [shape = 'u32[144,128]{1,0:T(1,128)}', space=vmem, size = 0x12000, scoped, tag = 'internal scratch']
  %s0 = inlined_call_operand.smem [shape: u32[52], index: -1, kind: input, shape index: {}]
  %s1 = sld [smem:[%s0]]
  %s2 = scalar_lea.smem %s0, 1
  %s3 = sld [smem:[%s2]]
  %s4 = scalar_lea.smem %s0, 2
  %s5 = sld [smem:[%s4]]
  %s6 = scalar_lea.smem %s0, 3
  %s7 = sld [smem:[%s6]]
  %s8 = scalar_lea.smem %s0, 4
  %s9 = sld [smem:[%s8]]
  %s10 = scalar_lea.smem %s0, 5
  %s11 = sld [smem:[%s10]]
  %s12 = scalar_lea.smem %s0, 6
  %s13 = sld [smem:[%s12]]
  %s14 = scalar_lea.smem %s0, 7
  %s15 = sld [smem:[%s14]]
  %s16 = scalar_lea.smem %s0, 8
  %s17 = sld [smem:[%s16]]
  %s18 = scalar_lea.smem %s0, 9
  %s19 = sld [smem:[%s18]]
  %s20 = scalar_lea.smem %s0, 10
  %s21 = sld [smem:[%s20]]
  %s22 = scalar_lea.smem %s0, 11
  %s23 = sld [smem:[%s22]]
  %s24 = scalar_lea.smem %s0, 12
  %s25 = sld [smem:[%s24]]
  %s26 = scalar_lea.smem %s0, 13
  %s27 = sld [smem:[%s26]]
  %s28 = scalar_lea.smem %s0, 14
  %s29 = sld [smem:[%s28]]
  %s30 = scalar_lea.smem %s0, 15
  %s31 = sld [smem:[%s30]]
  %s32 = scalar_lea.smem %s0, 16
  %s33 = sld [smem:[%s32]]
  %s34 = scalar_lea.smem %s0, 17
  %s35 = sld [smem:[%s34]]
  %s36 = scalar_lea.smem %s0, 18
  %s37 = sld [smem:[%s36]]
  %s38 = scalar_lea.smem %s0, 19
  %s39 = sld [smem:[%s38]]
  %s40 = scalar_lea.smem %s0, 20
  %s41 = sld [smem:[%s40]]
  %s42 = scalar_lea.smem %s0, 21
  %s43 = sld [smem:[%s42]]
  %s44 = scalar_lea.smem %s0, 22
  %s45 = sld [smem:[%s44]]
  %s46 = scalar_lea.smem %s0, 23
  %s47 = sld [smem:[%s46]]
  %s48 = scalar_lea.smem %s0, 24
  %s49 = sld [smem:[%s48]]
  %s50 = scalar_lea.smem %s0, 25
  %s51 = sld [smem:[%s50]]
  %s52 = scalar_lea.smem %s0, 26
  %s53 = sld [smem:[%s52]]
  %s54 = scalar_lea.smem %s0, 27
  %s55 = sld [smem:[%s54]]
  %s56 = scalar_lea.smem %s0, 28
  %s57 = sld [smem:[%s56]]
  %s58 = scalar_lea.smem %s0, 29
  %s59 = sld [smem:[%s58]]
  %s60 = scalar_lea.smem %s0, 30
  %s61 = sld [smem:[%s60]]
  %s62 = scalar_lea.smem %s0, 31
  %s63 = sld [smem:[%s62]]
  %s64 = scalar_lea.smem %s0, 32
  %s65 = sld [smem:[%s64]]
  %s66 = scalar_lea.smem %s0, 33
  %s67 = sld [smem:[%s66]]
  %s68 = scalar_lea.smem %s0, 34
  %s69 = sld [smem:[%s68]]
  %s70 = scalar_lea.smem %s0, 35
  %s71 = sld [smem:[%s70]]
  %s72 = scalar_lea.smem %s0, 36
  %s73 = sld [smem:[%s72]]
  %s74 = scalar_lea.smem %s0, 37
  %s75 = sld [smem:[%s74]]
  %s76 = scalar_lea.smem %s0, 38
  %s77 = sld [smem:[%s76]]
  %s78 = scalar_lea.smem %s0, 39
  %s79 = sld [smem:[%s78]]
  %s80 = scalar_lea.smem %s0, 40
  %s81 = sld [smem:[%s80]]
  %s82 = scalar_lea.smem %s0, 41
  %s83 = sld [smem:[%s82]]
  %s84 = scalar_lea.smem %s0, 42
  %s85 = sld [smem:[%s84]]
  %s86 = scalar_lea.smem %s0, 43
  %s87 = sld [smem:[%s86]]
  %s88 = scalar_lea.smem %s0, 44
  %s89 = sld [smem:[%s88]]
  %s90 = scalar_lea.smem %s0, 45
  %s91 = sld [smem:[%s90]]
  %s92 = scalar_lea.smem %s0, 46
  %s93 = sld [smem:[%s92]]
  %s94 = scalar_lea.smem %s0, 47
  %s95 = sld [smem:[%s94]]
  %s96 = scalar_lea.smem %s0, 48
  %s97 = sld [smem:[%s96]]
  %s98 = scalar_lea.smem %s0, 49
  %s99 = sld [smem:[%s98]]
  %s100 = scalar_lea.smem %s0, 50
  %s101 = sld [smem:[%s100]]
  %s102 = scalar_lea.smem %s0, 51
  %s103 = sld [smem:[%s102]]
  %s104 = sld [smem:[#allocation0]]
  $region237: #{_lambda_.1} parent=0
    _
  %s106 = ssub.s32 1, %s104
  %s107 = scalar_select 0, %s106, %s104
  $region1: #{_lambda_.1} parent=0
    #allocation2 [shape = 'u8[1024]{0}', space=vmem, size = 0x400, scoped, tag = 'output window, operand 0']
    #allocation3 [shape = 's32[2]{0}', space=sflag, size = 0x8, scoped, tag = 'scoped memory for _lambda_.1']
    %108 = vsyncpa [#allocation3], 0
    %s109 = scalar_lea.sflag [#allocation3], 1
    %110 = vsyncpa %s109, 0
    loop: start=0, step=1, limit=4
    $region2: #{_lambda_.1} parent=1 // loop_pre_header
      _
    $region3: #{_lambda_.1} parent=1 // loop_header
      %s112 = sphi 0, %s116
      %p113 = scmp.ge.s32.totalorder %s112, 4
      %s122 = sphi 0, %s124
      %s125 = sphi 0, %s122
      %s126 = sphi 0, %s125
      %s142 = sphi 0, %s126
      %s146 = sphi 0, %s146
      %s148 = sphi 0, %s146
      %s149 = sphi 0, %s148
      %s163 = sphi 0, %s149
      %s167 = sphi 0, %s167
      %s169 = sphi 0, %s167
      %s170 = sphi 0, %s169
      %s184 = sphi 0, %s170
      %s188 = sphi 0, %s188
      %s190 = sphi 0, %s188
      %s191 = sphi 0, %s190
      %s205 = sphi 0, %s191
      %s209 = sphi 0, %s209
      %s211 = sphi 0, %s209
      %s212 = sphi 0, %s211
      %s226 = sphi 0, %s212
      %s230 = sphi 0, %s230
      %s232 = sphi 0, %s230
      %s233 = sphi 0, %s232
      %s247 = sphi 0, %s233
      %s251 = sphi 0, %s251
      %s253 = sphi 0, %s251
      %s254 = sphi 0, %s253
      %s268 = sphi 0, %s254
      %s272 = sphi 0, %s272
      %s274 = sphi 0, %s272
      %s275 = sphi 0, %s274
      %s289 = sphi 0, %s275
      %s293 = sphi 0, %s293
      %s295 = sphi 0, %s293
      %s296 = sphi 0, %s295
      %s310 = sphi 0, %s296
      %s314 = sphi 0, %s314
      %s316 = sphi 0, %s314
      %s317 = sphi 0, %s316
      %s331 = sphi 0, %s317
      %s335 = sphi 0, %s335
      %s337 = sphi 0, %s335
      %s338 = sphi 0, %s337
      %s352 = sphi 0, %s338
      %s356 = sphi 0, %s356
      %s358 = sphi 0, %s356
      %s359 = sphi 0, %s358
      %s373 = sphi 0, %s359
      %s377 = sphi 0, %s377
      %s379 = sphi 0, %s377
      %s380 = sphi 0, %s379
      %s394 = sphi 0, %s380
      %s398 = sphi 0, %s398
      %s400 = sphi 0, %s398
      %s401 = sphi 0, %s400
      %s415 = sphi 0, %s401
      %s419 = sphi 0, %s419
      %s421 = sphi 0, %s419
      %s422 = sphi 0, %s421
      %s436 = sphi 0, %s422
      %s440 = sphi 0, %s440
      %s442 = sphi 0, %s440
      %s443 = sphi 0, %s442
      %s457 = sphi 0, %s443
      %s461 = sphi 0, %s461
      %s463 = sphi 0, %s461
      %s464 = sphi 0, %s463
      %s478 = sphi 0, %s464
      %s482 = sphi 0, %s482
      %s484 = sphi 0, %s482
      %s485 = sphi 0, %s484
      %s499 = sphi 0, %s485
      %s503 = sphi 0, %s503
      %s505 = sphi 0, %s503
      %s506 = sphi 0, %s505
      %s520 = sphi 0, %s506
      %s524 = sphi 0, %s524
      %s526 = sphi 0, %s524
      %s527 = sphi 0, %s526
      %s541 = sphi 0, %s527
      %s545 = sphi 0, %s545
      %s547 = sphi 0, %s545
      %s548 = sphi 0, %s547
      %s562 = sphi 0, %s548
      %s566 = sphi 0, %s566
      %s568 = sphi 0, %s566
      %s569 = sphi 0, %s568
      %s583 = sphi 0, %s569
      %s587 = sphi 0, %s587
      %s589 = sphi 0, %s587
      %s590 = sphi 0, %s589
      %s604 = sphi 0, %s590
      %s608 = sphi 0, %s608
      %s610 = sphi 0, %s608
      %s611 = sphi 0, %s610
      %s625 = sphi 0, %s611
      %s629 = sphi 0, %s629
      %s631 = sphi 0, %s629
      %s632 = sphi 0, %s631
      %s646 = sphi 0, %s632
      %s650 = sphi 0, %s650
      %s652 = sphi 0, %s650
      %s653 = sphi 0, %s652
      %s667 = sphi 0, %s653
      %s671 = sphi 0, %s671
      %s673 = sphi 0, %s671
      %s674 = sphi 0, %s673
      %s688 = sphi 0, %s674
      %s692 = sphi 0, %s692
      %s694 = sphi 0, %s692
      %s695 = sphi 0, %s694
      %s709 = sphi 0, %s695
      %s713 = sphi 0, %s713
      %s715 = sphi 0, %s713
      %s716 = sphi 0, %s715
      %s730 = sphi 0, %s716
      %s734 = sphi 0, %s734
      %s736 = sphi 0, %s734
      %s737 = sphi 0, %s736
      %s751 = sphi 0, %s737
      %s755 = sphi 0, %s755
      %s757 = sphi 0, %s755
      %s758 = sphi 0, %s757
      %s772 = sphi 0, %s758
      %s776 = sphi 0, %s776
      %s778 = sphi 0, %s776
      %s779 = sphi 0, %s778
      %s793 = sphi 0, %s779
      %s797 = sphi 0, %s797
      %s799 = sphi 0, %s797
      %s800 = sphi 0, %s799
      %s814 = sphi 0, %s800
      %s818 = sphi 0, %s818
      %s820 = sphi 0, %s818
      %s821 = sphi 0, %s820
      %s835 = sphi 0, %s821
      %s839 = sphi 0, %s839
      %s841 = sphi 0, %s839
      %s842 = sphi 0, %s841
      %s856 = sphi 0, %s842
      %s860 = sphi 0, %s860
      %s862 = sphi 0, %s860
      %s863 = sphi 0, %s862
      %s877 = sphi 0, %s863
      %s881 = sphi 0, %s881
      %s883 = sphi 0, %s881
      %s884 = sphi 0, %s883
      %s898 = sphi 0, %s884
      %s902 = sphi 0, %s902
      %s904 = sphi 0, %s902
      %s905 = sphi 0, %s904
      %s919 = sphi 0, %s905
      %s923 = sphi 0, %s923
      %s925 = sphi 0, %s923
      %s926 = sphi 0, %s925
      %s940 = sphi 0, %s926
      %s944 = sphi 0, %s944
      %s946 = sphi 0, %s944
      %s947 = sphi 0, %s946
      %s961 = sphi 0, %s947
      %s965 = sphi 0, %s965
      %s967 = sphi 0, %s965
      %s968 = sphi 0, %s967
      %s982 = sphi 0, %s968
      %s986 = sphi 0, %s986
      %s988 = sphi 0, %s986
      %s989 = sphi 0, %s988
      %s1003 = sphi 0, %s989
      %s1007 = sphi 0, %s1007
      %s1009 = sphi 0, %s1007
      %s1010 = sphi 0, %s1009
      %s1024 = sphi 0, %s1010
      %s1028 = sphi 0, %s1028
      %s1030 = sphi 0, %s1028
      %s1031 = sphi 0, %s1030
      %s1045 = sphi 0, %s1031
      %s1049 = sphi 0, %s1049
      %s1051 = sphi 0, %s1049
      %s1052 = sphi 0, %s1051
      %s1066 = sphi 0, %s1052
      %s1070 = sphi 0, %s1070
      %s1072 = sphi 0, %s1070
      %s1073 = sphi 0, %s1072
      %s1087 = sphi 0, %s1073
      %s1091 = sphi 0, %s1091
      %s1093 = sphi 0, %s1091
      %s1094 = sphi 0, %s1093
      %s1108 = sphi 0, %s1094
      %s1112 = sphi 0, %s1112
      %s1114 = sphi 0, %s1112
      %s1115 = sphi 0, %s1114
      %s1129 = sphi 0, %s1115
      %s1133 = sphi 0, %s1133
      %s1135 = sphi 0, %s1133
      %s1136 = sphi 0, %s1135
      %s1150 = sphi 0, %s1136
      %s1154 = sphi 0, %s1154
      %s1156 = sphi 0, %s1154
      %s1157 = sphi 0, %s1156
      %s1171 = sphi 0, %s1157
      %s1175 = sphi 0, %s1175
      %s1177 = sphi 0, %s1175
      %s1178 = sphi 0, %s1177
      %s1192 = sphi 0, %s1178
      %s1198 = sphi 0, %s1200
      %s1201 = sphi 0, %s1198
      %s1202 = sphi 0, %s1201
      %s1218 = sphi 0, %s1202
    $region4: #{_lambda_.1} parent=1 // loop_header_branch
      %115 = sbr.rel (%p113) target = $region8
    $region5: #{_lambda_.1} parent=1 // loop_body
      %s117 = ssub.s32 %s112, 1
      %s118 = ssub.s32 %s112, 2
      %s119 = sadd.s32 %s112, 1
      %s120 = ssub.s32 %s112, %s119
      %p121 = scmp.eq.s32.totalorder %s120, 0
      %s123 = sadd.s32 %s122, 1
      %s124 = scalar_select %p121, %s122, %s123
      %p127 = pneg %p121
      %p128 = scmp.eq.s32.totalorder %s112, 1
      %p129 = por %p127, %p128
      %p130 = scmp.ne.s32.totalorder %s122, %s125
      %p131 = scmp.eq.s32.totalorder %s112, 0
      %p132 = por %p130, %p131
      %p133 = scmp.ne.s32.totalorder %s122, %s125
      %p134 = scmp.eq.s32.totalorder %s117, 1
      %p135 = por %p133, %p134
      %p136 = scmp.ne.s32.totalorder %s125, %s126
      %p137 = scmp.eq.s32.totalorder %s117, 0
      %p138 = por %p136, %p137
      %p139 = scmp.ne.s32.totalorder %s125, %s126
      %p140 = scmp.eq.s32.totalorder %s118, 1
      %p141 = por %p139, %p140
      %p143 = scmp.ne.s32.totalorder %s126, %s142
      %p144 = scmp.eq.s32.totalorder %s118, 0
      %p145 = por %p143, %p144
      %s147 = sadd.s32 %s146, 1
      %p150 = scmp.eq.s32.totalorder %s112, 1
      %p151 = scmp.ne.s32.totalorder %s146, %s148
      %p152 = scmp.eq.s32.totalorder %s112, 0
      %p153 = por %p151, %p152
      %p154 = scmp.ne.s32.totalorder %s146, %s148
      %p155 = scmp.eq.s32.totalorder %s117, 1
      %p156 = por %p154, %p155
      %p157 = scmp.ne.s32.totalorder %s148, %s149
      %p158 = scmp.eq.s32.totalorder %s117, 0
      %p159 = por %p157, %p158
      %p160 = scmp.ne.s32.totalorder %s148, %s149
      %p161 = scmp.eq.s32.totalorder %s118, 1
      %p162 = por %p160, %p161
      %p164 = scmp.ne.s32.totalorder %s149, %s163
      %p165 = scmp.eq.s32.totalorder %s118, 0
      %p166 = por %p164, %p165
      %s168 = sadd.s32 %s167, 1
      %p171 = scmp.eq.s32.totalorder %s112, 1
      %p172 = scmp.ne.s32.totalorder %s167, %s169
      %p173 = scmp.eq.s32.totalorder %s112, 0
      %p174 = por %p172, %p173
      %p175 = scmp.ne.s32.totalorder %s167, %s169
      %p176 = scmp.eq.s32.totalorder %s117, 1
      %p177 = por %p175, %p176
      %p178 = scmp.ne.s32.totalorder %s169, %s170
      %p179 = scmp.eq.s32.totalorder %s117, 0
      %p180 = por %p178, %p179
      %p181 = scmp.ne.s32.totalorder %s169, %s170
      %p182 = scmp.eq.s32.totalorder %s118, 1
      %p183 = por %p181, %p182
      %p185 = scmp.ne.s32.totalorder %s170, %s184
      %p186 = scmp.eq.s32.totalorder %s118, 0
      %p187 = por %p185, %p186
      %s189 = sadd.s32 %s188, 1
      %p192 = scmp.eq.s32.totalorder %s112, 1
      %p193 = scmp.ne.s32.totalorder %s188, %s190
      %p194 = scmp.eq.s32.totalorder %s112, 0
      %p195 = por %p193, %p194
      %p196 = scmp.ne.s32.totalorder %s188, %s190
      %p197 = scmp.eq.s32.totalorder %s117, 1
      %p198 = por %p196, %p197
      %p199 = scmp.ne.s32.totalorder %s190, %s191
      %p200 = scmp.eq.s32.totalorder %s117, 0
      %p201 = por %p199, %p200
      %p202 = scmp.ne.s32.totalorder %s190, %s191
      %p203 = scmp.eq.s32.totalorder %s118, 1
      %p204 = por %p202, %p203
      %p206 = scmp.ne.s32.totalorder %s191, %s205
      %p207 = scmp.eq.s32.totalorder %s118, 0
      %p208 = por %p206, %p207
      %s210 = sadd.s32 %s209, 1
      %p213 = scmp.eq.s32.totalorder %s112, 1
      %p214 = scmp.ne.s32.totalorder %s209, %s211
      %p215 = scmp.eq.s32.totalorder %s112, 0
      %p216 = por %p214, %p215
      %p217 = scmp.ne.s32.totalorder %s209, %s211
      %p218 = scmp.eq.s32.totalorder %s117, 1
      %p219 = por %p217, %p218
      %p220 = scmp.ne.s32.totalorder %s211, %s212
      %p221 = scmp.eq.s32.totalorder %s117, 0
      %p222 = por %p220, %p221
      %p223 = scmp.ne.s32.totalorder %s211, %s212
      %p224 = scmp.eq.s32.totalorder %s118, 1
      %p225 = por %p223, %p224
      %p227 = scmp.ne.s32.totalorder %s212, %s226
      %p228 = scmp.eq.s32.totalorder %s118, 0
      %p229 = por %p227, %p228
      %s231 = sadd.s32 %s230, 1
      %p234 = scmp.eq.s32.totalorder %s112, 1
      %p235 = scmp.ne.s32.totalorder %s230, %s232
      %p236 = scmp.eq.s32.totalorder %s112, 0
      %p237 = por %p235, %p236
      %p238 = scmp.ne.s32.totalorder %s230, %s232
      %p239 = scmp.eq.s32.totalorder %s117, 1
      %p240 = por %p238, %p239
      %p241 = scmp.ne.s32.totalorder %s232, %s233
      %p242 = scmp.eq.s32.totalorder %s117, 0
      %p243 = por %p241, %p242
      %p244 = scmp.ne.s32.totalorder %s232, %s233
      %p245 = scmp.eq.s32.totalorder %s118, 1
      %p246 = por %p244, %p245
      %p248 = scmp.ne.s32.totalorder %s233, %s247
      %p249 = scmp.eq.s32.totalorder %s118, 0
      %p250 = por %p248, %p249
      %s252 = sadd.s32 %s251, 1
      %p255 = scmp.eq.s32.totalorder %s112, 1
      %p256 = scmp.ne.s32.totalorder %s251, %s253
      %p257 = scmp.eq.s32.totalorder %s112, 0
      %p258 = por %p256, %p257
      %p259 = scmp.ne.s32.totalorder %s251, %s253
      %p260 = scmp.eq.s32.totalorder %s117, 1
      %p261 = por %p259, %p260
      %p262 = scmp.ne.s32.totalorder %s253, %s254
      %p263 = scmp.eq.s32.totalorder %s117, 0
      %p264 = por %p262, %p263
      %p265 = scmp.ne.s32.totalorder %s253, %s254
      %p266 = scmp.eq.s32.totalorder %s118, 1
      %p267 = por %p265, %p266
      %p269 = scmp.ne.s32.totalorder %s254, %s268
      %p270 = scmp.eq.s32.totalorder %s118, 0
      %p271 = por %p269, %p270
      %s273 = sadd.s32 %s272, 1
      %p276 = scmp.eq.s32.totalorder %s112, 1
      %p277 = scmp.ne.s32.totalorder %s272, %s274
      %p278 = scmp.eq.s32.totalorder %s112, 0
      %p279 = por %p277, %p278
      %p280 = scmp.ne.s32.totalorder %s272, %s274
      %p281 = scmp.eq.s32.totalorder %s117, 1
      %p282 = por %p280, %p281
      %p283 = scmp.ne.s32.totalorder %s274, %s275
      %p284 = scmp.eq.s32.totalorder %s117, 0
      %p285 = por %p283, %p284
      %p286 = scmp.ne.s32.totalorder %s274, %s275
      %p287 = scmp.eq.s32.totalorder %s118, 1
      %p288 = por %p286, %p287
      %p290 = scmp.ne.s32.totalorder %s275, %s289
      %p291 = scmp.eq.s32.totalorder %s118, 0
      %p292 = por %p290, %p291
      %s294 = sadd.s32 %s293, 1
      %p297 = scmp.eq.s32.totalorder %s112, 1
      %p298 = scmp.ne.s32.totalorder %s293, %s295
      %p299 = scmp.eq.s32.totalorder %s112, 0
      %p300 = por %p298, %p299
      %p301 = scmp.ne.s32.totalorder %s293, %s295
      %p302 = scmp.eq.s32.totalorder %s117, 1
      %p303 = por %p301, %p302
      %p304 = scmp.ne.s32.totalorder %s295, %s296
      %p305 = scmp.eq.s32.totalorder %s117, 0
      %p306 = por %p304, %p305
      %p307 = scmp.ne.s32.totalorder %s295, %s296
      %p308 = scmp.eq.s32.totalorder %s118, 1
      %p309 = por %p307, %p308
      %p311 = scmp.ne.s32.totalorder %s296, %s310
      %p312 = scmp.eq.s32.totalorder %s118, 0
      %p313 = por %p311, %p312
      %s315 = sadd.s32 %s314, 1
      %p318 = scmp.eq.s32.totalorder %s112, 1
      %p319 = scmp.ne.s32.totalorder %s314, %s316
      %p320 = scmp.eq.s32.totalorder %s112, 0
      %p321 = por %p319, %p320
      %p322 = scmp.ne.s32.totalorder %s314, %s316
      %p323 = scmp.eq.s32.totalorder %s117, 1
      %p324 = por %p322, %p323
      %p325 = scmp.ne.s32.totalorder %s316, %s317
      %p326 = scmp.eq.s32.totalorder %s117, 0
      %p327 = por %p325, %p326
      %p328 = scmp.ne.s32.totalorder %s316, %s317
      %p329 = scmp.eq.s32.totalorder %s118, 1
      %p330 = por %p328, %p329
      %p332 = scmp.ne.s32.totalorder %s317, %s331
      %p333 = scmp.eq.s32.totalorder %s118, 0
      %p334 = por %p332, %p333
      %s336 = sadd.s32 %s335, 1
      %p339 = scmp.eq.s32.totalorder %s112, 1
      %p340 = scmp.ne.s32.totalorder %s335, %s337
      %p341 = scmp.eq.s32.totalorder %s112, 0
      %p342 = por %p340, %p341
      %p343 = scmp.ne.s32.totalorder %s335, %s337
      %p344 = scmp.eq.s32.totalorder %s117, 1
      %p345 = por %p343, %p344
      %p346 = scmp.ne.s32.totalorder %s337, %s338
      %p347 = scmp.eq.s32.totalorder %s117, 0
      %p348 = por %p346, %p347
      %p349 = scmp.ne.s32.totalorder %s337, %s338
      %p350 = scmp.eq.s32.totalorder %s118, 1
      %p351 = por %p349, %p350
      %p353 = scmp.ne.s32.totalorder %s338, %s352
      %p354 = scmp.eq.s32.totalorder %s118, 0
      %p355 = por %p353, %p354
      %s357 = sadd.s32 %s356, 1
      %p360 = scmp.eq.s32.totalorder %s112, 1
      %p361 = scmp.ne.s32.totalorder %s356, %s358
      %p362 = scmp.eq.s32.totalorder %s112, 0
      %p363 = por %p361, %p362
      %p364 = scmp.ne.s32.totalorder %s356, %s358
      %p365 = scmp.eq.s32.totalorder %s117, 1
      %p366 = por %p364, %p365
      %p367 = scmp.ne.s32.totalorder %s358, %s359
      %p368 = scmp.eq.s32.totalorder %s117, 0
      %p369 = por %p367, %p368
      %p370 = scmp.ne.s32.totalorder %s358, %s359
      %p371 = scmp.eq.s32.totalorder %s118, 1
      %p372 = por %p370, %p371
      %p374 = scmp.ne.s32.totalorder %s359, %s373
      %p375 = scmp.eq.s32.totalorder %s118, 0
      %p376 = por %p374, %p375
      %s378 = sadd.s32 %s377, 1
      %p381 = scmp.eq.s32.totalorder %s112, 1
      %p382 = scmp.ne.s32.totalorder %s377, %s379
      %p383 = scmp.eq.s32.totalorder %s112, 0
      %p384 = por %p382, %p383
      %p385 = scmp.ne.s32.totalorder %s377, %s379
      %p386 = scmp.eq.s32.totalorder %s117, 1
      %p387 = por %p385, %p386
      %p388 = scmp.ne.s32.totalorder %s379, %s380
      %p389 = scmp.eq.s32.totalorder %s117, 0
      %p390 = por %p388, %p389
      %p391 = scmp.ne.s32.totalorder %s379, %s380
      %p392 = scmp.eq.s32.totalorder %s118, 1
      %p393 = por %p391, %p392
      %p395 = scmp.ne.s32.totalorder %s380, %s394
      %p396 = scmp.eq.s32.totalorder %s118, 0
      %p397 = por %p395, %p396
      %s399 = sadd.s32 %s398, 1
      %p402 = scmp.eq.s32.totalorder %s112, 1
      %p403 = scmp.ne.s32.totalorder %s398, %s400
      %p404 = scmp.eq.s32.totalorder %s112, 0
      %p405 = por %p403, %p404
      %p406 = scmp.ne.s32.totalorder %s398, %s400
      %p407 = scmp.eq.s32.totalorder %s117, 1
      %p408 = por %p406, %p407
      %p409 = scmp.ne.s32.totalorder %s400, %s401
      %p410 = scmp.eq.s32.totalorder %s117, 0
      %p411 = por %p409, %p410
      %p412 = scmp.ne.s32.totalorder %s400, %s401
      %p413 = scmp.eq.s32.totalorder %s118, 1
      %p414 = por %p412, %p413
      %p416 = scmp.ne.s32.totalorder %s401, %s415
      %p417 = scmp.eq.s32.totalorder %s118, 0
      %p418 = por %p416, %p417
      %s420 = sadd.s32 %s419, 1
      %p423 = scmp.eq.s32.totalorder %s112, 1
      %p424 = scmp.ne.s32.totalorder %s419, %s421
      %p425 = scmp.eq.s32.totalorder %s112, 0
      %p426 = por %p424, %p425
      %p427 = scmp.ne.s32.totalorder %s419, %s421
      %p428 = scmp.eq.s32.totalorder %s117, 1
      %p429 = por %p427, %p428
      %p430 = scmp.ne.s32.totalorder %s421, %s422
      %p431 = scmp.eq.s32.totalorder %s117, 0
      %p432 = por %p430, %p431
      %p433 = scmp.ne.s32.totalorder %s421, %s422
      %p434 = scmp.eq.s32.totalorder %s118, 1
      %p435 = por %p433, %p434
      %p437 = scmp.ne.s32.totalorder %s422, %s436
      %p438 = scmp.eq.s32.totalorder %s118, 0
      %p439 = por %p437, %p438
      %s441 = sadd.s32 %s440, 1
      %p444 = scmp.eq.s32.totalorder %s112, 1
      %p445 = scmp.ne.s32.totalorder %s440, %s442
      %p446 = scmp.eq.s32.totalorder %s112, 0
      %p447 = por %p445, %p446
      %p448 = scmp.ne.s32.totalorder %s440, %s442
      %p449 = scmp.eq.s32.totalorder %s117, 1
      %p450 = por %p448, %p449
      %p451 = scmp.ne.s32.totalorder %s442, %s443
      %p452 = scmp.eq.s32.totalorder %s117, 0
      %p453 = por %p451, %p452
      %p454 = scmp.ne.s32.totalorder %s442, %s443
      %p455 = scmp.eq.s32.totalorder %s118, 1
      %p456 = por %p454, %p455
      %p458 = scmp.ne.s32.totalorder %s443, %s457
      %p459 = scmp.eq.s32.totalorder %s118, 0
      %p460 = por %p458, %p459
      %s462 = sadd.s32 %s461, 1
      %p465 = scmp.eq.s32.totalorder %s112, 1
      %p466 = scmp.ne.s32.totalorder %s461, %s463
      %p467 = scmp.eq.s32.totalorder %s112, 0
      %p468 = por %p466, %p467
      %p469 = scmp.ne.s32.totalorder %s461, %s463
      %p470 = scmp.eq.s32.totalorder %s117, 1
      %p471 = por %p469, %p470
      %p472 = scmp.ne.s32.totalorder %s463, %s464
      %p473 = scmp.eq.s32.totalorder %s117, 0
      %p474 = por %p472, %p473
      %p475 = scmp.ne.s32.totalorder %s463, %s464
      %p476 = scmp.eq.s32.totalorder %s118, 1
      %p477 = por %p475, %p476
      %p479 = scmp.ne.s32.totalorder %s464, %s478
      %p480 = scmp.eq.s32.totalorder %s118, 0
      %p481 = por %p479, %p480
      %s483 = sadd.s32 %s482, 1
      %p486 = scmp.eq.s32.totalorder %s112, 1
      %p487 = scmp.ne.s32.totalorder %s482, %s484
      %p488 = scmp.eq.s32.totalorder %s112, 0
      %p489 = por %p487, %p488
      %p490 = scmp.ne.s32.totalorder %s482, %s484
      %p491 = scmp.eq.s32.totalorder %s117, 1
      %p492 = por %p490, %p491
      %p493 = scmp.ne.s32.totalorder %s484, %s485
      %p494 = scmp.eq.s32.totalorder %s117, 0
      %p495 = por %p493, %p494
      %p496 = scmp.ne.s32.totalorder %s484, %s485
      %p497 = scmp.eq.s32.totalorder %s118, 1
      %p498 = por %p496, %p497
      %p500 = scmp.ne.s32.totalorder %s485, %s499
      %p501 = scmp.eq.s32.totalorder %s118, 0
      %p502 = por %p500, %p501
      %s504 = sadd.s32 %s503, 1
      %p507 = scmp.eq.s32.totalorder %s112, 1
      %p508 = scmp.ne.s32.totalorder %s503, %s505
      %p509 = scmp.eq.s32.totalorder %s112, 0
      %p510 = por %p508, %p509
      %p511 = scmp.ne.s32.totalorder %s503, %s505
      %p512 = scmp.eq.s32.totalorder %s117, 1
      %p513 = por %p511, %p512
      %p514 = scmp.ne.s32.totalorder %s505, %s506
      %p515 = scmp.eq.s32.totalorder %s117, 0
      %p516 = por %p514, %p515
      %p517 = scmp.ne.s32.totalorder %s505, %s506
      %p518 = scmp.eq.s32.totalorder %s118, 1
      %p519 = por %p517, %p518
      %p521 = scmp.ne.s32.totalorder %s506, %s520
      %p522 = scmp.eq.s32.totalorder %s118, 0
      %p523 = por %p521, %p522
      %s525 = sadd.s32 %s524, 1
      %p528 = scmp.eq.s32.totalorder %s112, 1
      %p529 = scmp.ne.s32.totalorder %s524, %s526
      %p530 = scmp.eq.s32.totalorder %s112, 0
      %p531 = por %p529, %p530
      %p532 = scmp.ne.s32.totalorder %s524, %s526
      %p533 = scmp.eq.s32.totalorder %s117, 1
      %p534 = por %p532, %p533
      %p535 = scmp.ne.s32.totalorder %s526, %s527
      %p536 = scmp.eq.s32.totalorder %s117, 0
      %p537 = por %p535, %p536
      %p538 = scmp.ne.s32.totalorder %s526, %s527
      %p539 = scmp.eq.s32.totalorder %s118, 1
      %p540 = por %p538, %p539
      %p542 = scmp.ne.s32.totalorder %s527, %s541
      %p543 = scmp.eq.s32.totalorder %s118, 0
      %p544 = por %p542, %p543
      %s546 = sadd.s32 %s545, 1
      %p549 = scmp.eq.s32.totalorder %s112, 1
      %p550 = scmp.ne.s32.totalorder %s545, %s547
      %p551 = scmp.eq.s32.totalorder %s112, 0
      %p552 = por %p550, %p551
      %p553 = scmp.ne.s32.totalorder %s545, %s547
      %p554 = scmp.eq.s32.totalorder %s117, 1
      %p555 = por %p553, %p554
      %p556 = scmp.ne.s32.totalorder %s547, %s548
      %p557 = scmp.eq.s32.totalorder %s117, 0
      %p558 = por %p556, %p557
      %p559 = scmp.ne.s32.totalorder %s547, %s548
      %p560 = scmp.eq.s32.totalorder %s118, 1
      %p561 = por %p559, %p560
      %p563 = scmp.ne.s32.totalorder %s548, %s562
      %p564 = scmp.eq.s32.totalorder %s118, 0
      %p565 = por %p563, %p564
      %s567 = sadd.s32 %s566, 1
      %p570 = scmp.eq.s32.totalorder %s112, 1
      %p571 = scmp.ne.s32.totalorder %s566, %s568
      %p572 = scmp.eq.s32.totalorder %s112, 0
      %p573 = por %p571, %p572
      %p574 = scmp.ne.s32.totalorder %s566, %s568
      %p575 = scmp.eq.s32.totalorder %s117, 1
      %p576 = por %p574, %p575
      %p577 = scmp.ne.s32.totalorder %s568, %s569
      %p578 = scmp.eq.s32.totalorder %s117, 0
      %p579 = por %p577, %p578
      %p580 = scmp.ne.s32.totalorder %s568, %s569
      %p581 = scmp.eq.s32.totalorder %s118, 1
      %p582 = por %p580, %p581
      %p584 = scmp.ne.s32.totalorder %s569, %s583
      %p585 = scmp.eq.s32.totalorder %s118, 0
      %p586 = por %p584, %p585
      %s588 = sadd.s32 %s587, 1
      %p591 = scmp.eq.s32.totalorder %s112, 1
      %p592 = scmp.ne.s32.totalorder %s587, %s589
      %p593 = scmp.eq.s32.totalorder %s112, 0
      %p594 = por %p592, %p593
      %p595 = scmp.ne.s32.totalorder %s587, %s589
      %p596 = scmp.eq.s32.totalorder %s117, 1
      %p597 = por %p595, %p596
      %p598 = scmp.ne.s32.totalorder %s589, %s590
      %p599 = scmp.eq.s32.totalorder %s117, 0
      %p600 = por %p598, %p599
      %p601 = scmp.ne.s32.totalorder %s589, %s590
      %p602 = scmp.eq.s32.totalorder %s118, 1
      %p603 = por %p601, %p602
      %p605 = scmp.ne.s32.totalorder %s590, %s604
      %p606 = scmp.eq.s32.totalorder %s118, 0
      %p607 = por %p605, %p606
      %s609 = sadd.s32 %s608, 1
      %p612 = scmp.eq.s32.totalorder %s112, 1
      %p613 = scmp.ne.s32.totalorder %s608, %s610
      %p614 = scmp.eq.s32.totalorder %s112, 0
      %p615 = por %p613, %p614
      %p616 = scmp.ne.s32.totalorder %s608, %s610
      %p617 = scmp.eq.s32.totalorder %s117, 1
      %p618 = por %p616, %p617
      %p619 = scmp.ne.s32.totalorder %s610, %s611
      %p620 = scmp.eq.s32.totalorder %s117, 0
      %p621 = por %p619, %p620
      %p622 = scmp.ne.s32.totalorder %s610, %s611
      %p623 = scmp.eq.s32.totalorder %s118, 1
      %p624 = por %p622, %p623
      %p626 = scmp.ne.s32.totalorder %s611, %s625
      %p627 = scmp.eq.s32.totalorder %s118, 0
      %p628 = por %p626, %p627
      %s630 = sadd.s32 %s629, 1
      %p633 = scmp.eq.s32.totalorder %s112, 1
      %p634 = scmp.ne.s32.totalorder %s629, %s631
      %p635 = scmp.eq.s32.totalorder %s112, 0
      %p636 = por %p634, %p635
      %p637 = scmp.ne.s32.totalorder %s629, %s631
      %p638 = scmp.eq.s32.totalorder %s117, 1
      %p639 = por %p637, %p638
      %p640 = scmp.ne.s32.totalorder %s631, %s632
      %p641 = scmp.eq.s32.totalorder %s117, 0
      %p642 = por %p640, %p641
      %p643 = scmp.ne.s32.totalorder %s631, %s632
      %p644 = scmp.eq.s32.totalorder %s118, 1
      %p645 = por %p643, %p644
      %p647 = scmp.ne.s32.totalorder %s632, %s646
      %p648 = scmp.eq.s32.totalorder %s118, 0
      %p649 = por %p647, %p648
      %s651 = sadd.s32 %s650, 1
      %p654 = scmp.eq.s32.totalorder %s112, 1
      %p655 = scmp.ne.s32.totalorder %s650, %s652
      %p656 = scmp.eq.s32.totalorder %s112, 0
      %p657 = por %p655, %p656
      %p658 = scmp.ne.s32.totalorder %s650, %s652
      %p659 = scmp.eq.s32.totalorder %s117, 1
      %p660 = por %p658, %p659
      %p661 = scmp.ne.s32.totalorder %s652, %s653
      %p662 = scmp.eq.s32.totalorder %s117, 0
      %p663 = por %p661, %p662
      %p664 = scmp.ne.s32.totalorder %s652, %s653
      %p665 = scmp.eq.s32.totalorder %s118, 1
      %p666 = por %p664, %p665
      %p668 = scmp.ne.s32.totalorder %s653, %s667
      %p669 = scmp.eq.s32.totalorder %s118, 0
      %p670 = por %p668, %p669
      %s672 = sadd.s32 %s671, 1
      %p675 = scmp.eq.s32.totalorder %s112, 1
      %p676 = scmp.ne.s32.totalorder %s671, %s673
      %p677 = scmp.eq.s32.totalorder %s112, 0
      %p678 = por %p676, %p677
      %p679 = scmp.ne.s32.totalorder %s671, %s673
      %p680 = scmp.eq.s32.totalorder %s117, 1
      %p681 = por %p679, %p680
      %p682 = scmp.ne.s32.totalorder %s673, %s674
      %p683 = scmp.eq.s32.totalorder %s117, 0
      %p684 = por %p682, %p683
      %p685 = scmp.ne.s32.totalorder %s673, %s674
      %p686 = scmp.eq.s32.totalorder %s118, 1
      %p687 = por %p685, %p686
      %p689 = scmp.ne.s32.totalorder %s674, %s688
      %p690 = scmp.eq.s32.totalorder %s118, 0
      %p691 = por %p689, %p690
      %s693 = sadd.s32 %s692, 1
      %p696 = scmp.eq.s32.totalorder %s112, 1
      %p697 = scmp.ne.s32.totalorder %s692, %s694
      %p698 = scmp.eq.s32.totalorder %s112, 0
      %p699 = por %p697, %p698
      %p700 = scmp.ne.s32.totalorder %s692, %s694
      %p701 = scmp.eq.s32.totalorder %s117, 1
      %p702 = por %p700, %p701
      %p703 = scmp.ne.s32.totalorder %s694, %s695
      %p704 = scmp.eq.s32.totalorder %s117, 0
      %p705 = por %p703, %p704
      %p706 = scmp.ne.s32.totalorder %s694, %s695
      %p707 = scmp.eq.s32.totalorder %s118, 1
      %p708 = por %p706, %p707
      %p710 = scmp.ne.s32.totalorder %s695, %s709
      %p711 = scmp.eq.s32.totalorder %s118, 0
      %p712 = por %p710, %p711
      %s714 = sadd.s32 %s713, 1
      %p717 = scmp.eq.s32.totalorder %s112, 1
      %p718 = scmp.ne.s32.totalorder %s713, %s715
      %p719 = scmp.eq.s32.totalorder %s112, 0
      %p720 = por %p718, %p719
      %p721 = scmp.ne.s32.totalorder %s713, %s715
      %p722 = scmp.eq.s32.totalorder %s117, 1
      %p723 = por %p721, %p722
      %p724 = scmp.ne.s32.totalorder %s715, %s716
      %p725 = scmp.eq.s32.totalorder %s117, 0
      %p726 = por %p724, %p725
      %p727 = scmp.ne.s32.totalorder %s715, %s716
      %p728 = scmp.eq.s32.totalorder %s118, 1
      %p729 = por %p727, %p728
      %p731 = scmp.ne.s32.totalorder %s716, %s730
      %p732 = scmp.eq.s32.totalorder %s118, 0
      %p733 = por %p731, %p732
      %s735 = sadd.s32 %s734, 1
      %p738 = scmp.eq.s32.totalorder %s112, 1
      %p739 = scmp.ne.s32.totalorder %s734, %s736
      %p740 = scmp.eq.s32.totalorder %s112, 0
      %p741 = por %p739, %p740
      %p742 = scmp.ne.s32.totalorder %s734, %s736
      %p743 = scmp.eq.s32.totalorder %s117, 1
      %p744 = por %p742, %p743
      %p745 = scmp.ne.s32.totalorder %s736, %s737
      %p746 = scmp.eq.s32.totalorder %s117, 0
      %p747 = por %p745, %p746
      %p748 = scmp.ne.s32.totalorder %s736, %s737
      %p749 = scmp.eq.s32.totalorder %s118, 1
      %p750 = por %p748, %p749
      %p752 = scmp.ne.s32.totalorder %s737, %s751
      %p753 = scmp.eq.s32.totalorder %s118, 0
      %p754 = por %p752, %p753
      %s756 = sadd.s32 %s755, 1
      %p759 = scmp.eq.s32.totalorder %s112, 1
      %p760 = scmp.ne.s32.totalorder %s755, %s757
      %p761 = scmp.eq.s32.totalorder %s112, 0
      %p762 = por %p760, %p761
      %p763 = scmp.ne.s32.totalorder %s755, %s757
      %p764 = scmp.eq.s32.totalorder %s117, 1
      %p765 = por %p763, %p764
      %p766 = scmp.ne.s32.totalorder %s757, %s758
      %p767 = scmp.eq.s32.totalorder %s117, 0
      %p768 = por %p766, %p767
      %p769 = scmp.ne.s32.totalorder %s757, %s758
      %p770 = scmp.eq.s32.totalorder %s118, 1
      %p771 = por %p769, %p770
      %p773 = scmp.ne.s32.totalorder %s758, %s772
      %p774 = scmp.eq.s32.totalorder %s118, 0
      %p775 = por %p773, %p774
      %s777 = sadd.s32 %s776, 1
      %p780 = scmp.eq.s32.totalorder %s112, 1
      %p781 = scmp.ne.s32.totalorder %s776, %s778
      %p782 = scmp.eq.s32.totalorder %s112, 0
      %p783 = por %p781, %p782
      %p784 = scmp.ne.s32.totalorder %s776, %s778
      %p785 = scmp.eq.s32.totalorder %s117, 1
      %p786 = por %p784, %p785
      %p787 = scmp.ne.s32.totalorder %s778, %s779
      %p788 = scmp.eq.s32.totalorder %s117, 0
      %p789 = por %p787, %p788
      %p790 = scmp.ne.s32.totalorder %s778, %s779
      %p791 = scmp.eq.s32.totalorder %s118, 1
      %p792 = por %p790, %p791
      %p794 = scmp.ne.s32.totalorder %s779, %s793
      %p795 = scmp.eq.s32.totalorder %s118, 0
      %p796 = por %p794, %p795
      %s798 = sadd.s32 %s797, 1
      %p801 = scmp.eq.s32.totalorder %s112, 1
      %p802 = scmp.ne.s32.totalorder %s797, %s799
      %p803 = scmp.eq.s32.totalorder %s112, 0
      %p804 = por %p802, %p803
      %p805 = scmp.ne.s32.totalorder %s797, %s799
      %p806 = scmp.eq.s32.totalorder %s117, 1
      %p807 = por %p805, %p806
      %p808 = scmp.ne.s32.totalorder %s799, %s800
      %p809 = scmp.eq.s32.totalorder %s117, 0
      %p810 = por %p808, %p809
      %p811 = scmp.ne.s32.totalorder %s799, %s800
      %p812 = scmp.eq.s32.totalorder %s118, 1
      %p813 = por %p811, %p812
      %p815 = scmp.ne.s32.totalorder %s800, %s814
      %p816 = scmp.eq.s32.totalorder %s118, 0
      %p817 = por %p815, %p816
      %s819 = sadd.s32 %s818, 1
      %p822 = scmp.eq.s32.totalorder %s112, 1
      %p823 = scmp.ne.s32.totalorder %s818, %s820
      %p824 = scmp.eq.s32.totalorder %s112, 0
      %p825 = por %p823, %p824
      %p826 = scmp.ne.s32.totalorder %s818, %s820
      %p827 = scmp.eq.s32.totalorder %s117, 1
      %p828 = por %p826, %p827
      %p829 = scmp.ne.s32.totalorder %s820, %s821
      %p830 = scmp.eq.s32.totalorder %s117, 0
      %p831 = por %p829, %p830
      %p832 = scmp.ne.s32.totalorder %s820, %s821
      %p833 = scmp.eq.s32.totalorder %s118, 1
      %p834 = por %p832, %p833
      %p836 = scmp.ne.s32.totalorder %s821, %s835
      %p837 = scmp.eq.s32.totalorder %s118, 0
      %p838 = por %p836, %p837
      %s840 = sadd.s32 %s839, 1
      %p843 = scmp.eq.s32.totalorder %s112, 1
      %p844 = scmp.ne.s32.totalorder %s839, %s841
      %p845 = scmp.eq.s32.totalorder %s112, 0
      %p846 = por %p844, %p845
      %p847 = scmp.ne.s32.totalorder %s839, %s841
      %p848 = scmp.eq.s32.totalorder %s117, 1
      %p849 = por %p847, %p848
      %p850 = scmp.ne.s32.totalorder %s841, %s842
      %p851 = scmp.eq.s32.totalorder %s117, 0
      %p852 = por %p850, %p851
      %p853 = scmp.ne.s32.totalorder %s841, %s842
      %p854 = scmp.eq.s32.totalorder %s118, 1
      %p855 = por %p853, %p854
      %p857 = scmp.ne.s32.totalorder %s842, %s856
      %p858 = scmp.eq.s32.totalorder %s118, 0
      %p859 = por %p857, %p858
      %s861 = sadd.s32 %s860, 1
      %p864 = scmp.eq.s32.totalorder %s112, 1
      %p865 = scmp.ne.s32.totalorder %s860, %s862
      %p866 = scmp.eq.s32.totalorder %s112, 0
      %p867 = por %p865, %p866
      %p868 = scmp.ne.s32.totalorder %s860, %s862
      %p869 = scmp.eq.s32.totalorder %s117, 1
      %p870 = por %p868, %p869
      %p871 = scmp.ne.s32.totalorder %s862, %s863
      %p872 = scmp.eq.s32.totalorder %s117, 0
      %p873 = por %p871, %p872
      %p874 = scmp.ne.s32.totalorder %s862, %s863
      %p875 = scmp.eq.s32.totalorder %s118, 1
      %p876 = por %p874, %p875
      %p878 = scmp.ne.s32.totalorder %s863, %s877
      %p879 = scmp.eq.s32.totalorder %s118, 0
      %p880 = por %p878, %p879
      %s882 = sadd.s32 %s881, 1
      %p885 = scmp.eq.s32.totalorder %s112, 1
      %p886 = scmp.ne.s32.totalorder %s881, %s883
      %p887 = scmp.eq.s32.totalorder %s112, 0
      %p888 = por %p886, %p887
      %p889 = scmp.ne.s32.totalorder %s881, %s883
      %p890 = scmp.eq.s32.totalorder %s117, 1
      %p891 = por %p889, %p890
      %p892 = scmp.ne.s32.totalorder %s883, %s884
      %p893 = scmp.eq.s32.totalorder %s117, 0
      %p894 = por %p892, %p893
      %p895 = scmp.ne.s32.totalorder %s883, %s884
      %p896 = scmp.eq.s32.totalorder %s118, 1
      %p897 = por %p895, %p896
      %p899 = scmp.ne.s32.totalorder %s884, %s898
      %p900 = scmp.eq.s32.totalorder %s118, 0
      %p901 = por %p899, %p900
      %s903 = sadd.s32 %s902, 1
      %p906 = scmp.eq.s32.totalorder %s112, 1
      %p907 = scmp.ne.s32.totalorder %s902, %s904
      %p908 = scmp.eq.s32.totalorder %s112, 0
      %p909 = por %p907, %p908
      %p910 = scmp.ne.s32.totalorder %s902, %s904
      %p911 = scmp.eq.s32.totalorder %s117, 1
      %p912 = por %p910, %p911
      %p913 = scmp.ne.s32.totalorder %s904, %s905
      %p914 = scmp.eq.s32.totalorder %s117, 0
      %p915 = por %p913, %p914
      %p916 = scmp.ne.s32.totalorder %s904, %s905
      %p917 = scmp.eq.s32.totalorder %s118, 1
      %p918 = por %p916, %p917
      %p920 = scmp.ne.s32.totalorder %s905, %s919
      %p921 = scmp.eq.s32.totalorder %s118, 0
      %p922 = por %p920, %p921
      %s924 = sadd.s32 %s923, 1
      %p927 = scmp.eq.s32.totalorder %s112, 1
      %p928 = scmp.ne.s32.totalorder %s923, %s925
      %p929 = scmp.eq.s32.totalorder %s112, 0
      %p930 = por %p928, %p929
      %p931 = scmp.ne.s32.totalorder %s923, %s925
      %p932 = scmp.eq.s32.totalorder %s117, 1
      %p933 = por %p931, %p932
      %p934 = scmp.ne.s32.totalorder %s925, %s926
      %p935 = scmp.eq.s32.totalorder %s117, 0
      %p936 = por %p934, %p935
      %p937 = scmp.ne.s32.totalorder %s925, %s926
      %p938 = scmp.eq.s32.totalorder %s118, 1
      %p939 = por %p937, %p938
      %p941 = scmp.ne.s32.totalorder %s926, %s940
      %p942 = scmp.eq.s32.totalorder %s118, 0
      %p943 = por %p941, %p942
      %s945 = sadd.s32 %s944, 1
      %p948 = scmp.eq.s32.totalorder %s112, 1
      %p949 = scmp.ne.s32.totalorder %s944, %s946
      %p950 = scmp.eq.s32.totalorder %s112, 0
      %p951 = por %p949, %p950
      %p952 = scmp.ne.s32.totalorder %s944, %s946
      %p953 = scmp.eq.s32.totalorder %s117, 1
      %p954 = por %p952, %p953
      %p955 = scmp.ne.s32.totalorder %s946, %s947
      %p956 = scmp.eq.s32.totalorder %s117, 0
      %p957 = por %p955, %p956
      %p958 = scmp.ne.s32.totalorder %s946, %s947
      %p959 = scmp.eq.s32.totalorder %s118, 1
      %p960 = por %p958, %p959
      %p962 = scmp.ne.s32.totalorder %s947, %s961
      %p963 = scmp.eq.s32.totalorder %s118, 0
      %p964 = por %p962, %p963
      %s966 = sadd.s32 %s965, 1
      %p969 = scmp.eq.s32.totalorder %s112, 1
      %p970 = scmp.ne.s32.totalorder %s965, %s967
      %p971 = scmp.eq.s32.totalorder %s112, 0
      %p972 = por %p970, %p971
      %p973 = scmp.ne.s32.totalorder %s965, %s967
      %p974 = scmp.eq.s32.totalorder %s117, 1
      %p975 = por %p973, %p974
      %p976 = scmp.ne.s32.totalorder %s967, %s968
      %p977 = scmp.eq.s32.totalorder %s117, 0
      %p978 = por %p976, %p977
      %p979 = scmp.ne.s32.totalorder %s967, %s968
      %p980 = scmp.eq.s32.totalorder %s118, 1
      %p981 = por %p979, %p980
      %p983 = scmp.ne.s32.totalorder %s968, %s982
      %p984 = scmp.eq.s32.totalorder %s118, 0
      %p985 = por %p983, %p984
      %s987 = sadd.s32 %s986, 1
      %p990 = scmp.eq.s32.totalorder %s112, 1
      %p991 = scmp.ne.s32.totalorder %s986, %s988
      %p992 = scmp.eq.s32.totalorder %s112, 0
      %p993 = por %p991, %p992
      %p994 = scmp.ne.s32.totalorder %s986, %s988
      %p995 = scmp.eq.s32.totalorder %s117, 1
      %p996 = por %p994, %p995
      %p997 = scmp.ne.s32.totalorder %s988, %s989
      %p998 = scmp.eq.s32.totalorder %s117, 0
      %p999 = por %p997, %p998
      %p1000 = scmp.ne.s32.totalorder %s988, %s989
      %p1001 = scmp.eq.s32.totalorder %s118, 1
      %p1002 = por %p1000, %p1001
      %p1004 = scmp.ne.s32.totalorder %s989, %s1003
      %p1005 = scmp.eq.s32.totalorder %s118, 0
      %p1006 = por %p1004, %p1005
      %s1008 = sadd.s32 %s1007, 1
      %p1011 = scmp.eq.s32.totalorder %s112, 1
      %p1012 = scmp.ne.s32.totalorder %s1007, %s1009
      %p1013 = scmp.eq.s32.totalorder %s112, 0
      %p1014 = por %p1012, %p1013
      %p1015 = scmp.ne.s32.totalorder %s1007, %s1009
      %p1016 = scmp.eq.s32.totalorder %s117, 1
      %p1017 = por %p1015, %p1016
      %p1018 = scmp.ne.s32.totalorder %s1009, %s1010
      %p1019 = scmp.eq.s32.totalorder %s117, 0
      %p1020 = por %p1018, %p1019
      %p1021 = scmp.ne.s32.totalorder %s1009, %s1010
      %p1022 = scmp.eq.s32.totalorder %s118, 1
      %p1023 = por %p1021, %p1022
      %p1025 = scmp.ne.s32.totalorder %s1010, %s1024
      %p1026 = scmp.eq.s32.totalorder %s118, 0
      %p1027 = por %p1025, %p1026
      %s1029 = sadd.s32 %s1028, 1
      %p1032 = scmp.eq.s32.totalorder %s112, 1
      %p1033 = scmp.ne.s32.totalorder %s1028, %s1030
      %p1034 = scmp.eq.s32.totalorder %s112, 0
      %p1035 = por %p1033, %p1034
      %p1036 = scmp.ne.s32.totalorder %s1028, %s1030
      %p1037 = scmp.eq.s32.totalorder %s117, 1
      %p1038 = por %p1036, %p1037
      %p1039 = scmp.ne.s32.totalorder %s1030, %s1031
      %p1040 = scmp.eq.s32.totalorder %s117, 0
      %p1041 = por %p1039, %p1040
      %p1042 = scmp.ne.s32.totalorder %s1030, %s1031
      %p1043 = scmp.eq.s32.totalorder %s118, 1
      %p1044 = por %p1042, %p1043
      %p1046 = scmp.ne.s32.totalorder %s1031, %s1045
      %p1047 = scmp.eq.s32.totalorder %s118, 0
      %p1048 = por %p1046, %p1047
      %s1050 = sadd.s32 %s1049, 1
      %p1053 = scmp.eq.s32.totalorder %s112, 1
      %p1054 = scmp.ne.s32.totalorder %s1049, %s1051
      %p1055 = scmp.eq.s32.totalorder %s112, 0
      %p1056 = por %p1054, %p1055
      %p1057 = scmp.ne.s32.totalorder %s1049, %s1051
      %p1058 = scmp.eq.s32.totalorder %s117, 1
      %p1059 = por %p1057, %p1058
      %p1060 = scmp.ne.s32.totalorder %s1051, %s1052
      %p1061 = scmp.eq.s32.totalorder %s117, 0
      %p1062 = por %p1060, %p1061
      %p1063 = scmp.ne.s32.totalorder %s1051, %s1052
      %p1064 = scmp.eq.s32.totalorder %s118, 1
      %p1065 = por %p1063, %p1064
      %p1067 = scmp.ne.s32.totalorder %s1052, %s1066
      %p1068 = scmp.eq.s32.totalorder %s118, 0
      %p1069 = por %p1067, %p1068
      %s1071 = sadd.s32 %s1070, 1
      %p1074 = scmp.eq.s32.totalorder %s112, 1
      %p1075 = scmp.ne.s32.totalorder %s1070, %s1072
      %p1076 = scmp.eq.s32.totalorder %s112, 0
      %p1077 = por %p1075, %p1076
      %p1078 = scmp.ne.s32.totalorder %s1070, %s1072
      %p1079 = scmp.eq.s32.totalorder %s117, 1
      %p1080 = por %p1078, %p1079
      %p1081 = scmp.ne.s32.totalorder %s1072, %s1073
      %p1082 = scmp.eq.s32.totalorder %s117, 0
      %p1083 = por %p1081, %p1082
      %p1084 = scmp.ne.s32.totalorder %s1072, %s1073
      %p1085 = scmp.eq.s32.totalorder %s118, 1
      %p1086 = por %p1084, %p1085
      %p1088 = scmp.ne.s32.totalorder %s1073, %s1087
      %p1089 = scmp.eq.s32.totalorder %s118, 0
      %p1090 = por %p1088, %p1089
      %s1092 = sadd.s32 %s1091, 1
      %p1095 = scmp.eq.s32.totalorder %s112, 1
      %p1096 = scmp.ne.s32.totalorder %s1091, %s1093
      %p1097 = scmp.eq.s32.totalorder %s112, 0
      %p1098 = por %p1096, %p1097
      %p1099 = scmp.ne.s32.totalorder %s1091, %s1093
      %p1100 = scmp.eq.s32.totalorder %s117, 1
      %p1101 = por %p1099, %p1100
      %p1102 = scmp.ne.s32.totalorder %s1093, %s1094
      %p1103 = scmp.eq.s32.totalorder %s117, 0
      %p1104 = por %p1102, %p1103
      %p1105 = scmp.ne.s32.totalorder %s1093, %s1094
      %p1106 = scmp.eq.s32.totalorder %s118, 1
      %p1107 = por %p1105, %p1106
      %p1109 = scmp.ne.s32.totalorder %s1094, %s1108
      %p1110 = scmp.eq.s32.totalorder %s118, 0
      %p1111 = por %p1109, %p1110
      %s1113 = sadd.s32 %s1112, 1
      %p1116 = scmp.eq.s32.totalorder %s112, 1
      %p1117 = scmp.ne.s32.totalorder %s1112, %s1114
      %p1118 = scmp.eq.s32.totalorder %s112, 0
      %p1119 = por %p1117, %p1118
      %p1120 = scmp.ne.s32.totalorder %s1112, %s1114
      %p1121 = scmp.eq.s32.totalorder %s117, 1
      %p1122 = por %p1120, %p1121
      %p1123 = scmp.ne.s32.totalorder %s1114, %s1115
      %p1124 = scmp.eq.s32.totalorder %s117, 0
      %p1125 = por %p1123, %p1124
      %p1126 = scmp.ne.s32.totalorder %s1114, %s1115
      %p1127 = scmp.eq.s32.totalorder %s118, 1
      %p1128 = por %p1126, %p1127
      %p1130 = scmp.ne.s32.totalorder %s1115, %s1129
      %p1131 = scmp.eq.s32.totalorder %s118, 0
      %p1132 = por %p1130, %p1131
      %s1134 = sadd.s32 %s1133, 1
      %p1137 = scmp.eq.s32.totalorder %s112, 1
      %p1138 = scmp.ne.s32.totalorder %s1133, %s1135
      %p1139 = scmp.eq.s32.totalorder %s112, 0
      %p1140 = por %p1138, %p1139
      %p1141 = scmp.ne.s32.totalorder %s1133, %s1135
      %p1142 = scmp.eq.s32.totalorder %s117, 1
      %p1143 = por %p1141, %p1142
      %p1144 = scmp.ne.s32.totalorder %s1135, %s1136
      %p1145 = scmp.eq.s32.totalorder %s117, 0
      %p1146 = por %p1144, %p1145
      %p1147 = scmp.ne.s32.totalorder %s1135, %s1136
      %p1148 = scmp.eq.s32.totalorder %s118, 1
      %p1149 = por %p1147, %p1148
      %p1151 = scmp.ne.s32.totalorder %s1136, %s1150
      %p1152 = scmp.eq.s32.totalorder %s118, 0
      %p1153 = por %p1151, %p1152
      %s1155 = sadd.s32 %s1154, 1
      %p1158 = scmp.eq.s32.totalorder %s112, 1
      %p1159 = scmp.ne.s32.totalorder %s1154, %s1156
      %p1160 = scmp.eq.s32.totalorder %s112, 0
      %p1161 = por %p1159, %p1160
      %p1162 = scmp.ne.s32.totalorder %s1154, %s1156
      %p1163 = scmp.eq.s32.totalorder %s117, 1
      %p1164 = por %p1162, %p1163
      %p1165 = scmp.ne.s32.totalorder %s1156, %s1157
      %p1166 = scmp.eq.s32.totalorder %s117, 0
      %p1167 = por %p1165, %p1166
      %p1168 = scmp.ne.s32.totalorder %s1156, %s1157
      %p1169 = scmp.eq.s32.totalorder %s118, 1
      %p1170 = por %p1168, %p1169
      %p1172 = scmp.ne.s32.totalorder %s1157, %s1171
      %p1173 = scmp.eq.s32.totalorder %s118, 0
      %p1174 = por %p1172, %p1173
      %s1176 = sadd.s32 %s1175, 1
      %p1179 = scmp.eq.s32.totalorder %s112, 1
      %p1180 = scmp.ne.s32.totalorder %s1175, %s1177
      %p1181 = scmp.eq.s32.totalorder %s112, 0
      %p1182 = por %p1180, %p1181
      %p1183 = scmp.ne.s32.totalorder %s1175, %s1177
      %p1184 = scmp.eq.s32.totalorder %s117, 1
      %p1185 = por %p1183, %p1184
      %p1186 = scmp.ne.s32.totalorder %s1177, %s1178
      %p1187 = scmp.eq.s32.totalorder %s117, 0
      %p1188 = por %p1186, %p1187
      %p1189 = scmp.ne.s32.totalorder %s1177, %s1178
      %p1190 = scmp.eq.s32.totalorder %s118, 1
      %p1191 = por %p1189, %p1190
      %p1193 = scmp.ne.s32.totalorder %s1178, %s1192
      %p1194 = scmp.eq.s32.totalorder %s118, 0
      %p1195 = por %p1193, %p1194
      %s1196 = ssub.s32 %s112, %s119
      %p1197 = scmp.eq.s32.totalorder %s1196, 0
      %s1199 = sadd.s32 %s1198, 1
      %s1200 = scalar_select %p1197, %s1198, %s1199
      %p1203 = pneg %p1197
      %p1204 = scmp.eq.s32.totalorder %s112, 1
      %p1205 = por %p1203, %p1204
      %p1206 = scmp.ne.s32.totalorder %s1198, %s1201
      %p1207 = scmp.eq.s32.totalorder %s112, 0
      %p1208 = por %p1206, %p1207
      %p1209 = scmp.ne.s32.totalorder %s1198, %s1201
      %p1210 = scmp.eq.s32.totalorder %s117, 1
      %p1211 = por %p1209, %p1210
      %p1212 = scmp.ne.s32.totalorder %s1201, %s1202
      %p1213 = scmp.eq.s32.totalorder %s117, 0
      %p1214 = por %p1212, %p1213
      %p1215 = scmp.ne.s32.totalorder %s1201, %s1202
      %p1216 = scmp.eq.s32.totalorder %s118, 1
      %p1217 = por %p1215, %p1216
      %p1219 = scmp.ne.s32.totalorder %s1202, %s1218
      %p1220 = scmp.eq.s32.totalorder %s118, 0
      %p1221 = por %p1219, %p1220
      %p1222 = scmp.le.s32.totalorder 1, %s112
      %p1223 = scmp.lt.s32.totalorder %s112, 3
      %p1224 = pnand %p1222, %p1223
      %p1225 = pneg %p1224
      // Predicated region
      $region9: #{_lambda_.1} parent=5 // pred_check
        _
      $region10: #{_lambda_.1} parent=5 // pred_check_branch
        %1227 = sbr.rel (%p1224) target = $region12
      $region11: #{_lambda_.1} parent=5 // pred_region
        %s1228 = ssub.s32 %s112, 1
        // Predicated region
        $region13: #{_lambda_.1} parent=11 // pred_check
          %p1229 = pneg %p159
        $region14: #{_lambda_.1} parent=11 // pred_check_branch
          %1231 = sbr.rel (%p1229) target = $region16
        $region15: #{_lambda_.1} parent=11 // pred_region
          _
        $region16: #{_lambda_.1} parent=11 // pred_fallthru
          _
        // Predicated region
        $region17: #{_lambda_.1} parent=11 // pred_check
          %p1232 = pneg %p180
        $region18: #{_lambda_.1} parent=11 // pred_check_branch
          %1234 = sbr.rel (%p1232) target = $region20
        $region19: #{_lambda_.1} parent=11 // pred_region
          _
        $region20: #{_lambda_.1} parent=11 // pred_fallthru
          _
        // Predicated region
        $region21: #{_lambda_.1} parent=11 // pred_check
          %p1235 = pneg %p201
        $region22: #{_lambda_.1} parent=11 // pred_check_branch
          %1237 = sbr.rel (%p1235) target = $region24
        $region23: #{_lambda_.1} parent=11 // pred_region
          _
        $region24: #{_lambda_.1} parent=11 // pred_fallthru
          _
        // Predicated region
        $region25: #{_lambda_.1} parent=11 // pred_check
          %p1238 = pneg %p222
        $region26: #{_lambda_.1} parent=11 // pred_check_branch
          %1240 = sbr.rel (%p1238) target = $region28
        $region27: #{_lambda_.1} parent=11 // pred_region
          _
        $region28: #{_lambda_.1} parent=11 // pred_fallthru
          _
        // Predicated region
        $region29: #{_lambda_.1} parent=11 // pred_check
          %p1241 = pneg %p243
        $region30: #{_lambda_.1} parent=11 // pred_check_branch
          %1243 = sbr.rel (%p1241) target = $region32
        $region31: #{_lambda_.1} parent=11 // pred_region
          _
        $region32: #{_lambda_.1} parent=11 // pred_fallthru
          _
        // Predicated region
        $region33: #{_lambda_.1} parent=11 // pred_check
          %p1244 = pneg %p264
        $region34: #{_lambda_.1} parent=11 // pred_check_branch
          %1246 = sbr.rel (%p1244) target = $region36
        $region35: #{_lambda_.1} parent=11 // pred_region
          _
        $region36: #{_lambda_.1} parent=11 // pred_fallthru
          _
        // Predicated region
        $region37: #{_lambda_.1} parent=11 // pred_check
          %p1247 = pneg %p285
        $region38: #{_lambda_.1} parent=11 // pred_check_branch
          %1249 = sbr.rel (%p1247) target = $region40
        $region39: #{_lambda_.1} parent=11 // pred_region
          _
        $region40: #{_lambda_.1} parent=11 // pred_fallthru
          _
        // Predicated region
        $region41: #{_lambda_.1} parent=11 // pred_check
          %p1250 = pneg %p306
        $region42: #{_lambda_.1} parent=11 // pred_check_branch
          %1252 = sbr.rel (%p1250) target = $region44
        $region43: #{_lambda_.1} parent=11 // pred_region
          _
        $region44: #{_lambda_.1} parent=11 // pred_fallthru
          _
        // Predicated region
        $region45: #{_lambda_.1} parent=11 // pred_check
          %p1253 = pneg %p327
        $region46: #{_lambda_.1} parent=11 // pred_check_branch
          %1255 = sbr.rel (%p1253) target = $region48
        $region47: #{_lambda_.1} parent=11 // pred_region
          _
        $region48: #{_lambda_.1} parent=11 // pred_fallthru
          _
        // Predicated region
        $region49: #{_lambda_.1} parent=11 // pred_check
          %p1256 = pneg %p348
        $region50: #{_lambda_.1} parent=11 // pred_check_branch
          %1258 = sbr.rel (%p1256) target = $region52
        $region51: #{_lambda_.1} parent=11 // pred_region
          _
        $region52: #{_lambda_.1} parent=11 // pred_fallthru
          _
        // Predicated region
        $region53: #{_lambda_.1} parent=11 // pred_check
          %p1259 = pneg %p369
        $region54: #{_lambda_.1} parent=11 // pred_check_branch
          %1261 = sbr.rel (%p1259) target = $region56
        $region55: #{_lambda_.1} parent=11 // pred_region
          _
        $region56: #{_lambda_.1} parent=11 // pred_fallthru
          _
        // Predicated region
        $region57: #{_lambda_.1} parent=11 // pred_check
          %p1262 = pneg %p390
        $region58: #{_lambda_.1} parent=11 // pred_check_branch
          %1264 = sbr.rel (%p1262) target = $region60
        $region59: #{_lambda_.1} parent=11 // pred_region
          _
        $region60: #{_lambda_.1} parent=11 // pred_fallthru
          _
        // Predicated region
        $region61: #{_lambda_.1} parent=11 // pred_check
          %p1265 = pneg %p411
        $region62: #{_lambda_.1} parent=11 // pred_check_branch
          %1267 = sbr.rel (%p1265) target = $region64
        $region63: #{_lambda_.1} parent=11 // pred_region
          _
        $region64: #{_lambda_.1} parent=11 // pred_fallthru
          _
        // Predicated region
        $region65: #{_lambda_.1} parent=11 // pred_check
          %p1268 = pneg %p432
        $region66: #{_lambda_.1} parent=11 // pred_check_branch
          %1270 = sbr.rel (%p1268) target = $region68
        $region67: #{_lambda_.1} parent=11 // pred_region
          _
        $region68: #{_lambda_.1} parent=11 // pred_fallthru
          _
        // Predicated region
        $region69: #{_lambda_.1} parent=11 // pred_check
          %p1271 = pneg %p453
        $region70: #{_lambda_.1} parent=11 // pred_check_branch
          %1273 = sbr.rel (%p1271) target = $region72
        $region71: #{_lambda_.1} parent=11 // pred_region
          _
        $region72: #{_lambda_.1} parent=11 // pred_fallthru
          _
        // Predicated region
        $region73: #{_lambda_.1} parent=11 // pred_check
          %p1274 = pneg %p474
        $region74: #{_lambda_.1} parent=11 // pred_check_branch
          %1276 = sbr.rel (%p1274) target = $region76
        $region75: #{_lambda_.1} parent=11 // pred_region
          _
        $region76: #{_lambda_.1} parent=11 // pred_fallthru
          _
        // Predicated region
        $region77: #{_lambda_.1} parent=11 // pred_check
          %p1277 = pneg %p495
        $region78: #{_lambda_.1} parent=11 // pred_check_branch
          %1279 = sbr.rel (%p1277) target = $region80
        $region79: #{_lambda_.1} parent=11 // pred_region
          _
        $region80: #{_lambda_.1} parent=11 // pred_fallthru
          _
        // Predicated region
        $region81: #{_lambda_.1} parent=11 // pred_check
          %p1280 = pneg %p516
        $region82: #{_lambda_.1} parent=11 // pred_check_branch
          %1282 = sbr.rel (%p1280) target = $region84
        $region83: #{_lambda_.1} parent=11 // pred_region
          _
        $region84: #{_lambda_.1} parent=11 // pred_fallthru
          _
        // Predicated region
        $region85: #{_lambda_.1} parent=11 // pred_check
          %p1283 = pneg %p537
        $region86: #{_lambda_.1} parent=11 // pred_check_branch
          %1285 = sbr.rel (%p1283) target = $region88
        $region87: #{_lambda_.1} parent=11 // pred_region
          _
        $region88: #{_lambda_.1} parent=11 // pred_fallthru
          _
        // Predicated region
        $region89: #{_lambda_.1} parent=11 // pred_check
          %p1286 = pneg %p558
        $region90: #{_lambda_.1} parent=11 // pred_check_branch
          %1288 = sbr.rel (%p1286) target = $region92
        $region91: #{_lambda_.1} parent=11 // pred_region
          _
        $region92: #{_lambda_.1} parent=11 // pred_fallthru
          _
        // Predicated region
        $region93: #{_lambda_.1} parent=11 // pred_check
          %p1289 = pneg %p579
        $region94: #{_lambda_.1} parent=11 // pred_check_branch
          %1291 = sbr.rel (%p1289) target = $region96
        $region95: #{_lambda_.1} parent=11 // pred_region
          _
        $region96: #{_lambda_.1} parent=11 // pred_fallthru
          _
        // Predicated region
        $region97: #{_lambda_.1} parent=11 // pred_check
          %p1292 = pneg %p600
        $region98: #{_lambda_.1} parent=11 // pred_check_branch
          %1294 = sbr.rel (%p1292) target = $region100
        $region99: #{_lambda_.1} parent=11 // pred_region
          _
        $region100: #{_lambda_.1} parent=11 // pred_fallthru
          _
        // Predicated region
        $region101: #{_lambda_.1} parent=11 // pred_check
          %p1295 = pneg %p621
        $region102: #{_lambda_.1} parent=11 // pred_check_branch
          %1297 = sbr.rel (%p1295) target = $region104
        $region103: #{_lambda_.1} parent=11 // pred_region
          _
        $region104: #{_lambda_.1} parent=11 // pred_fallthru
          _
        // Predicated region
        $region105: #{_lambda_.1} parent=11 // pred_check
          %p1298 = pneg %p642
        $region106: #{_lambda_.1} parent=11 // pred_check_branch
          %1300 = sbr.rel (%p1298) target = $region108
        $region107: #{_lambda_.1} parent=11 // pred_region
          _
        $region108: #{_lambda_.1} parent=11 // pred_fallthru
          _
        // Predicated region
        $region109: #{_lambda_.1} parent=11 // pred_check
          %p1301 = pneg %p663
        $region110: #{_lambda_.1} parent=11 // pred_check_branch
          %1303 = sbr.rel (%p1301) target = $region112
        $region111: #{_lambda_.1} parent=11 // pred_region
          _
        $region112: #{_lambda_.1} parent=11 // pred_fallthru
          _
        // Predicated region
        $region113: #{_lambda_.1} parent=11 // pred_check
          %p1304 = pneg %p684
        $region114: #{_lambda_.1} parent=11 // pred_check_branch
          %1306 = sbr.rel (%p1304) target = $region116
        $region115: #{_lambda_.1} parent=11 // pred_region
          _
        $region116: #{_lambda_.1} parent=11 // pred_fallthru
          _
        // Predicated region
        $region117: #{_lambda_.1} parent=11 // pred_check
          %p1307 = pneg %p705
        $region118: #{_lambda_.1} parent=11 // pred_check_branch
          %1309 = sbr.rel (%p1307) target = $region120
        $region119: #{_lambda_.1} parent=11 // pred_region
          _
        $region120: #{_lambda_.1} parent=11 // pred_fallthru
          _
        // Predicated region
        $region121: #{_lambda_.1} parent=11 // pred_check
          %p1310 = pneg %p726
        $region122: #{_lambda_.1} parent=11 // pred_check_branch
          %1312 = sbr.rel (%p1310) target = $region124
        $region123: #{_lambda_.1} parent=11 // pred_region
          _
        $region124: #{_lambda_.1} parent=11 // pred_fallthru
          _
        // Predicated region
        $region125: #{_lambda_.1} parent=11 // pred_check
          %p1313 = pneg %p747
        $region126: #{_lambda_.1} parent=11 // pred_check_branch
          %1315 = sbr.rel (%p1313) target = $region128
        $region127: #{_lambda_.1} parent=11 // pred_region
          _
        $region128: #{_lambda_.1} parent=11 // pred_fallthru
          _
        // Predicated region
        $region129: #{_lambda_.1} parent=11 // pred_check
          %p1316 = pneg %p768
        $region130: #{_lambda_.1} parent=11 // pred_check_branch
          %1318 = sbr.rel (%p1316) target = $region132
        $region131: #{_lambda_.1} parent=11 // pred_region
          _
        $region132: #{_lambda_.1} parent=11 // pred_fallthru
          _
        // Predicated region
        $region133: #{_lambda_.1} parent=11 // pred_check
          %p1319 = pneg %p789
        $region134: #{_lambda_.1} parent=11 // pred_check_branch
          %1321 = sbr.rel (%p1319) target = $region136
        $region135: #{_lambda_.1} parent=11 // pred_region
          _
        $region136: #{_lambda_.1} parent=11 // pred_fallthru
          _
        // Predicated region
        $region137: #{_lambda_.1} parent=11 // pred_check
          %p1322 = pneg %p810
        $region138: #{_lambda_.1} parent=11 // pred_check_branch
          %1324 = sbr.rel (%p1322) target = $region140
        $region139: #{_lambda_.1} parent=11 // pred_region
          _
        $region140: #{_lambda_.1} parent=11 // pred_fallthru
          _
        // Predicated region
        $region141: #{_lambda_.1} parent=11 // pred_check
          %p1325 = pneg %p831
        $region142: #{_lambda_.1} parent=11 // pred_check_branch
          %1327 = sbr.rel (%p1325) target = $region144
        $region143: #{_lambda_.1} parent=11 // pred_region
          _
        $region144: #{_lambda_.1} parent=11 // pred_fallthru
          _
        // Predicated region
        $region145: #{_lambda_.1} parent=11 // pred_check
          %p1328 = pneg %p852
        $region146: #{_lambda_.1} parent=11 // pred_check_branch
          %1330 = sbr.rel (%p1328) target = $region148
        $region147: #{_lambda_.1} parent=11 // pred_region
          _
        $region148: #{_lambda_.1} parent=11 // pred_fallthru
          _
        // Predicated region
        $region149: #{_lambda_.1} parent=11 // pred_check
          %p1331 = pneg %p873
        $region150: #{_lambda_.1} parent=11 // pred_check_branch
          %1333 = sbr.rel (%p1331) target = $region152
        $region151: #{_lambda_.1} parent=11 // pred_region
          _
        $region152: #{_lambda_.1} parent=11 // pred_fallthru
          _
        // Predicated region
        $region153: #{_lambda_.1} parent=11 // pred_check
          %p1334 = pneg %p894
        $region154: #{_lambda_.1} parent=11 // pred_check_branch
          %1336 = sbr.rel (%p1334) target = $region156
        $region155: #{_lambda_.1} parent=11 // pred_region
          _
        $region156: #{_lambda_.1} parent=11 // pred_fallthru
          _
        // Predicated region
        $region157: #{_lambda_.1} parent=11 // pred_check
          %p1337 = pneg %p915
        $region158: #{_lambda_.1} parent=11 // pred_check_branch
          %1339 = sbr.rel (%p1337) target = $region160
        $region159: #{_lambda_.1} parent=11 // pred_region
          _
        $region160: #{_lambda_.1} parent=11 // pred_fallthru
          _
        // Predicated region
        $region161: #{_lambda_.1} parent=11 // pred_check
          %p1340 = pneg %p936
        $region162: #{_lambda_.1} parent=11 // pred_check_branch
          %1342 = sbr.rel (%p1340) target = $region164
        $region163: #{_lambda_.1} parent=11 // pred_region
          _
        $region164: #{_lambda_.1} parent=11 // pred_fallthru
          _
        // Predicated region
        $region165: #{_lambda_.1} parent=11 // pred_check
          %p1343 = pneg %p957
        $region166: #{_lambda_.1} parent=11 // pred_check_branch
          %1345 = sbr.rel (%p1343) target = $region168
        $region167: #{_lambda_.1} parent=11 // pred_region
          _
        $region168: #{_lambda_.1} parent=11 // pred_fallthru
          _
        // Predicated region
        $region169: #{_lambda_.1} parent=11 // pred_check
          %p1346 = pneg %p978
        $region170: #{_lambda_.1} parent=11 // pred_check_branch
          %1348 = sbr.rel (%p1346) target = $region172
        $region171: #{_lambda_.1} parent=11 // pred_region
          _
        $region172: #{_lambda_.1} parent=11 // pred_fallthru
          _
        // Predicated region
        $region173: #{_lambda_.1} parent=11 // pred_check
          %p1349 = pneg %p999
        $region174: #{_lambda_.1} parent=11 // pred_check_branch
          %1351 = sbr.rel (%p1349) target = $region176
        $region175: #{_lambda_.1} parent=11 // pred_region
          _
        $region176: #{_lambda_.1} parent=11 // pred_fallthru
          _
        // Predicated region
        $region177: #{_lambda_.1} parent=11 // pred_check
          %p1352 = pneg %p1020
        $region178: #{_lambda_.1} parent=11 // pred_check_branch
          %1354 = sbr.rel (%p1352) target = $region180
        $region179: #{_lambda_.1} parent=11 // pred_region
          _
        $region180: #{_lambda_.1} parent=11 // pred_fallthru
          _
        // Predicated region
        $region181: #{_lambda_.1} parent=11 // pred_check
          %p1355 = pneg %p1041
        $region182: #{_lambda_.1} parent=11 // pred_check_branch
          %1357 = sbr.rel (%p1355) target = $region184
        $region183: #{_lambda_.1} parent=11 // pred_region
          _
        $region184: #{_lambda_.1} parent=11 // pred_fallthru
          _
        // Predicated region
        $region185: #{_lambda_.1} parent=11 // pred_check
          %p1358 = pneg %p1062
        $region186: #{_lambda_.1} parent=11 // pred_check_branch
          %1360 = sbr.rel (%p1358) target = $region188
        $region187: #{_lambda_.1} parent=11 // pred_region
          _
        $region188: #{_lambda_.1} parent=11 // pred_fallthru
          _
        // Predicated region
        $region189: #{_lambda_.1} parent=11 // pred_check
          %p1361 = pneg %p1083
        $region190: #{_lambda_.1} parent=11 // pred_check_branch
          %1363 = sbr.rel (%p1361) target = $region192
        $region191: #{_lambda_.1} parent=11 // pred_region
          _
        $region192: #{_lambda_.1} parent=11 // pred_fallthru
          _
        // Predicated region
        $region193: #{_lambda_.1} parent=11 // pred_check
          %p1364 = pneg %p1104
        $region194: #{_lambda_.1} parent=11 // pred_check_branch
          %1366 = sbr.rel (%p1364) target = $region196
        $region195: #{_lambda_.1} parent=11 // pred_region
          _
        $region196: #{_lambda_.1} parent=11 // pred_fallthru
          _
        // Predicated region
        $region197: #{_lambda_.1} parent=11 // pred_check
          %p1367 = pneg %p1125
        $region198: #{_lambda_.1} parent=11 // pred_check_branch
          %1369 = sbr.rel (%p1367) target = $region200
        $region199: #{_lambda_.1} parent=11 // pred_region
          _
        $region200: #{_lambda_.1} parent=11 // pred_fallthru
          _
        // Predicated region
        $region201: #{_lambda_.1} parent=11 // pred_check
          %p1370 = pneg %p1146
        $region202: #{_lambda_.1} parent=11 // pred_check_branch
          %1372 = sbr.rel (%p1370) target = $region204
        $region203: #{_lambda_.1} parent=11 // pred_region
          _
        $region204: #{_lambda_.1} parent=11 // pred_fallthru
          _
        // Predicated region
        $region205: #{_lambda_.1} parent=11 // pred_check
          %p1373 = pneg %p1167
        $region206: #{_lambda_.1} parent=11 // pred_check_branch
          %1375 = sbr.rel (%p1373) target = $region208
        $region207: #{_lambda_.1} parent=11 // pred_region
          _
        $region208: #{_lambda_.1} parent=11 // pred_fallthru
          _
        // Predicated region
        $region209: #{_lambda_.1} parent=11 // pred_check
          %p1376 = pneg %p1188
        $region210: #{_lambda_.1} parent=11 // pred_check_branch
          %1378 = sbr.rel (%p1376) target = $region212
        $region211: #{_lambda_.1} parent=11 // pred_region
          _
        $region212: #{_lambda_.1} parent=11 // pred_fallthru
          _
      $region12: #{_lambda_.1} parent=5 // pred_fallthru
        _
      %p1379 = scmp.lt.s32.totalorder %s112, 2
      // Predicated region
      $region213: #{_lambda_.1} parent=5 // pred_check
        %p1380 = pneg %p1379
      $region214: #{_lambda_.1} parent=5 // pred_check_branch
        %1382 = sbr.rel (%p1380) target = $region216
      $region215: #{_lambda_.1} parent=5 // pred_region
        // Predicated region
        $region217: #{_lambda_.1} parent=215 // pred_check
          %p1383 = pneg %p132
        $region218: #{_lambda_.1} parent=215 // pred_check_branch
          %1385 = sbr.rel (%p1383) target = $region220
        $region219: #{_lambda_.1} parent=215 // pred_region
          %p1386 = scmp.lt.s32.totalorder %s112, 1
          %s1387 = scalar_select %p1386, %s112, 1
          %s1388 = smul.addr %s1387, 3
          %s1389 = smul.addr %s1388, 8
          %s1390 = scalar_lea.vmem %s1, %s1389
        $region220: #{_lambda_.1} parent=215 // pred_fallthru
          _
      $region216: #{_lambda_.1} parent=5 // pred_fallthru
        _
      %p1391 = scmp.le.s32.totalorder 1, %s112
      %p1392 = scmp.lt.s32.totalorder %s112, 3
      %p1393 = pnand %p1391, %p1392
      %p1394 = pneg %p1393
      // Predicated region
      $region221: #{_lambda_.1} parent=5 // pred_check
        _
      $region222: #{_lambda_.1} parent=5 // pred_check_branch
        %1396 = sbr.rel (%p1393) target = $region224
      $region223: #{_lambda_.1} parent=5 // pred_region
        %s1397 = ssub.s32 %s112, 1
        %p1398 = scmp.lt.s32.totalorder %s117, 1
        %s1399 = scalar_select %p1398, %s117, 1
        %s1400 = smul.addr %s1399, 3
        %s1401 = smul.addr %s1400, 8
        %s1402 = scalar_lea.vmem %s1, %s1401
        %p1403 = pneg %p138
        %p1404 = pneg %p135
        %p1405 = pneg %p159
        %p1406 = pneg %p156
        %p1407 = pneg %p180
        %p1408 = pneg %p177
        %p1409 = pneg %p201
        %p1410 = pneg %p198
        %p1411 = pneg %p222
        %p1412 = pneg %p219
        %p1413 = pneg %p243
        %p1414 = pneg %p240
        %p1415 = pneg %p264
        %p1416 = pneg %p261
        %p1417 = pneg %p285
        %p1418 = pneg %p282
        %p1419 = pneg %p306
        %p1420 = pneg %p303
        %p1421 = pneg %p327
        %p1422 = pneg %p324
        %p1423 = pneg %p348
        %p1424 = pneg %p345
        %p1425 = pneg %p369
        %p1426 = pneg %p366
        %p1427 = pneg %p390
        %p1428 = pneg %p387
        %p1429 = pneg %p411
        %p1430 = pneg %p408
        %p1431 = pneg %p432
        %p1432 = pneg %p429
        %p1433 = pneg %p453
        %p1434 = pneg %p450
        %p1435 = pneg %p474
        %p1436 = pneg %p471
        %p1437 = pneg %p495
        %p1438 = pneg %p492
        %p1439 = pneg %p516
        %p1440 = pneg %p513
        %p1441 = pneg %p537
        %p1442 = pneg %p534
        %p1443 = pneg %p558
        %p1444 = pneg %p555
        %p1445 = pneg %p579
        %p1446 = pneg %p576
        %p1447 = pneg %p600
        %p1448 = pneg %p597
        %p1449 = pneg %p621
        %p1450 = pneg %p618
        %p1451 = pneg %p642
        %p1452 = pneg %p639
        %p1453 = pneg %p663
        %p1454 = pneg %p660
        %p1455 = pneg %p684
        %p1456 = pneg %p681
        %p1457 = pneg %p705
        %p1458 = pneg %p702
        %p1459 = pneg %p726
        %p1460 = pneg %p723
        %p1461 = pneg %p747
        %p1462 = pneg %p744
        %p1463 = pneg %p768
        %p1464 = pneg %p765
        %p1465 = pneg %p789
        %p1466 = pneg %p786
        %p1467 = pneg %p810
        %p1468 = pneg %p807
        %p1469 = pneg %p831
        %p1470 = pneg %p828
        %p1471 = pneg %p852
        %p1472 = pneg %p849
        %p1473 = pneg %p873
        %p1474 = pneg %p870
        %p1475 = pneg %p894
        %p1476 = pneg %p891
        %p1477 = pneg %p915
        %p1478 = pneg %p912
        %p1479 = pneg %p936
        %p1480 = pneg %p933
        %p1481 = pneg %p957
        %p1482 = pneg %p954
        %p1483 = pneg %p978
        %p1484 = pneg %p975
        %p1485 = pneg %p999
        %p1486 = pneg %p996
        %p1487 = pneg %p1020
        %p1488 = pneg %p1017
        %p1489 = pneg %p1041
        %p1490 = pneg %p1038
        %p1491 = pneg %p1062
        %p1492 = pneg %p1059
        %p1493 = pneg %p1083
        %p1494 = pneg %p1080
        %p1495 = pneg %p1104
        %p1496 = pneg %p1101
        %p1497 = pneg %p1125
        %p1498 = pneg %p1122
        %p1499 = pneg %p1146
        %p1500 = pneg %p1143
        %p1501 = pneg %p1167
        %p1502 = pneg %p1164
        %p1503 = pneg %p1188
        %p1504 = pneg %p1185
        %p1505 = pneg %p1214
        %p1506 = pneg %p1211
        %s1507 = sand.u32 %s1201, 1
        %s1508 = scalar_lea.sflag [#allocation3], %s1507
        %s1509 = sand.u32 %s1201, 1
        %s1510 = scalar_lea.vmem [#allocation2], %s1509
        %p1511 = scmp.lt.s32.totalorder %s117, 1
        %s1512 = scalar_select %p1511, %s117, 1
        %s1513 = smul.addr %s1512, 3
        %s1514 = smul.addr %s1513, 8
        %s1515 = scalar_lea.vmem %s1, %s1514
        %v1516 = vld [vmem:[%s1515] sm:$0xff]
        %v1517 = vld [vmem:[%s1515 + $0x8] sm:$0xff]
        %v1518 = vld [vmem:[%s1515 + $0x10] sm:$0xff]
        %v1519 = vld [vmem:[%s3] sm:$0xff]
        %v1520 = vld [vmem:[%s3 + $0x8] sm:$0xff]
        %v1521 = vld [vmem:[%s3 + $0x10] sm:$0xff]
        %v1522 = vld [vmem:[%s3 + $0x18] sm:$0xff]
        %v1523 = vld [vmem:[%s3 + $0x20] sm:$0xff]
        %v1524 = vld [vmem:[%s3 + $0x28] sm:$0xff]
        %v1525 = vld [vmem:[%s3 + $0x30] sm:$0xff]
        %v1526 = vld [vmem:[%s3 + $0x38] sm:$0xff]
        %v1527 = vld [vmem:[%s5] sm:$0x1]
        %v1529 = vlaneseq
        %v1530 = vshrl.u32 %v1529, 7
        %v1531 = vsub.s32 0, %v1530
        %v1532 = vrot.slane %v1527, %v1531
        %vm1534 = vcmask 523264
        %v1536 = vsel %vm1534, %v1516, 0
        %v1539 = vsel %vm1534, %v1517, 0
        %v1542 = vsel %vm1534, %v1518, 0
        %1544 = vmatprep.subr.mxu0 0.0
        %1545 = vmatpush1.msra.mxu0 %v1519
        %1546 = vmatprep.subr.mxu0 0.0
        %1547 = vmatpush1.msra.mxu0 %v1520
        %1548 = vmatprep.subr.mxu0 0.0
        %1549 = vmatpush1.msra.mxu0 %v1521
        %1550 = vmatprep.subr.mxu0 0.0
        %1551 = vmatpush1.msra.mxu0 %v1522
        %1552 = vmatprep.subr.mxu0 0.0
        %1553 = vmatpush1.msra.mxu0 %v1523
        %1554 = vmatprep.subr.mxu0 0.0
        %1555 = vmatpush1.msra.mxu0 %v1524
        %1556 = vmatprep.subr.mxu0 0.0
        %1557 = vmatpush1.msra.mxu0 %v1525
        %1558 = vmatprep.subr.mxu0 0.0
        %1559 = vmatpush1.msra.mxu0 %v1526
        %1560 = vmatprep.subr.mxu0 0.0
        %1561 = vmatpush1.msra.mxu0 0.0
        %1562 = vmatprep.subr.mxu0 0.0
        %1563 = vmatpush1.msra.mxu0 0.0
        %1564 = vmatprep.subr.mxu0 0.0
        %1565 = vmatpush1.msra.mxu0 0.0
        %1566 = vmatprep.subr.mxu0 0.0
        %1567 = vmatpush1.msra.mxu0 0.0
        %1568 = vmatprep.subr.mxu0 0.0
        %1569 = vmatpush1.msra.mxu0 0.0
        %1570 = vmatprep.subr.mxu0 0.0
        %1571 = vmatpush1.msra.mxu0 0.0
        %1572 = vmatprep.subr.mxu0 0.0
        %1573 = vmatpush1.msra.mxu0 0.0
        %1574 = vmatprep.subr.mxu0 0.0
        %1575 = vmatpush1.msra.mxu0 0.0
        %1576 = vmatprep.subr.mxu0 0.0
        %1577 = vmatpush1.msra.mxu0 0.0
        %1578 = vmatprep.subr.mxu0 0.0
        %1579 = vmatpush1.msra.mxu0 0.0
        %1580 = vmatprep.subr.mxu0 0.0
        %1581 = vmatpush1.msra.mxu0 0.0
        %1582 = vmatprep.subr.mxu0 0.0
        %1583 = vmatpush1.msra.mxu0 0.0
        %1584 = vmatprep.subr.mxu0 0.0
        %1585 = vmatpush1.msra.mxu0 0.0
        %1586 = vmatprep.subr.mxu0 0.0
        %1587 = vmatpush1.msra.mxu0 0.0
        %1588 = vmatprep.subr.mxu0 0.0
        %1589 = vmatpush1.msra.mxu0 0.0
        %1590 = vmatprep.subr.mxu0 0.0
        %1591 = vmatpush1.msra.mxu0 0.0
        %1592 = vmatprep.subr.mxu0 0.0
        %1593 = vmatpush1.msra.mxu0 0.0
        %1594 = vmatprep.subr.mxu0 0.0
        %1595 = vmatpush1.msra.mxu0 0.0
        %1596 = vmatprep.subr.mxu0 0.0
        %1597 = vmatpush1.msra.mxu0 0.0
        %1598 = vmatprep.subr.mxu0 0.0
        %1599 = vmatpush1.msra.mxu0 0.0
        %1600 = vmatprep.subr.mxu0 0.0
        %1601 = vmatpush1.msra.mxu0 0.0
        %1602 = vmatprep.subr.mxu0 0.0
        %1603 = vmatpush1.msra.mxu0 0.0
        %1604 = vmatprep.subr.mxu0 0.0
        %1605 = vmatpush1.msra.mxu0 0.0
        %1606 = vmatprep.subr.mxu0 0.0
        %1607 = vmatpush1.msra.mxu0 0.0
        %1608 = vmatprep.mubr.f32.mxu0 0.0
        %1609 = vmatmul.mubr.f32.gmra.mrb[0].mxu0 %v1536
        %v1610 = vpop.f32.mrb[0].mxu0
        %v1611 = vadd.f32 %v1532, %v1610
        %v1612 = vpop.f32.mrb[0].mxu0
        %1613 = vmatprep.mubr.f32.mxu0 0.0
        %1614 = vmatmul.mubr.f32.gmra.mrb[0].mxu0 %v1539
        %v1615 = vpop.f32.mrb[0].mxu0
        %v1616 = vadd.f32 %v1532, %v1615
        %v1617 = vpop.f32.mrb[0].mxu0
        %1618 = vmatprep.mubr.f32.mxu0 0.0
        %1619 = vmatmul.mubr.f32.gmra.mrb[0].mxu0 %v1542
        %v1620 = vpop.f32.mrb[0].mxu0
        %v1621 = vadd.f32 %v1532, %v1620
        %v1622 = vpop.f32.mrb[0].mxu0
        %1623 = vdwg.mxu0
        %v1624 = vmax.f32 %v1611, 0.0
        %v1625 = vmax.f32 %v1616, 0.0
        %v1626 = vmax.f32 %v1621, 0.0
        %v1627 = vld [vmem:[%s7] sm:$0xff]
        %v1628 = vld [vmem:[%s9] sm:$0x1]
        %v1630 = vlaneseq
        %v1631 = vshrl.u32 %v1630, 7
        %v1632 = vsub.s32 0, %v1631
        %v1633 = vrot.slane %v1628, %v1632
        %vm1635 = vcmask 64512
        %v1637 = vsel %vm1635, %v1624, 0
        %v1640 = vsel %vm1635, %v1625, 0
        %v1643 = vsel %vm1635, %v1626, 0
        %1645 = vmatprep.subr.mxu0 0.0
        %1646 = vmatpush1.msra.mxu0 %v1627
        %1647 = vmatprep.subr.mxu0 0.0
        %1648 = vmatpush1.msra.mxu0 0.0
        %1649 = vmatprep.subr.mxu0 0.0
        %1650 = vmatpush1.msra.mxu0 0.0
        %1651 = vmatprep.subr.mxu0 0.0
        %1652 = vmatpush1.msra.mxu0 0.0
        %1653 = vmatprep.subr.mxu0 0.0
        %1654 = vmatpush1.msra.mxu0 0.0
        %1655 = vmatprep.subr.mxu0 0.0
        %1656 = vmatpush1.msra.mxu0 0.0
        %1657 = vmatprep.subr.mxu0 0.0
        %1658 = vmatpush1.msra.mxu0 0.0
        %1659 = vmatprep.subr.mxu0 0.0
        %1660 = vmatpush1.msra.mxu0 0.0
        %1661 = vmatprep.subr.mxu0 0.0
        %1662 = vmatpush1.msra.mxu0 0.0
        %1663 = vmatprep.subr.mxu0 0.0
        %1664 = vmatpush1.msra.mxu0 0.0
        %1665 = vmatprep.subr.mxu0 0.0
        %1666 = vmatpush1.msra.mxu0 0.0
        %1667 = vmatprep.subr.mxu0 0.0
        %1668 = vmatpush1.msra.mxu0 0.0
        %1669 = vmatprep.subr.mxu0 0.0
        %1670 = vmatpush1.msra.mxu0 0.0
        %1671 = vmatprep.subr.mxu0 0.0
        %1672 = vmatpush1.msra.mxu0 0.0
        %1673 = vmatprep.subr.mxu0 0.0
        %1674 = vmatpush1.msra.mxu0 0.0
        %1675 = vmatprep.subr.mxu0 0.0
        %1676 = vmatpush1.msra.mxu0 0.0
        %1677 = vmatprep.subr.mxu0 0.0
        %1678 = vmatpush1.msra.mxu0 0.0
        %1679 = vmatprep.subr.mxu0 0.0
        %1680 = vmatpush1.msra.mxu0 0.0
        %1681 = vmatprep.subr.mxu0 0.0
        %1682 = vmatpush1.msra.mxu0 0.0
        %1683 = vmatprep.subr.mxu0 0.0
        %1684 = vmatpush1.msra.mxu0 0.0
        %1685 = vmatprep.subr.mxu0 0.0
        %1686 = vmatpush1.msra.mxu0 0.0
        %1687 = vmatprep.subr.mxu0 0.0
        %1688 = vmatpush1.msra.mxu0 0.0
        %1689 = vmatprep.subr.mxu0 0.0
        %1690 = vmatpush1.msra.mxu0 0.0
        %1691 = vmatprep.subr.mxu0 0.0
        %1692 = vmatpush1.msra.mxu0 0.0
        %1693 = vmatprep.subr.mxu0 0.0
        %1694 = vmatpush1.msra.mxu0 0.0
        %1695 = vmatprep.subr.mxu0 0.0
        %1696 = vmatpush1.msra.mxu0 0.0
        %1697 = vmatprep.subr.mxu0 0.0
        %1698 = vmatpush1.msra.mxu0 0.0
        %1699 = vmatprep.subr.mxu0 0.0
        %1700 = vmatpush1.msra.mxu0 0.0
        %1701 = vmatprep.subr.mxu0 0.0
        %1702 = vmatpush1.msra.mxu0 0.0
        %1703 = vmatprep.subr.mxu0 0.0
        %1704 = vmatpush1.msra.mxu0 0.0
        %1705 = vmatprep.subr.mxu0 0.0
        %1706 = vmatpush1.msra.mxu0 0.0
        %1707 = vmatprep.subr.mxu0 0.0
        %1708 = vmatpush1.msra.mxu0 0.0
        %1709 = vmatprep.mubr.f32.mxu0 0.0
        %1710 = vmatmul.mubr.f32.gmra.mrb[0].mxu0 %v1637
        %v1711 = vpop.f32.mrb[0].mxu0
        %v1712 = vadd.f32 %v1633, %v1711
        %v1713 = vpop.f32.mrb[0].mxu0
        %1714 = vmatprep.mubr.f32.mxu0 0.0
        %1715 = vmatmul.mubr.f32.gmra.mrb[0].mxu0 %v1640
        %v1716 = vpop.f32.mrb[0].mxu0
        %v1717 = vadd.f32 %v1633, %v1716
        %v1718 = vpop.f32.mrb[0].mxu0
        %1719 = vmatprep.mubr.f32.mxu0 0.0
        %1720 = vmatmul.mubr.f32.gmra.mrb[0].mxu0 %v1643
        %v1721 = vpop.f32.mrb[0].mxu0
        %v1722 = vadd.f32 %v1633, %v1721
        %v1723 = vpop.f32.mrb[0].mxu0
        %1724 = vdwg.mxu0
        %v1725 = vmax.f32 %v1712, 0.0
        %v1726 = vmax.f32 %v1717, 0.0
        %v1727 = vmax.f32 %v1722, 0.0
        %v1728 = vld [vmem:[%s11] sm:$0xff]
        %v1729 = vld [vmem:[%s11 + $0x8] sm:$0xff]
        %v1730 = vld [vmem:[%s13] sm:$0x1]
        %v1732 = vlaneseq
        %v1733 = vshrl.u32 %v1732, 7
        %v1734 = vsub.s32 0, %v1733
        %v1735 = vrot.slane %v1730, %v1734
        %vm1737 = vcmask 130048
        %v1739 = vsel %vm1737, %v1725, 0
        %v1742 = vsel %vm1737, %v1726, 0
        %v1745 = vsel %vm1737, %v1727, 0
        %1747 = vmatprep.subr.mxu0 0.0
        %1748 = vmatpush1.msra.mxu0 %v1728
        %1749 = vmatprep.subr.mxu0 0.0
        %1750 = vmatpush1.msra.mxu0 %v1729
        %1751 = vmatprep.subr.mxu0 0.0
        %1752 = vmatpush1.msra.mxu0 0.0
        %1753 = vmatprep.subr.mxu0 0.0
        %1754 = vmatpush1.msra.mxu0 0.0
        %1755 = vmatprep.subr.mxu0 0.0
        %1756 = vmatpush1.msra.mxu0 0.0
        %1757 = vmatprep.subr.mxu0 0.0
        %1758 = vmatpush1.msra.mxu0 0.0
        %1759 = vmatprep.subr.mxu0 0.0
        %1760 = vmatpush1.msra.mxu0 0.0
        %1761 = vmatprep.subr.mxu0 0.0
        %1762 = vmatpush1.msra.mxu0 0.0
        %1763 = vmatprep.subr.mxu0 0.0
        %1764 = vmatpush1.msra.mxu0 0.0
        %1765 = vmatprep.subr.mxu0 0.0
        %1766 = vmatpush1.msra.mxu0 0.0
        %1767 = vmatprep.subr.mxu0 0.0
        %1768 = vmatpush1.msra.mxu0 0.0
        %1769 = vmatprep.subr.mxu0 0.0
        %1770 = vmatpush1.msra.mxu0 0.0
        %1771 = vmatprep.subr.mxu0 0.0
        %1772 = vmatpush1.msra.mxu0 0.0
        %1773 = vmatprep.subr.mxu0 0.0
        %1774 = vmatpush1.msra.mxu0 0.0
        %1775 = vmatprep.subr.mxu0 0.0
        %1776 = vmatpush1.msra.mxu0 0.0
        %1777 = vmatprep.subr.mxu0 0.0
        %1778 = vmatpush1.msra.mxu0 0.0
        %1779 = vmatprep.subr.mxu0 0.0
        %1780 = vmatpush1.msra.mxu0 0.0
        %1781 = vmatprep.subr.mxu0 0.0
        %1782 = vmatpush1.msra.mxu0 0.0
        %1783 = vmatprep.subr.mxu0 0.0
        %1784 = vmatpush1.msra.mxu0 0.0
        %1785 = vmatprep.subr.mxu0 0.0
        %1786 = vmatpush1.msra.mxu0 0.0
        %1787 = vmatprep.subr.mxu0 0.0
        %1788 = vmatpush1.msra.mxu0 0.0
        %1789 = vmatprep.subr.mxu0 0.0
        %1790 = vmatpush1.msra.mxu0 0.0
        %1791 = vmatprep.subr.mxu0 0.0
        %1792 = vmatpush1.msra.mxu0 0.0
        %1793 = vmatprep.subr.mxu0 0.0
        %1794 = vmatpush1.msra.mxu0 0.0
        %1795 = vmatprep.subr.mxu0 0.0
        %1796 = vmatpush1.msra.mxu0 0.0
        %1797 = vmatprep.subr.mxu0 0.0
        %1798 = vmatpush1.msra.mxu0 0.0
        %1799 = vmatprep.subr.mxu0 0.0
        %1800 = vmatpush1.msra.mxu0 0.0
        %1801 = vmatprep.subr.mxu0 0.0
        %1802 = vmatpush1.msra.mxu0 0.0
        %1803 = vmatprep.subr.mxu0 0.0
        %1804 = vmatpush1.msra.mxu0 0.0
        %1805 = vmatprep.subr.mxu0 0.0
        %1806 = vmatpush1.msra.mxu0 0.0
        %1807 = vmatprep.subr.mxu0 0.0
        %1808 = vmatpush1.msra.mxu0 0.0
        %1809 = vmatprep.subr.mxu0 0.0
        %1810 = vmatpush1.msra.mxu0 0.0
        %1811 = vmatprep.mubr.f32.mxu0 0.0
        %1812 = vmatmul.mubr.f32.gmra.mrb[0].mxu0 %v1739
        %v1813 = vpop.f32.mrb[0].mxu0
        %v1814 = vadd.f32 %v1735, %v1813
        %v1815 = vpop.f32.mrb[0].mxu0
        %1816 = vmatprep.mubr.f32.mxu0 0.0
        %1817 = vmatmul.mubr.f32.gmra.mrb[0].mxu0 %v1742
        %v1818 = vpop.f32.mrb[0].mxu0
        %v1819 = vadd.f32 %v1735, %v1818
        %v1820 = vpop.f32.mrb[0].mxu0
        %1821 = vmatprep.mubr.f32.mxu0 0.0
        %1822 = vmatmul.mubr.f32.gmra.mrb[0].mxu0 %v1745
        %v1823 = vpop.f32.mrb[0].mxu0
        %v1824 = vadd.f32 %v1735, %v1823
        %v1825 = vpop.f32.mrb[0].mxu0
        %1826 = vdwg.mxu0
        %v1827 = vlaneseq
        %v1828 = vshrl.u32 %v1827, 7
        %v1829 = vadd.s32 %v1828, 8
        %v1830 = vadd.s32 %v1828, 16
        %vm1831 = vcmp.eq.s32.totalorder %v1828, 0
        %vm1832 = vcmp.eq.s32.totalorder %v1829, 0
        %vm1833 = vcmp.eq.s32.totalorder %v1830, 0
        %v1834 = vld [vmem:[%s15] sm:$0x1]
        %v1836 = vlaneseq
        %v1837 = vshrl.u32 %v1836, 7
        %v1838 = vsub.s32 0, %v1837
        %v1839 = vrot.slane %v1834, %v1838
        %v1841 = vsel %vm1831, %v1839, %v1814
        %v1842 = vsel %vm1832, %v1839, %v1819
        %v1843 = vsel %vm1833, %v1839, %v1824
        %v1844 = vld [vmem:[%s17] sm:$0xff]
        %v1845 = vld [vmem:[%s17 + $0x8] sm:$0xff]
        %v1846 = vld [vmem:[%s17 + $0x10] sm:$0xff]
        %v1847 = vadd.f32 %v1841, %v1844
        %v1848 = vadd.f32 %v1842, %v1845
        %v1849 = vadd.f32 %v1843, %v1846
        %vm1850 = vcmask 261120
        %v1851 = vsel %vm1850, %v1847, 0.0
        %1852 = vadd.xlane.f32.xlu0 %v1851
        %v1853 = vpop.xlane.xlu0 %1852
        %v1854 = vsel %vm1850, %v1848, 0.0
        %1855 = vadd.xlane.f32.xlu0 %v1854
        %v1856 = vpop.xlane.xlu0 %1855
        %v1857 = vsel %vm1850, %v1849, 0.0
        %1858 = vadd.xlane.f32.xlu0 %v1857
        %v1859 = vpop.xlane.xlu0 %1858
        %v1860 = vrcp.pop 32.0
        %v1861 = vmul.f32 %v1853, %v1860
        %v1862 = vmul.f32 %v1856, %v1860
        %v1863 = vmul.f32 %v1859, %v1860
        %v1864 = vsub.f32 %v1847, %v1861
        %v1865 = vsub.f32 %v1848, %v1862
        %v1866 = vsub.f32 %v1849, %v1863
        %v1867 = vmul.f32 %v1864, %v1864
        %v1868 = vmul.f32 %v1865, %v1865
        %v1869 = vmul.f32 %v1866, %v1866
        %v1870 = vsel %vm1850, %v1867, 0.0
        %1871 = vadd.xlane.f32.xlu0 %v1870
        %v1872 = vpop.xlane.xlu0 %1871
        %v1873 = vsel %vm1850, %v1868, 0.0
        %1874 = vadd.xlane.f32.xlu0 %v1873
        %v1875 = vpop.xlane.xlu0 %1874
        %v1876 = vsel %vm1850, %v1869, 0.0
        %1877 = vadd.xlane.f32.xlu0 %v1876
        %v1878 = vpop.xlane.xlu0 %1877
        %v1879 = vmul.f32 %v1872, %v1860
        %v1880 = vmul.f32 %v1875, %v1860
        %v1881 = vmul.f32 %v1878, %v1860
        %v1882 = vadd.f32 %v1879, 1e-05
        %v1883 = vadd.f32 %v1880, 1e-05
        %v1884 = vadd.f32 %v1881, 1e-05
        %v1885 = vrsqrt.pop %v1882
        %v1886 = vrsqrt.pop %v1883
        %v1887 = vrsqrt.pop %v1884
        %v1888 = vmul.f32 %v1864, %v1885
        %v1889 = vmul.f32 %v1865, %v1886
        %v1890 = vmul.f32 %v1866, %v1887
        %v1891 = vld [vmem:[%s19] sm:$0x1]
        %v1893 = vlaneseq
        %v1894 = vshrl.u32 %v1893, 7
        %v1895 = vsub.s32 0, %v1894
        %v1896 = vrot.slane %v1891, %v1895
        %v1898 = vmul.f32 %v1888, %v1896
        %v1899 = vmul.f32 %v1889, %v1896
        %v1900 = vmul.f32 %v1890, %v1896
        %v1901 = vld [vmem:[%s21] sm:$0x1]
        %v1903 = vlaneseq
        %v1904 = vshrl.u32 %v1903, 7
        %v1905 = vsub.s32 0, %v1904
        %v1906 = vrot.slane %v1901, %v1905
        %v1908 = vadd.f32 %v1898, %v1906
        %v1909 = vadd.f32 %v1899, %v1906
        %v1910 = vadd.f32 %v1900, %v1906
        %v1911 = vlaneseq
        %v1912 = vand.u32 %v1911, 127
        %vm1913 = vcmp.lt.s32.totalorder %v1912, 17
        %v1914 = vld [vmem:[%s23] sm:$0xff]
        %v1915 = vld [vmem:[%s23 + $0x8] sm:$0xff]
        %v1916 = vld [vmem:[%s23 + $0x10] sm:$0xff]
        %v1917 = vld [vmem:[%s23 + $0x18] sm:$0xff]
        %v1918 = vld [vmem:[%s25] sm:$0x1]
        %v1920 = vlaneseq
        %v1921 = vshrl.u32 %v1920, 7
        %v1922 = vsub.s32 0, %v1921
        %v1923 = vrot.slane %v1918, %v1922
        %v1926 = vsel %vm1850, %v1908, 0
        %v1929 = vsel %vm1850, %v1909, 0
        %v1932 = vsel %vm1850, %v1910, 0
        %1934 = vmatprep.subr.mxu0 0.0
        %1935 = vmatpush1.msra.mxu0 %v1914
        %1936 = vmatprep.subr.mxu0 0.0
        %1937 = vmatpush1.msra.mxu0 %v1915
        %1938 = vmatprep.subr.mxu0 0.0
        %1939 = vmatpush1.msra.mxu0 %v1916
        %1940 = vmatprep.subr.mxu0 0.0
        %1941 = vmatpush1.msra.mxu0 %v1917
        %1942 = vmatprep.subr.mxu0 0.0
        %1943 = vmatpush1.msra.mxu0 0.0
        %1944 = vmatprep.subr.mxu0 0.0
        %1945 = vmatpush1.msra.mxu0 0.0
        %1946 = vmatprep.subr.mxu0 0.0
        %1947 = vmatpush1.msra.mxu0 0.0
        %1948 = vmatprep.subr.mxu0 0.0
        %1949 = vmatpush1.msra.mxu0 0.0
        %1950 = vmatprep.subr.mxu0 0.0
        %1951 = vmatpush1.msra.mxu0 0.0
        %1952 = vmatprep.subr.mxu0 0.0
        %1953 = vmatpush1.msra.mxu0 0.0
        %1954 = vmatprep.subr.mxu0 0.0
        %1955 = vmatpush1.msra.mxu0 0.0
        %1956 = vmatprep.subr.mxu0 0.0
        %1957 = vmatpush1.msra.mxu0 0.0
        %1958 = vmatprep.subr.mxu0 0.0
        %1959 = vmatpush1.msra.mxu0 0.0
        %1960 = vmatprep.subr.mxu0 0.0
        %1961 = vmatpush1.msra.mxu0 0.0
        %1962 = vmatprep.subr.mxu0 0.0
        %1963 = vmatpush1.msra.mxu0 0.0
        %1964 = vmatprep.subr.mxu0 0.0
        %1965 = vmatpush1.msra.mxu0 0.0
        %1966 = vmatprep.subr.mxu0 0.0
        %1967 = vmatpush1.msra.mxu0 0.0
        %1968 = vmatprep.subr.mxu0 0.0
        %1969 = vmatpush1.msra.mxu0 0.0
        %1970 = vmatprep.subr.mxu0 0.0
        %1971 = vmatpush1.msra.mxu0 0.0
        %1972 = vmatprep.subr.mxu0 0.0
        %1973 = vmatpush1.msra.mxu0 0.0
        %1974 = vmatprep.subr.mxu0 0.0
        %1975 = vmatpush1.msra.mxu0 0.0
        %1976 = vmatprep.subr.mxu0 0.0
        %1977 = vmatpush1.msra.mxu0 0.0
        %1978 = vmatprep.subr.mxu0 0.0
        %1979 = vmatpush1.msra.mxu0 0.0
        %1980 = vmatprep.subr.mxu0 0.0
        %1981 = vmatpush1.msra.mxu0 0.0
        %1982 = vmatprep.subr.mxu0 0.0
        %1983 = vmatpush1.msra.mxu0 0.0
        %1984 = vmatprep.subr.mxu0 0.0
        %1985 = vmatpush1.msra.mxu0 0.0
        %1986 = vmatprep.subr.mxu0 0.0
        %1987 = vmatpush1.msra.mxu0 0.0
        %1988 = vmatprep.subr.mxu0 0.0
        %1989 = vmatpush1.msra.mxu0 0.0
        %1990 = vmatprep.subr.mxu0 0.0
        %1991 = vmatpush1.msra.mxu0 0.0
        %1992 = vmatprep.subr.mxu0 0.0
        %1993 = vmatpush1.msra.mxu0 0.0
        %1994 = vmatprep.subr.mxu0 0.0
        %1995 = vmatpush1.msra.mxu0 0.0
        %1996 = vmatprep.subr.mxu0 0.0
        %1997 = vmatpush1.msra.mxu0 0.0
        %1998 = vmatprep.mubr.f32.mxu0 0.0
        %1999 = vmatmul.mubr.f32.gmra.mrb[0].mxu0 %v1926
        %v2000 = vpop.f32.mrb[0].mxu0
        %v2001 = vadd.f32 %v1923, %v2000
        %v2002 = vpop.f32.mrb[0].mxu0
        %2003 = vmatprep.mubr.f32.mxu0 0.0
        %2004 = vmatmul.mubr.f32.gmra.mrb[0].mxu0 %v1929
        %v2005 = vpop.f32.mrb[0].mxu0
        %v2006 = vadd.f32 %v1923, %v2005
        %v2007 = vpop.f32.mrb[0].mxu0
        %2008 = vmatprep.mubr.f32.mxu0 0.0
        %2009 = vmatmul.mubr.f32.gmra.mrb[0].mxu0 %v1932
        %v2010 = vpop.f32.mrb[0].mxu0
        %v2011 = vadd.f32 %v1923, %v2010
        %v2012 = vpop.f32.mrb[0].mxu0
        %2013 = vdwg.mxu0
        %v2014 = vld [vmem:[%s27] sm:$0xff]
        %v2015 = vld [vmem:[%s27 + $0x8] sm:$0xff]
        %v2016 = vld [vmem:[%s27 + $0x10] sm:$0xff]
        %v2017 = vld [vmem:[%s27 + $0x18] sm:$0xff]
        %v2018 = vld [vmem:[%s29] sm:$0x1]
        %v2020 = vlaneseq
        %v2021 = vshrl.u32 %v2020, 7
        %v2022 = vsub.s32 0, %v2021
        %v2023 = vrot.slane %v2018, %v2022
        %2025 = vmatprep.subr.mxu0 0.0
        %2026 = vmatpush1.msra.mxu0 %v2014
        %2027 = vmatprep.subr.mxu0 0.0
        %2028 = vmatpush1.msra.mxu0 %v2015
        %2029 = vmatprep.subr.mxu0 0.0
        %2030 = vmatpush1.msra.mxu0 %v2016
        %2031 = vmatprep.subr.mxu0 0.0
        %2032 = vmatpush1.msra.mxu0 %v2017
        %2033 = vmatprep.subr.mxu0 0.0
        %2034 = vmatpush1.msra.mxu0 0.0
        %2035 = vmatprep.subr.mxu0 0.0
        %2036 = vmatpush1.msra.mxu0 0.0
        %2037 = vmatprep.subr.mxu0 0.0
        %2038 = vmatpush1.msra.mxu0 0.0
        %2039 = vmatprep.subr.mxu0 0.0
        %2040 = vmatpush1.msra.mxu0 0.0
        %2041 = vmatprep.subr.mxu0 0.0
        %2042 = vmatpush1.msra.mxu0 0.0
        %2043 = vmatprep.subr.mxu0 0.0
        %2044 = vmatpush1.msra.mxu0 0.0
        %2045 = vmatprep.subr.mxu0 0.0
        %2046 = vmatpush1.msra.mxu0 0.0
        %2047 = vmatprep.subr.mxu0 0.0
        %2048 = vmatpush1.msra.mxu0 0.0
        %2049 = vmatprep.subr.mxu0 0.0
        %2050 = vmatpush1.msra.mxu0 0.0
        %2051 = vmatprep.subr.mxu0 0.0
        %2052 = vmatpush1.msra.mxu0 0.0
        %2053 = vmatprep.subr.mxu0 0.0
        %2054 = vmatpush1.msra.mxu0 0.0
        %2055 = vmatprep.subr.mxu0 0.0
        %2056 = vmatpush1.msra.mxu0 0.0
        %2057 = vmatprep.subr.mxu0 0.0
        %2058 = vmatpush1.msra.mxu0 0.0
        %2059 = vmatprep.subr.mxu0 0.0
        %2060 = vmatpush1.msra.mxu0 0.0
        %2061 = vmatprep.subr.mxu0 0.0
        %2062 = vmatpush1.msra.mxu0 0.0
        %2063 = vmatprep.subr.mxu0 0.0
        %2064 = vmatpush1.msra.mxu0 0.0
        %2065 = vmatprep.subr.mxu0 0.0
        %2066 = vmatpush1.msra.mxu0 0.0
        %2067 = vmatprep.subr.mxu0 0.0
        %2068 = vmatpush1.msra.mxu0 0.0
        %2069 = vmatprep.subr.mxu0 0.0
        %2070 = vmatpush1.msra.mxu0 0.0
        %2071 = vmatprep.subr.mxu0 0.0
        %2072 = vmatpush1.msra.mxu0 0.0
        %2073 = vmatprep.subr.mxu0 0.0
        %2074 = vmatpush1.msra.mxu0 0.0
        %2075 = vmatprep.subr.mxu0 0.0
        %2076 = vmatpush1.msra.mxu0 0.0
        %2077 = vmatprep.subr.mxu0 0.0
        %2078 = vmatpush1.msra.mxu0 0.0
        %2079 = vmatprep.subr.mxu0 0.0
        %2080 = vmatpush1.msra.mxu0 0.0
        %2081 = vmatprep.subr.mxu0 0.0
        %2082 = vmatpush1.msra.mxu0 0.0
        %2083 = vmatprep.subr.mxu0 0.0
        %2084 = vmatpush1.msra.mxu0 0.0
        %2085 = vmatprep.subr.mxu0 0.0
        %2086 = vmatpush1.msra.mxu0 0.0
        %2087 = vmatprep.subr.mxu0 0.0
        %2088 = vmatpush1.msra.mxu0 0.0
        %2089 = vmatprep.mubr.f32.mxu0 0.0
        %2090 = vmatmul.mubr.f32.gmra.mrb[0].mxu0 %v1926
        %v2091 = vpop.f32.mrb[0].mxu0
        %v2092 = vadd.f32 %v2023, %v2091
        %v2093 = vpop.f32.mrb[0].mxu0
        %2094 = vmatprep.mubr.f32.mxu0 0.0
        %2095 = vmatmul.mubr.f32.gmra.mrb[0].mxu0 %v1929
        %v2096 = vpop.f32.mrb[0].mxu0
        %v2097 = vadd.f32 %v2023, %v2096
        %v2098 = vpop.f32.mrb[0].mxu0
        %2099 = vmatprep.mubr.f32.mxu0 0.0
        %2100 = vmatmul.mubr.f32.gmra.mrb[0].mxu0 %v1932
        %v2101 = vpop.f32.mrb[0].mxu0
        %v2102 = vadd.f32 %v2023, %v2101
        %v2103 = vpop.f32.mrb[0].mxu0
        %2104 = vdwg.mxu0
        %v2105 = vld [vmem:[%s31] sm:$0xff]
        %v2106 = vld [vmem:[%s31 + $0x8] sm:$0xff]
        %v2107 = vld [vmem:[%s31 + $0x10] sm:$0xff]
        %v2108 = vld [vmem:[%s31 + $0x18] sm:$0xff]
        %v2109 = vld [vmem:[%s33] sm:$0x1]
        %v2111 = vlaneseq
        %v2112 = vshrl.u32 %v2111, 7
        %v2113 = vsub.s32 0, %v2112
        %v2114 = vrot.slane %v2109, %v2113
        %2116 = vmatprep.subr.mxu0 0.0
        %2117 = vmatpush1.msra.mxu0 %v2105
        %2118 = vmatprep.subr.mxu0 0.0
        %2119 = vmatpush1.msra.mxu0 %v2106
        %2120 = vmatprep.subr.mxu0 0.0
        %2121 = vmatpush1.msra.mxu0 %v2107
        %2122 = vmatprep.subr.mxu0 0.0
        %2123 = vmatpush1.msra.mxu0 %v2108
        %2124 = vmatprep.subr.mxu0 0.0
        %2125 = vmatpush1.msra.mxu0 0.0
        %2126 = vmatprep.subr.mxu0 0.0
        %2127 = vmatpush1.msra.mxu0 0.0
        %2128 = vmatprep.subr.mxu0 0.0
        %2129 = vmatpush1.msra.mxu0 0.0
        %2130 = vmatprep.subr.mxu0 0.0
        %2131 = vmatpush1.msra.mxu0 0.0
        %2132 = vmatprep.subr.mxu0 0.0
        %2133 = vmatpush1.msra.mxu0 0.0
        %2134 = vmatprep.subr.mxu0 0.0
        %2135 = vmatpush1.msra.mxu0 0.0
        %2136 = vmatprep.subr.mxu0 0.0
        %2137 = vmatpush1.msra.mxu0 0.0
        %2138 = vmatprep.subr.mxu0 0.0
        %2139 = vmatpush1.msra.mxu0 0.0
        %2140 = vmatprep.subr.mxu0 0.0
        %2141 = vmatpush1.msra.mxu0 0.0
        %2142 = vmatprep.subr.mxu0 0.0
        %2143 = vmatpush1.msra.mxu0 0.0
        %2144 = vmatprep.subr.mxu0 0.0
        %2145 = vmatpush1.msra.mxu0 0.0
        %2146 = vmatprep.subr.mxu0 0.0
        %2147 = vmatpush1.msra.mxu0 0.0
        %2148 = vmatprep.subr.mxu0 0.0
        %2149 = vmatpush1.msra.mxu0 0.0
        %2150 = vmatprep.subr.mxu0 0.0
        %2151 = vmatpush1.msra.mxu0 0.0
        %2152 = vmatprep.subr.mxu0 0.0
        %2153 = vmatpush1.msra.mxu0 0.0
        %2154 = vmatprep.subr.mxu0 0.0
        %2155 = vmatpush1.msra.mxu0 0.0
        %2156 = vmatprep.subr.mxu0 0.0
        %2157 = vmatpush1.msra.mxu0 0.0
        %2158 = vmatprep.subr.mxu0 0.0
        %2159 = vmatpush1.msra.mxu0 0.0
        %2160 = vmatprep.subr.mxu0 0.0
        %2161 = vmatpush1.msra.mxu0 0.0
        %2162 = vmatprep.subr.mxu0 0.0
        %2163 = vmatpush1.msra.mxu0 0.0
        %2164 = vmatprep.subr.mxu0 0.0
        %2165 = vmatpush1.msra.mxu0 0.0
        %2166 = vmatprep.subr.mxu0 0.0
        %2167 = vmatpush1.msra.mxu0 0.0
        %2168 = vmatprep.subr.mxu0 0.0
        %2169 = vmatpush1.msra.mxu0 0.0
        %2170 = vmatprep.subr.mxu0 0.0
        %2171 = vmatpush1.msra.mxu0 0.0
        %2172 = vmatprep.subr.mxu0 0.0
        %2173 = vmatpush1.msra.mxu0 0.0
        %2174 = vmatprep.subr.mxu0 0.0
        %2175 = vmatpush1.msra.mxu0 0.0
        %2176 = vmatprep.subr.mxu0 0.0
        %2177 = vmatpush1.msra.mxu0 0.0
        %2178 = vmatprep.subr.mxu0 0.0
        %2179 = vmatpush1.msra.mxu0 0.0
        %2180 = vmatprep.mubr.f32.mxu0 0.0
        %2181 = vmatmul.mubr.f32.gmra.mrb[0].mxu0 %v1926
        %v2182 = vpop.f32.mrb[0].mxu0
        %v2183 = vadd.f32 %v2114, %v2182
        %v2184 = vpop.f32.mrb[0].mxu0
        %2185 = vmatprep.mubr.f32.mxu0 0.0
        %2186 = vmatmul.mubr.f32.gmra.mrb[0].mxu0 %v1929
        %v2187 = vpop.f32.mrb[0].mxu0
        %v2188 = vadd.f32 %v2114, %v2187
        %v2189 = vpop.f32.mrb[0].mxu0
        %2190 = vmatprep.mubr.f32.mxu0 0.0
        %2191 = vmatmul.mubr.f32.gmra.mrb[0].mxu0 %v1932
        %v2192 = vpop.f32.mrb[0].mxu0
        %v2193 = vadd.f32 %v2114, %v2192
        %v2194 = vpop.f32.mrb[0].mxu0
        %2195 = vdwg.mxu0
        %v2197 = vsel %vm1635, %v2001, 0
        %v2200 = vsel %vm1635, %v2006, 0
        %v2203 = vsel %vm1635, %v2011, 0
        %v2206 = vsel %vm1635, %v2092, 0
        %v2209 = vsel %vm1635, %v2097, 0
        %v2212 = vsel %vm1635, %v2102, 0
        %2214 = vmatprep.subr.mxu0 0.0
        %2215 = vmatpush1.xpose.msra.mxu0 %v2206
        %2216 = vmatprep.subr.mxu0 0.0
        %2217 = vmatpush1.xpose.msra.mxu0 %v2209
        %2218 = vmatprep.subr.mxu0 0.0
        %2219 = vmatpush1.xpose.msra.mxu0 %v2212
        %2220 = vmatprep.subr.mxu0 0.0
        %2221 = vmatpush1.xpose.msra.mxu0 0.0
        %2222 = vmatprep.subr.mxu0 0.0
        %2223 = vmatpush1.xpose.msra.mxu0 0.0
        %2224 = vmatprep.subr.mxu0 0.0
        %2225 = vmatpush1.xpose.msra.mxu0 0.0
        %2226 = vmatprep.subr.mxu0 0.0
        %2227 = vmatpush1.xpose.msra.mxu0 0.0
        %2228 = vmatprep.subr.mxu0 0.0
        %2229 = vmatpush1.xpose.msra.mxu0 0.0
        %2230 = vmatprep.subr.mxu0 0.0
        %2231 = vmatpush1.xpose.msra.mxu0 0.0
        %2232 = vmatprep.subr.mxu0 0.0
        %2233 = vmatpush1.xpose.msra.mxu0 0.0
        %2234 = vmatprep.subr.mxu0 0.0
        %2235 = vmatpush1.xpose.msra.mxu0 0.0
        %2236 = vmatprep.subr.mxu0 0.0
        %2237 = vmatpush1.xpose.msra.mxu0 0.0
        %2238 = vmatprep.subr.mxu0 0.0
        %2239 = vmatpush1.xpose.msra.mxu0 0.0
        %2240 = vmatprep.subr.mxu0 0.0
        %2241 = vmatpush1.xpose.msra.mxu0 0.0
        %2242 = vmatprep.subr.mxu0 0.0
        %2243 = vmatpush1.xpose.msra.mxu0 0.0
        %2244 = vmatprep.subr.mxu0 0.0
        %2245 = vmatpush1.xpose.msra.mxu0 0.0
        %2246 = vmatprep.subr.mxu0 0.0
        %2247 = vmatpush1.xpose.msra.mxu0 0.0
        %2248 = vmatprep.subr.mxu0 0.0
        %2249 = vmatpush1.xpose.msra.mxu0 0.0
        %2250 = vmatprep.subr.mxu0 0.0
        %2251 = vmatpush1.xpose.msra.mxu0 0.0
        %2252 = vmatprep.subr.mxu0 0.0
        %2253 = vmatpush1.xpose.msra.mxu0 0.0
        %2254 = vmatprep.subr.mxu0 0.0
        %2255 = vmatpush1.xpose.msra.mxu0 0.0
        %2256 = vmatprep.subr.mxu0 0.0
        %2257 = vmatpush1.xpose.msra.mxu0 0.0
        %2258 = vmatprep.subr.mxu0 0.0
        %2259 = vmatpush1.xpose.msra.mxu0 0.0
        %2260 = vmatprep.subr.mxu0 0.0
        %2261 = vmatpush1.xpose.msra.mxu0 0.0
        %2262 = vmatprep.subr.mxu0 0.0
        %2263 = vmatpush1.xpose.msra.mxu0 0.0
        %2264 = vmatprep.subr.mxu0 0.0
        %2265 = vmatpush1.xpose.msra.mxu0 0.0
        %2266 = vmatprep.subr.mxu0 0.0
        %2267 = vmatpush1.xpose.msra.mxu0 0.0
        %2268 = vmatprep.subr.mxu0 0.0
        %2269 = vmatpush1.xpose.msra.mxu0 0.0
        %2270 = vmatprep.subr.mxu0 0.0
        %2271 = vmatpush1.xpose.msra.mxu0 0.0
        %2272 = vmatprep.subr.mxu0 0.0
        %2273 = vmatpush1.xpose.msra.mxu0 0.0
        %2274 = vmatprep.subr.mxu0 0.0
        %2275 = vmatpush1.xpose.msra.mxu0 0.0
        %2276 = vmatprep.subr.mxu0 0.0
        %2277 = vmatpush1.xpose.msra.mxu0 0.0
        %2278 = vmatprep.mubr.f32.mxu0 0.0
        %2279 = vmatmul.mubr.f32.gmra.mrb[0].mxu0 %v2197
        %v2280 = vpop.f32.mrb[0].mxu0
        %v2281 = vadd.f32 0.0, %v2280
        %v2282 = vpop.f32.mrb[0].mxu0
        %2283 = vmatprep.mubr.f32.mxu0 0.0
        %2284 = vmatmul.mubr.f32.gmra.mrb[0].mxu0 %v2200
        %v2285 = vpop.f32.mrb[0].mxu0
        %v2286 = vadd.f32 0.0, %v2285
        %v2287 = vpop.f32.mrb[0].mxu0
        %2288 = vmatprep.mubr.f32.mxu0 0.0
        %2289 = vmatmul.mubr.f32.gmra.mrb[0].mxu0 %v2203
        %v2290 = vpop.f32.mrb[0].mxu0
        %v2291 = vadd.f32 0.0, %v2290
        %v2292 = vpop.f32.mrb[0].mxu0
        %2293 = vdwg.mxu0
        %v2294 = vmul.f32 %v2281, 0.35355338
        %v2295 = vmul.f32 %v2286, 0.35355338
        %v2296 = vmul.f32 %v2291, 0.35355338
        %v2297 = vsel %vm1913, %v2294, -1e+30
        %v2298 = vsel %vm1913, %v2295, -1e+30
        %v2299 = vsel %vm1913, %v2296, -1e+30
        %vm2300 = vcmask 195584
        %v2301 = vsel %vm2300, %v2297, -inf
        %2302 = vmax.xlane.f32.xlu0 %v2301
        %v2303 = vpop.xlane.xlu0 %2302
        %v2304 = vsel %vm2300, %v2298, -inf
        %2305 = vmax.xlane.f32.xlu0 %v2304
        %v2306 = vpop.xlane.xlu0 %2305
        %v2307 = vsel %vm2300, %v2299, -inf
        %2308 = vmax.xlane.f32.xlu0 %v2307
        %v2309 = vpop.xlane.xlu0 %2308
        %v2310 = vsub.f32 %v2297, %v2303
        %v2311 = vsub.f32 %v2298, %v2306
        %v2312 = vsub.f32 %v2299, %v2309
        %v2313 = vmul.f32 %v2310, 1.442695
        %v2314 = vpow.pop %v2313
        %v2315 = vmul.f32 %v2311, 1.442695
        %v2316 = vpow.pop %v2315
        %v2317 = vmul.f32 %v2312, 1.442695
        %v2318 = vpow.pop %v2317
        %v2319 = vsel %vm2300, %v2314, 0.0
        %2320 = vadd.xlane.f32.xlu0 %v2319
        %v2321 = vpop.xlane.xlu0 %2320
        %v2322 = vsel %vm2300, %v2316, 0.0
        %2323 = vadd.xlane.f32.xlu0 %v2322
        %v2324 = vpop.xlane.xlu0 %2323
        %v2325 = vsel %vm2300, %v2318, 0.0
        %2326 = vadd.xlane.f32.xlu0 %v2325
        %v2327 = vpop.xlane.xlu0 %2326
        %v2328 = vrcp.pop %v2321
        %v2329 = vrcp.pop %v2324
        %v2330 = vrcp.pop %v2327
        %v2331 = vmul.f32 %v2314, %v2328
        %v2332 = vmul.f32 %v2316, %v2329
        %v2333 = vmul.f32 %v2318, %v2330
        %v2335 = vsel %vm2300, %v2331, 0
        %v2338 = vsel %vm2300, %v2332, 0
        %v2341 = vsel %vm2300, %v2333, 0
        %2343 = vmatprep.subr.mxu0 0.0
        %2344 = vmatpush1.msra.mxu0 %v2183
        %2345 = vmatprep.subr.mxu0 0.0
        %2346 = vmatpush1.msra.mxu0 %v2188
        %2347 = vmatprep.subr.mxu0 0.0
        %2348 = vmatpush1.msra.mxu0 %v2193
        %2349 = vmatprep.subr.mxu0 0.0
        %2350 = vmatpush1.msra.mxu0 0.0
        %2351 = vmatprep.subr.mxu0 0.0
        %2352 = vmatpush1.msra.mxu0 0.0
        %2353 = vmatprep.subr.mxu0 0.0
        %2354 = vmatpush1.msra.mxu0 0.0
        %2355 = vmatprep.subr.mxu0 0.0
        %2356 = vmatpush1.msra.mxu0 0.0
        %2357 = vmatprep.subr.mxu0 0.0
        %2358 = vmatpush1.msra.mxu0 0.0
        %2359 = vmatprep.subr.mxu0 0.0
        %2360 = vmatpush1.msra.mxu0 0.0
        %2361 = vmatprep.subr.mxu0 0.0
        %2362 = vmatpush1.msra.mxu0 0.0
        %2363 = vmatprep.subr.mxu0 0.0
        %2364 = vmatpush1.msra.mxu0 0.0
        %2365 = vmatprep.subr.mxu0 0.0
        %2366 = vmatpush1.msra.mxu0 0.0
        %2367 = vmatprep.subr.mxu0 0.0
        %2368 = vmatpush1.msra.mxu0 0.0
        %2369 = vmatprep.subr.mxu0 0.0
        %2370 = vmatpush1.msra.mxu0 0.0
        %2371 = vmatprep.subr.mxu0 0.0
        %2372 = vmatpush1.msra.mxu0 0.0
        %2373 = vmatprep.subr.mxu0 0.0
        %2374 = vmatpush1.msra.mxu0 0.0
        %2375 = vmatprep.subr.mxu0 0.0
        %2376 = vmatpush1.msra.mxu0 0.0
        %2377 = vmatprep.subr.mxu0 0.0
        %2378 = vmatpush1.msra.mxu0 0.0
        %2379 = vmatprep.subr.mxu0 0.0
        %2380 = vmatpush1.msra.mxu0 0.0
        %2381 = vmatprep.subr.mxu0 0.0
        %2382 = vmatpush1.msra.mxu0 0.0
        %2383 = vmatprep.subr.mxu0 0.0
        %2384 = vmatpush1.msra.mxu0 0.0
        %2385 = vmatprep.subr.mxu0 0.0
        %2386 = vmatpush1.msra.mxu0 0.0
        %2387 = vmatprep.subr.mxu0 0.0
        %2388 = vmatpush1.msra.mxu0 0.0
        %2389 = vmatprep.subr.mxu0 0.0
        %2390 = vmatpush1.msra.mxu0 0.0
        %2391 = vmatprep.subr.mxu0 0.0
        %2392 = vmatpush1.msra.mxu0 0.0
        %2393 = vmatprep.subr.mxu0 0.0
        %2394 = vmatpush1.msra.mxu0 0.0
        %2395 = vmatprep.subr.mxu0 0.0
        %2396 = vmatpush1.msra.mxu0 0.0
        %2397 = vmatprep.subr.mxu0 0.0
        %2398 = vmatpush1.msra.mxu0 0.0
        %2399 = vmatprep.subr.mxu0 0.0
        %2400 = vmatpush1.msra.mxu0 0.0
        %2401 = vmatprep.subr.mxu0 0.0
        %2402 = vmatpush1.msra.mxu0 0.0
        %2403 = vmatprep.subr.mxu0 0.0
        %2404 = vmatpush1.msra.mxu0 0.0
        %2405 = vmatprep.subr.mxu0 0.0
        %2406 = vmatpush1.msra.mxu0 0.0
        %2407 = vmatprep.mubr.f32.mxu0 0.0
        %2408 = vmatmul.mubr.f32.gmra.mrb[0].mxu0 %v2335
        %v2409 = vpop.f32.mrb[0].mxu0
        %v2410 = vadd.f32 0.0, %v2409
        %v2411 = vpop.f32.mrb[0].mxu0
        %2412 = vmatprep.mubr.f32.mxu0 0.0
        %2413 = vmatmul.mubr.f32.gmra.mrb[0].mxu0 %v2338
        %v2414 = vpop.f32.mrb[0].mxu0
        %v2415 = vadd.f32 0.0, %v2414
        %v2416 = vpop.f32.mrb[0].mxu0
        %2417 = vmatprep.mubr.f32.mxu0 0.0
        %2418 = vmatmul.mubr.f32.gmra.mrb[0].mxu0 %v2341
        %v2419 = vpop.f32.mrb[0].mxu0
        %v2420 = vadd.f32 0.0, %v2419
        %v2421 = vpop.f32.mrb[0].mxu0
        %2422 = vdwg.mxu0
        %v2423 = vld [vmem:[%s35] sm:$0xff]
        %s2424 = scalar_lea.vmem %s23, 32
        %v2425 = vld [vmem:[%s2424] sm:$0xff]
        %v2426 = vld [vmem:[%s2424 + $0x8] sm:$0xff]
        %v2427 = vld [vmem:[%s2424 + $0x10] sm:$0xff]
        %v2428 = vld [vmem:[%s2424 + $0x18] sm:$0xff]
        %s2429 = scalar_lea.vmem %s25, 1
        %v2430 = vld [vmem:[%s2429] sm:$0x1]
        %v2432 = vlaneseq
        %v2433 = vshrl.u32 %v2432, 7
        %v2434 = vsub.s32 0, %v2433
        %v2435 = vrot.slane %v2430, %v2434
        %2437 = vmatprep.subr.mxu0 0.0
        %2438 = vmatpush1.msra.mxu0 %v2425
        %2439 = vmatprep.subr.mxu0 0.0
        %2440 = vmatpush1.msra.mxu0 %v2426
        %2441 = vmatprep.subr.mxu0 0.0
        %2442 = vmatpush1.msra.mxu0 %v2427
        %2443 = vmatprep.subr.mxu0 0.0
        %2444 = vmatpush1.msra.mxu0 %v2428
        %2445 = vmatprep.subr.mxu0 0.0
        %2446 = vmatpush1.msra.mxu0 0.0
        %2447 = vmatprep.subr.mxu0 0.0
        %2448 = vmatpush1.msra.mxu0 0.0
        %2449 = vmatprep.subr.mxu0 0.0
        %2450 = vmatpush1.msra.mxu0 0.0
        %2451 = vmatprep.subr.mxu0 0.0
        %2452 = vmatpush1.msra.mxu0 0.0
        %2453 = vmatprep.subr.mxu0 0.0
        %2454 = vmatpush1.msra.mxu0 0.0
        %2455 = vmatprep.subr.mxu0 0.0
        %2456 = vmatpush1.msra.mxu0 0.0
        %2457 = vmatprep.subr.mxu0 0.0
        %2458 = vmatpush1.msra.mxu0 0.0
        %2459 = vmatprep.subr.mxu0 0.0
        %2460 = vmatpush1.msra.mxu0 0.0
        %2461 = vmatprep.subr.mxu0 0.0
        %2462 = vmatpush1.msra.mxu0 0.0
        %2463 = vmatprep.subr.mxu0 0.0
        %2464 = vmatpush1.msra.mxu0 0.0
        %2465 = vmatprep.subr.mxu0 0.0
        %2466 = vmatpush1.msra.mxu0 0.0
        %2467 = vmatprep.subr.mxu0 0.0
        %2468 = vmatpush1.msra.mxu0 0.0
        %2469 = vmatprep.subr.mxu0 0.0
        %2470 = vmatpush1.msra.mxu0 0.0
        %2471 = vmatprep.subr.mxu0 0.0
        %2472 = vmatpush1.msra.mxu0 0.0
        %2473 = vmatprep.subr.mxu0 0.0
        %2474 = vmatpush1.msra.mxu0 0.0
        %2475 = vmatprep.subr.mxu0 0.0
        %2476 = vmatpush1.msra.mxu0 0.0
        %2477 = vmatprep.subr.mxu0 0.0
        %2478 = vmatpush1.msra.mxu0 0.0
        %2479 = vmatprep.subr.mxu0 0.0
        %2480 = vmatpush1.msra.mxu0 0.0
        %2481 = vmatprep.subr.mxu0 0.0
        %2482 = vmatpush1.msra.mxu0 0.0
        %2483 = vmatprep.subr.mxu0 0.0
        %2484 = vmatpush1.msra.mxu0 0.0
        %2485 = vmatprep.subr.mxu0 0.0
        %2486 = vmatpush1.msra.mxu0 0.0
        %2487 = vmatprep.subr.mxu0 0.0
        %2488 = vmatpush1.msra.mxu0 0.0
        %2489 = vmatprep.subr.mxu0 0.0
        %2490 = vmatpush1.msra.mxu0 0.0
        %2491 = vmatprep.subr.mxu0 0.0
        %2492 = vmatpush1.msra.mxu0 0.0
        %2493 = vmatprep.subr.mxu0 0.0
        %2494 = vmatpush1.msra.mxu0 0.0
        %2495 = vmatprep.subr.mxu0 0.0
        %2496 = vmatpush1.msra.mxu0 0.0
        %2497 = vmatprep.subr.mxu0 0.0
        %2498 = vmatpush1.msra.mxu0 0.0
        %2499 = vmatprep.subr.mxu0 0.0
        %2500 = vmatpush1.msra.mxu0 0.0
        %2501 = vmatprep.mubr.f32.mxu0 0.0
        %2502 = vmatmul.mubr.f32.gmra.mrb[0].mxu0 %v1926
        %v2503 = vpop.f32.mrb[0].mxu0
        %v2504 = vadd.f32 %v2435, %v2503
        %v2505 = vpop.f32.mrb[0].mxu0
        %2506 = vmatprep.mubr.f32.mxu0 0.0
        %2507 = vmatmul.mubr.f32.gmra.mrb[0].mxu0 %v1929
        %v2508 = vpop.f32.mrb[0].mxu0
        %v2509 = vadd.f32 %v2435, %v2508
        %v2510 = vpop.f32.mrb[0].mxu0
        %2511 = vmatprep.mubr.f32.mxu0 0.0
        %2512 = vmatmul.mubr.f32.gmra.mrb[0].mxu0 %v1932
        %v2513 = vpop.f32.mrb[0].mxu0
        %v2514 = vadd.f32 %v2435, %v2513
        %v2515 = vpop.f32.mrb[0].mxu0
        %2516 = vdwg.mxu0
        %s2517 = scalar_lea.vmem %s27, 32
        %v2518 = vld [vmem:[%s2517] sm:$0xff]
        %v2519 = vld [vmem:[%s2517 + $0x8] sm:$0xff]
        %v2520 = vld [vmem:[%s2517 + $0x10] sm:$0xff]
        %v2521 = vld [vmem:[%s2517 + $0x18] sm:$0xff]
        %s2522 = scalar_lea.vmem %s29, 1
        %v2523 = vld [vmem:[%s2522] sm:$0x1]
        %v2525 = vlaneseq
        %v2526 = vshrl.u32 %v2525, 7
        %v2527 = vsub.s32 0, %v2526
        %v2528 = vrot.slane %v2523, %v2527
        %2530 = vmatprep.subr.mxu0 0.0
        %2531 = vmatpush1.msra.mxu0 %v2518
        %2532 = vmatprep.subr.mxu0 0.0
        %2533 = vmatpush1.msra.mxu0 %v2519
        %2534 = vmatprep.subr.mxu0 0.0
        %2535 = vmatpush1.msra.mxu0 %v2520
        %2536 = vmatprep.subr.mxu0 0.0
        %2537 = vmatpush1.msra.mxu0 %v2521
        %2538 = vmatprep.subr.mxu0 0.0
        %2539 = vmatpush1.msra.mxu0 0.0
        %2540 = vmatprep.subr.mxu0 0.0
        %2541 = vmatpush1.msra.mxu0 0.0
        %2542 = vmatprep.subr.mxu0 0.0
        %2543 = vmatpush1.msra.mxu0 0.0
        %2544 = vmatprep.subr.mxu0 0.0
        %2545 = vmatpush1.msra.mxu0 0.0
        %2546 = vmatprep.subr.mxu0 0.0
        %2547 = vmatpush1.msra.mxu0 0.0
        %2548 = vmatprep.subr.mxu0 0.0
        %2549 = vmatpush1.msra.mxu0 0.0
        %2550 = vmatprep.subr.mxu0 0.0
        %2551 = vmatpush1.msra.mxu0 0.0
        %2552 = vmatprep.subr.mxu0 0.0
        %2553 = vmatpush1.msra.mxu0 0.0
        %2554 = vmatprep.subr.mxu0 0.0
        %2555 = vmatpush1.msra.mxu0 0.0
        %2556 = vmatprep.subr.mxu0 0.0
        %2557 = vmatpush1.msra.mxu0 0.0
        %2558 = vmatprep.subr.mxu0 0.0
        %2559 = vmatpush1.msra.mxu0 0.0
        %2560 = vmatprep.subr.mxu0 0.0
        %2561 = vmatpush1.msra.mxu0 0.0
        %2562 = vmatprep.subr.mxu0 0.0
        %2563 = vmatpush1.msra.mxu0 0.0
        %2564 = vmatprep.subr.mxu0 0.0
        %2565 = vmatpush1.msra.mxu0 0.0
        %2566 = vmatprep.subr.mxu0 0.0
        %2567 = vmatpush1.msra.mxu0 0.0
        %2568 = vmatprep.subr.mxu0 0.0
        %2569 = vmatpush1.msra.mxu0 0.0
        %2570 = vmatprep.subr.mxu0 0.0
        %2571 = vmatpush1.msra.mxu0 0.0
        %2572 = vmatprep.subr.mxu0 0.0
        %2573 = vmatpush1.msra.mxu0 0.0
        %2574 = vmatprep.subr.mxu0 0.0
        %2575 = vmatpush1.msra.mxu0 0.0
        %2576 = vmatprep.subr.mxu0 0.0
        %2577 = vmatpush1.msra.mxu0 0.0
        %2578 = vmatprep.subr.mxu0 0.0
        %2579 = vmatpush1.msra.mxu0 0.0
        %2580 = vmatprep.subr.mxu0 0.0
        %2581 = vmatpush1.msra.mxu0 0.0
        %2582 = vmatprep.subr.mxu0 0.0
        %2583 = vmatpush1.msra.mxu0 0.0
        %2584 = vmatprep.subr.mxu0 0.0
        %2585 = vmatpush1.msra.mxu0 0.0
        %2586 = vmatprep.subr.mxu0 0.0
        %2587 = vmatpush1.msra.mxu0 0.0
        %2588 = vmatprep.subr.mxu0 0.0
        %2589 = vmatpush1.msra.mxu0 0.0
        %2590 = vmatprep.subr.mxu0 0.0
        %2591 = vmatpush1.msra.mxu0 0.0
        %2592 = vmatprep.subr.mxu0 0.0
        %2593 = vmatpush1.msra.mxu0 0.0
        %2594 = vmatprep.mubr.f32.mxu0 0.0
        %2595 = vmatmul.mubr.f32.gmra.mrb[0].mxu0 %v1926
        %v2596 = vpop.f32.mrb[0].mxu0
        %v2597 = vadd.f32 %v2528, %v2596
        %v2598 = vpop.f32.mrb[0].mxu0
        %2599 = vmatprep.mubr.f32.mxu0 0.0
        %2600 = vmatmul.mubr.f32.gmra.mrb[0].mxu0 %v1929
        %v2601 = vpop.f32.mrb[0].mxu0
        %v2602 = vadd.f32 %v2528, %v2601
        %v2603 = vpop.f32.mrb[0].mxu0
        %2604 = vmatprep.mubr.f32.mxu0 0.0
        %2605 = vmatmul.mubr.f32.gmra.mrb[0].mxu0 %v1932
        %v2606 = vpop.f32.mrb[0].mxu0
        %v2607 = vadd.f32 %v2528, %v2606
        %v2608 = vpop.f32.mrb[0].mxu0
        %2609 = vdwg.mxu0
        %s2610 = scalar_lea.vmem %s31, 32
        %v2611 = vld [vmem:[%s2610] sm:$0xff]
        %v2612 = vld [vmem:[%s2610 + $0x8] sm:$0xff]
        %v2613 = vld [vmem:[%s2610 + $0x10] sm:$0xff]
        %v2614 = vld [vmem:[%s2610 + $0x18] sm:$0xff]
        %s2615 = scalar_lea.vmem %s33, 1
        %v2616 = vld [vmem:[%s2615] sm:$0x1]
        %v2618 = vlaneseq
        %v2619 = vshrl.u32 %v2618, 7
        %v2620 = vsub.s32 0, %v2619
        %v2621 = vrot.slane %v2616, %v2620
        %2623 = vmatprep.subr.mxu0 0.0
        %2624 = vmatpush1.msra.mxu0 %v2611
        %2625 = vmatprep.subr.mxu0 0.0
        %2626 = vmatpush1.msra.mxu0 %v2612
        %2627 = vmatprep.subr.mxu0 0.0
        %2628 = vmatpush1.msra.mxu0 %v2613
        %2629 = vmatprep.subr.mxu0 0.0
        %2630 = vmatpush1.msra.mxu0 %v2614
        %2631 = vmatprep.subr.mxu0 0.0
        %2632 = vmatpush1.msra.mxu0 0.0
        %2633 = vmatprep.subr.mxu0 0.0
        %2634 = vmatpush1.msra.mxu0 0.0
        %2635 = vmatprep.subr.mxu0 0.0
        %2636 = vmatpush1.msra.mxu0 0.0
        %2637 = vmatprep.subr.mxu0 0.0
        %2638 = vmatpush1.msra.mxu0 0.0
        %2639 = vmatprep.subr.mxu0 0.0
        %2640 = vmatpush1.msra.mxu0 0.0
        %2641 = vmatprep.subr.mxu0 0.0
        %2642 = vmatpush1.msra.mxu0 0.0
        %2643 = vmatprep.subr.mxu0 0.0
        %2644 = vmatpush1.msra.mxu0 0.0
        %2645 = vmatprep.subr.mxu0 0.0
        %2646 = vmatpush1.msra.mxu0 0.0
        %2647 = vmatprep.subr.mxu0 0.0
        %2648 = vmatpush1.msra.mxu0 0.0
        %2649 = vmatprep.subr.mxu0 0.0
        %2650 = vmatpush1.msra.mxu0 0.0
        %2651 = vmatprep.subr.mxu0 0.0
        %2652 = vmatpush1.msra.mxu0 0.0
        %2653 = vmatprep.subr.mxu0 0.0
        %2654 = vmatpush1.msra.mxu0 0.0
        %2655 = vmatprep.subr.mxu0 0.0
        %2656 = vmatpush1.msra.mxu0 0.0
        %2657 = vmatprep.subr.mxu0 0.0
        %2658 = vmatpush1.msra.mxu0 0.0
        %2659 = vmatprep.subr.mxu0 0.0
        %2660 = vmatpush1.msra.mxu0 0.0
        %2661 = vmatprep.subr.mxu0 0.0
        %2662 = vmatpush1.msra.mxu0 0.0
        %2663 = vmatprep.subr.mxu0 0.0
        %2664 = vmatpush1.msra.mxu0 0.0
        %2665 = vmatprep.subr.mxu0 0.0
        %2666 = vmatpush1.msra.mxu0 0.0
        %2667 = vmatprep.subr.mxu0 0.0
        %2668 = vmatpush1.msra.mxu0 0.0
        %2669 = vmatprep.subr.mxu0 0.0
        %2670 = vmatpush1.msra.mxu0 0.0
        %2671 = vmatprep.subr.mxu0 0.0
        %2672 = vmatpush1.msra.mxu0 0.0
        %2673 = vmatprep.subr.mxu0 0.0
        %2674 = vmatpush1.msra.mxu0 0.0
        %2675 = vmatprep.subr.mxu0 0.0
        %2676 = vmatpush1.msra.mxu0 0.0
        %2677 = vmatprep.subr.mxu0 0.0
        %2678 = vmatpush1.msra.mxu0 0.0
        %2679 = vmatprep.subr.mxu0 0.0
        %2680 = vmatpush1.msra.mxu0 0.0
        %2681 = vmatprep.subr.mxu0 0.0
        %2682 = vmatpush1.msra.mxu0 0.0
        %2683 = vmatprep.subr.mxu0 0.0
        %2684 = vmatpush1.msra.mxu0 0.0
        %2685 = vmatprep.subr.mxu0 0.0
        %2686 = vmatpush1.msra.mxu0 0.0
        %2687 = vmatprep.mubr.f32.mxu0 0.0
        %2688 = vmatmul.mubr.f32.gmra.mrb[0].mxu0 %v1926
        %v2689 = vpop.f32.mrb[0].mxu0
        %v2690 = vadd.f32 %v2621, %v2689
        %v2691 = vpop.f32.mrb[0].mxu0
        %2692 = vmatprep.mubr.f32.mxu0 0.0
        %2693 = vmatmul.mubr.f32.gmra.mrb[0].mxu0 %v1929
        %v2694 = vpop.f32.mrb[0].mxu0
        %v2695 = vadd.f32 %v2621, %v2694
        %v2696 = vpop.f32.mrb[0].mxu0
        %2697 = vmatprep.mubr.f32.mxu0 0.0
        %2698 = vmatmul.mubr.f32.gmra.mrb[0].mxu0 %v1932
        %v2699 = vpop.f32.mrb[0].mxu0
        %v2700 = vadd.f32 %v2621, %v2699
        %v2701 = vpop.f32.mrb[0].mxu0
        %2702 = vdwg.mxu0
        %v2704 = vsel %vm1635, %v2504, 0
        %v2707 = vsel %vm1635, %v2509, 0
        %v2710 = vsel %vm1635, %v2514, 0
        %v2713 = vsel %vm1635, %v2597, 0
        %v2716 = vsel %vm1635, %v2602, 0
        %v2719 = vsel %vm1635, %v2607, 0
        %2721 = vmatprep.subr.mxu0 0.0
        %2722 = vmatpush1.xpose.msra.mxu0 %v2713
        %2723 = vmatprep.subr.mxu0 0.0
        %2724 = vmatpush1.xpose.msra.mxu0 %v2716
        %2725 = vmatprep.subr.mxu0 0.0
        %2726 = vmatpush1.xpose.msra.mxu0 %v2719
        %2727 = vmatprep.subr.mxu0 0.0
        %2728 = vmatpush1.xpose.msra.mxu0 0.0
        %2729 = vmatprep.subr.mxu0 0.0
        %2730 = vmatpush1.xpose.msra.mxu0 0.0
        %2731 = vmatprep.subr.mxu0 0.0
        %2732 = vmatpush1.xpose.msra.mxu0 0.0
        %2733 = vmatprep.subr.mxu0 0.0
        %2734 = vmatpush1.xpose.msra.mxu0 0.0
        %2735 = vmatprep.subr.mxu0 0.0
        %2736 = vmatpush1.xpose.msra.mxu0 0.0
        %2737 = vmatprep.subr.mxu0 0.0
        %2738 = vmatpush1.xpose.msra.mxu0 0.0
        %2739 = vmatprep.subr.mxu0 0.0
        %2740 = vmatpush1.xpose.msra.mxu0 0.0
        %2741 = vmatprep.subr.mxu0 0.0
        %2742 = vmatpush1.xpose.msra.mxu0 0.0
        %2743 = vmatprep.subr.mxu0 0.0
        %2744 = vmatpush1.xpose.msra.mxu0 0.0
        %2745 = vmatprep.subr.mxu0 0.0
        %2746 = vmatpush1.xpose.msra.mxu0 0.0
        %2747 = vmatprep.subr.mxu0 0.0
        %2748 = vmatpush1.xpose.msra.mxu0 0.0
        %2749 = vmatprep.subr.mxu0 0.0
        %2750 = vmatpush1.xpose.msra.mxu0 0.0
        %2751 = vmatprep.subr.mxu0 0.0
        %2752 = vmatpush1.xpose.msra.mxu0 0.0
        %2753 = vmatprep.subr.mxu0 0.0
        %2754 = vmatpush1.xpose.msra.mxu0 0.0
        %2755 = vmatprep.subr.mxu0 0.0
        %2756 = vmatpush1.xpose.msra.mxu0 0.0
        %2757 = vmatprep.subr.mxu0 0.0
        %2758 = vmatpush1.xpose.msra.mxu0 0.0
        %2759 = vmatprep.subr.mxu0 0.0
        %2760 = vmatpush1.xpose.msra.mxu0 0.0
        %2761 = vmatprep.subr.mxu0 0.0
        %2762 = vmatpush1.xpose.msra.mxu0 0.0
        %2763 = vmatprep.subr.mxu0 0.0
        %2764 = vmatpush1.xpose.msra.mxu0 0.0
        %2765 = vmatprep.subr.mxu0 0.0
        %2766 = vmatpush1.xpose.msra.mxu0 0.0
        %2767 = vmatprep.subr.mxu0 0.0
        %2768 = vmatpush1.xpose.msra.mxu0 0.0
        %2769 = vmatprep.subr.mxu0 0.0
        %2770 = vmatpush1.xpose.msra.mxu0 0.0
        %2771 = vmatprep.subr.mxu0 0.0
        %2772 = vmatpush1.xpose.msra.mxu0 0.0
        %2773 = vmatprep.subr.mxu0 0.0
        %2774 = vmatpush1.xpose.msra.mxu0 0.0
        %2775 = vmatprep.subr.mxu0 0.0
        %2776 = vmatpush1.xpose.msra.mxu0 0.0
        %2777 = vmatprep.subr.mxu0 0.0
        %2778 = vmatpush1.xpose.msra.mxu0 0.0
        %2779 = vmatprep.subr.mxu0 0.0
        %2780 = vmatpush1.xpose.msra.mxu0 0.0
        %2781 = vmatprep.subr.mxu0 0.0
        %2782 = vmatpush1.xpose.msra.mxu0 0.0
        %2783 = vmatprep.subr.mxu0 0.0
        %2784 = vmatpush1.xpose.msra.mxu0 0.0
        %2785 = vmatprep.mubr.f32.mxu0 0.0
        %2786 = vmatmul.mubr.f32.gmra.mrb[0].mxu0 %v2704
        %v2787 = vpop.f32.mrb[0].mxu0
        %v2788 = vadd.f32 0.0, %v2787
        %v2789 = vpop.f32.mrb[0].mxu0
        %2790 = vmatprep.mubr.f32.mxu0 0.0
        %2791 = vmatmul.mubr.f32.gmra.mrb[0].mxu0 %v2707
        %v2792 = vpop.f32.mrb[0].mxu0
        %v2793 = vadd.f32 0.0, %v2792
        %v2794 = vpop.f32.mrb[0].mxu0
        %2795 = vmatprep.mubr.f32.mxu0 0.0
        %2796 = vmatmul.mubr.f32.gmra.mrb[0].mxu0 %v2710
        %v2797 = vpop.f32.mrb[0].mxu0
        %v2798 = vadd.f32 0.0, %v2797
        %v2799 = vpop.f32.mrb[0].mxu0
        %2800 = vdwg.mxu0
        %v2801 = vmul.f32 %v2788, 0.35355338
        %v2802 = vmul.f32 %v2793, 0.35355338
        %v2803 = vmul.f32 %v2798, 0.35355338
        %v2804 = vsel %vm1913, %v2801, -1e+30
        %v2805 = vsel %vm1913, %v2802, -1e+30
        %v2806 = vsel %vm1913, %v2803, -1e+30
        %v2807 = vsel %vm2300, %v2804, -inf
        %2808 = vmax.xlane.f32.xlu0 %v2807
        %v2809 = vpop.xlane.xlu0 %2808
        %v2810 = vsel %vm2300, %v2805, -inf
        %2811 = vmax.xlane.f32.xlu0 %v2810
        %v2812 = vpop.xlane.xlu0 %2811
        %v2813 = vsel %vm2300, %v2806, -inf
        %2814 = vmax.xlane.f32.xlu0 %v2813
        %v2815 = vpop.xlane.xlu0 %2814
        %v2816 = vsub.f32 %v2804, %v2809
        %v2817 = vsub.f32 %v2805, %v2812
        %v2818 = vsub.f32 %v2806, %v2815
        %v2819 = vmul.f32 %v2816, 1.442695
        %v2820 = vpow.pop %v2819
        %v2821 = vmul.f32 %v2817, 1.442695
        %v2822 = vpow.pop %v2821
        %v2823 = vmul.f32 %v2818, 1.442695
        %v2824 = vpow.pop %v2823
        %v2825 = vsel %vm2300, %v2820, 0.0
        %2826 = vadd.xlane.f32.xlu0 %v2825
        %v2827 = vpop.xlane.xlu0 %2826
        %v2828 = vsel %vm2300, %v2822, 0.0
        %2829 = vadd.xlane.f32.xlu0 %v2828
        %v2830 = vpop.xlane.xlu0 %2829
        %v2831 = vsel %vm2300, %v2824, 0.0
        %2832 = vadd.xlane.f32.xlu0 %v2831
        %v2833 = vpop.xlane.xlu0 %2832
        %v2834 = vrcp.pop %v2827
        %v2835 = vrcp.pop %v2830
        %v2836 = vrcp.pop %v2833
        %v2837 = vmul.f32 %v2820, %v2834
        %v2838 = vmul.f32 %v2822, %v2835
        %v2839 = vmul.f32 %v2824, %v2836
        %v2841 = vsel %vm2300, %v2837, 0
        %v2844 = vsel %vm2300, %v2838, 0
        %v2847 = vsel %vm2300, %v2839, 0
        %2849 = vmatprep.subr.mxu0 0.0
        %2850 = vmatpush1.msra.mxu0 %v2690
        %2851 = vmatprep.subr.mxu0 0.0
        %2852 = vmatpush1.msra.mxu0 %v2695
        %2853 = vmatprep.subr.mxu0 0.0
        %2854 = vmatpush1.msra.mxu0 %v2700
        %2855 = vmatprep.subr.mxu0 0.0
        %2856 = vmatpush1.msra.mxu0 0.0
        %2857 = vmatprep.subr.mxu0 0.0
        %2858 = vmatpush1.msra.mxu0 0.0
        %2859 = vmatprep.subr.mxu0 0.0
        %2860 = vmatpush1.msra.mxu0 0.0
        %2861 = vmatprep.subr.mxu0 0.0
        %2862 = vmatpush1.msra.mxu0 0.0
        %2863 = vmatprep.subr.mxu0 0.0
        %2864 = vmatpush1.msra.mxu0 0.0
        %2865 = vmatprep.subr.mxu0 0.0
        %2866 = vmatpush1.msra.mxu0 0.0
        %2867 = vmatprep.subr.mxu0 0.0
        %2868 = vmatpush1.msra.mxu0 0.0
        %2869 = vmatprep.subr.mxu0 0.0
        %2870 = vmatpush1.msra.mxu0 0.0
        %2871 = vmatprep.subr.mxu0 0.0
        %2872 = vmatpush1.msra.mxu0 0.0
        %2873 = vmatprep.subr.mxu0 0.0
        %2874 = vmatpush1.msra.mxu0 0.0
        %2875 = vmatprep.subr.mxu0 0.0
        %2876 = vmatpush1.msra.mxu0 0.0
        %2877 = vmatprep.subr.mxu0 0.0
        %2878 = vmatpush1.msra.mxu0 0.0
        %2879 = vmatprep.subr.mxu0 0.0
        %2880 = vmatpush1.msra.mxu0 0.0
        %2881 = vmatprep.subr.mxu0 0.0
        %2882 = vmatpush1.msra.mxu0 0.0
        %2883 = vmatprep.subr.mxu0 0.0
        %2884 = vmatpush1.msra.mxu0 0.0
        %2885 = vmatprep.subr.mxu0 0.0
        %2886 = vmatpush1.msra.mxu0 0.0
        %2887 = vmatprep.subr.mxu0 0.0
        %2888 = vmatpush1.msra.mxu0 0.0
        %2889 = vmatprep.subr.mxu0 0.0
        %2890 = vmatpush1.msra.mxu0 0.0
        %2891 = vmatprep.subr.mxu0 0.0
        %2892 = vmatpush1.msra.mxu0 0.0
        %2893 = vmatprep.subr.mxu0 0.0
        %2894 = vmatpush1.msra.mxu0 0.0
        %2895 = vmatprep.subr.mxu0 0.0
        %2896 = vmatpush1.msra.mxu0 0.0
        %2897 = vmatprep.subr.mxu0 0.0
        %2898 = vmatpush1.msra.mxu0 0.0
        %2899 = vmatprep.subr.mxu0 0.0
        %2900 = vmatpush1.msra.mxu0 0.0
        %2901 = vmatprep.subr.mxu0 0.0
        %2902 = vmatpush1.msra.mxu0 0.0
        %2903 = vmatprep.subr.mxu0 0.0
        %2904 = vmatpush1.msra.mxu0 0.0
        %2905 = vmatprep.subr.mxu0 0.0
        %2906 = vmatpush1.msra.mxu0 0.0
        %2907 = vmatprep.subr.mxu0 0.0
        %2908 = vmatpush1.msra.mxu0 0.0
        %2909 = vmatprep.subr.mxu0 0.0
        %2910 = vmatpush1.msra.mxu0 0.0
        %2911 = vmatprep.subr.mxu0 0.0
        %2912 = vmatpush1.msra.mxu0 0.0
        %2913 = vmatprep.mubr.f32.mxu0 0.0
        %2914 = vmatmul.mubr.f32.gmra.mrb[0].mxu0 %v2841
        %v2915 = vpop.f32.mrb[0].mxu0
        %v2916 = vadd.f32 0.0, %v2915
        %v2917 = vpop.f32.mrb[0].mxu0
        %2918 = vmatprep.mubr.f32.mxu0 0.0
        %2919 = vmatmul.mubr.f32.gmra.mrb[0].mxu0 %v2844
        %v2920 = vpop.f32.mrb[0].mxu0
        %v2921 = vadd.f32 0.0, %v2920
        %v2922 = vpop.f32.mrb[0].mxu0
        %2923 = vmatprep.mubr.f32.mxu0 0.0
        %2924 = vmatmul.mubr.f32.gmra.mrb[0].mxu0 %v2847
        %v2925 = vpop.f32.mrb[0].mxu0
        %v2926 = vadd.f32 0.0, %v2925
        %v2927 = vpop.f32.mrb[0].mxu0
        %2928 = vdwg.mxu0
        %s2929 = scalar_lea.vmem %s35, 8
        %v2930 = vld [vmem:[%s2929] sm:$0xff]
        %v2932 = vsel %vm1635, %v2916, 0
        %v2935 = vsel %vm1635, %v2921, 0
        %v2938 = vsel %vm1635, %v2926, 0
        %2940 = vmatprep.subr.mxu0 0.0
        %2941 = vmatpush1.msra.mxu0 %v2930
        %2942 = vmatprep.subr.mxu0 0.0
        %2943 = vmatpush1.msra.mxu0 0.0
        %2944 = vmatprep.subr.mxu0 0.0
        %2945 = vmatpush1.msra.mxu0 0.0
        %2946 = vmatprep.subr.mxu0 0.0
        %2947 = vmatpush1.msra.mxu0 0.0
        %2948 = vmatprep.subr.mxu0 0.0
        %2949 = vmatpush1.msra.mxu0 0.0
        %2950 = vmatprep.subr.mxu0 0.0
        %2951 = vmatpush1.msra.mxu0 0.0
        %2952 = vmatprep.subr.mxu0 0.0
        %2953 = vmatpush1.msra.mxu0 0.0
        %2954 = vmatprep.subr.mxu0 0.0
        %2955 = vmatpush1.msra.mxu0 0.0
        %2956 = vmatprep.subr.mxu0 0.0
        %2957 = vmatpush1.msra.mxu0 0.0
        %2958 = vmatprep.subr.mxu0 0.0
        %2959 = vmatpush1.msra.mxu0 0.0
        %2960 = vmatprep.subr.mxu0 0.0
        %2961 = vmatpush1.msra.mxu0 0.0
        %2962 = vmatprep.subr.mxu0 0.0
        %2963 = vmatpush1.msra.mxu0 0.0
        %2964 = vmatprep.subr.mxu0 0.0
        %2965 = vmatpush1.msra.mxu0 0.0
        %2966 = vmatprep.subr.mxu0 0.0
        %2967 = vmatpush1.msra.mxu0 0.0
        %2968 = vmatprep.subr.mxu0 0.0
        %2969 = vmatpush1.msra.mxu0 0.0
        %2970 = vmatprep.subr.mxu0 0.0
        %2971 = vmatpush1.msra.mxu0 0.0
        %2972 = vmatprep.subr.mxu0 0.0
        %2973 = vmatpush1.msra.mxu0 0.0
        %2974 = vmatprep.subr.mxu0 0.0
        %2975 = vmatpush1.msra.mxu0 0.0
        %2976 = vmatprep.subr.mxu0 0.0
        %2977 = vmatpush1.msra.mxu0 0.0
        %2978 = vmatprep.subr.mxu0 0.0
        %2979 = vmatpush1.msra.mxu0 0.0
        %2980 = vmatprep.subr.mxu0 0.0
        %2981 = vmatpush1.msra.mxu0 0.0
        %2982 = vmatprep.subr.mxu0 0.0
        %2983 = vmatpush1.msra.mxu0 0.0
        %2984 = vmatprep.subr.mxu0 0.0
        %2985 = vmatpush1.msra.mxu0 0.0
        %2986 = vmatprep.subr.mxu0 0.0
        %2987 = vmatpush1.msra.mxu0 0.0
        %2988 = vmatprep.subr.mxu0 0.0
        %2989 = vmatpush1.msra.mxu0 0.0
        %2990 = vmatprep.subr.mxu0 0.0
        %2991 = vmatpush1.msra.mxu0 0.0
        %2992 = vmatprep.subr.mxu0 0.0
        %2993 = vmatpush1.msra.mxu0 0.0
        %2994 = vmatprep.subr.mxu0 0.0
        %2995 = vmatpush1.msra.mxu0 0.0
        %2996 = vmatprep.subr.mxu0 0.0
        %2997 = vmatpush1.msra.mxu0 0.0
        %2998 = vmatprep.subr.mxu0 0.0
        %2999 = vmatpush1.msra.mxu0 0.0
        %3000 = vmatprep.subr.mxu0 0.0
        %3001 = vmatpush1.msra.mxu0 0.0
        %3002 = vmatprep.subr.mxu0 0.0
        %3003 = vmatpush1.msra.mxu0 0.0
        %3004 = vmatprep.mubr.f32.mxu0 0.0
        %3005 = vmatmul.mubr.f32.gmra.mrb[0].mxu0 %v2932
        %v3006 = vpop.f32.mrb[0].mxu0
        %v3007 = vadd.f32 0.0, %v3006
        %v3008 = vpop.f32.mrb[0].mxu0
        %3009 = vmatprep.mubr.f32.mxu0 0.0
        %3010 = vmatmul.mubr.f32.gmra.mrb[0].mxu0 %v2935
        %v3011 = vpop.f32.mrb[0].mxu0
        %v3012 = vadd.f32 0.0, %v3011
        %v3013 = vpop.f32.mrb[0].mxu0
        %3014 = vmatprep.mubr.f32.mxu0 0.0
        %3015 = vmatmul.mubr.f32.gmra.mrb[0].mxu0 %v2938
        %v3016 = vpop.f32.mrb[0].mxu0
        %v3017 = vadd.f32 0.0, %v3016
        %v3018 = vpop.f32.mrb[0].mxu0
        %3019 = vdwg.mxu0
        %v3021 = vsel %vm1635, %v2410, 0
        %v3024 = vsel %vm1635, %v2415, 0
        %v3027 = vsel %vm1635, %v2420, 0
        %3029 = vmatprep.subr.mxu0 0.0
        %3030 = vmatpush1.msra.mxu0 %v2423
        %3031 = vmatprep.subr.mxu0 0.0
        %3032 = vmatpush1.msra.mxu0 0.0
        %3033 = vmatprep.subr.mxu0 0.0
        %3034 = vmatpush1.msra.mxu0 0.0
        %3035 = vmatprep.subr.mxu0 0.0
        %3036 = vmatpush1.msra.mxu0 0.0
        %3037 = vmatprep.subr.mxu0 0.0
        %3038 = vmatpush1.msra.mxu0 0.0
        %3039 = vmatprep.subr.mxu0 0.0
        %3040 = vmatpush1.msra.mxu0 0.0
        %3041 = vmatprep.subr.mxu0 0.0
        %3042 = vmatpush1.msra.mxu0 0.0
        %3043 = vmatprep.subr.mxu0 0.0
        %3044 = vmatpush1.msra.mxu0 0.0
        %3045 = vmatprep.subr.mxu0 0.0
        %3046 = vmatpush1.msra.mxu0 0.0
        %3047 = vmatprep.subr.mxu0 0.0
        %3048 = vmatpush1.msra.mxu0 0.0
        %3049 = vmatprep.subr.mxu0 0.0
        %3050 = vmatpush1.msra.mxu0 0.0
        %3051 = vmatprep.subr.mxu0 0.0
        %3052 = vmatpush1.msra.mxu0 0.0
        %3053 = vmatprep.subr.mxu0 0.0
        %3054 = vmatpush1.msra.mxu0 0.0
        %3055 = vmatprep.subr.mxu0 0.0
        %3056 = vmatpush1.msra.mxu0 0.0
        %3057 = vmatprep.subr.mxu0 0.0
        %3058 = vmatpush1.msra.mxu0 0.0
        %3059 = vmatprep.subr.mxu0 0.0
        %3060 = vmatpush1.msra.mxu0 0.0
        %3061 = vmatprep.subr.mxu0 0.0
        %3062 = vmatpush1.msra.mxu0 0.0
        %3063 = vmatprep.subr.mxu0 0.0
        %3064 = vmatpush1.msra.mxu0 0.0
        %3065 = vmatprep.subr.mxu0 0.0
        %3066 = vmatpush1.msra.mxu0 0.0
        %3067 = vmatprep.subr.mxu0 0.0
        %3068 = vmatpush1.msra.mxu0 0.0
        %3069 = vmatprep.subr.mxu0 0.0
        %3070 = vmatpush1.msra.mxu0 0.0
        %3071 = vmatprep.subr.mxu0 0.0
        %3072 = vmatpush1.msra.mxu0 0.0
        %3073 = vmatprep.subr.mxu0 0.0
        %3074 = vmatpush1.msra.mxu0 0.0
        %3075 = vmatprep.subr.mxu0 0.0
        %3076 = vmatpush1.msra.mxu0 0.0
        %3077 = vmatprep.subr.mxu0 0.0
        %3078 = vmatpush1.msra.mxu0 0.0
        %3079 = vmatprep.subr.mxu0 0.0
        %3080 = vmatpush1.msra.mxu0 0.0
        %3081 = vmatprep.subr.mxu0 0.0
        %3082 = vmatpush1.msra.mxu0 0.0
        %3083 = vmatprep.subr.mxu0 0.0
        %3084 = vmatpush1.msra.mxu0 0.0
        %3085 = vmatprep.subr.mxu0 0.0
        %3086 = vmatpush1.msra.mxu0 0.0
        %3087 = vmatprep.subr.mxu0 0.0
        %3088 = vmatpush1.msra.mxu0 0.0
        %3089 = vmatprep.subr.mxu0 0.0
        %3090 = vmatpush1.msra.mxu0 0.0
        %3091 = vmatprep.subr.mxu0 0.0
        %3092 = vmatpush1.msra.mxu0 0.0
        %3093 = vmatprep.mubr.f32.mxu0 0.0
        %3094 = vmatmul.mubr.f32.gmra.mrb[0].mxu0 %v3021
        %v3095 = vpop.f32.mrb[0].mxu0
        %v3096 = vadd.f32 %v3007, %v3095
        %v3097 = vpop.f32.mrb[0].mxu0
        %3098 = vmatprep.mubr.f32.mxu0 0.0
        %3099 = vmatmul.mubr.f32.gmra.mrb[0].mxu0 %v3024
        %v3100 = vpop.f32.mrb[0].mxu0
        %v3101 = vadd.f32 %v3012, %v3100
        %v3102 = vpop.f32.mrb[0].mxu0
        %3103 = vmatprep.mubr.f32.mxu0 0.0
        %3104 = vmatmul.mubr.f32.gmra.mrb[0].mxu0 %v3027
        %v3105 = vpop.f32.mrb[0].mxu0
        %v3106 = vadd.f32 %v3017, %v3105
        %v3107 = vpop.f32.mrb[0].mxu0
        %3108 = vdwg.mxu0
        %s3109 = scalar_lea.vmem %s23, 64
        %v3110 = vld [vmem:[%s3109] sm:$0xff]
        %v3111 = vld [vmem:[%s3109 + $0x8] sm:$0xff]
        %v3112 = vld [vmem:[%s3109 + $0x10] sm:$0xff]
        %v3113 = vld [vmem:[%s3109 + $0x18] sm:$0xff]
        %s3114 = scalar_lea.vmem %s25, 2
        %v3115 = vld [vmem:[%s3114] sm:$0x1]
        %v3117 = vlaneseq
        %v3118 = vshrl.u32 %v3117, 7
        %v3119 = vsub.s32 0, %v3118
        %v3120 = vrot.slane %v3115, %v3119
        %3122 = vmatprep.subr.mxu0 0.0
        %3123 = vmatpush1.msra.mxu0 %v3110
        %3124 = vmatprep.subr.mxu0 0.0
        %3125 = vmatpush1.msra.mxu0 %v3111
        %3126 = vmatprep.subr.mxu0 0.0
        %3127 = vmatpush1.msra.mxu0 %v3112
        %3128 = vmatprep.subr.mxu0 0.0
        %3129 = vmatpush1.msra.mxu0 %v3113
        %3130 = vmatprep.subr.mxu0 0.0
        %3131 = vmatpush1.msra.mxu0 0.0
        %3132 = vmatprep.subr.mxu0 0.0
        %3133 = vmatpush1.msra.mxu0 0.0
        %3134 = vmatprep.subr.mxu0 0.0
        %3135 = vmatpush1.msra.mxu0 0.0
        %3136 = vmatprep.subr.mxu0 0.0
        %3137 = vmatpush1.msra.mxu0 0.0
        %3138 = vmatprep.subr.mxu0 0.0
        %3139 = vmatpush1.msra.mxu0 0.0
        %3140 = vmatprep.subr.mxu0 0.0
        %3141 = vmatpush1.msra.mxu0 0.0
        %3142 = vmatprep.subr.mxu0 0.0
        %3143 = vmatpush1.msra.mxu0 0.0
        %3144 = vmatprep.subr.mxu0 0.0
        %3145 = vmatpush1.msra.mxu0 0.0
        %3146 = vmatprep.subr.mxu0 0.0
        %3147 = vmatpush1.msra.mxu0 0.0
        %3148 = vmatprep.subr.mxu0 0.0
        %3149 = vmatpush1.msra.mxu0 0.0
        %3150 = vmatprep.subr.mxu0 0.0
        %3151 = vmatpush1.msra.mxu0 0.0
        %3152 = vmatprep.subr.mxu0 0.0
        %3153 = vmatpush1.msra.mxu0 0.0
        %3154 = vmatprep.subr.mxu0 0.0
        %3155 = vmatpush1.msra.mxu0 0.0
        %3156 = vmatprep.subr.mxu0 0.0
        %3157 = vmatpush1.msra.mxu0 0.0
        %3158 = vmatprep.subr.mxu0 0.0
        %3159 = vmatpush1.msra.mxu0 0.0
        %3160 = vmatprep.subr.mxu0 0.0
        %3161 = vmatpush1.msra.mxu0 0.0
        %3162 = vmatprep.subr.mxu0 0.0
        %3163 = vmatpush1.msra.mxu0 0.0
        %3164 = vmatprep.subr.mxu0 0.0
        %3165 = vmatpush1.msra.mxu0 0.0
        %3166 = vmatprep.subr.mxu0 0.0
        %3167 = vmatpush1.msra.mxu0 0.0
        %3168 = vmatprep.subr.mxu0 0.0
        %3169 = vmatpush1.msra.mxu0 0.0
        %3170 = vmatprep.subr.mxu0 0.0
        %3171 = vmatpush1.msra.mxu0 0.0
        %3172 = vmatprep.subr.mxu0 0.0
        %3173 = vmatpush1.msra.mxu0 0.0
        %3174 = vmatprep.subr.mxu0 0.0
        %3175 = vmatpush1.msra.mxu0 0.0
        %3176 = vmatprep.subr.mxu0 0.0
        %3177 = vmatpush1.msra.mxu0 0.0
        %3178 = vmatprep.subr.mxu0 0.0
        %3179 = vmatpush1.msra.mxu0 0.0
        %3180 = vmatprep.subr.mxu0 0.0
        %3181 = vmatpush1.msra.mxu0 0.0
        %3182 = vmatprep.subr.mxu0 0.0
        %3183 = vmatpush1.msra.mxu0 0.0
        %3184 = vmatprep.subr.mxu0 0.0
        %3185 = vmatpush1.msra.mxu0 0.0
        %3186 = vmatprep.mubr.f32.mxu0 0.0
        %3187 = vmatmul.mubr.f32.gmra.mrb[0].mxu0 %v1926
        %v3188 = vpop.f32.mrb[0].mxu0
        %v3189 = vadd.f32 %v3120, %v3188
        %v3190 = vpop.f32.mrb[0].mxu0
        %3191 = vmatprep.mubr.f32.mxu0 0.0
        %3192 = vmatmul.mubr.f32.gmra.mrb[0].mxu0 %v1929
        %v3193 = vpop.f32.mrb[0].mxu0
        %v3194 = vadd.f32 %v3120, %v3193
        %v3195 = vpop.f32.mrb[0].mxu0
        %3196 = vmatprep.mubr.f32.mxu0 0.0
        %3197 = vmatmul.mubr.f32.gmra.mrb[0].mxu0 %v1932
        %v3198 = vpop.f32.mrb[0].mxu0
        %v3199 = vadd.f32 %v3120, %v3198
        %v3200 = vpop.f32.mrb[0].mxu0
        %3201 = vdwg.mxu0
        %s3202 = scalar_lea.vmem %s27, 64
        %v3203 = vld [vmem:[%s3202] sm:$0xff]
        %v3204 = vld [vmem:[%s3202 + $0x8] sm:$0xff]
        %v3205 = vld [vmem:[%s3202 + $0x10] sm:$0xff]
        %v3206 = vld [vmem:[%s3202 + $0x18] sm:$0xff]
        %s3207 = scalar_lea.vmem %s29, 2
        %v3208 = vld [vmem:[%s3207] sm:$0x1]
        %v3210 = vlaneseq
        %v3211 = vshrl.u32 %v3210, 7
        %v3212 = vsub.s32 0, %v3211
        %v3213 = vrot.slane %v3208, %v3212
        %3215 = vmatprep.subr.mxu0 0.0
        %3216 = vmatpush1.msra.mxu0 %v3203
        %3217 = vmatprep.subr.mxu0 0.0
        %3218 = vmatpush1.msra.mxu0 %v3204
        %3219 = vmatprep.subr.mxu0 0.0
        %3220 = vmatpush1.msra.mxu0 %v3205
        %3221 = vmatprep.subr.mxu0 0.0
        %3222 = vmatpush1.msra.mxu0 %v3206
        %3223 = vmatprep.subr.mxu0 0.0
        %3224 = vmatpush1.msra.mxu0 0.0
        %3225 = vmatprep.subr.mxu0 0.0
        %3226 = vmatpush1.msra.mxu0 0.0
        %3227 = vmatprep.subr.mxu0 0.0
        %3228 = vmatpush1.msra.mxu0 0.0
        %3229 = vmatprep.subr.mxu0 0.0
        %3230 = vmatpush1.msra.mxu0 0.0
        %3231 = vmatprep.subr.mxu0 0.0
        %3232 = vmatpush1.msra.mxu0 0.0
        %3233 = vmatprep.subr.mxu0 0.0
        %3234 = vmatpush1.msra.mxu0 0.0
        %3235 = vmatprep.subr.mxu0 0.0
        %3236 = vmatpush1.msra.mxu0 0.0
        %3237 = vmatprep.subr.mxu0 0.0
        %3238 = vmatpush1.msra.mxu0 0.0
        %3239 = vmatprep.subr.mxu0 0.0
        %3240 = vmatpush1.msra.mxu0 0.0
        %3241 = vmatprep.subr.mxu0 0.0
        %3242 = vmatpush1.msra.mxu0 0.0
        %3243 = vmatprep.subr.mxu0 0.0
        %3244 = vmatpush1.msra.mxu0 0.0
        %3245 = vmatprep.subr.mxu0 0.0
        %3246 = vmatpush1.msra.mxu0 0.0
        %3247 = vmatprep.subr.mxu0 0.0
        %3248 = vmatpush1.msra.mxu0 0.0
        %3249 = vmatprep.subr.mxu0 0.0
        %3250 = vmatpush1.msra.mxu0 0.0
        %3251 = vmatprep.subr.mxu0 0.0
        %3252 = vmatpush1.msra.mxu0 0.0
        %3253 = vmatprep.subr.mxu0 0.0
        %3254 = vmatpush1.msra.mxu0 0.0
        %3255 = vmatprep.subr.mxu0 0.0
        %3256 = vmatpush1.msra.mxu0 0.0
        %3257 = vmatprep.subr.mxu0 0.0
        %3258 = vmatpush1.msra.mxu0 0.0
        %3259 = vmatprep.subr.mxu0 0.0
        %3260 = vmatpush1.msra.mxu0 0.0
        %3261 = vmatprep.subr.mxu0 0.0
        %3262 = vmatpush1.msra.mxu0 0.0
        %3263 = vmatprep.subr.mxu0 0.0
        %3264 = vmatpush1.msra.mxu0 0.0
        %3265 = vmatprep.subr.mxu0 0.0
        %3266 = vmatpush1.msra.mxu0 0.0
        %3267 = vmatprep.subr.mxu0 0.0
        %3268 = vmatpush1.msra.mxu0 0.0
        %3269 = vmatprep.subr.mxu0 0.0
        %3270 = vmatpush1.msra.mxu0 0.0
        %3271 = vmatprep.subr.mxu0 0.0
        %3272 = vmatpush1.msra.mxu0 0.0
        %3273 = vmatprep.subr.mxu0 0.0
        %3274 = vmatpush1.msra.mxu0 0.0
        %3275 = vmatprep.subr.mxu0 0.0
        %3276 = vmatpush1.msra.mxu0 0.0
        %3277 = vmatprep.subr.mxu0 0.0
        %3278 = vmatpush1.msra.mxu0 0.0
        %3279 = vmatprep.mubr.f32.mxu0 0.0
        %3280 = vmatmul.mubr.f32.gmra.mrb[0].mxu0 %v1926
        %v3281 = vpop.f32.mrb[0].mxu0
        %v3282 = vadd.f32 %v3213, %v3281
        %v3283 = vpop.f32.mrb[0].mxu0
        %3284 = vmatprep.mubr.f32.mxu0 0.0
        %3285 = vmatmul.mubr.f32.gmra.mrb[0].mxu0 %v1929
        %v3286 = vpop.f32.mrb[0].mxu0
        %v3287 = vadd.f32 %v3213, %v3286
        %v3288 = vpop.f32.mrb[0].mxu0
        %3289 = vmatprep.mubr.f32.mxu0 0.0
        %3290 = vmatmul.mubr.f32.gmra.mrb[0].mxu0 %v1932
        %v3291 = vpop.f32.mrb[0].mxu0
        %v3292 = vadd.f32 %v3213, %v3291
        %v3293 = vpop.f32.mrb[0].mxu0
        %3294 = vdwg.mxu0
        %s3295 = scalar_lea.vmem %s31, 64
        %v3296 = vld [vmem:[%s3295] sm:$0xff]
        %v3297 = vld [vmem:[%s3295 + $0x8] sm:$0xff]
        %v3298 = vld [vmem:[%s3295 + $0x10] sm:$0xff]
        %v3299 = vld [vmem:[%s3295 + $0x18] sm:$0xff]
        %s3300 = scalar_lea.vmem %s33, 2
        %v3301 = vld [vmem:[%s3300] sm:$0x1]
        %v3303 = vlaneseq
        %v3304 = vshrl.u32 %v3303, 7
        %v3305 = vsub.s32 0, %v3304
        %v3306 = vrot.slane %v3301, %v3305
        %3308 = vmatprep.subr.mxu0 0.0
        %3309 = vmatpush1.msra.mxu0 %v3296
        %3310 = vmatprep.subr.mxu0 0.0
        %3311 = vmatpush1.msra.mxu0 %v3297
        %3312 = vmatprep.subr.mxu0 0.0
        %3313 = vmatpush1.msra.mxu0 %v3298
        %3314 = vmatprep.subr.mxu0 0.0
        %3315 = vmatpush1.msra.mxu0 %v3299
        %3316 = vmatprep.subr.mxu0 0.0
        %3317 = vmatpush1.msra.mxu0 0.0
        %3318 = vmatprep.subr.mxu0 0.0
        %3319 = vmatpush1.msra.mxu0 0.0
        %3320 = vmatprep.subr.mxu0 0.0
        %3321 = vmatpush1.msra.mxu0 0.0
        %3322 = vmatprep.subr.mxu0 0.0
        %3323 = vmatpush1.msra.mxu0 0.0
        %3324 = vmatprep.subr.mxu0 0.0
        %3325 = vmatpush1.msra.mxu0 0.0
        %3326 = vmatprep.subr.mxu0 0.0
        %3327 = vmatpush1.msra.mxu0 0.0
        %3328 = vmatprep.subr.mxu0 0.0
        %3329 = vmatpush1.msra.mxu0 0.0
        %3330 = vmatprep.subr.mxu0 0.0
        %3331 = vmatpush1.msra.mxu0 0.0
        %3332 = vmatprep.subr.mxu0 0.0
        %3333 = vmatpush1.msra.mxu0 0.0
        %3334 = vmatprep.subr.mxu0 0.0
        %3335 = vmatpush1.msra.mxu0 0.0
        %3336 = vmatprep.subr.mxu0 0.0
        %3337 = vmatpush1.msra.mxu0 0.0
        %3338 = vmatprep.subr.mxu0 0.0
        %3339 = vmatpush1.msra.mxu0 0.0
        %3340 = vmatprep.subr.mxu0 0.0
        %3341 = vmatpush1.msra.mxu0 0.0
        %3342 = vmatprep.subr.mxu0 0.0
        %3343 = vmatpush1.msra.mxu0 0.0
        %3344 = vmatprep.subr.mxu0 0.0
        %3345 = vmatpush1.msra.mxu0 0.0
        %3346 = vmatprep.subr.mxu0 0.0
        %3347 = vmatpush1.msra.mxu0 0.0
        %3348 = vmatprep.subr.mxu0 0.0
        %3349 = vmatpush1.msra.mxu0 0.0
        %3350 = vmatprep.subr.mxu0 0.0
        %3351 = vmatpush1.msra.mxu0 0.0
        %3352 = vmatprep.subr.mxu0 0.0
        %3353 = vmatpush1.msra.mxu0 0.0
        %3354 = vmatprep.subr.mxu0 0.0
        %3355 = vmatpush1.msra.mxu0 0.0
        %3356 = vmatprep.subr.mxu0 0.0
        %3357 = vmatpush1.msra.mxu0 0.0
        %3358 = vmatprep.subr.mxu0 0.0
        %3359 = vmatpush1.msra.mxu0 0.0
        %3360 = vmatprep.subr.mxu0 0.0
        %3361 = vmatpush1.msra.mxu0 0.0
        %3362 = vmatprep.subr.mxu0 0.0
        %3363 = vmatpush1.msra.mxu0 0.0
        %3364 = vmatprep.subr.mxu0 0.0
        %3365 = vmatpush1.msra.mxu0 0.0
        %3366 = vmatprep.subr.mxu0 0.0
        %3367 = vmatpush1.msra.mxu0 0.0
        %3368 = vmatprep.subr.mxu0 0.0
        %3369 = vmatpush1.msra.mxu0 0.0
        %3370 = vmatprep.subr.mxu0 0.0
        %3371 = vmatpush1.msra.mxu0 0.0
        %3372 = vmatprep.mubr.f32.mxu0 0.0
        %3373 = vmatmul.mubr.f32.gmra.mrb[0].mxu0 %v1926
        %v3374 = vpop.f32.mrb[0].mxu0
        %v3375 = vadd.f32 %v3306, %v3374
        %v3376 = vpop.f32.mrb[0].mxu0
        %3377 = vmatprep.mubr.f32.mxu0 0.0
        %3378 = vmatmul.mubr.f32.gmra.mrb[0].mxu0 %v1929
        %v3379 = vpop.f32.mrb[0].mxu0
        %v3380 = vadd.f32 %v3306, %v3379
        %v3381 = vpop.f32.mrb[0].mxu0
        %3382 = vmatprep.mubr.f32.mxu0 0.0
        %3383 = vmatmul.mubr.f32.gmra.mrb[0].mxu0 %v1932
        %v3384 = vpop.f32.mrb[0].mxu0
        %v3385 = vadd.f32 %v3306, %v3384
        %v3386 = vpop.f32.mrb[0].mxu0
        %3387 = vdwg.mxu0
        %v3389 = vsel %vm1635, %v3189, 0
        %v3392 = vsel %vm1635, %v3194, 0
        %v3395 = vsel %vm1635, %v3199, 0
        %v3398 = vsel %vm1635, %v3282, 0
        %v3401 = vsel %vm1635, %v3287, 0
        %v3404 = vsel %vm1635, %v3292, 0
        %3406 = vmatprep.subr.mxu0 0.0
        %3407 = vmatpush1.xpose.msra.mxu0 %v3398
        %3408 = vmatprep.subr.mxu0 0.0
        %3409 = vmatpush1.xpose.msra.mxu0 %v3401
        %3410 = vmatprep.subr.mxu0 0.0
        %3411 = vmatpush1.xpose.msra.mxu0 %v3404
        %3412 = vmatprep.subr.mxu0 0.0
        %3413 = vmatpush1.xpose.msra.mxu0 0.0
        %3414 = vmatprep.subr.mxu0 0.0
        %3415 = vmatpush1.xpose.msra.mxu0 0.0
        %3416 = vmatprep.subr.mxu0 0.0
        %3417 = vmatpush1.xpose.msra.mxu0 0.0
        %3418 = vmatprep.subr.mxu0 0.0
        %3419 = vmatpush1.xpose.msra.mxu0 0.0
        %3420 = vmatprep.subr.mxu0 0.0
        %3421 = vmatpush1.xpose.msra.mxu0 0.0
        %3422 = vmatprep.subr.mxu0 0.0
        %3423 = vmatpush1.xpose.msra.mxu0 0.0
        %3424 = vmatprep.subr.mxu0 0.0
        %3425 = vmatpush1.xpose.msra.mxu0 0.0
        %3426 = vmatprep.subr.mxu0 0.0
        %3427 = vmatpush1.xpose.msra.mxu0 0.0
        %3428 = vmatprep.subr.mxu0 0.0
        %3429 = vmatpush1.xpose.msra.mxu0 0.0
        %3430 = vmatprep.subr.mxu0 0.0
        %3431 = vmatpush1.xpose.msra.mxu0 0.0
        %3432 = vmatprep.subr.mxu0 0.0
        %3433 = vmatpush1.xpose.msra.mxu0 0.0
        %3434 = vmatprep.subr.mxu0 0.0
        %3435 = vmatpush1.xpose.msra.mxu0 0.0
        %3436 = vmatprep.subr.mxu0 0.0
        %3437 = vmatpush1.xpose.msra.mxu0 0.0
        %3438 = vmatprep.subr.mxu0 0.0
        %3439 = vmatpush1.xpose.msra.mxu0 0.0
        %3440 = vmatprep.subr.mxu0 0.0
        %3441 = vmatpush1.xpose.msra.mxu0 0.0
        %3442 = vmatprep.subr.mxu0 0.0
        %3443 = vmatpush1.xpose.msra.mxu0 0.0
        %3444 = vmatprep.subr.mxu0 0.0
        %3445 = vmatpush1.xpose.msra.mxu0 0.0
        %3446 = vmatprep.subr.mxu0 0.0
        %3447 = vmatpush1.xpose.msra.mxu0 0.0
        %3448 = vmatprep.subr.mxu0 0.0
        %3449 = vmatpush1.xpose.msra.mxu0 0.0
        %3450 = vmatprep.subr.mxu0 0.0
        %3451 = vmatpush1.xpose.msra.mxu0 0.0
        %3452 = vmatprep.subr.mxu0 0.0
        %3453 = vmatpush1.xpose.msra.mxu0 0.0
        %3454 = vmatprep.subr.mxu0 0.0
        %3455 = vmatpush1.xpose.msra.mxu0 0.0
        %3456 = vmatprep.subr.mxu0 0.0
        %3457 = vmatpush1.xpose.msra.mxu0 0.0
        %3458 = vmatprep.subr.mxu0 0.0
        %3459 = vmatpush1.xpose.msra.mxu0 0.0
        %3460 = vmatprep.subr.mxu0 0.0
        %3461 = vmatpush1.xpose.msra.mxu0 0.0
        %3462 = vmatprep.subr.mxu0 0.0
        %3463 = vmatpush1.xpose.msra.mxu0 0.0
        %3464 = vmatprep.subr.mxu0 0.0
        %3465 = vmatpush1.xpose.msra.mxu0 0.0
        %3466 = vmatprep.subr.mxu0 0.0
        %3467 = vmatpush1.xpose.msra.mxu0 0.0
        %3468 = vmatprep.subr.mxu0 0.0
        %3469 = vmatpush1.xpose.msra.mxu0 0.0
        %3470 = vmatprep.mubr.f32.mxu0 0.0
        %3471 = vmatmul.mubr.f32.gmra.mrb[0].mxu0 %v3389
        %v3472 = vpop.f32.mrb[0].mxu0
        %v3473 = vadd.f32 0.0, %v3472
        %v3474 = vpop.f32.mrb[0].mxu0
        %3475 = vmatprep.mubr.f32.mxu0 0.0
        %3476 = vmatmul.mubr.f32.gmra.mrb[0].mxu0 %v3392
        %v3477 = vpop.f32.mrb[0].mxu0
        %v3478 = vadd.f32 0.0, %v3477
        %v3479 = vpop.f32.mrb[0].mxu0
        %3480 = vmatprep.mubr.f32.mxu0 0.0
        %3481 = vmatmul.mubr.f32.gmra.mrb[0].mxu0 %v3395
        %v3482 = vpop.f32.mrb[0].mxu0
        %v3483 = vadd.f32 0.0, %v3482
        %v3484 = vpop.f32.mrb[0].mxu0
        %3485 = vdwg.mxu0
        %v3486 = vmul.f32 %v3473, 0.35355338
        %v3487 = vmul.f32 %v3478, 0.35355338
        %v3488 = vmul.f32 %v3483, 0.35355338
        %v3489 = vsel %vm1913, %v3486, -1e+30
        %v3490 = vsel %vm1913, %v3487, -1e+30
        %v3491 = vsel %vm1913, %v3488, -1e+30
        %v3492 = vsel %vm2300, %v3489, -inf
        %3493 = vmax.xlane.f32.xlu0 %v3492
        %v3494 = vpop.xlane.xlu0 %3493
        %v3495 = vsel %vm2300, %v3490, -inf
        %3496 = vmax.xlane.f32.xlu0 %v3495
        %v3497 = vpop.xlane.xlu0 %3496
        %v3498 = vsel %vm2300, %v3491, -inf
        %3499 = vmax.xlane.f32.xlu0 %v3498
        %v3500 = vpop.xlane.xlu0 %3499
        %v3501 = vsub.f32 %v3489, %v3494
        %v3502 = vsub.f32 %v3490, %v3497
        %v3503 = vsub.f32 %v3491, %v3500
        %v3504 = vmul.f32 %v3501, 1.442695
        %v3505 = vpow.pop %v3504
        %v3506 = vmul.f32 %v3502, 1.442695
        %v3507 = vpow.pop %v3506
        %v3508 = vmul.f32 %v3503, 1.442695
        %v3509 = vpow.pop %v3508
        %v3510 = vsel %vm2300, %v3505, 0.0
        %3511 = vadd.xlane.f32.xlu0 %v3510
        %v3512 = vpop.xlane.xlu0 %3511
        %v3513 = vsel %vm2300, %v3507, 0.0
        %3514 = vadd.xlane.f32.xlu0 %v3513
        %v3515 = vpop.xlane.xlu0 %3514
        %v3516 = vsel %vm2300, %v3509, 0.0
        %3517 = vadd.xlane.f32.xlu0 %v3516
        %v3518 = vpop.xlane.xlu0 %3517
        %v3519 = vrcp.pop %v3512
        %v3520 = vrcp.pop %v3515
        %v3521 = vrcp.pop %v3518
        %v3522 = vmul.f32 %v3505, %v3519
        %v3523 = vmul.f32 %v3507, %v3520
        %v3524 = vmul.f32 %v3509, %v3521
        %v3526 = vsel %vm2300, %v3522, 0
        %v3529 = vsel %vm2300, %v3523, 0
        %v3532 = vsel %vm2300, %v3524, 0
        %3534 = vmatprep.subr.mxu0 0.0
        %3535 = vmatpush1.msra.mxu0 %v3375
        %3536 = vmatprep.subr.mxu0 0.0
        %3537 = vmatpush1.msra.mxu0 %v3380
        %3538 = vmatprep.subr.mxu0 0.0
        %3539 = vmatpush1.msra.mxu0 %v3385
        %3540 = vmatprep.subr.mxu0 0.0
        %3541 = vmatpush1.msra.mxu0 0.0
        %3542 = vmatprep.subr.mxu0 0.0
        %3543 = vmatpush1.msra.mxu0 0.0
        %3544 = vmatprep.subr.mxu0 0.0
        %3545 = vmatpush1.msra.mxu0 0.0
        %3546 = vmatprep.subr.mxu0 0.0
        %3547 = vmatpush1.msra.mxu0 0.0
        %3548 = vmatprep.subr.mxu0 0.0
        %3549 = vmatpush1.msra.mxu0 0.0
        %3550 = vmatprep.subr.mxu0 0.0
        %3551 = vmatpush1.msra.mxu0 0.0
        %3552 = vmatprep.subr.mxu0 0.0
        %3553 = vmatpush1.msra.mxu0 0.0
        %3554 = vmatprep.subr.mxu0 0.0
        %3555 = vmatpush1.msra.mxu0 0.0
        %3556 = vmatprep.subr.mxu0 0.0
        %3557 = vmatpush1.msra.mxu0 0.0
        %3558 = vmatprep.subr.mxu0 0.0
        %3559 = vmatpush1.msra.mxu0 0.0
        %3560 = vmatprep.subr.mxu0 0.0
        %3561 = vmatpush1.msra.mxu0 0.0
        %3562 = vmatprep.subr.mxu0 0.0
        %3563 = vmatpush1.msra.mxu0 0.0
        %3564 = vmatprep.subr.mxu0 0.0
        %3565 = vmatpush1.msra.mxu0 0.0
        %3566 = vmatprep.subr.mxu0 0.0
        %3567 = vmatpush1.msra.mxu0 0.0
        %3568 = vmatprep.subr.mxu0 0.0
        %3569 = vmatpush1.msra.mxu0 0.0
        %3570 = vmatprep.subr.mxu0 0.0
        %3571 = vmatpush1.msra.mxu0 0.0
        %3572 = vmatprep.subr.mxu0 0.0
        %3573 = vmatpush1.msra.mxu0 0.0
        %3574 = vmatprep.subr.mxu0 0.0
        %3575 = vmatpush1.msra.mxu0 0.0
        %3576 = vmatprep.subr.mxu0 0.0
        %3577 = vmatpush1.msra.mxu0 0.0
        %3578 = vmatprep.subr.mxu0 0.0
        %3579 = vmatpush1.msra.mxu0 0.0
        %3580 = vmatprep.subr.mxu0 0.0
        %3581 = vmatpush1.msra.mxu0 0.0
        %3582 = vmatprep.subr.mxu0 0.0
        %3583 = vmatpush1.msra.mxu0 0.0
        %3584 = vmatprep.subr.mxu0 0.0
        %3585 = vmatpush1.msra.mxu0 0.0
        %3586 = vmatprep.subr.mxu0 0.0
        %3587 = vmatpush1.msra.mxu0 0.0
        %3588 = vmatprep.subr.mxu0 0.0
        %3589 = vmatpush1.msra.mxu0 0.0
        %3590 = vmatprep.subr.mxu0 0.0
        %3591 = vmatpush1.msra.mxu0 0.0
        %3592 = vmatprep.subr.mxu0 0.0
        %3593 = vmatpush1.msra.mxu0 0.0
        %3594 = vmatprep.subr.mxu0 0.0
        %3595 = vmatpush1.msra.mxu0 0.0
        %3596 = vmatprep.subr.mxu0 0.0
        %3597 = vmatpush1.msra.mxu0 0.0
        %3598 = vmatprep.mubr.f32.mxu0 0.0
        %3599 = vmatmul.mubr.f32.gmra.mrb[0].mxu0 %v3526
        %v3600 = vpop.f32.mrb[0].mxu0
        %v3601 = vadd.f32 0.0, %v3600
        %v3602 = vpop.f32.mrb[0].mxu0
        %3603 = vmatprep.mubr.f32.mxu0 0.0
        %3604 = vmatmul.mubr.f32.gmra.mrb[0].mxu0 %v3529
        %v3605 = vpop.f32.mrb[0].mxu0
        %v3606 = vadd.f32 0.0, %v3605
        %v3607 = vpop.f32.mrb[0].mxu0
        %3608 = vmatprep.mubr.f32.mxu0 0.0
        %3609 = vmatmul.mubr.f32.gmra.mrb[0].mxu0 %v3532
        %v3610 = vpop.f32.mrb[0].mxu0
        %v3611 = vadd.f32 0.0, %v3610
        %v3612 = vpop.f32.mrb[0].mxu0
        %3613 = vdwg.mxu0
        %s3614 = scalar_lea.vmem %s35, 16
        %v3615 = vld [vmem:[%s3614] sm:$0xff]
        %v3617 = vsel %vm1635, %v3601, 0
        %v3620 = vsel %vm1635, %v3606, 0
        %v3623 = vsel %vm1635, %v3611, 0
        %3625 = vmatprep.subr.mxu0 0.0
        %3626 = vmatpush1.msra.mxu0 %v3615
        %3627 = vmatprep.subr.mxu0 0.0
        %3628 = vmatpush1.msra.mxu0 0.0
        %3629 = vmatprep.subr.mxu0 0.0
        %3630 = vmatpush1.msra.mxu0 0.0
        %3631 = vmatprep.subr.mxu0 0.0
        %3632 = vmatpush1.msra.mxu0 0.0
        %3633 = vmatprep.subr.mxu0 0.0
        %3634 = vmatpush1.msra.mxu0 0.0
        %3635 = vmatprep.subr.mxu0 0.0
        %3636 = vmatpush1.msra.mxu0 0.0
        %3637 = vmatprep.subr.mxu0 0.0
        %3638 = vmatpush1.msra.mxu0 0.0
        %3639 = vmatprep.subr.mxu0 0.0
        %3640 = vmatpush1.msra.mxu0 0.0
        %3641 = vmatprep.subr.mxu0 0.0
        %3642 = vmatpush1.msra.mxu0 0.0
        %3643 = vmatprep.subr.mxu0 0.0
        %3644 = vmatpush1.msra.mxu0 0.0
        %3645 = vmatprep.subr.mxu0 0.0
        %3646 = vmatpush1.msra.mxu0 0.0
        %3647 = vmatprep.subr.mxu0 0.0
        %3648 = vmatpush1.msra.mxu0 0.0
        %3649 = vmatprep.subr.mxu0 0.0
        %3650 = vmatpush1.msra.mxu0 0.0
        %3651 = vmatprep.subr.mxu0 0.0
        %3652 = vmatpush1.msra.mxu0 0.0
        %3653 = vmatprep.subr.mxu0 0.0
        %3654 = vmatpush1.msra.mxu0 0.0
        %3655 = vmatprep.subr.mxu0 0.0
        %3656 = vmatpush1.msra.mxu0 0.0
        %3657 = vmatprep.subr.mxu0 0.0
        %3658 = vmatpush1.msra.mxu0 0.0
        %3659 = vmatprep.subr.mxu0 0.0
        %3660 = vmatpush1.msra.mxu0 0.0
        %3661 = vmatprep.subr.mxu0 0.0
        %3662 = vmatpush1.msra.mxu0 0.0
        %3663 = vmatprep.subr.mxu0 0.0
        %3664 = vmatpush1.msra.mxu0 0.0
        %3665 = vmatprep.subr.mxu0 0.0
        %3666 = vmatpush1.msra.mxu0 0.0
        %3667 = vmatprep.subr.mxu0 0.0
        %3668 = vmatpush1.msra.mxu0 0.0
        %3669 = vmatprep.subr.mxu0 0.0
        %3670 = vmatpush1.msra.mxu0 0.0
        %3671 = vmatprep.subr.mxu0 0.0
        %3672 = vmatpush1.msra.mxu0 0.0
        %3673 = vmatprep.subr.mxu0 0.0
        %3674 = vmatpush1.msra.mxu0 0.0
        %3675 = vmatprep.subr.mxu0 0.0
        %3676 = vmatpush1.msra.mxu0 0.0
        %3677 = vmatprep.subr.mxu0 0.0
        %3678 = vmatpush1.msra.mxu0 0.0
        %3679 = vmatprep.subr.mxu0 0.0
        %3680 = vmatpush1.msra.mxu0 0.0
        %3681 = vmatprep.subr.mxu0 0.0
        %3682 = vmatpush1.msra.mxu0 0.0
        %3683 = vmatprep.subr.mxu0 0.0
        %3684 = vmatpush1.msra.mxu0 0.0
        %3685 = vmatprep.subr.mxu0 0.0
        %3686 = vmatpush1.msra.mxu0 0.0
        %3687 = vmatprep.subr.mxu0 0.0
        %3688 = vmatpush1.msra.mxu0 0.0
        %3689 = vmatprep.mubr.f32.mxu0 0.0
        %3690 = vmatmul.mubr.f32.gmra.mrb[0].mxu0 %v3617
        %v3691 = vpop.f32.mrb[0].mxu0
        %v3692 = vadd.f32 0.0, %v3691
        %v3693 = vpop.f32.mrb[0].mxu0
        %3694 = vmatprep.mubr.f32.mxu0 0.0
        %3695 = vmatmul.mubr.f32.gmra.mrb[0].mxu0 %v3620
        %v3696 = vpop.f32.mrb[0].mxu0
        %v3697 = vadd.f32 0.0, %v3696
        %v3698 = vpop.f32.mrb[0].mxu0
        %3699 = vmatprep.mubr.f32.mxu0 0.0
        %3700 = vmatmul.mubr.f32.gmra.mrb[0].mxu0 %v3623
        %v3701 = vpop.f32.mrb[0].mxu0
        %v3702 = vadd.f32 0.0, %v3701
        %v3703 = vpop.f32.mrb[0].mxu0
        %3704 = vdwg.mxu0
        %v3705 = vadd.f32 %v3096, %v3692
        %v3706 = vadd.f32 %v3101, %v3697
        %v3707 = vadd.f32 %v3106, %v3702
        %s3708 = scalar_lea.vmem %s23, 96
        %v3709 = vld [vmem:[%s3708] sm:$0xff]
        %v3710 = vld [vmem:[%s3708 + $0x8] sm:$0xff]
        %v3711 = vld [vmem:[%s3708 + $0x10] sm:$0xff]
        %v3712 = vld [vmem:[%s3708 + $0x18] sm:$0xff]
        %s3713 = scalar_lea.vmem %s25, 3
        %v3714 = vld [vmem:[%s3713] sm:$0x1]
        %v3716 = vlaneseq
        %v3717 = vshrl.u32 %v3716, 7
        %v3718 = vsub.s32 0, %v3717
        %v3719 = vrot.slane %v3714, %v3718
        %3721 = vmatprep.subr.mxu0 0.0
        %3722 = vmatpush1.msra.mxu0 %v3709
        %3723 = vmatprep.subr.mxu0 0.0
        %3724 = vmatpush1.msra.mxu0 %v3710
        %3725 = vmatprep.subr.mxu0 0.0
        %3726 = vmatpush1.msra.mxu0 %v3711
        %3727 = vmatprep.subr.mxu0 0.0
        %3728 = vmatpush1.msra.mxu0 %v3712
        %3729 = vmatprep.subr.mxu0 0.0
        %3730 = vmatpush1.msra.mxu0 0.0
        %3731 = vmatprep.subr.mxu0 0.0
        %3732 = vmatpush1.msra.mxu0 0.0
        %3733 = vmatprep.subr.mxu0 0.0
        %3734 = vmatpush1.msra.mxu0 0.0
        %3735 = vmatprep.subr.mxu0 0.0
        %3736 = vmatpush1.msra.mxu0 0.0
        %3737 = vmatprep.subr.mxu0 0.0
        %3738 = vmatpush1.msra.mxu0 0.0
        %3739 = vmatprep.subr.mxu0 0.0
        %3740 = vmatpush1.msra.mxu0 0.0
        %3741 = vmatprep.subr.mxu0 0.0
        %3742 = vmatpush1.msra.mxu0 0.0
        %3743 = vmatprep.subr.mxu0 0.0
        %3744 = vmatpush1.msra.mxu0 0.0
        %3745 = vmatprep.subr.mxu0 0.0
        %3746 = vmatpush1.msra.mxu0 0.0
        %3747 = vmatprep.subr.mxu0 0.0
        %3748 = vmatpush1.msra.mxu0 0.0
        %3749 = vmatprep.subr.mxu0 0.0
        %3750 = vmatpush1.msra.mxu0 0.0
        %3751 = vmatprep.subr.mxu0 0.0
        %3752 = vmatpush1.msra.mxu0 0.0
        %3753 = vmatprep.subr.mxu0 0.0
        %3754 = vmatpush1.msra.mxu0 0.0
        %3755 = vmatprep.subr.mxu0 0.0
        %3756 = vmatpush1.msra.mxu0 0.0
        %3757 = vmatprep.subr.mxu0 0.0
        %3758 = vmatpush1.msra.mxu0 0.0
        %3759 = vmatprep.subr.mxu0 0.0
        %3760 = vmatpush1.msra.mxu0 0.0
        %3761 = vmatprep.subr.mxu0 0.0
        %3762 = vmatpush1.msra.mxu0 0.0
        %3763 = vmatprep.subr.mxu0 0.0
        %3764 = vmatpush1.msra.mxu0 0.0
        %3765 = vmatprep.subr.mxu0 0.0
        %3766 = vmatpush1.msra.mxu0 0.0
        %3767 = vmatprep.subr.mxu0 0.0
        %3768 = vmatpush1.msra.mxu0 0.0
        %3769 = vmatprep.subr.mxu0 0.0
        %3770 = vmatpush1.msra.mxu0 0.0
        %3771 = vmatprep.subr.mxu0 0.0
        %3772 = vmatpush1.msra.mxu0 0.0
        %3773 = vmatprep.subr.mxu0 0.0
        %3774 = vmatpush1.msra.mxu0 0.0
        %3775 = vmatprep.subr.mxu0 0.0
        %3776 = vmatpush1.msra.mxu0 0.0
        %3777 = vmatprep.subr.mxu0 0.0
        %3778 = vmatpush1.msra.mxu0 0.0
        %3779 = vmatprep.subr.mxu0 0.0
        %3780 = vmatpush1.msra.mxu0 0.0
        %3781 = vmatprep.subr.mxu0 0.0
        %3782 = vmatpush1.msra.mxu0 0.0
        %3783 = vmatprep.subr.mxu0 0.0
        %3784 = vmatpush1.msra.mxu0 0.0
        %3785 = vmatprep.mubr.f32.mxu0 0.0
        %3786 = vmatmul.mubr.f32.gmra.mrb[0].mxu0 %v1926
        %v3787 = vpop.f32.mrb[0].mxu0
        %v3788 = vadd.f32 %v3719, %v3787
        %v3789 = vpop.f32.mrb[0].mxu0
        %3790 = vmatprep.mubr.f32.mxu0 0.0
        %3791 = vmatmul.mubr.f32.gmra.mrb[0].mxu0 %v1929
        %v3792 = vpop.f32.mrb[0].mxu0
        %v3793 = vadd.f32 %v3719, %v3792
        %v3794 = vpop.f32.mrb[0].mxu0
        %3795 = vmatprep.mubr.f32.mxu0 0.0
        %3796 = vmatmul.mubr.f32.gmra.mrb[0].mxu0 %v1932
        %v3797 = vpop.f32.mrb[0].mxu0
        %v3798 = vadd.f32 %v3719, %v3797
        %v3799 = vpop.f32.mrb[0].mxu0
        %3800 = vdwg.mxu0
        %s3801 = scalar_lea.vmem %s27, 96
        %v3802 = vld [vmem:[%s3801] sm:$0xff]
        %v3803 = vld [vmem:[%s3801 + $0x8] sm:$0xff]
        %v3804 = vld [vmem:[%s3801 + $0x10] sm:$0xff]
        %v3805 = vld [vmem:[%s3801 + $0x18] sm:$0xff]
        %s3806 = scalar_lea.vmem %s29, 3
        %v3807 = vld [vmem:[%s3806] sm:$0x1]
        %v3809 = vlaneseq
        %v3810 = vshrl.u32 %v3809, 7
        %v3811 = vsub.s32 0, %v3810
        %v3812 = vrot.slane %v3807, %v3811
        %3814 = vmatprep.subr.mxu0 0.0
        %3815 = vmatpush1.msra.mxu0 %v3802
        %3816 = vmatprep.subr.mxu0 0.0
        %3817 = vmatpush1.msra.mxu0 %v3803
        %3818 = vmatprep.subr.mxu0 0.0
        %3819 = vmatpush1.msra.mxu0 %v3804
        %3820 = vmatprep.subr.mxu0 0.0
        %3821 = vmatpush1.msra.mxu0 %v3805
        %3822 = vmatprep.subr.mxu0 0.0
        %3823 = vmatpush1.msra.mxu0 0.0
        %3824 = vmatprep.subr.mxu0 0.0
        %3825 = vmatpush1.msra.mxu0 0.0
        %3826 = vmatprep.subr.mxu0 0.0
        %3827 = vmatpush1.msra.mxu0 0.0
        %3828 = vmatprep.subr.mxu0 0.0
        %3829 = vmatpush1.msra.mxu0 0.0
        %3830 = vmatprep.subr.mxu0 0.0
        %3831 = vmatpush1.msra.mxu0 0.0
        %3832 = vmatprep.subr.mxu0 0.0
        %3833 = vmatpush1.msra.mxu0 0.0
        %3834 = vmatprep.subr.mxu0 0.0
        %3835 = vmatpush1.msra.mxu0 0.0
        %3836 = vmatprep.subr.mxu0 0.0
        %3837 = vmatpush1.msra.mxu0 0.0
        %3838 = vmatprep.subr.mxu0 0.0
        %3839 = vmatpush1.msra.mxu0 0.0
        %3840 = vmatprep.subr.mxu0 0.0
        %3841 = vmatpush1.msra.mxu0 0.0
        %3842 = vmatprep.subr.mxu0 0.0
        %3843 = vmatpush1.msra.mxu0 0.0
        %3844 = vmatprep.subr.mxu0 0.0
        %3845 = vmatpush1.msra.mxu0 0.0
        %3846 = vmatprep.subr.mxu0 0.0
        %3847 = vmatpush1.msra.mxu0 0.0
        %3848 = vmatprep.subr.mxu0 0.0
        %3849 = vmatpush1.msra.mxu0 0.0
        %3850 = vmatprep.subr.mxu0 0.0
        %3851 = vmatpush1.msra.mxu0 0.0
        %3852 = vmatprep.subr.mxu0 0.0
        %3853 = vmatpush1.msra.mxu0 0.0
        %3854 = vmatprep.subr.mxu0 0.0
        %3855 = vmatpush1.msra.mxu0 0.0
        %3856 = vmatprep.subr.mxu0 0.0
        %3857 = vmatpush1.msra.mxu0 0.0
        %3858 = vmatprep.subr.mxu0 0.0
        %3859 = vmatpush1.msra.mxu0 0.0
        %3860 = vmatprep.subr.mxu0 0.0
        %3861 = vmatpush1.msra.mxu0 0.0
        %3862 = vmatprep.subr.mxu0 0.0
        %3863 = vmatpush1.msra.mxu0 0.0
        %3864 = vmatprep.subr.mxu0 0.0
        %3865 = vmatpush1.msra.mxu0 0.0
        %3866 = vmatprep.subr.mxu0 0.0
        %3867 = vmatpush1.msra.mxu0 0.0
        %3868 = vmatprep.subr.mxu0 0.0
        %3869 = vmatpush1.msra.mxu0 0.0
        %3870 = vmatprep.subr.mxu0 0.0
        %3871 = vmatpush1.msra.mxu0 0.0
        %3872 = vmatprep.subr.mxu0 0.0
        %3873 = vmatpush1.msra.mxu0 0.0
        %3874 = vmatprep.subr.mxu0 0.0
        %3875 = vmatpush1.msra.mxu0 0.0
        %3876 = vmatprep.subr.mxu0 0.0
        %3877 = vmatpush1.msra.mxu0 0.0
        %3878 = vmatprep.mubr.f32.mxu0 0.0
        %3879 = vmatmul.mubr.f32.gmra.mrb[0].mxu0 %v1926
        %v3880 = vpop.f32.mrb[0].mxu0
        %v3881 = vadd.f32 %v3812, %v3880
        %v3882 = vpop.f32.mrb[0].mxu0
        %3883 = vmatprep.mubr.f32.mxu0 0.0
        %3884 = vmatmul.mubr.f32.gmra.mrb[0].mxu0 %v1929
        %v3885 = vpop.f32.mrb[0].mxu0
        %v3886 = vadd.f32 %v3812, %v3885
        %v3887 = vpop.f32.mrb[0].mxu0
        %3888 = vmatprep.mubr.f32.mxu0 0.0
        %3889 = vmatmul.mubr.f32.gmra.mrb[0].mxu0 %v1932
        %v3890 = vpop.f32.mrb[0].mxu0
        %v3891 = vadd.f32 %v3812, %v3890
        %v3892 = vpop.f32.mrb[0].mxu0
        %3893 = vdwg.mxu0
        %s3894 = scalar_lea.vmem %s31, 96
        %v3895 = vld [vmem:[%s3894] sm:$0xff]
        %v3896 = vld [vmem:[%s3894 + $0x8] sm:$0xff]
        %v3897 = vld [vmem:[%s3894 + $0x10] sm:$0xff]
        %v3898 = vld [vmem:[%s3894 + $0x18] sm:$0xff]
        %s3899 = scalar_lea.vmem %s33, 3
        %v3900 = vld [vmem:[%s3899] sm:$0x1]
        %v3902 = vlaneseq
        %v3903 = vshrl.u32 %v3902, 7
        %v3904 = vsub.s32 0, %v3903
        %v3905 = vrot.slane %v3900, %v3904
        %3907 = vmatprep.subr.mxu0 0.0
        %3908 = vmatpush1.msra.mxu0 %v3895
        %3909 = vmatprep.subr.mxu0 0.0
        %3910 = vmatpush1.msra.mxu0 %v3896
        %3911 = vmatprep.subr.mxu0 0.0
        %3912 = vmatpush1.msra.mxu0 %v3897
        %3913 = vmatprep.subr.mxu0 0.0
        %3914 = vmatpush1.msra.mxu0 %v3898
        %3915 = vmatprep.subr.mxu0 0.0
        %3916 = vmatpush1.msra.mxu0 0.0
        %3917 = vmatprep.subr.mxu0 0.0
        %3918 = vmatpush1.msra.mxu0 0.0
        %3919 = vmatprep.subr.mxu0 0.0
        %3920 = vmatpush1.msra.mxu0 0.0
        %3921 = vmatprep.subr.mxu0 0.0
        %3922 = vmatpush1.msra.mxu0 0.0
        %3923 = vmatprep.subr.mxu0 0.0
        %3924 = vmatpush1.msra.mxu0 0.0
        %3925 = vmatprep.subr.mxu0 0.0
        %3926 = vmatpush1.msra.mxu0 0.0
        %3927 = vmatprep.subr.mxu0 0.0
        %3928 = vmatpush1.msra.mxu0 0.0
        %3929 = vmatprep.subr.mxu0 0.0
        %3930 = vmatpush1.msra.mxu0 0.0
        %3931 = vmatprep.subr.mxu0 0.0
        %3932 = vmatpush1.msra.mxu0 0.0
        %3933 = vmatprep.subr.mxu0 0.0
        %3934 = vmatpush1.msra.mxu0 0.0
        %3935 = vmatprep.subr.mxu0 0.0
        %3936 = vmatpush1.msra.mxu0 0.0
        %3937 = vmatprep.subr.mxu0 0.0
        %3938 = vmatpush1.msra.mxu0 0.0
        %3939 = vmatprep.subr.mxu0 0.0
        %3940 = vmatpush1.msra.mxu0 0.0
        %3941 = vmatprep.subr.mxu0 0.0
        %3942 = vmatpush1.msra.mxu0 0.0
        %3943 = vmatprep.subr.mxu0 0.0
        %3944 = vmatpush1.msra.mxu0 0.0
        %3945 = vmatprep.subr.mxu0 0.0
        %3946 = vmatpush1.msra.mxu0 0.0
        %3947 = vmatprep.subr.mxu0 0.0
        %3948 = vmatpush1.msra.mxu0 0.0
        %3949 = vmatprep.subr.mxu0 0.0
        %3950 = vmatpush1.msra.mxu0 0.0
        %3951 = vmatprep.subr.mxu0 0.0
        %3952 = vmatpush1.msra.mxu0 0.0
        %3953 = vmatprep.subr.mxu0 0.0
        %3954 = vmatpush1.msra.mxu0 0.0
        %3955 = vmatprep.subr.mxu0 0.0
        %3956 = vmatpush1.msra.mxu0 0.0
        %3957 = vmatprep.subr.mxu0 0.0
        %3958 = vmatpush1.msra.mxu0 0.0
        %3959 = vmatprep.subr.mxu0 0.0
        %3960 = vmatpush1.msra.mxu0 0.0
        %3961 = vmatprep.subr.mxu0 0.0
        %3962 = vmatpush1.msra.mxu0 0.0
        %3963 = vmatprep.subr.mxu0 0.0
        %3964 = vmatpush1.msra.mxu0 0.0
        %3965 = vmatprep.subr.mxu0 0.0
        %3966 = vmatpush1.msra.mxu0 0.0
        %3967 = vmatprep.subr.mxu0 0.0
        %3968 = vmatpush1.msra.mxu0 0.0
        %3969 = vmatprep.subr.mxu0 0.0
        %3970 = vmatpush1.msra.mxu0 0.0
        %3971 = vmatprep.mubr.f32.mxu0 0.0
        %3972 = vmatmul.mubr.f32.gmra.mrb[0].mxu0 %v1926
        %v3973 = vpop.f32.mrb[0].mxu0
        %v3974 = vadd.f32 %v3905, %v3973
        %v3975 = vpop.f32.mrb[0].mxu0
        %3976 = vmatprep.mubr.f32.mxu0 0.0
        %3977 = vmatmul.mubr.f32.gmra.mrb[0].mxu0 %v1929
        %v3978 = vpop.f32.mrb[0].mxu0
        %v3979 = vadd.f32 %v3905, %v3978
        %v3980 = vpop.f32.mrb[0].mxu0
        %3981 = vmatprep.mubr.f32.mxu0 0.0
        %3982 = vmatmul.mubr.f32.gmra.mrb[0].mxu0 %v1932
        %v3983 = vpop.f32.mrb[0].mxu0
        %v3984 = vadd.f32 %v3905, %v3983
        %v3985 = vpop.f32.mrb[0].mxu0
        %3986 = vdwg.mxu0
        %v3988 = vsel %vm1635, %v3788, 0
        %v3991 = vsel %vm1635, %v3793, 0
        %v3994 = vsel %vm1635, %v3798, 0
        %v3997 = vsel %vm1635, %v3881, 0
        %v4000 = vsel %vm1635, %v3886, 0
        %v4003 = vsel %vm1635, %v3891, 0
        %4005 = vmatprep.subr.mxu0 0.0
        %4006 = vmatpush1.xpose.msra.mxu0 %v3997
        %4007 = vmatprep.subr.mxu0 0.0
        %4008 = vmatpush1.xpose.msra.mxu0 %v4000
        %4009 = vmatprep.subr.mxu0 0.0
        %4010 = vmatpush1.xpose.msra.mxu0 %v4003
        %4011 = vmatprep.subr.mxu0 0.0
        %4012 = vmatpush1.xpose.msra.mxu0 0.0
        %4013 = vmatprep.subr.mxu0 0.0
        %4014 = vmatpush1.xpose.msra.mxu0 0.0
        %4015 = vmatprep.subr.mxu0 0.0
        %4016 = vmatpush1.xpose.msra.mxu0 0.0
        %4017 = vmatprep.subr.mxu0 0.0
        %4018 = vmatpush1.xpose.msra.mxu0 0.0
        %4019 = vmatprep.subr.mxu0 0.0
        %4020 = vmatpush1.xpose.msra.mxu0 0.0
        %4021 = vmatprep.subr.mxu0 0.0
        %4022 = vmatpush1.xpose.msra.mxu0 0.0
        %4023 = vmatprep.subr.mxu0 0.0
        %4024 = vmatpush1.xpose.msra.mxu0 0.0
        %4025 = vmatprep.subr.mxu0 0.0
        %4026 = vmatpush1.xpose.msra.mxu0 0.0
        %4027 = vmatprep.subr.mxu0 0.0
        %4028 = vmatpush1.xpose.msra.mxu0 0.0
        %4029 = vmatprep.subr.mxu0 0.0
        %4030 = vmatpush1.xpose.msra.mxu0 0.0
        %4031 = vmatprep.subr.mxu0 0.0
        %4032 = vmatpush1.xpose.msra.mxu0 0.0
        %4033 = vmatprep.subr.mxu0 0.0
        %4034 = vmatpush1.xpose.msra.mxu0 0.0
        %4035 = vmatprep.subr.mxu0 0.0
        %4036 = vmatpush1.xpose.msra.mxu0 0.0
        %4037 = vmatprep.subr.mxu0 0.0
        %4038 = vmatpush1.xpose.msra.mxu0 0.0
        %4039 = vmatprep.subr.mxu0 0.0
        %4040 = vmatpush1.xpose.msra.mxu0 0.0
        %4041 = vmatprep.subr.mxu0 0.0
        %4042 = vmatpush1.xpose.msra.mxu0 0.0
        %4043 = vmatprep.subr.mxu0 0.0
        %4044 = vmatpush1.xpose.msra.mxu0 0.0
        %4045 = vmatprep.subr.mxu0 0.0
        %4046 = vmatpush1.xpose.msra.mxu0 0.0
        %4047 = vmatprep.subr.mxu0 0.0
        %4048 = vmatpush1.xpose.msra.mxu0 0.0
        %4049 = vmatprep.subr.mxu0 0.0
        %4050 = vmatpush1.xpose.msra.mxu0 0.0
        %4051 = vmatprep.subr.mxu0 0.0
        %4052 = vmatpush1.xpose.msra.mxu0 0.0
        %4053 = vmatprep.subr.mxu0 0.0
        %4054 = vmatpush1.xpose.msra.mxu0 0.0
        %4055 = vmatprep.subr.mxu0 0.0
        %4056 = vmatpush1.xpose.msra.mxu0 0.0
        %4057 = vmatprep.subr.mxu0 0.0
        %4058 = vmatpush1.xpose.msra.mxu0 0.0
        %4059 = vmatprep.subr.mxu0 0.0
        %4060 = vmatpush1.xpose.msra.mxu0 0.0
        %4061 = vmatprep.subr.mxu0 0.0
        %4062 = vmatpush1.xpose.msra.mxu0 0.0
        %4063 = vmatprep.subr.mxu0 0.0
        %4064 = vmatpush1.xpose.msra.mxu0 0.0
        %4065 = vmatprep.subr.mxu0 0.0
        %4066 = vmatpush1.xpose.msra.mxu0 0.0
        %4067 = vmatprep.subr.mxu0 0.0
        %4068 = vmatpush1.xpose.msra.mxu0 0.0
        %4069 = vmatprep.mubr.f32.mxu0 0.0
        %4070 = vmatmul.mubr.f32.gmra.mrb[0].mxu0 %v3988
        %v4071 = vpop.f32.mrb[0].mxu0
        %v4072 = vadd.f32 0.0, %v4071
        %v4073 = vpop.f32.mrb[0].mxu0
        %4074 = vmatprep.mubr.f32.mxu0 0.0
        %4075 = vmatmul.mubr.f32.gmra.mrb[0].mxu0 %v3991
        %v4076 = vpop.f32.mrb[0].mxu0
        %v4077 = vadd.f32 0.0, %v4076
        %v4078 = vpop.f32.mrb[0].mxu0
        %4079 = vmatprep.mubr.f32.mxu0 0.0
        %4080 = vmatmul.mubr.f32.gmra.mrb[0].mxu0 %v3994
        %v4081 = vpop.f32.mrb[0].mxu0
        %v4082 = vadd.f32 0.0, %v4081
        %v4083 = vpop.f32.mrb[0].mxu0
        %4084 = vdwg.mxu0
        %v4085 = vmul.f32 %v4072, 0.35355338
        %v4086 = vmul.f32 %v4077, 0.35355338
        %v4087 = vmul.f32 %v4082, 0.35355338
        %v4088 = vsel %vm1913, %v4085, -1e+30
        %v4089 = vsel %vm1913, %v4086, -1e+30
        %v4090 = vsel %vm1913, %v4087, -1e+30
        %v4091 = vsel %vm2300, %v4088, -inf
        %4092 = vmax.xlane.f32.xlu0 %v4091
        %v4093 = vpop.xlane.xlu0 %4092
        %v4094 = vsel %vm2300, %v4089, -inf
        %4095 = vmax.xlane.f32.xlu0 %v4094
        %v4096 = vpop.xlane.xlu0 %4095
        %v4097 = vsel %vm2300, %v4090, -inf
        %4098 = vmax.xlane.f32.xlu0 %v4097
        %v4099 = vpop.xlane.xlu0 %4098
        %v4100 = vsub.f32 %v4088, %v4093
        %v4101 = vsub.f32 %v4089, %v4096
        %v4102 = vsub.f32 %v4090, %v4099
        %v4103 = vmul.f32 %v4100, 1.442695
        %v4104 = vpow.pop %v4103
        %v4105 = vmul.f32 %v4101, 1.442695
        %v4106 = vpow.pop %v4105
        %v4107 = vmul.f32 %v4102, 1.442695
        %v4108 = vpow.pop %v4107
        %v4109 = vsel %vm2300, %v4104, 0.0
        %4110 = vadd.xlane.f32.xlu0 %v4109
        %v4111 = vpop.xlane.xlu0 %4110
        %v4112 = vsel %vm2300, %v4106, 0.0
        %4113 = vadd.xlane.f32.xlu0 %v4112
        %v4114 = vpop.xlane.xlu0 %4113
        %v4115 = vsel %vm2300, %v4108, 0.0
        %4116 = vadd.xlane.f32.xlu0 %v4115
        %v4117 = vpop.xlane.xlu0 %4116
        %v4118 = vrcp.pop %v4111
        %v4119 = vrcp.pop %v4114
        %v4120 = vrcp.pop %v4117
        %v4121 = vmul.f32 %v4104, %v4118
        %v4122 = vmul.f32 %v4106, %v4119
        %v4123 = vmul.f32 %v4108, %v4120
        %v4125 = vsel %vm2300, %v4121, 0
        %v4128 = vsel %vm2300, %v4122, 0
        %v4131 = vsel %vm2300, %v4123, 0
        %4133 = vmatprep.subr.mxu0 0.0
        %4134 = vmatpush1.msra.mxu0 %v3974
        %4135 = vmatprep.subr.mxu0 0.0
        %4136 = vmatpush1.msra.mxu0 %v3979
        %4137 = vmatprep.subr.mxu0 0.0
        %4138 = vmatpush1.msra.mxu0 %v3984
        %4139 = vmatprep.subr.mxu0 0.0
        %4140 = vmatpush1.msra.mxu0 0.0
        %4141 = vmatprep.subr.mxu0 0.0
        %4142 = vmatpush1.msra.mxu0 0.0
        %4143 = vmatprep.subr.mxu0 0.0
        %4144 = vmatpush1.msra.mxu0 0.0
        %4145 = vmatprep.subr.mxu0 0.0
        %4146 = vmatpush1.msra.mxu0 0.0
        %4147 = vmatprep.subr.mxu0 0.0
        %4148 = vmatpush1.msra.mxu0 0.0
        %4149 = vmatprep.subr.mxu0 0.0
        %4150 = vmatpush1.msra.mxu0 0.0
        %4151 = vmatprep.subr.mxu0 0.0
        %4152 = vmatpush1.msra.mxu0 0.0
        %4153 = vmatprep.subr.mxu0 0.0
        %4154 = vmatpush1.msra.mxu0 0.0
        %4155 = vmatprep.subr.mxu0 0.0
        %4156 = vmatpush1.msra.mxu0 0.0
        %4157 = vmatprep.subr.mxu0 0.0
        %4158 = vmatpush1.msra.mxu0 0.0
        %4159 = vmatprep.subr.mxu0 0.0
        %4160 = vmatpush1.msra.mxu0 0.0
        %4161 = vmatprep.subr.mxu0 0.0
        %4162 = vmatpush1.msra.mxu0 0.0
        %4163 = vmatprep.subr.mxu0 0.0
        %4164 = vmatpush1.msra.mxu0 0.0
        %4165 = vmatprep.subr.mxu0 0.0
        %4166 = vmatpush1.msra.mxu0 0.0
        %4167 = vmatprep.subr.mxu0 0.0
        %4168 = vmatpush1.msra.mxu0 0.0
        %4169 = vmatprep.subr.mxu0 0.0
        %4170 = vmatpush1.msra.mxu0 0.0
        %4171 = vmatprep.subr.mxu0 0.0
        %4172 = vmatpush1.msra.mxu0 0.0
        %4173 = vmatprep.subr.mxu0 0.0
        %4174 = vmatpush1.msra.mxu0 0.0
        %4175 = vmatprep.subr.mxu0 0.0
        %4176 = vmatpush1.msra.mxu0 0.0
        %4177 = vmatprep.subr.mxu0 0.0
        %4178 = vmatpush1.msra.mxu0 0.0
        %4179 = vmatprep.subr.mxu0 0.0
        %4180 = vmatpush1.msra.mxu0 0.0
        %4181 = vmatprep.subr.mxu0 0.0
        %4182 = vmatpush1.msra.mxu0 0.0
        %4183 = vmatprep.subr.mxu0 0.0
        %4184 = vmatpush1.msra.mxu0 0.0
        %4185 = vmatprep.subr.mxu0 0.0
        %4186 = vmatpush1.msra.mxu0 0.0
        %4187 = vmatprep.subr.mxu0 0.0
        %4188 = vmatpush1.msra.mxu0 0.0
        %4189 = vmatprep.subr.mxu0 0.0
        %4190 = vmatpush1.msra.mxu0 0.0
        %4191 = vmatprep.subr.mxu0 0.0
        %4192 = vmatpush1.msra.mxu0 0.0
        %4193 = vmatprep.subr.mxu0 0.0
        %4194 = vmatpush1.msra.mxu0 0.0
        %4195 = vmatprep.subr.mxu0 0.0
        %4196 = vmatpush1.msra.mxu0 0.0
        %4197 = vmatprep.mubr.f32.mxu0 0.0
        %4198 = vmatmul.mubr.f32.gmra.mrb[0].mxu0 %v4125
        %v4199 = vpop.f32.mrb[0].mxu0
        %v4200 = vadd.f32 0.0, %v4199
        %v4201 = vpop.f32.mrb[0].mxu0
        %4202 = vmatprep.mubr.f32.mxu0 0.0
        %4203 = vmatmul.mubr.f32.gmra.mrb[0].mxu0 %v4128
        %v4204 = vpop.f32.mrb[0].mxu0
        %v4205 = vadd.f32 0.0, %v4204
        %v4206 = vpop.f32.mrb[0].mxu0
        %4207 = vmatprep.mubr.f32.mxu0 0.0
        %4208 = vmatmul.mubr.f32.gmra.mrb[0].mxu0 %v4131
        %v4209 = vpop.f32.mrb[0].mxu0
        %v4210 = vadd.f32 0.0, %v4209
        %v4211 = vpop.f32.mrb[0].mxu0
        %4212 = vdwg.mxu0
        %s4213 = scalar_lea.vmem %s35, 24
        %v4214 = vld [vmem:[%s4213] sm:$0xff]
        %v4216 = vsel %vm1635, %v4200, 0
        %v4219 = vsel %vm1635, %v4205, 0
        %v4222 = vsel %vm1635, %v4210, 0
        %4224 = vmatprep.subr.mxu0 0.0
        %4225 = vmatpush1.msra.mxu0 %v4214
        %4226 = vmatprep.subr.mxu0 0.0
        %4227 = vmatpush1.msra.mxu0 0.0
        %4228 = vmatprep.subr.mxu0 0.0
        %4229 = vmatpush1.msra.mxu0 0.0
        %4230 = vmatprep.subr.mxu0 0.0
        %4231 = vmatpush1.msra.mxu0 0.0
        %4232 = vmatprep.subr.mxu0 0.0
        %4233 = vmatpush1.msra.mxu0 0.0
        %4234 = vmatprep.subr.mxu0 0.0
        %4235 = vmatpush1.msra.mxu0 0.0
        %4236 = vmatprep.subr.mxu0 0.0
        %4237 = vmatpush1.msra.mxu0 0.0
        %4238 = vmatprep.subr.mxu0 0.0
        %4239 = vmatpush1.msra.mxu0 0.0
        %4240 = vmatprep.subr.mxu0 0.0
        %4241 = vmatpush1.msra.mxu0 0.0
        %4242 = vmatprep.subr.mxu0 0.0
        %4243 = vmatpush1.msra.mxu0 0.0
        %4244 = vmatprep.subr.mxu0 0.0
        %4245 = vmatpush1.msra.mxu0 0.0
        %4246 = vmatprep.subr.mxu0 0.0
        %4247 = vmatpush1.msra.mxu0 0.0
        %4248 = vmatprep.subr.mxu0 0.0
        %4249 = vmatpush1.msra.mxu0 0.0
        %4250 = vmatprep.subr.mxu0 0.0
        %4251 = vmatpush1.msra.mxu0 0.0
        %4252 = vmatprep.subr.mxu0 0.0
        %4253 = vmatpush1.msra.mxu0 0.0
        %4254 = vmatprep.subr.mxu0 0.0
        %4255 = vmatpush1.msra.mxu0 0.0
        %4256 = vmatprep.subr.mxu0 0.0
        %4257 = vmatpush1.msra.mxu0 0.0
        %4258 = vmatprep.subr.mxu0 0.0
        %4259 = vmatpush1.msra.mxu0 0.0
        %4260 = vmatprep.subr.mxu0 0.0
        %4261 = vmatpush1.msra.mxu0 0.0
        %4262 = vmatprep.subr.mxu0 0.0
        %4263 = vmatpush1.msra.mxu0 0.0
        %4264 = vmatprep.subr.mxu0 0.0
        %4265 = vmatpush1.msra.mxu0 0.0
        %4266 = vmatprep.subr.mxu0 0.0
        %4267 = vmatpush1.msra.mxu0 0.0
        %4268 = vmatprep.subr.mxu0 0.0
        %4269 = vmatpush1.msra.mxu0 0.0
        %4270 = vmatprep.subr.mxu0 0.0
        %4271 = vmatpush1.msra.mxu0 0.0
        %4272 = vmatprep.subr.mxu0 0.0
        %4273 = vmatpush1.msra.mxu0 0.0
        %4274 = vmatprep.subr.mxu0 0.0
        %4275 = vmatpush1.msra.mxu0 0.0
        %4276 = vmatprep.subr.mxu0 0.0
        %4277 = vmatpush1.msra.mxu0 0.0
        %4278 = vmatprep.subr.mxu0 0.0
        %4279 = vmatpush1.msra.mxu0 0.0
        %4280 = vmatprep.subr.mxu0 0.0
        %4281 = vmatpush1.msra.mxu0 0.0
        %4282 = vmatprep.subr.mxu0 0.0
        %4283 = vmatpush1.msra.mxu0 0.0
        %4284 = vmatprep.subr.mxu0 0.0
        %4285 = vmatpush1.msra.mxu0 0.0
        %4286 = vmatprep.subr.mxu0 0.0
        %4287 = vmatpush1.msra.mxu0 0.0
        %4288 = vmatprep.mubr.f32.mxu0 0.0
        %4289 = vmatmul.mubr.f32.gmra.mrb[0].mxu0 %v4216
        %v4290 = vpop.f32.mrb[0].mxu0
        %v4291 = vadd.f32 0.0, %v4290
        %v4292 = vpop.f32.mrb[0].mxu0
        %4293 = vmatprep.mubr.f32.mxu0 0.0
        %4294 = vmatmul.mubr.f32.gmra.mrb[0].mxu0 %v4219
        %v4295 = vpop.f32.mrb[0].mxu0
        %v4296 = vadd.f32 0.0, %v4295
        %v4297 = vpop.f32.mrb[0].mxu0
        %4298 = vmatprep.mubr.f32.mxu0 0.0
        %4299 = vmatmul.mubr.f32.gmra.mrb[0].mxu0 %v4222
        %v4300 = vpop.f32.mrb[0].mxu0
        %v4301 = vadd.f32 0.0, %v4300
        %v4302 = vpop.f32.mrb[0].mxu0
        %4303 = vdwg.mxu0
        %v4304 = vadd.f32 %v3705, %v4291
        %v4305 = vadd.f32 %v3706, %v4296
        %v4306 = vadd.f32 %v3707, %v4301
        %v4307 = vld [vmem:[%s37] sm:$0x1]
        %v4309 = vlaneseq
        %v4310 = vshrl.u32 %v4309, 7
        %v4311 = vsub.s32 0, %v4310
        %v4312 = vrot.slane %v4307, %v4311
        %v4314 = vadd.f32 %v4304, %v4312
        %v4315 = vadd.f32 %v4305, %v4312
        %v4316 = vadd.f32 %v4306, %v4312
        %v4317 = vadd.f32 %v1908, %v4314
        %v4318 = vadd.f32 %v1909, %v4315
        %v4319 = vadd.f32 %v1910, %v4316
        %v4320 = vsel %vm1850, %v4317, 0.0
        %4321 = vadd.xlane.f32.xlu0 %v4320
        %v4322 = vpop.xlane.xlu0 %4321
        %v4323 = vsel %vm1850, %v4318, 0.0
        %4324 = vadd.xlane.f32.xlu0 %v4323
        %v4325 = vpop.xlane.xlu0 %4324
        %v4326 = vsel %vm1850, %v4319, 0.0
        %4327 = vadd.xlane.f32.xlu0 %v4326
        %v4328 = vpop.xlane.xlu0 %4327
        %v4329 = vmul.f32 %v4322, %v1860
        %v4330 = vmul.f32 %v4325, %v1860
        %v4331 = vmul.f32 %v4328, %v1860
        %v4332 = vsub.f32 %v4317, %v4329
        %v4333 = vsub.f32 %v4318, %v4330
        %v4334 = vsub.f32 %v4319, %v4331
        %v4335 = vmul.f32 %v4332, %v4332
        %v4336 = vmul.f32 %v4333, %v4333
        %v4337 = vmul.f32 %v4334, %v4334
        %v4338 = vsel %vm1850, %v4335, 0.0
        %4339 = vadd.xlane.f32.xlu0 %v4338
        %v4340 = vpop.xlane.xlu0 %4339
        %v4341 = vsel %vm1850, %v4336, 0.0
        %4342 = vadd.xlane.f32.xlu0 %v4341
        %v4343 = vpop.xlane.xlu0 %4342
        %v4344 = vsel %vm1850, %v4337, 0.0
        %4345 = vadd.xlane.f32.xlu0 %v4344
        %v4346 = vpop.xlane.xlu0 %4345
        %v4347 = vmul.f32 %v4340, %v1860
        %v4348 = vmul.f32 %v4343, %v1860
        %v4349 = vmul.f32 %v4346, %v1860
        %v4350 = vadd.f32 %v4347, 1e-05
        %v4351 = vadd.f32 %v4348, 1e-05
        %v4352 = vadd.f32 %v4349, 1e-05
        %v4353 = vrsqrt.pop %v4350
        %v4354 = vrsqrt.pop %v4351
        %v4355 = vrsqrt.pop %v4352
        %v4356 = vmul.f32 %v4332, %v4353
        %v4357 = vmul.f32 %v4333, %v4354
        %v4358 = vmul.f32 %v4334, %v4355
        %v4359 = vld [vmem:[%s39] sm:$0x1]
        %v4361 = vlaneseq
        %v4362 = vshrl.u32 %v4361, 7
        %v4363 = vsub.s32 0, %v4362
        %v4364 = vrot.slane %v4359, %v4363
        %v4366 = vmul.f32 %v4356, %v4364
        %v4367 = vmul.f32 %v4357, %v4364
        %v4368 = vmul.f32 %v4358, %v4364
        %v4369 = vld [vmem:[%s41] sm:$0x1]
        %v4371 = vlaneseq
        %v4372 = vshrl.u32 %v4371, 7
        %v4373 = vsub.s32 0, %v4372
        %v4374 = vrot.slane %v4369, %v4373
        %v4376 = vadd.f32 %v4366, %v4374
        %v4377 = vadd.f32 %v4367, %v4374
        %v4378 = vadd.f32 %v4368, %v4374
        %v4379 = vld [vmem:[%s43] sm:$0xff]
        %v4380 = vld [vmem:[%s43 + $0x8] sm:$0xff]
        %v4381 = vld [vmem:[%s43 + $0x10] sm:$0xff]
        %v4382 = vld [vmem:[%s43 + $0x18] sm:$0xff]
        %v4383 = vld [vmem:[%s45] sm:$0x1]
        %v4385 = vlaneseq
        %v4386 = vshrl.u32 %v4385, 7
        %v4387 = vsub.s32 0, %v4386
        %v4388 = vrot.slane %v4383, %v4387
        %v4391 = vsel %vm1850, %v4376, 0
        %v4394 = vsel %vm1850, %v4377, 0
        %v4397 = vsel %vm1850, %v4378, 0
        %4399 = vmatprep.subr.mxu0 0.0
        %4400 = vmatpush1.msra.mxu0 %v4379
        %4401 = vmatprep.subr.mxu0 0.0
        %4402 = vmatpush1.msra.mxu0 %v4380
        %4403 = vmatprep.subr.mxu0 0.0
        %4404 = vmatpush1.msra.mxu0 %v4381
        %4405 = vmatprep.subr.mxu0 0.0
        %4406 = vmatpush1.msra.mxu0 %v4382
        %4407 = vmatprep.subr.mxu0 0.0
        %4408 = vmatpush1.msra.mxu0 0.0
        %4409 = vmatprep.subr.mxu0 0.0
        %4410 = vmatpush1.msra.mxu0 0.0
        %4411 = vmatprep.subr.mxu0 0.0
        %4412 = vmatpush1.msra.mxu0 0.0
        %4413 = vmatprep.subr.mxu0 0.0
        %4414 = vmatpush1.msra.mxu0 0.0
        %4415 = vmatprep.subr.mxu0 0.0
        %4416 = vmatpush1.msra.mxu0 0.0
        %4417 = vmatprep.subr.mxu0 0.0
        %4418 = vmatpush1.msra.mxu0 0.0
        %4419 = vmatprep.subr.mxu0 0.0
        %4420 = vmatpush1.msra.mxu0 0.0
        %4421 = vmatprep.subr.mxu0 0.0
        %4422 = vmatpush1.msra.mxu0 0.0
        %4423 = vmatprep.subr.mxu0 0.0
        %4424 = vmatpush1.msra.mxu0 0.0
        %4425 = vmatprep.subr.mxu0 0.0
        %4426 = vmatpush1.msra.mxu0 0.0
        %4427 = vmatprep.subr.mxu0 0.0
        %4428 = vmatpush1.msra.mxu0 0.0
        %4429 = vmatprep.subr.mxu0 0.0
        %4430 = vmatpush1.msra.mxu0 0.0
        %4431 = vmatprep.subr.mxu0 0.0
        %4432 = vmatpush1.msra.mxu0 0.0
        %4433 = vmatprep.subr.mxu0 0.0
        %4434 = vmatpush1.msra.mxu0 0.0
        %4435 = vmatprep.subr.mxu0 0.0
        %4436 = vmatpush1.msra.mxu0 0.0
        %4437 = vmatprep.subr.mxu0 0.0
        %4438 = vmatpush1.msra.mxu0 0.0
        %4439 = vmatprep.subr.mxu0 0.0
        %4440 = vmatpush1.msra.mxu0 0.0
        %4441 = vmatprep.subr.mxu0 0.0
        %4442 = vmatpush1.msra.mxu0 0.0
        %4443 = vmatprep.subr.mxu0 0.0
        %4444 = vmatpush1.msra.mxu0 0.0
        %4445 = vmatprep.subr.mxu0 0.0
        %4446 = vmatpush1.msra.mxu0 0.0
        %4447 = vmatprep.subr.mxu0 0.0
        %4448 = vmatpush1.msra.mxu0 0.0
        %4449 = vmatprep.subr.mxu0 0.0
        %4450 = vmatpush1.msra.mxu0 0.0
        %4451 = vmatprep.subr.mxu0 0.0
        %4452 = vmatpush1.msra.mxu0 0.0
        %4453 = vmatprep.subr.mxu0 0.0
        %4454 = vmatpush1.msra.mxu0 0.0
        %4455 = vmatprep.subr.mxu0 0.0
        %4456 = vmatpush1.msra.mxu0 0.0
        %4457 = vmatprep.subr.mxu0 0.0
        %4458 = vmatpush1.msra.mxu0 0.0
        %4459 = vmatprep.subr.mxu0 0.0
        %4460 = vmatpush1.msra.mxu0 0.0
        %4461 = vmatprep.subr.mxu0 0.0
        %4462 = vmatpush1.msra.mxu0 0.0
        %4463 = vmatprep.mubr.f32.mxu0 0.0
        %4464 = vmatmul.mubr.f32.gmra.mrb[0].mxu0 %v4391
        %v4465 = vpop.f32.mrb[0].mxu0
        %v4466 = vadd.f32 %v4388, %v4465
        %v4467 = vpop.f32.mrb[0].mxu0
        %4468 = vmatprep.mubr.f32.mxu0 0.0
        %4469 = vmatmul.mubr.f32.gmra.mrb[0].mxu0 %v4394
        %v4470 = vpop.f32.mrb[0].mxu0
        %v4471 = vadd.f32 %v4388, %v4470
        %v4472 = vpop.f32.mrb[0].mxu0
        %4473 = vmatprep.mubr.f32.mxu0 0.0
        %4474 = vmatmul.mubr.f32.gmra.mrb[0].mxu0 %v4397
        %v4475 = vpop.f32.mrb[0].mxu0
        %v4476 = vadd.f32 %v4388, %v4475
        %v4477 = vpop.f32.mrb[0].mxu0
        %4478 = vdwg.mxu0
        %v4479 = vmax.f32 %v4466, 0.0
        %v4480 = vmax.f32 %v4471, 0.0
        %v4481 = vmax.f32 %v4476, 0.0
        %v4482 = vld [vmem:[%s47] sm:$0xff]
        %v4483 = vld [vmem:[%s47 + $0x8] sm:$0xff]
        %v4484 = vld [vmem:[%s47 + $0x10] sm:$0xff]
        %v4485 = vld [vmem:[%s47 + $0x18] sm:$0xff]
        %v4486 = vld [vmem:[%s47 + $0x20] sm:$0xff]
        %v4487 = vld [vmem:[%s47 + $0x28] sm:$0xff]
        %v4488 = vld [vmem:[%s47 + $0x30] sm:$0xff]
        %v4489 = vld [vmem:[%s47 + $0x38] sm:$0xff]
        %v4490 = vld [vmem:[%s49] sm:$0x1]
        %v4492 = vlaneseq
        %v4493 = vshrl.u32 %v4492, 7
        %v4494 = vsub.s32 0, %v4493
        %v4495 = vrot.slane %v4490, %v4494
        %v4498 = vsel %vm1534, %v4479, 0
        %v4501 = vsel %vm1534, %v4480, 0
        %v4504 = vsel %vm1534, %v4481, 0
        %4506 = vmatprep.subr.mxu0 0.0
        %4507 = vmatpush1.msra.mxu0 %v4482
        %4508 = vmatprep.subr.mxu0 0.0
        %4509 = vmatpush1.msra.mxu0 %v4483
        %4510 = vmatprep.subr.mxu0 0.0
        %4511 = vmatpush1.msra.mxu0 %v4484
        %4512 = vmatprep.subr.mxu0 0.0
        %4513 = vmatpush1.msra.mxu0 %v4485
        %4514 = vmatprep.subr.mxu0 0.0
        %4515 = vmatpush1.msra.mxu0 %v4486
        %4516 = vmatprep.subr.mxu0 0.0
        %4517 = vmatpush1.msra.mxu0 %v4487
        %4518 = vmatprep.subr.mxu0 0.0
        %4519 = vmatpush1.msra.mxu0 %v4488
        %4520 = vmatprep.subr.mxu0 0.0
        %4521 = vmatpush1.msra.mxu0 %v4489
        %4522 = vmatprep.subr.mxu0 0.0
        %4523 = vmatpush1.msra.mxu0 0.0
        %4524 = vmatprep.subr.mxu0 0.0
        %4525 = vmatpush1.msra.mxu0 0.0
        %4526 = vmatprep.subr.mxu0 0.0
        %4527 = vmatpush1.msra.mxu0 0.0
        %4528 = vmatprep.subr.mxu0 0.0
        %4529 = vmatpush1.msra.mxu0 0.0
        %4530 = vmatprep.subr.mxu0 0.0
        %4531 = vmatpush1.msra.mxu0 0.0
        %4532 = vmatprep.subr.mxu0 0.0
        %4533 = vmatpush1.msra.mxu0 0.0
        %4534 = vmatprep.subr.mxu0 0.0
        %4535 = vmatpush1.msra.mxu0 0.0
        %4536 = vmatprep.subr.mxu0 0.0
        %4537 = vmatpush1.msra.mxu0 0.0
        %4538 = vmatprep.subr.mxu0 0.0
        %4539 = vmatpush1.msra.mxu0 0.0
        %4540 = vmatprep.subr.mxu0 0.0
        %4541 = vmatpush1.msra.mxu0 0.0
        %4542 = vmatprep.subr.mxu0 0.0
        %4543 = vmatpush1.msra.mxu0 0.0
        %4544 = vmatprep.subr.mxu0 0.0
        %4545 = vmatpush1.msra.mxu0 0.0
        %4546 = vmatprep.subr.mxu0 0.0
        %4547 = vmatpush1.msra.mxu0 0.0
        %4548 = vmatprep.subr.mxu0 0.0
        %4549 = vmatpush1.msra.mxu0 0.0
        %4550 = vmatprep.subr.mxu0 0.0
        %4551 = vmatpush1.msra.mxu0 0.0
        %4552 = vmatprep.subr.mxu0 0.0
        %4553 = vmatpush1.msra.mxu0 0.0
        %4554 = vmatprep.subr.mxu0 0.0
        %4555 = vmatpush1.msra.mxu0 0.0
        %4556 = vmatprep.subr.mxu0 0.0
        %4557 = vmatpush1.msra.mxu0 0.0
        %4558 = vmatprep.subr.mxu0 0.0
        %4559 = vmatpush1.msra.mxu0 0.0
        %4560 = vmatprep.subr.mxu0 0.0
        %4561 = vmatpush1.msra.mxu0 0.0
        %4562 = vmatprep.subr.mxu0 0.0
        %4563 = vmatpush1.msra.mxu0 0.0
        %4564 = vmatprep.subr.mxu0 0.0
        %4565 = vmatpush1.msra.mxu0 0.0
        %4566 = vmatprep.subr.mxu0 0.0
        %4567 = vmatpush1.msra.mxu0 0.0
        %4568 = vmatprep.subr.mxu0 0.0
        %4569 = vmatpush1.msra.mxu0 0.0
        %4570 = vmatprep.mubr.f32.mxu0 0.0
        %4571 = vmatmul.mubr.f32.gmra.mrb[0].mxu0 %v4498
        %v4572 = vpop.f32.mrb[0].mxu0
        %v4573 = vadd.f32 %v4495, %v4572
        %v4574 = vpop.f32.mrb[0].mxu0
        %4575 = vmatprep.mubr.f32.mxu0 0.0
        %4576 = vmatmul.mubr.f32.gmra.mrb[0].mxu0 %v4501
        %v4577 = vpop.f32.mrb[0].mxu0
        %v4578 = vadd.f32 %v4495, %v4577
        %v4579 = vpop.f32.mrb[0].mxu0
        %4580 = vmatprep.mubr.f32.mxu0 0.0
        %4581 = vmatmul.mubr.f32.gmra.mrb[0].mxu0 %v4504
        %v4582 = vpop.f32.mrb[0].mxu0
        %v4583 = vadd.f32 %v4495, %v4582
        %v4584 = vpop.f32.mrb[0].mxu0
        %4585 = vdwg.mxu0
        %v4586 = vadd.f32 %v4376, %v4573
        %v4587 = vadd.f32 %v4377, %v4578
        %v4588 = vadd.f32 %v4378, %v4583
        %v4589 = vsel %vm1850, %v4586, 0.0
        %4590 = vadd.xlane.f32.xlu0 %v4589
        %v4591 = vpop.xlane.xlu0 %4590
        %v4592 = vsel %vm1850, %v4587, 0.0
        %4593 = vadd.xlane.f32.xlu0 %v4592
        %v4594 = vpop.xlane.xlu0 %4593
        %v4595 = vsel %vm1850, %v4588, 0.0
        %4596 = vadd.xlane.f32.xlu0 %v4595
        %v4597 = vpop.xlane.xlu0 %4596
        %v4598 = vmul.f32 %v4591, %v1860
        %v4599 = vmul.f32 %v4594, %v1860
        %v4600 = vmul.f32 %v4597, %v1860
        %v4601 = vsub.f32 %v4586, %v4598
        %v4602 = vsub.f32 %v4587, %v4599
        %v4603 = vsub.f32 %v4588, %v4600
        %v4604 = vmul.f32 %v4601, %v4601
        %v4605 = vmul.f32 %v4602, %v4602
        %v4606 = vmul.f32 %v4603, %v4603
        %v4607 = vsel %vm1850, %v4604, 0.0
        %4608 = vadd.xlane.f32.xlu0 %v4607
        %v4609 = vpop.xlane.xlu0 %4608
        %v4610 = vsel %vm1850, %v4605, 0.0
        %4611 = vadd.xlane.f32.xlu0 %v4610
        %v4612 = vpop.xlane.xlu0 %4611
        %v4613 = vsel %vm1850, %v4606, 0.0
        %4614 = vadd.xlane.f32.xlu0 %v4613
        %v4615 = vpop.xlane.xlu0 %4614
        %v4616 = vmul.f32 %v4609, %v1860
        %v4617 = vmul.f32 %v4612, %v1860
        %v4618 = vmul.f32 %v4615, %v1860
        %v4619 = vadd.f32 %v4616, 1e-05
        %v4620 = vadd.f32 %v4617, 1e-05
        %v4621 = vadd.f32 %v4618, 1e-05
        %v4622 = vrsqrt.pop %v4619
        %v4623 = vrsqrt.pop %v4620
        %v4624 = vrsqrt.pop %v4621
        %v4625 = vmul.f32 %v4601, %v4622
        %v4626 = vmul.f32 %v4602, %v4623
        %v4627 = vmul.f32 %v4603, %v4624
        %v4628 = vld [vmem:[%s51] sm:$0x1]
        %v4630 = vlaneseq
        %v4631 = vshrl.u32 %v4630, 7
        %v4632 = vsub.s32 0, %v4631
        %v4633 = vrot.slane %v4628, %v4632
        %v4635 = vmul.f32 %v4625, %v4633
        %v4636 = vmul.f32 %v4626, %v4633
        %v4637 = vmul.f32 %v4627, %v4633
        %v4638 = vld [vmem:[%s53] sm:$0x1]
        %v4640 = vlaneseq
        %v4641 = vshrl.u32 %v4640, 7
        %v4642 = vsub.s32 0, %v4641
        %v4643 = vrot.slane %v4638, %v4642
        %v4645 = vadd.f32 %v4635, %v4643
        %v4646 = vadd.f32 %v4636, %v4643
        %v4647 = vadd.f32 %v4637, %v4643
        %v4648 = vld [vmem:[%s55] sm:$0xff]
        %v4649 = vld [vmem:[%s55 + $0x8] sm:$0xff]
        %v4650 = vld [vmem:[%s55 + $0x10] sm:$0xff]
        %v4651 = vld [vmem:[%s55 + $0x18] sm:$0xff]
        %v4652 = vld [vmem:[%s57] sm:$0x1]
        %v4654 = vlaneseq
        %v4655 = vshrl.u32 %v4654, 7
        %v4656 = vsub.s32 0, %v4655
        %v4657 = vrot.slane %v4652, %v4656
        %v4660 = vsel %vm1850, %v4645, 0
        %v4663 = vsel %vm1850, %v4646, 0
        %v4666 = vsel %vm1850, %v4647, 0
        %4668 = vmatprep.subr.mxu0 0.0
        %4669 = vmatpush1.msra.mxu0 %v4648
        %4670 = vmatprep.subr.mxu0 0.0
        %4671 = vmatpush1.msra.mxu0 %v4649
        %4672 = vmatprep.subr.mxu0 0.0
        %4673 = vmatpush1.msra.mxu0 %v4650
        %4674 = vmatprep.subr.mxu0 0.0
        %4675 = vmatpush1.msra.mxu0 %v4651
        %4676 = vmatprep.subr.mxu0 0.0
        %4677 = vmatpush1.msra.mxu0 0.0
        %4678 = vmatprep.subr.mxu0 0.0
        %4679 = vmatpush1.msra.mxu0 0.0
        %4680 = vmatprep.subr.mxu0 0.0
        %4681 = vmatpush1.msra.mxu0 0.0
        %4682 = vmatprep.subr.mxu0 0.0
        %4683 = vmatpush1.msra.mxu0 0.0
        %4684 = vmatprep.subr.mxu0 0.0
        %4685 = vmatpush1.msra.mxu0 0.0
        %4686 = vmatprep.subr.mxu0 0.0
        %4687 = vmatpush1.msra.mxu0 0.0
        %4688 = vmatprep.subr.mxu0 0.0
        %4689 = vmatpush1.msra.mxu0 0.0
        %4690 = vmatprep.subr.mxu0 0.0
        %4691 = vmatpush1.msra.mxu0 0.0
        %4692 = vmatprep.subr.mxu0 0.0
        %4693 = vmatpush1.msra.mxu0 0.0
        %4694 = vmatprep.subr.mxu0 0.0
        %4695 = vmatpush1.msra.mxu0 0.0
        %4696 = vmatprep.subr.mxu0 0.0
        %4697 = vmatpush1.msra.mxu0 0.0
        %4698 = vmatprep.subr.mxu0 0.0
        %4699 = vmatpush1.msra.mxu0 0.0
        %4700 = vmatprep.subr.mxu0 0.0
        %4701 = vmatpush1.msra.mxu0 0.0
        %4702 = vmatprep.subr.mxu0 0.0
        %4703 = vmatpush1.msra.mxu0 0.0
        %4704 = vmatprep.subr.mxu0 0.0
        %4705 = vmatpush1.msra.mxu0 0.0
        %4706 = vmatprep.subr.mxu0 0.0
        %4707 = vmatpush1.msra.mxu0 0.0
        %4708 = vmatprep.subr.mxu0 0.0
        %4709 = vmatpush1.msra.mxu0 0.0
        %4710 = vmatprep.subr.mxu0 0.0
        %4711 = vmatpush1.msra.mxu0 0.0
        %4712 = vmatprep.subr.mxu0 0.0
        %4713 = vmatpush1.msra.mxu0 0.0
        %4714 = vmatprep.subr.mxu0 0.0
        %4715 = vmatpush1.msra.mxu0 0.0
        %4716 = vmatprep.subr.mxu0 0.0
        %4717 = vmatpush1.msra.mxu0 0.0
        %4718 = vmatprep.subr.mxu0 0.0
        %4719 = vmatpush1.msra.mxu0 0.0
        %4720 = vmatprep.subr.mxu0 0.0
        %4721 = vmatpush1.msra.mxu0 0.0
        %4722 = vmatprep.subr.mxu0 0.0
        %4723 = vmatpush1.msra.mxu0 0.0
        %4724 = vmatprep.subr.mxu0 0.0
        %4725 = vmatpush1.msra.mxu0 0.0
        %4726 = vmatprep.subr.mxu0 0.0
        %4727 = vmatpush1.msra.mxu0 0.0
        %4728 = vmatprep.subr.mxu0 0.0
        %4729 = vmatpush1.msra.mxu0 0.0
        %4730 = vmatprep.subr.mxu0 0.0
        %4731 = vmatpush1.msra.mxu0 0.0
        %4732 = vmatprep.mubr.f32.mxu0 0.0
        %4733 = vmatmul.mubr.f32.gmra.mrb[0].mxu0 %v4660
        %v4734 = vpop.f32.mrb[0].mxu0
        %v4735 = vadd.f32 %v4657, %v4734
        %v4736 = vpop.f32.mrb[0].mxu0
        %4737 = vmatprep.mubr.f32.mxu0 0.0
        %4738 = vmatmul.mubr.f32.gmra.mrb[0].mxu0 %v4663
        %v4739 = vpop.f32.mrb[0].mxu0
        %v4740 = vadd.f32 %v4657, %v4739
        %v4741 = vpop.f32.mrb[0].mxu0
        %4742 = vmatprep.mubr.f32.mxu0 0.0
        %4743 = vmatmul.mubr.f32.gmra.mrb[0].mxu0 %v4666
        %v4744 = vpop.f32.mrb[0].mxu0
        %v4745 = vadd.f32 %v4657, %v4744
        %v4746 = vpop.f32.mrb[0].mxu0
        %4747 = vdwg.mxu0
        %v4748 = vld [vmem:[%s59] sm:$0xff]
        %v4749 = vld [vmem:[%s59 + $0x8] sm:$0xff]
        %v4750 = vld [vmem:[%s59 + $0x10] sm:$0xff]
        %v4751 = vld [vmem:[%s59 + $0x18] sm:$0xff]
        %v4752 = vld [vmem:[%s61] sm:$0x1]
        %v4754 = vlaneseq
        %v4755 = vshrl.u32 %v4754, 7
        %v4756 = vsub.s32 0, %v4755
        %v4757 = vrot.slane %v4752, %v4756
        %4759 = vmatprep.subr.mxu0 0.0
        %4760 = vmatpush1.msra.mxu0 %v4748
        %4761 = vmatprep.subr.mxu0 0.0
        %4762 = vmatpush1.msra.mxu0 %v4749
        %4763 = vmatprep.subr.mxu0 0.0
        %4764 = vmatpush1.msra.mxu0 %v4750
        %4765 = vmatprep.subr.mxu0 0.0
        %4766 = vmatpush1.msra.mxu0 %v4751
        %4767 = vmatprep.subr.mxu0 0.0
        %4768 = vmatpush1.msra.mxu0 0.0
        %4769 = vmatprep.subr.mxu0 0.0
        %4770 = vmatpush1.msra.mxu0 0.0
        %4771 = vmatprep.subr.mxu0 0.0
        %4772 = vmatpush1.msra.mxu0 0.0
        %4773 = vmatprep.subr.mxu0 0.0
        %4774 = vmatpush1.msra.mxu0 0.0
        %4775 = vmatprep.subr.mxu0 0.0
        %4776 = vmatpush1.msra.mxu0 0.0
        %4777 = vmatprep.subr.mxu0 0.0
        %4778 = vmatpush1.msra.mxu0 0.0
        %4779 = vmatprep.subr.mxu0 0.0
        %4780 = vmatpush1.msra.mxu0 0.0
        %4781 = vmatprep.subr.mxu0 0.0
        %4782 = vmatpush1.msra.mxu0 0.0
        %4783 = vmatprep.subr.mxu0 0.0
        %4784 = vmatpush1.msra.mxu0 0.0
        %4785 = vmatprep.subr.mxu0 0.0
        %4786 = vmatpush1.msra.mxu0 0.0
        %4787 = vmatprep.subr.mxu0 0.0
        %4788 = vmatpush1.msra.mxu0 0.0
        %4789 = vmatprep.subr.mxu0 0.0
        %4790 = vmatpush1.msra.mxu0 0.0
        %4791 = vmatprep.subr.mxu0 0.0
        %4792 = vmatpush1.msra.mxu0 0.0
        %4793 = vmatprep.subr.mxu0 0.0
        %4794 = vmatpush1.msra.mxu0 0.0
        %4795 = vmatprep.subr.mxu0 0.0
        %4796 = vmatpush1.msra.mxu0 0.0
        %4797 = vmatprep.subr.mxu0 0.0
        %4798 = vmatpush1.msra.mxu0 0.0
        %4799 = vmatprep.subr.mxu0 0.0
        %4800 = vmatpush1.msra.mxu0 0.0
        %4801 = vmatprep.subr.mxu0 0.0
        %4802 = vmatpush1.msra.mxu0 0.0
        %4803 = vmatprep.subr.mxu0 0.0
        %4804 = vmatpush1.msra.mxu0 0.0
        %4805 = vmatprep.subr.mxu0 0.0
        %4806 = vmatpush1.msra.mxu0 0.0
        %4807 = vmatprep.subr.mxu0 0.0
        %4808 = vmatpush1.msra.mxu0 0.0
        %4809 = vmatprep.subr.mxu0 0.0
        %4810 = vmatpush1.msra.mxu0 0.0
        %4811 = vmatprep.subr.mxu0 0.0
        %4812 = vmatpush1.msra.mxu0 0.0
        %4813 = vmatprep.subr.mxu0 0.0
        %4814 = vmatpush1.msra.mxu0 0.0
        %4815 = vmatprep.subr.mxu0 0.0
        %4816 = vmatpush1.msra.mxu0 0.0
        %4817 = vmatprep.subr.mxu0 0.0
        %4818 = vmatpush1.msra.mxu0 0.0
        %4819 = vmatprep.subr.mxu0 0.0
        %4820 = vmatpush1.msra.mxu0 0.0
        %4821 = vmatprep.subr.mxu0 0.0
        %4822 = vmatpush1.msra.mxu0 0.0
        %4823 = vmatprep.mubr.f32.mxu0 0.0
        %4824 = vmatmul.mubr.f32.gmra.mrb[0].mxu0 %v4660
        %v4825 = vpop.f32.mrb[0].mxu0
        %v4826 = vadd.f32 %v4757, %v4825
        %v4827 = vpop.f32.mrb[0].mxu0
        %4828 = vmatprep.mubr.f32.mxu0 0.0
        %4829 = vmatmul.mubr.f32.gmra.mrb[0].mxu0 %v4663
        %v4830 = vpop.f32.mrb[0].mxu0
        %v4831 = vadd.f32 %v4757, %v4830
        %v4832 = vpop.f32.mrb[0].mxu0
        %4833 = vmatprep.mubr.f32.mxu0 0.0
        %4834 = vmatmul.mubr.f32.gmra.mrb[0].mxu0 %v4666
        %v4835 = vpop.f32.mrb[0].mxu0
        %v4836 = vadd.f32 %v4757, %v4835
        %v4837 = vpop.f32.mrb[0].mxu0
        %4838 = vdwg.mxu0
        %v4839 = vld [vmem:[%s63] sm:$0xff]
        %v4840 = vld [vmem:[%s63 + $0x8] sm:$0xff]
        %v4841 = vld [vmem:[%s63 + $0x10] sm:$0xff]
        %v4842 = vld [vmem:[%s63 + $0x18] sm:$0xff]
        %v4843 = vld [vmem:[%s65] sm:$0x1]
        %v4845 = vlaneseq
        %v4846 = vshrl.u32 %v4845, 7
        %v4847 = vsub.s32 0, %v4846
        %v4848 = vrot.slane %v4843, %v4847
        %4850 = vmatprep.subr.mxu0 0.0
        %4851 = vmatpush1.msra.mxu0 %v4839
        %4852 = vmatprep.subr.mxu0 0.0
        %4853 = vmatpush1.msra.mxu0 %v4840
        %4854 = vmatprep.subr.mxu0 0.0
        %4855 = vmatpush1.msra.mxu0 %v4841
        %4856 = vmatprep.subr.mxu0 0.0
        %4857 = vmatpush1.msra.mxu0 %v4842
        %4858 = vmatprep.subr.mxu0 0.0
        %4859 = vmatpush1.msra.mxu0 0.0
        %4860 = vmatprep.subr.mxu0 0.0
        %4861 = vmatpush1.msra.mxu0 0.0
        %4862 = vmatprep.subr.mxu0 0.0
        %4863 = vmatpush1.msra.mxu0 0.0
        %4864 = vmatprep.subr.mxu0 0.0
        %4865 = vmatpush1.msra.mxu0 0.0
        %4866 = vmatprep.subr.mxu0 0.0
        %4867 = vmatpush1.msra.mxu0 0.0
        %4868 = vmatprep.subr.mxu0 0.0
        %4869 = vmatpush1.msra.mxu0 0.0
        %4870 = vmatprep.subr.mxu0 0.0
        %4871 = vmatpush1.msra.mxu0 0.0
        %4872 = vmatprep.subr.mxu0 0.0
        %4873 = vmatpush1.msra.mxu0 0.0
        %4874 = vmatprep.subr.mxu0 0.0
        %4875 = vmatpush1.msra.mxu0 0.0
        %4876 = vmatprep.subr.mxu0 0.0
        %4877 = vmatpush1.msra.mxu0 0.0
        %4878 = vmatprep.subr.mxu0 0.0
        %4879 = vmatpush1.msra.mxu0 0.0
        %4880 = vmatprep.subr.mxu0 0.0
        %4881 = vmatpush1.msra.mxu0 0.0
        %4882 = vmatprep.subr.mxu0 0.0
        %4883 = vmatpush1.msra.mxu0 0.0
        %4884 = vmatprep.subr.mxu0 0.0
        %4885 = vmatpush1.msra.mxu0 0.0
        %4886 = vmatprep.subr.mxu0 0.0
        %4887 = vmatpush1.msra.mxu0 0.0
        %4888 = vmatprep.subr.mxu0 0.0
        %4889 = vmatpush1.msra.mxu0 0.0
        %4890 = vmatprep.subr.mxu0 0.0
        %4891 = vmatpush1.msra.mxu0 0.0
        %4892 = vmatprep.subr.mxu0 0.0
        %4893 = vmatpush1.msra.mxu0 0.0
        %4894 = vmatprep.subr.mxu0 0.0
        %4895 = vmatpush1.msra.mxu0 0.0
        %4896 = vmatprep.subr.mxu0 0.0
        %4897 = vmatpush1.msra.mxu0 0.0
        %4898 = vmatprep.subr.mxu0 0.0
        %4899 = vmatpush1.msra.mxu0 0.0
        %4900 = vmatprep.subr.mxu0 0.0
        %4901 = vmatpush1.msra.mxu0 0.0
        %4902 = vmatprep.subr.mxu0 0.0
        %4903 = vmatpush1.msra.mxu0 0.0
        %4904 = vmatprep.subr.mxu0 0.0
        %4905 = vmatpush1.msra.mxu0 0.0
        %4906 = vmatprep.subr.mxu0 0.0
        %4907 = vmatpush1.msra.mxu0 0.0
        %4908 = vmatprep.subr.mxu0 0.0
        %4909 = vmatpush1.msra.mxu0 0.0
        %4910 = vmatprep.subr.mxu0 0.0
        %4911 = vmatpush1.msra.mxu0 0.0
        %4912 = vmatprep.subr.mxu0 0.0
        %4913 = vmatpush1.msra.mxu0 0.0
        %4914 = vmatprep.mubr.f32.mxu0 0.0
        %4915 = vmatmul.mubr.f32.gmra.mrb[0].mxu0 %v4660
        %v4916 = vpop.f32.mrb[0].mxu0
        %v4917 = vadd.f32 %v4848, %v4916
        %v4918 = vpop.f32.mrb[0].mxu0
        %4919 = vmatprep.mubr.f32.mxu0 0.0
        %4920 = vmatmul.mubr.f32.gmra.mrb[0].mxu0 %v4663
        %v4921 = vpop.f32.mrb[0].mxu0
        %v4922 = vadd.f32 %v4848, %v4921
        %v4923 = vpop.f32.mrb[0].mxu0
        %4924 = vmatprep.mubr.f32.mxu0 0.0
        %4925 = vmatmul.mubr.f32.gmra.mrb[0].mxu0 %v4666
        %v4926 = vpop.f32.mrb[0].mxu0
        %v4927 = vadd.f32 %v4848, %v4926
        %v4928 = vpop.f32.mrb[0].mxu0
        %4929 = vdwg.mxu0
        %v4931 = vsel %vm1635, %v4735, 0
        %v4934 = vsel %vm1635, %v4740, 0
        %v4937 = vsel %vm1635, %v4745, 0
        %v4940 = vsel %vm1635, %v4826, 0
        %v4943 = vsel %vm1635, %v4831, 0
        %v4946 = vsel %vm1635, %v4836, 0
        %4948 = vmatprep.subr.mxu0 0.0
        %4949 = vmatpush1.xpose.msra.mxu0 %v4940
        %4950 = vmatprep.subr.mxu0 0.0
        %4951 = vmatpush1.xpose.msra.mxu0 %v4943
        %4952 = vmatprep.subr.mxu0 0.0
        %4953 = vmatpush1.xpose.msra.mxu0 %v4946
        %4954 = vmatprep.subr.mxu0 0.0
        %4955 = vmatpush1.xpose.msra.mxu0 0.0
        %4956 = vmatprep.subr.mxu0 0.0
        %4957 = vmatpush1.xpose.msra.mxu0 0.0
        %4958 = vmatprep.subr.mxu0 0.0
        %4959 = vmatpush1.xpose.msra.mxu0 0.0
        %4960 = vmatprep.subr.mxu0 0.0
        %4961 = vmatpush1.xpose.msra.mxu0 0.0
        %4962 = vmatprep.subr.mxu0 0.0
        %4963 = vmatpush1.xpose.msra.mxu0 0.0
        %4964 = vmatprep.subr.mxu0 0.0
        %4965 = vmatpush1.xpose.msra.mxu0 0.0
        %4966 = vmatprep.subr.mxu0 0.0
        %4967 = vmatpush1.xpose.msra.mxu0 0.0
        %4968 = vmatprep.subr.mxu0 0.0
        %4969 = vmatpush1.xpose.msra.mxu0 0.0
        %4970 = vmatprep.subr.mxu0 0.0
        %4971 = vmatpush1.xpose.msra.mxu0 0.0
        %4972 = vmatprep.subr.mxu0 0.0
        %4973 = vmatpush1.xpose.msra.mxu0 0.0
        %4974 = vmatprep.subr.mxu0 0.0
        %4975 = vmatpush1.xpose.msra.mxu0 0.0
        %4976 = vmatprep.subr.mxu0 0.0
        %4977 = vmatpush1.xpose.msra.mxu0 0.0
        %4978 = vmatprep.subr.mxu0 0.0
        %4979 = vmatpush1.xpose.msra.mxu0 0.0
        %4980 = vmatprep.subr.mxu0 0.0
        %4981 = vmatpush1.xpose.msra.mxu0 0.0
        %4982 = vmatprep.subr.mxu0 0.0
        %4983 = vmatpush1.xpose.msra.mxu0 0.0
        %4984 = vmatprep.subr.mxu0 0.0
        %4985 = vmatpush1.xpose.msra.mxu0 0.0
        %4986 = vmatprep.subr.mxu0 0.0
        %4987 = vmatpush1.xpose.msra.mxu0 0.0
        %4988 = vmatprep.subr.mxu0 0.0
        %4989 = vmatpush1.xpose.msra.mxu0 0.0
        %4990 = vmatprep.subr.mxu0 0.0
        %4991 = vmatpush1.xpose.msra.mxu0 0.0
        %4992 = vmatprep.subr.mxu0 0.0
        %4993 = vmatpush1.xpose.msra.mxu0 0.0
        %4994 = vmatprep.subr.mxu0 0.0
        %4995 = vmatpush1.xpose.msra.mxu0 0.0
        %4996 = vmatprep.subr.mxu0 0.0
        %4997 = vmatpush1.xpose.msra.mxu0 0.0
        %4998 = vmatprep.subr.mxu0 0.0
        %4999 = vmatpush1.xpose.msra.mxu0 0.0
        %5000 = vmatprep.subr.mxu0 0.0
        %5001 = vmatpush1.xpose.msra.mxu0 0.0
        %5002 = vmatprep.subr.mxu0 0.0
        %5003 = vmatpush1.xpose.msra.mxu0 0.0
        %5004 = vmatprep.subr.mxu0 0.0
        %5005 = vmatpush1.xpose.msra.mxu0 0.0
        %5006 = vmatprep.subr.mxu0 0.0
        %5007 = vmatpush1.xpose.msra.mxu0 0.0
        %5008 = vmatprep.subr.mxu0 0.0
        %5009 = vmatpush1.xpose.msra.mxu0 0.0
        %5010 = vmatprep.subr.mxu0 0.0
        %5011 = vmatpush1.xpose.msra.mxu0 0.0
        %5012 = vmatprep.mubr.f32.mxu0 0.0
        %5013 = vmatmul.mubr.f32.gmra.mrb[0].mxu0 %v4931
        %v5014 = vpop.f32.mrb[0].mxu0
        %v5015 = vadd.f32 0.0, %v5014
        %v5016 = vpop.f32.mrb[0].mxu0
        %5017 = vmatprep.mubr.f32.mxu0 0.0
        %5018 = vmatmul.mubr.f32.gmra.mrb[0].mxu0 %v4934
        %v5019 = vpop.f32.mrb[0].mxu0
        %v5020 = vadd.f32 0.0, %v5019
        %v5021 = vpop.f32.mrb[0].mxu0
        %5022 = vmatprep.mubr.f32.mxu0 0.0
        %5023 = vmatmul.mubr.f32.gmra.mrb[0].mxu0 %v4937
        %v5024 = vpop.f32.mrb[0].mxu0
        %v5025 = vadd.f32 0.0, %v5024
        %v5026 = vpop.f32.mrb[0].mxu0
        %5027 = vdwg.mxu0
        %v5028 = vmul.f32 %v5015, 0.35355338
        %v5029 = vmul.f32 %v5020, 0.35355338
        %v5030 = vmul.f32 %v5025, 0.35355338
        %v5031 = vsel %vm1913, %v5028, -1e+30
        %v5032 = vsel %vm1913, %v5029, -1e+30
        %v5033 = vsel %vm1913, %v5030, -1e+30
        %v5034 = vsel %vm2300, %v5031, -inf
        %5035 = vmax.xlane.f32.xlu0 %v5034
        %v5036 = vpop.xlane.xlu0 %5035
        %v5037 = vsel %vm2300, %v5032, -inf
        %5038 = vmax.xlane.f32.xlu0 %v5037
        %v5039 = vpop.xlane.xlu0 %5038
        %v5040 = vsel %vm2300, %v5033, -inf
        %5041 = vmax.xlane.f32.xlu0 %v5040
        %v5042 = vpop.xlane.xlu0 %5041
        %v5043 = vsub.f32 %v5031, %v5036
        %v5044 = vsub.f32 %v5032, %v5039
        %v5045 = vsub.f32 %v5033, %v5042
        %v5046 = vmul.f32 %v5043, 1.442695
        %v5047 = vpow.pop %v5046
        %v5048 = vmul.f32 %v5044, 1.442695
        %v5049 = vpow.pop %v5048
        %v5050 = vmul.f32 %v5045, 1.442695
        %v5051 = vpow.pop %v5050
        %v5052 = vsel %vm2300, %v5047, 0.0
        %5053 = vadd.xlane.f32.xlu0 %v5052
        %v5054 = vpop.xlane.xlu0 %5053
        %v5055 = vsel %vm2300, %v5049, 0.0
        %5056 = vadd.xlane.f32.xlu0 %v5055
        %v5057 = vpop.xlane.xlu0 %5056
        %v5058 = vsel %vm2300, %v5051, 0.0
        %5059 = vadd.xlane.f32.xlu0 %v5058
        %v5060 = vpop.xlane.xlu0 %5059
        %v5061 = vrcp.pop %v5054
        %v5062 = vrcp.pop %v5057
        %v5063 = vrcp.pop %v5060
        %v5064 = vmul.f32 %v5047, %v5061
        %v5065 = vmul.f32 %v5049, %v5062
        %v5066 = vmul.f32 %v5051, %v5063
        %v5068 = vsel %vm2300, %v5064, 0
        %v5071 = vsel %vm2300, %v5065, 0
        %v5074 = vsel %vm2300, %v5066, 0
        %5076 = vmatprep.subr.mxu0 0.0
        %5077 = vmatpush1.msra.mxu0 %v4917
        %5078 = vmatprep.subr.mxu0 0.0
        %5079 = vmatpush1.msra.mxu0 %v4922
        %5080 = vmatprep.subr.mxu0 0.0
        %5081 = vmatpush1.msra.mxu0 %v4927
        %5082 = vmatprep.subr.mxu0 0.0
        %5083 = vmatpush1.msra.mxu0 0.0
        %5084 = vmatprep.subr.mxu0 0.0
        %5085 = vmatpush1.msra.mxu0 0.0
        %5086 = vmatprep.subr.mxu0 0.0
        %5087 = vmatpush1.msra.mxu0 0.0
        %5088 = vmatprep.subr.mxu0 0.0
        %5089 = vmatpush1.msra.mxu0 0.0
        %5090 = vmatprep.subr.mxu0 0.0
        %5091 = vmatpush1.msra.mxu0 0.0
        %5092 = vmatprep.subr.mxu0 0.0
        %5093 = vmatpush1.msra.mxu0 0.0
        %5094 = vmatprep.subr.mxu0 0.0
        %5095 = vmatpush1.msra.mxu0 0.0
        %5096 = vmatprep.subr.mxu0 0.0
        %5097 = vmatpush1.msra.mxu0 0.0
        %5098 = vmatprep.subr.mxu0 0.0
        %5099 = vmatpush1.msra.mxu0 0.0
        %5100 = vmatprep.subr.mxu0 0.0
        %5101 = vmatpush1.msra.mxu0 0.0
        %5102 = vmatprep.subr.mxu0 0.0
        %5103 = vmatpush1.msra.mxu0 0.0
        %5104 = vmatprep.subr.mxu0 0.0
        %5105 = vmatpush1.msra.mxu0 0.0
        %5106 = vmatprep.subr.mxu0 0.0
        %5107 = vmatpush1.msra.mxu0 0.0
        %5108 = vmatprep.subr.mxu0 0.0
        %5109 = vmatpush1.msra.mxu0 0.0
        %5110 = vmatprep.subr.mxu0 0.0
        %5111 = vmatpush1.msra.mxu0 0.0
        %5112 = vmatprep.subr.mxu0 0.0
        %5113 = vmatpush1.msra.mxu0 0.0
        %5114 = vmatprep.subr.mxu0 0.0
        %5115 = vmatpush1.msra.mxu0 0.0
        %5116 = vmatprep.subr.mxu0 0.0
        %5117 = vmatpush1.msra.mxu0 0.0
        %5118 = vmatprep.subr.mxu0 0.0
        %5119 = vmatpush1.msra.mxu0 0.0
        %5120 = vmatprep.subr.mxu0 0.0
        %5121 = vmatpush1.msra.mxu0 0.0
        %5122 = vmatprep.subr.mxu0 0.0
        %5123 = vmatpush1.msra.mxu0 0.0
        %5124 = vmatprep.subr.mxu0 0.0
        %5125 = vmatpush1.msra.mxu0 0.0
        %5126 = vmatprep.subr.mxu0 0.0
        %5127 = vmatpush1.msra.mxu0 0.0
        %5128 = vmatprep.subr.mxu0 0.0
        %5129 = vmatpush1.msra.mxu0 0.0
        %5130 = vmatprep.subr.mxu0 0.0
        %5131 = vmatpush1.msra.mxu0 0.0
        %5132 = vmatprep.subr.mxu0 0.0
        %5133 = vmatpush1.msra.mxu0 0.0
        %5134 = vmatprep.subr.mxu0 0.0
        %5135 = vmatpush1.msra.mxu0 0.0
        %5136 = vmatprep.subr.mxu0 0.0
        %5137 = vmatpush1.msra.mxu0 0.0
        %5138 = vmatprep.subr.mxu0 0.0
        %5139 = vmatpush1.msra.mxu0 0.0
        %5140 = vmatprep.mubr.f32.mxu0 0.0
        %5141 = vmatmul.mubr.f32.gmra.mrb[0].mxu0 %v5068
        %v5142 = vpop.f32.mrb[0].mxu0
        %v5143 = vadd.f32 0.0, %v5142
        %v5144 = vpop.f32.mrb[0].mxu0
        %5145 = vmatprep.mubr.f32.mxu0 0.0
        %5146 = vmatmul.mubr.f32.gmra.mrb[0].mxu0 %v5071
        %v5147 = vpop.f32.mrb[0].mxu0
        %v5148 = vadd.f32 0.0, %v5147
        %v5149 = vpop.f32.mrb[0].mxu0
        %5150 = vmatprep.mubr.f32.mxu0 0.0
        %5151 = vmatmul.mubr.f32.gmra.mrb[0].mxu0 %v5074
        %v5152 = vpop.f32.mrb[0].mxu0
        %v5153 = vadd.f32 0.0, %v5152
        %v5154 = vpop.f32.mrb[0].mxu0
        %5155 = vdwg.mxu0
        %v5156 = vld [vmem:[%s67] sm:$0xff]
        %s5157 = scalar_lea.vmem %s55, 32
        %v5158 = vld [vmem:[%s5157] sm:$0xff]
        %v5159 = vld [vmem:[%s5157 + $0x8] sm:$0xff]
        %v5160 = vld [vmem:[%s5157 + $0x10] sm:$0xff]
        %v5161 = vld [vmem:[%s5157 + $0x18] sm:$0xff]
        %s5162 = scalar_lea.vmem %s57, 1
        %v5163 = vld [vmem:[%s5162] sm:$0x1]
        %v5165 = vlaneseq
        %v5166 = vshrl.u32 %v5165, 7
        %v5167 = vsub.s32 0, %v5166
        %v5168 = vrot.slane %v5163, %v5167
        %5170 = vmatprep.subr.mxu0 0.0
        %5171 = vmatpush1.msra.mxu0 %v5158
        %5172 = vmatprep.subr.mxu0 0.0
        %5173 = vmatpush1.msra.mxu0 %v5159
        %5174 = vmatprep.subr.mxu0 0.0
        %5175 = vmatpush1.msra.mxu0 %v5160
        %5176 = vmatprep.subr.mxu0 0.0
        %5177 = vmatpush1.msra.mxu0 %v5161
        %5178 = vmatprep.subr.mxu0 0.0
        %5179 = vmatpush1.msra.mxu0 0.0
        %5180 = vmatprep.subr.mxu0 0.0
        %5181 = vmatpush1.msra.mxu0 0.0
        %5182 = vmatprep.subr.mxu0 0.0
        %5183 = vmatpush1.msra.mxu0 0.0
        %5184 = vmatprep.subr.mxu0 0.0
        %5185 = vmatpush1.msra.mxu0 0.0
        %5186 = vmatprep.subr.mxu0 0.0
        %5187 = vmatpush1.msra.mxu0 0.0
        %5188 = vmatprep.subr.mxu0 0.0
        %5189 = vmatpush1.msra.mxu0 0.0
        %5190 = vmatprep.subr.mxu0 0.0
        %5191 = vmatpush1.msra.mxu0 0.0
        %5192 = vmatprep.subr.mxu0 0.0
        %5193 = vmatpush1.msra.mxu0 0.0
        %5194 = vmatprep.subr.mxu0 0.0
        %5195 = vmatpush1.msra.mxu0 0.0
        %5196 = vmatprep.subr.mxu0 0.0
        %5197 = vmatpush1.msra.mxu0 0.0
        %5198 = vmatprep.subr.mxu0 0.0
        %5199 = vmatpush1.msra.mxu0 0.0
        %5200 = vmatprep.subr.mxu0 0.0
        %5201 = vmatpush1.msra.mxu0 0.0
        %5202 = vmatprep.subr.mxu0 0.0
        %5203 = vmatpush1.msra.mxu0 0.0
        %5204 = vmatprep.subr.mxu0 0.0
        %5205 = vmatpush1.msra.mxu0 0.0
        %5206 = vmatprep.subr.mxu0 0.0
        %5207 = vmatpush1.msra.mxu0 0.0
        %5208 = vmatprep.subr.mxu0 0.0
        %5209 = vmatpush1.msra.mxu0 0.0
        %5210 = vmatprep.subr.mxu0 0.0
        %5211 = vmatpush1.msra.mxu0 0.0
        %5212 = vmatprep.subr.mxu0 0.0
        %5213 = vmatpush1.msra.mxu0 0.0
        %5214 = vmatprep.subr.mxu0 0.0
        %5215 = vmatpush1.msra.mxu0 0.0
        %5216 = vmatprep.subr.mxu0 0.0
        %5217 = vmatpush1.msra.mxu0 0.0
        %5218 = vmatprep.subr.mxu0 0.0
        %5219 = vmatpush1.msra.mxu0 0.0
        %5220 = vmatprep.subr.mxu0 0.0
        %5221 = vmatpush1.msra.mxu0 0.0
        %5222 = vmatprep.subr.mxu0 0.0
        %5223 = vmatpush1.msra.mxu0 0.0
        %5224 = vmatprep.subr.mxu0 0.0
        %5225 = vmatpush1.msra.mxu0 0.0
        %5226 = vmatprep.subr.mxu0 0.0
        %5227 = vmatpush1.msra.mxu0 0.0
        %5228 = vmatprep.subr.mxu0 0.0
        %5229 = vmatpush1.msra.mxu0 0.0
        %5230 = vmatprep.subr.mxu0 0.0
        %5231 = vmatpush1.msra.mxu0 0.0
        %5232 = vmatprep.subr.mxu0 0.0
        %5233 = vmatpush1.msra.mxu0 0.0
        %5234 = vmatprep.mubr.f32.mxu0 0.0
        %5235 = vmatmul.mubr.f32.gmra.mrb[0].mxu0 %v4660
        %v5236 = vpop.f32.mrb[0].mxu0
        %v5237 = vadd.f32 %v5168, %v5236
        %v5238 = vpop.f32.mrb[0].mxu0
        %5239 = vmatprep.mubr.f32.mxu0 0.0
        %5240 = vmatmul.mubr.f32.gmra.mrb[0].mxu0 %v4663
        %v5241 = vpop.f32.mrb[0].mxu0
        %v5242 = vadd.f32 %v5168, %v5241
        %v5243 = vpop.f32.mrb[0].mxu0
        %5244 = vmatprep.mubr.f32.mxu0 0.0
        %5245 = vmatmul.mubr.f32.gmra.mrb[0].mxu0 %v4666
        %v5246 = vpop.f32.mrb[0].mxu0
        %v5247 = vadd.f32 %v5168, %v5246
        %v5248 = vpop.f32.mrb[0].mxu0
        %5249 = vdwg.mxu0
        %s5250 = scalar_lea.vmem %s59, 32
        %v5251 = vld [vmem:[%s5250] sm:$0xff]
        %v5252 = vld [vmem:[%s5250 + $0x8] sm:$0xff]
        %v5253 = vld [vmem:[%s5250 + $0x10] sm:$0xff]
        %v5254 = vld [vmem:[%s5250 + $0x18] sm:$0xff]
        %s5255 = scalar_lea.vmem %s61, 1
        %v5256 = vld [vmem:[%s5255] sm:$0x1]
        %v5258 = vlaneseq
        %v5259 = vshrl.u32 %v5258, 7
        %v5260 = vsub.s32 0, %v5259
        %v5261 = vrot.slane %v5256, %v5260
        %5263 = vmatprep.subr.mxu0 0.0
        %5264 = vmatpush1.msra.mxu0 %v5251
        %5265 = vmatprep.subr.mxu0 0.0
        %5266 = vmatpush1.msra.mxu0 %v5252
        %5267 = vmatprep.subr.mxu0 0.0
        %5268 = vmatpush1.msra.mxu0 %v5253
        %5269 = vmatprep.subr.mxu0 0.0
        %5270 = vmatpush1.msra.mxu0 %v5254
        %5271 = vmatprep.subr.mxu0 0.0
        %5272 = vmatpush1.msra.mxu0 0.0
        %5273 = vmatprep.subr.mxu0 0.0
        %5274 = vmatpush1.msra.mxu0 0.0
        %5275 = vmatprep.subr.mxu0 0.0
        %5276 = vmatpush1.msra.mxu0 0.0
        %5277 = vmatprep.subr.mxu0 0.0
        %5278 = vmatpush1.msra.mxu0 0.0
        %5279 = vmatprep.subr.mxu0 0.0
        %5280 = vmatpush1.msra.mxu0 0.0
        %5281 = vmatprep.subr.mxu0 0.0
        %5282 = vmatpush1.msra.mxu0 0.0
        %5283 = vmatprep.subr.mxu0 0.0
        %5284 = vmatpush1.msra.mxu0 0.0
        %5285 = vmatprep.subr.mxu0 0.0
        %5286 = vmatpush1.msra.mxu0 0.0
        %5287 = vmatprep.subr.mxu0 0.0
        %5288 = vmatpush1.msra.mxu0 0.0
        %5289 = vmatprep.subr.mxu0 0.0
        %5290 = vmatpush1.msra.mxu0 0.0
        %5291 = vmatprep.subr.mxu0 0.0
        %5292 = vmatpush1.msra.mxu0 0.0
        %5293 = vmatprep.subr.mxu0 0.0
        %5294 = vmatpush1.msra.mxu0 0.0
        %5295 = vmatprep.subr.mxu0 0.0
        %5296 = vmatpush1.msra.mxu0 0.0
        %5297 = vmatprep.subr.mxu0 0.0
        %5298 = vmatpush1.msra.mxu0 0.0
        %5299 = vmatprep.subr.mxu0 0.0
        %5300 = vmatpush1.msra.mxu0 0.0
        %5301 = vmatprep.subr.mxu0 0.0
        %5302 = vmatpush1.msra.mxu0 0.0
        %5303 = vmatprep.subr.mxu0 0.0
        %5304 = vmatpush1.msra.mxu0 0.0
        %5305 = vmatprep.subr.mxu0 0.0
        %5306 = vmatpush1.msra.mxu0 0.0
        %5307 = vmatprep.subr.mxu0 0.0
        %5308 = vmatpush1.msra.mxu0 0.0
        %5309 = vmatprep.subr.mxu0 0.0
        %5310 = vmatpush1.msra.mxu0 0.0
        %5311 = vmatprep.subr.mxu0 0.0
        %5312 = vmatpush1.msra.mxu0 0.0
        %5313 = vmatprep.subr.mxu0 0.0
        %5314 = vmatpush1.msra.mxu0 0.0
        %5315 = vmatprep.subr.mxu0 0.0
        %5316 = vmatpush1.msra.mxu0 0.0
        %5317 = vmatprep.subr.mxu0 0.0
        %5318 = vmatpush1.msra.mxu0 0.0
        %5319 = vmatprep.subr.mxu0 0.0
        %5320 = vmatpush1.msra.mxu0 0.0
        %5321 = vmatprep.subr.mxu0 0.0
        %5322 = vmatpush1.msra.mxu0 0.0
        %5323 = vmatprep.subr.mxu0 0.0
        %5324 = vmatpush1.msra.mxu0 0.0
        %5325 = vmatprep.subr.mxu0 0.0
        %5326 = vmatpush1.msra.mxu0 0.0
        %5327 = vmatprep.mubr.f32.mxu0 0.0
        %5328 = vmatmul.mubr.f32.gmra.mrb[0].mxu0 %v4660
        %v5329 = vpop.f32.mrb[0].mxu0
        %v5330 = vadd.f32 %v5261, %v5329
        %v5331 = vpop.f32.mrb[0].mxu0
        %5332 = vmatprep.mubr.f32.mxu0 0.0
        %5333 = vmatmul.mubr.f32.gmra.mrb[0].mxu0 %v4663
        %v5334 = vpop.f32.mrb[0].mxu0
        %v5335 = vadd.f32 %v5261, %v5334
        %v5336 = vpop.f32.mrb[0].mxu0
        %5337 = vmatprep.mubr.f32.mxu0 0.0
        %5338 = vmatmul.mubr.f32.gmra.mrb[0].mxu0 %v4666
        %v5339 = vpop.f32.mrb[0].mxu0
        %v5340 = vadd.f32 %v5261, %v5339
        %v5341 = vpop.f32.mrb[0].mxu0
        %5342 = vdwg.mxu0
        %s5343 = scalar_lea.vmem %s63, 32
        %v5344 = vld [vmem:[%s5343] sm:$0xff]
        %v5345 = vld [vmem:[%s5343 + $0x8] sm:$0xff]
        %v5346 = vld [vmem:[%s5343 + $0x10] sm:$0xff]
        %v5347 = vld [vmem:[%s5343 + $0x18] sm:$0xff]
        %s5348 = scalar_lea.vmem %s65, 1
        %v5349 = vld [vmem:[%s5348] sm:$0x1]
        %v5351 = vlaneseq
        %v5352 = vshrl.u32 %v5351, 7
        %v5353 = vsub.s32 0, %v5352
        %v5354 = vrot.slane %v5349, %v5353
        %5356 = vmatprep.subr.mxu0 0.0
        %5357 = vmatpush1.msra.mxu0 %v5344
        %5358 = vmatprep.subr.mxu0 0.0
        %5359 = vmatpush1.msra.mxu0 %v5345
        %5360 = vmatprep.subr.mxu0 0.0
        %5361 = vmatpush1.msra.mxu0 %v5346
        %5362 = vmatprep.subr.mxu0 0.0
        %5363 = vmatpush1.msra.mxu0 %v5347
        %5364 = vmatprep.subr.mxu0 0.0
        %5365 = vmatpush1.msra.mxu0 0.0
        %5366 = vmatprep.subr.mxu0 0.0
        %5367 = vmatpush1.msra.mxu0 0.0
        %5368 = vmatprep.subr.mxu0 0.0
        %5369 = vmatpush1.msra.mxu0 0.0
        %5370 = vmatprep.subr.mxu0 0.0
        %5371 = vmatpush1.msra.mxu0 0.0
        %5372 = vmatprep.subr.mxu0 0.0
        %5373 = vmatpush1.msra.mxu0 0.0
        %5374 = vmatprep.subr.mxu0 0.0
        %5375 = vmatpush1.msra.mxu0 0.0
        %5376 = vmatprep.subr.mxu0 0.0
        %5377 = vmatpush1.msra.mxu0 0.0
        %5378 = vmatprep.subr.mxu0 0.0
        %5379 = vmatpush1.msra.mxu0 0.0
        %5380 = vmatprep.subr.mxu0 0.0
        %5381 = vmatpush1.msra.mxu0 0.0
        %5382 = vmatprep.subr.mxu0 0.0
        %5383 = vmatpush1.msra.mxu0 0.0
        %5384 = vmatprep.subr.mxu0 0.0
        %5385 = vmatpush1.msra.mxu0 0.0
        %5386 = vmatprep.subr.mxu0 0.0
        %5387 = vmatpush1.msra.mxu0 0.0
        %5388 = vmatprep.subr.mxu0 0.0
        %5389 = vmatpush1.msra.mxu0 0.0
        %5390 = vmatprep.subr.mxu0 0.0
        %5391 = vmatpush1.msra.mxu0 0.0
        %5392 = vmatprep.subr.mxu0 0.0
        %5393 = vmatpush1.msra.mxu0 0.0
        %5394 = vmatprep.subr.mxu0 0.0
        %5395 = vmatpush1.msra.mxu0 0.0
        %5396 = vmatprep.subr.mxu0 0.0
        %5397 = vmatpush1.msra.mxu0 0.0
        %5398 = vmatprep.subr.mxu0 0.0
        %5399 = vmatpush1.msra.mxu0 0.0
        %5400 = vmatprep.subr.mxu0 0.0
        %5401 = vmatpush1.msra.mxu0 0.0
        %5402 = vmatprep.subr.mxu0 0.0
        %5403 = vmatpush1.msra.mxu0 0.0
        %5404 = vmatprep.subr.mxu0 0.0
        %5405 = vmatpush1.msra.mxu0 0.0
        %5406 = vmatprep.subr.mxu0 0.0
        %5407 = vmatpush1.msra.mxu0 0.0
        %5408 = vmatprep.subr.mxu0 0.0
        %5409 = vmatpush1.msra.mxu0 0.0
        %5410 = vmatprep.subr.mxu0 0.0
        %5411 = vmatpush1.msra.mxu0 0.0
        %5412 = vmatprep.subr.mxu0 0.0
        %5413 = vmatpush1.msra.mxu0 0.0
        %5414 = vmatprep.subr.mxu0 0.0
        %5415 = vmatpush1.msra.mxu0 0.0
        %5416 = vmatprep.subr.mxu0 0.0
        %5417 = vmatpush1.msra.mxu0 0.0
        %5418 = vmatprep.subr.mxu0 0.0
        %5419 = vmatpush1.msra.mxu0 0.0
        %5420 = vmatprep.mubr.f32.mxu0 0.0
        %5421 = vmatmul.mubr.f32.gmra.mrb[0].mxu0 %v4660
        %v5422 = vpop.f32.mrb[0].mxu0
        %v5423 = vadd.f32 %v5354, %v5422
        %v5424 = vpop.f32.mrb[0].mxu0
        %5425 = vmatprep.mubr.f32.mxu0 0.0
        %5426 = vmatmul.mubr.f32.gmra.mrb[0].mxu0 %v4663
        %v5427 = vpop.f32.mrb[0].mxu0
        %v5428 = vadd.f32 %v5354, %v5427
        %v5429 = vpop.f32.mrb[0].mxu0
        %5430 = vmatprep.mubr.f32.mxu0 0.0
        %5431 = vmatmul.mubr.f32.gmra.mrb[0].mxu0 %v4666
        %v5432 = vpop.f32.mrb[0].mxu0
        %v5433 = vadd.f32 %v5354, %v5432
        %v5434 = vpop.f32.mrb[0].mxu0
        %5435 = vdwg.mxu0
        %v5437 = vsel %vm1635, %v5237, 0
        %v5440 = vsel %vm1635, %v5242, 0
        %v5443 = vsel %vm1635, %v5247, 0
        %v5446 = vsel %vm1635, %v5330, 0
        %v5449 = vsel %vm1635, %v5335, 0
        %v5452 = vsel %vm1635, %v5340, 0
        %5454 = vmatprep.subr.mxu0 0.0
        %5455 = vmatpush1.xpose.msra.mxu0 %v5446
        %5456 = vmatprep.subr.mxu0 0.0
        %5457 = vmatpush1.xpose.msra.mxu0 %v5449
        %5458 = vmatprep.subr.mxu0 0.0
        %5459 = vmatpush1.xpose.msra.mxu0 %v5452
        %5460 = vmatprep.subr.mxu0 0.0
        %5461 = vmatpush1.xpose.msra.mxu0 0.0
        %5462 = vmatprep.subr.mxu0 0.0
        %5463 = vmatpush1.xpose.msra.mxu0 0.0
        %5464 = vmatprep.subr.mxu0 0.0
        %5465 = vmatpush1.xpose.msra.mxu0 0.0
        %5466 = vmatprep.subr.mxu0 0.0
        %5467 = vmatpush1.xpose.msra.mxu0 0.0
        %5468 = vmatprep.subr.mxu0 0.0
        %5469 = vmatpush1.xpose.msra.mxu0 0.0
        %5470 = vmatprep.subr.mxu0 0.0
        %5471 = vmatpush1.xpose.msra.mxu0 0.0
        %5472 = vmatprep.subr.mxu0 0.0
        %5473 = vmatpush1.xpose.msra.mxu0 0.0
        %5474 = vmatprep.subr.mxu0 0.0
        %5475 = vmatpush1.xpose.msra.mxu0 0.0
        %5476 = vmatprep.subr.mxu0 0.0
        %5477 = vmatpush1.xpose.msra.mxu0 0.0
        %5478 = vmatprep.subr.mxu0 0.0
        %5479 = vmatpush1.xpose.msra.mxu0 0.0
        %5480 = vmatprep.subr.mxu0 0.0
        %5481 = vmatpush1.xpose.msra.mxu0 0.0
        %5482 = vmatprep.subr.mxu0 0.0
        %5483 = vmatpush1.xpose.msra.mxu0 0.0
        %5484 = vmatprep.subr.mxu0 0.0
        %5485 = vmatpush1.xpose.msra.mxu0 0.0
        %5486 = vmatprep.subr.mxu0 0.0
        %5487 = vmatpush1.xpose.msra.mxu0 0.0
        %5488 = vmatprep.subr.mxu0 0.0
        %5489 = vmatpush1.xpose.msra.mxu0 0.0
        %5490 = vmatprep.subr.mxu0 0.0
        %5491 = vmatpush1.xpose.msra.mxu0 0.0
        %5492 = vmatprep.subr.mxu0 0.0
        %5493 = vmatpush1.xpose.msra.mxu0 0.0
        %5494 = vmatprep.subr.mxu0 0.0
        %5495 = vmatpush1.xpose.msra.mxu0 0.0
        %5496 = vmatprep.subr.mxu0 0.0
        %5497 = vmatpush1.xpose.msra.mxu0 0.0
        %5498 = vmatprep.subr.mxu0 0.0
        %5499 = vmatpush1.xpose.msra.mxu0 0.0
        %5500 = vmatprep.subr.mxu0 0.0
        %5501 = vmatpush1.xpose.msra.mxu0 0.0
        %5502 = vmatprep.subr.mxu0 0.0
        %5503 = vmatpush1.xpose.msra.mxu0 0.0
        %5504 = vmatprep.subr.mxu0 0.0
        %5505 = vmatpush1.xpose.msra.mxu0 0.0
        %5506 = vmatprep.subr.mxu0 0.0
        %5507 = vmatpush1.xpose.msra.mxu0 0.0
        %5508 = vmatprep.subr.mxu0 0.0
        %5509 = vmatpush1.xpose.msra.mxu0 0.0
        %5510 = vmatprep.subr.mxu0 0.0
        %5511 = vmatpush1.xpose.msra.mxu0 0.0
        %5512 = vmatprep.subr.mxu0 0.0
        %5513 = vmatpush1.xpose.msra.mxu0 0.0
        %5514 = vmatprep.subr.mxu0 0.0
        %5515 = vmatpush1.xpose.msra.mxu0 0.0
        %5516 = vmatprep.subr.mxu0 0.0
        %5517 = vmatpush1.xpose.msra.mxu0 0.0
        %5518 = vmatprep.mubr.f32.mxu0 0.0
        %5519 = vmatmul.mubr.f32.gmra.mrb[0].mxu0 %v5437
        %v5520 = vpop.f32.mrb[0].mxu0
        %v5521 = vadd.f32 0.0, %v5520
        %v5522 = vpop.f32.mrb[0].mxu0
        %5523 = vmatprep.mubr.f32.mxu0 0.0
        %5524 = vmatmul.mubr.f32.gmra.mrb[0].mxu0 %v5440
        %v5525 = vpop.f32.mrb[0].mxu0
        %v5526 = vadd.f32 0.0, %v5525
        %v5527 = vpop.f32.mrb[0].mxu0
        %5528 = vmatprep.mubr.f32.mxu0 0.0
        %5529 = vmatmul.mubr.f32.gmra.mrb[0].mxu0 %v5443
        %v5530 = vpop.f32.mrb[0].mxu0
        %v5531 = vadd.f32 0.0, %v5530
        %v5532 = vpop.f32.mrb[0].mxu0
        %5533 = vdwg.mxu0
        %v5534 = vmul.f32 %v5521, 0.35355338
        %v5535 = vmul.f32 %v5526, 0.35355338
        %v5536 = vmul.f32 %v5531, 0.35355338
        %v5537 = vsel %vm1913, %v5534, -1e+30
        %v5538 = vsel %vm1913, %v5535, -1e+30
        %v5539 = vsel %vm1913, %v5536, -1e+30
        %v5540 = vsel %vm2300, %v5537, -inf
        %5541 = vmax.xlane.f32.xlu0 %v5540
        %v5542 = vpop.xlane.xlu0 %5541
        %v5543 = vsel %vm2300, %v5538, -inf
        %5544 = vmax.xlane.f32.xlu0 %v5543
        %v5545 = vpop.xlane.xlu0 %5544
        %v5546 = vsel %vm2300, %v5539, -inf
        %5547 = vmax.xlane.f32.xlu0 %v5546
        %v5548 = vpop.xlane.xlu0 %5547
        %v5549 = vsub.f32 %v5537, %v5542
        %v5550 = vsub.f32 %v5538, %v5545
        %v5551 = vsub.f32 %v5539, %v5548
        %v5552 = vmul.f32 %v5549, 1.442695
        %v5553 = vpow.pop %v5552
        %v5554 = vmul.f32 %v5550, 1.442695
        %v5555 = vpow.pop %v5554
        %v5556 = vmul.f32 %v5551, 1.442695
        %v5557 = vpow.pop %v5556
        %v5558 = vsel %vm2300, %v5553, 0.0
        %5559 = vadd.xlane.f32.xlu0 %v5558
        %v5560 = vpop.xlane.xlu0 %5559
        %v5561 = vsel %vm2300, %v5555, 0.0
        %5562 = vadd.xlane.f32.xlu0 %v5561
        %v5563 = vpop.xlane.xlu0 %5562
        %v5564 = vsel %vm2300, %v5557, 0.0
        %5565 = vadd.xlane.f32.xlu0 %v5564
        %v5566 = vpop.xlane.xlu0 %5565
        %v5567 = vrcp.pop %v5560
        %v5568 = vrcp.pop %v5563
        %v5569 = vrcp.pop %v5566
        %v5570 = vmul.f32 %v5553, %v5567
        %v5571 = vmul.f32 %v5555, %v5568
        %v5572 = vmul.f32 %v5557, %v5569
        %v5574 = vsel %vm2300, %v5570, 0
        %v5577 = vsel %vm2300, %v5571, 0
        %v5580 = vsel %vm2300, %v5572, 0
        %5582 = vmatprep.subr.mxu0 0.0
        %5583 = vmatpush1.msra.mxu0 %v5423
        %5584 = vmatprep.subr.mxu0 0.0
        %5585 = vmatpush1.msra.mxu0 %v5428
        %5586 = vmatprep.subr.mxu0 0.0
        %5587 = vmatpush1.msra.mxu0 %v5433
        %5588 = vmatprep.subr.mxu0 0.0
        %5589 = vmatpush1.msra.mxu0 0.0
        %5590 = vmatprep.subr.mxu0 0.0
        %5591 = vmatpush1.msra.mxu0 0.0
        %5592 = vmatprep.subr.mxu0 0.0
        %5593 = vmatpush1.msra.mxu0 0.0
        %5594 = vmatprep.subr.mxu0 0.0
        %5595 = vmatpush1.msra.mxu0 0.0
        %5596 = vmatprep.subr.mxu0 0.0
        %5597 = vmatpush1.msra.mxu0 0.0
        %5598 = vmatprep.subr.mxu0 0.0
        %5599 = vmatpush1.msra.mxu0 0.0
        %5600 = vmatprep.subr.mxu0 0.0
        %5601 = vmatpush1.msra.mxu0 0.0
        %5602 = vmatprep.subr.mxu0 0.0
        %5603 = vmatpush1.msra.mxu0 0.0
        %5604 = vmatprep.subr.mxu0 0.0
        %5605 = vmatpush1.msra.mxu0 0.0
        %5606 = vmatprep.subr.mxu0 0.0
        %5607 = vmatpush1.msra.mxu0 0.0
        %5608 = vmatprep.subr.mxu0 0.0
        %5609 = vmatpush1.msra.mxu0 0.0
        %5610 = vmatprep.subr.mxu0 0.0
        %5611 = vmatpush1.msra.mxu0 0.0
        %5612 = vmatprep.subr.mxu0 0.0
        %5613 = vmatpush1.msra.mxu0 0.0
        %5614 = vmatprep.subr.mxu0 0.0
        %5615 = vmatpush1.msra.mxu0 0.0
        %5616 = vmatprep.subr.mxu0 0.0
        %5617 = vmatpush1.msra.mxu0 0.0
        %5618 = vmatprep.subr.mxu0 0.0
        %5619 = vmatpush1.msra.mxu0 0.0
        %5620 = vmatprep.subr.mxu0 0.0
        %5621 = vmatpush1.msra.mxu0 0.0
        %5622 = vmatprep.subr.mxu0 0.0
        %5623 = vmatpush1.msra.mxu0 0.0
        %5624 = vmatprep.subr.mxu0 0.0
        %5625 = vmatpush1.msra.mxu0 0.0
        %5626 = vmatprep.subr.mxu0 0.0
        %5627 = vmatpush1.msra.mxu0 0.0
        %5628 = vmatprep.subr.mxu0 0.0
        %5629 = vmatpush1.msra.mxu0 0.0
        %5630 = vmatprep.subr.mxu0 0.0
        %5631 = vmatpush1.msra.mxu0 0.0
        %5632 = vmatprep.subr.mxu0 0.0
        %5633 = vmatpush1.msra.mxu0 0.0
        %5634 = vmatprep.subr.mxu0 0.0
        %5635 = vmatpush1.msra.mxu0 0.0
        %5636 = vmatprep.subr.mxu0 0.0
        %5637 = vmatpush1.msra.mxu0 0.0
        %5638 = vmatprep.subr.mxu0 0.0
        %5639 = vmatpush1.msra.mxu0 0.0
        %5640 = vmatprep.subr.mxu0 0.0
        %5641 = vmatpush1.msra.mxu0 0.0
        %5642 = vmatprep.subr.mxu0 0.0
        %5643 = vmatpush1.msra.mxu0 0.0
        %5644 = vmatprep.subr.mxu0 0.0
        %5645 = vmatpush1.msra.mxu0 0.0
        %5646 = vmatprep.mubr.f32.mxu0 0.0
        %5647 = vmatmul.mubr.f32.gmra.mrb[0].mxu0 %v5574
        %v5648 = vpop.f32.mrb[0].mxu0
        %v5649 = vadd.f32 0.0, %v5648
        %v5650 = vpop.f32.mrb[0].mxu0
        %5651 = vmatprep.mubr.f32.mxu0 0.0
        %5652 = vmatmul.mubr.f32.gmra.mrb[0].mxu0 %v5577
        %v5653 = vpop.f32.mrb[0].mxu0
        %v5654 = vadd.f32 0.0, %v5653
        %v5655 = vpop.f32.mrb[0].mxu0
        %5656 = vmatprep.mubr.f32.mxu0 0.0
        %5657 = vmatmul.mubr.f32.gmra.mrb[0].mxu0 %v5580
        %v5658 = vpop.f32.mrb[0].mxu0
        %v5659 = vadd.f32 0.0, %v5658
        %v5660 = vpop.f32.mrb[0].mxu0
        %5661 = vdwg.mxu0
        %s5662 = scalar_lea.vmem %s67, 8
        %v5663 = vld [vmem:[%s5662] sm:$0xff]
        %v5665 = vsel %vm1635, %v5649, 0
        %v5668 = vsel %vm1635, %v5654, 0
        %v5671 = vsel %vm1635, %v5659, 0
        %5673 = vmatprep.subr.mxu0 0.0
        %5674 = vmatpush1.msra.mxu0 %v5663
        %5675 = vmatprep.subr.mxu0 0.0
        %5676 = vmatpush1.msra.mxu0 0.0
        %5677 = vmatprep.subr.mxu0 0.0
        %5678 = vmatpush1.msra.mxu0 0.0
        %5679 = vmatprep.subr.mxu0 0.0
        %5680 = vmatpush1.msra.mxu0 0.0
        %5681 = vmatprep.subr.mxu0 0.0
        %5682 = vmatpush1.msra.mxu0 0.0
        %5683 = vmatprep.subr.mxu0 0.0
        %5684 = vmatpush1.msra.mxu0 0.0
        %5685 = vmatprep.subr.mxu0 0.0
        %5686 = vmatpush1.msra.mxu0 0.0
        %5687 = vmatprep.subr.mxu0 0.0
        %5688 = vmatpush1.msra.mxu0 0.0
        %5689 = vmatprep.subr.mxu0 0.0
        %5690 = vmatpush1.msra.mxu0 0.0
        %5691 = vmatprep.subr.mxu0 0.0
        %5692 = vmatpush1.msra.mxu0 0.0
        %5693 = vmatprep.subr.mxu0 0.0
        %5694 = vmatpush1.msra.mxu0 0.0
        %5695 = vmatprep.subr.mxu0 0.0
        %5696 = vmatpush1.msra.mxu0 0.0
        %5697 = vmatprep.subr.mxu0 0.0
        %5698 = vmatpush1.msra.mxu0 0.0
        %5699 = vmatprep.subr.mxu0 0.0
        %5700 = vmatpush1.msra.mxu0 0.0
        %5701 = vmatprep.subr.mxu0 0.0
        %5702 = vmatpush1.msra.mxu0 0.0
        %5703 = vmatprep.subr.mxu0 0.0
        %5704 = vmatpush1.msra.mxu0 0.0
        %5705 = vmatprep.subr.mxu0 0.0
        %5706 = vmatpush1.msra.mxu0 0.0
        %5707 = vmatprep.subr.mxu0 0.0
        %5708 = vmatpush1.msra.mxu0 0.0
        %5709 = vmatprep.subr.mxu0 0.0
        %5710 = vmatpush1.msra.mxu0 0.0
        %5711 = vmatprep.subr.mxu0 0.0
        %5712 = vmatpush1.msra.mxu0 0.0
        %5713 = vmatprep.subr.mxu0 0.0
        %5714 = vmatpush1.msra.mxu0 0.0
        %5715 = vmatprep.subr.mxu0 0.0
        %5716 = vmatpush1.msra.mxu0 0.0
        %5717 = vmatprep.subr.mxu0 0.0
        %5718 = vmatpush1.msra.mxu0 0.0
        %5719 = vmatprep.subr.mxu0 0.0
        %5720 = vmatpush1.msra.mxu0 0.0
        %5721 = vmatprep.subr.mxu0 0.0
        %5722 = vmatpush1.msra.mxu0 0.0
        %5723 = vmatprep.subr.mxu0 0.0
        %5724 = vmatpush1.msra.mxu0 0.0
        %5725 = vmatprep.subr.mxu0 0.0
        %5726 = vmatpush1.msra.mxu0 0.0
        %5727 = vmatprep.subr.mxu0 0.0
        %5728 = vmatpush1.msra.mxu0 0.0
        %5729 = vmatprep.subr.mxu0 0.0
        %5730 = vmatpush1.msra.mxu0 0.0
        %5731 = vmatprep.subr.mxu0 0.0
        %5732 = vmatpush1.msra.mxu0 0.0
        %5733 = vmatprep.subr.mxu0 0.0
        %5734 = vmatpush1.msra.mxu0 0.0
        %5735 = vmatprep.subr.mxu0 0.0
        %5736 = vmatpush1.msra.mxu0 0.0
        %5737 = vmatprep.mubr.f32.mxu0 0.0
        %5738 = vmatmul.mubr.f32.gmra.mrb[0].mxu0 %v5665
        %v5739 = vpop.f32.mrb[0].mxu0
        %v5740 = vadd.f32 0.0, %v5739
        %v5741 = vpop.f32.mrb[0].mxu0
        %5742 = vmatprep.mubr.f32.mxu0 0.0
        %5743 = vmatmul.mubr.f32.gmra.mrb[0].mxu0 %v5668
        %v5744 = vpop.f32.mrb[0].mxu0
        %v5745 = vadd.f32 0.0, %v5744
        %v5746 = vpop.f32.mrb[0].mxu0
        %5747 = vmatprep.mubr.f32.mxu0 0.0
        %5748 = vmatmul.mubr.f32.gmra.mrb[0].mxu0 %v5671
        %v5749 = vpop.f32.mrb[0].mxu0
        %v5750 = vadd.f32 0.0, %v5749
        %v5751 = vpop.f32.mrb[0].mxu0
        %5752 = vdwg.mxu0
        %v5754 = vsel %vm1635, %v5143, 0
        %v5757 = vsel %vm1635, %v5148, 0
        %v5760 = vsel %vm1635, %v5153, 0
        %5762 = vmatprep.subr.mxu0 0.0
        %5763 = vmatpush1.msra.mxu0 %v5156
        %5764 = vmatprep.subr.mxu0 0.0
        %5765 = vmatpush1.msra.mxu0 0.0
        %5766 = vmatprep.subr.mxu0 0.0
        %5767 = vmatpush1.msra.mxu0 0.0
        %5768 = vmatprep.subr.mxu0 0.0
        %5769 = vmatpush1.msra.mxu0 0.0
        %5770 = vmatprep.subr.mxu0 0.0
        %5771 = vmatpush1.msra.mxu0 0.0
        %5772 = vmatprep.subr.mxu0 0.0
        %5773 = vmatpush1.msra.mxu0 0.0
        %5774 = vmatprep.subr.mxu0 0.0
        %5775 = vmatpush1.msra.mxu0 0.0
        %5776 = vmatprep.subr.mxu0 0.0
        %5777 = vmatpush1.msra.mxu0 0.0
        %5778 = vmatprep.subr.mxu0 0.0
        %5779 = vmatpush1.msra.mxu0 0.0
        %5780 = vmatprep.subr.mxu0 0.0
        %5781 = vmatpush1.msra.mxu0 0.0
        %5782 = vmatprep.subr.mxu0 0.0
        %5783 = vmatpush1.msra.mxu0 0.0
        %5784 = vmatprep.subr.mxu0 0.0
        %5785 = vmatpush1.msra.mxu0 0.0
        %5786 = vmatprep.subr.mxu0 0.0
        %5787 = vmatpush1.msra.mxu0 0.0
        %5788 = vmatprep.subr.mxu0 0.0
        %5789 = vmatpush1.msra.mxu0 0.0
        %5790 = vmatprep.subr.mxu0 0.0
        %5791 = vmatpush1.msra.mxu0 0.0
        %5792 = vmatprep.subr.mxu0 0.0
        %5793 = vmatpush1.msra.mxu0 0.0
        %5794 = vmatprep.subr.mxu0 0.0
        %5795 = vmatpush1.msra.mxu0 0.0
        %5796 = vmatprep.subr.mxu0 0.0
        %5797 = vmatpush1.msra.mxu0 0.0
        %5798 = vmatprep.subr.mxu0 0.0
        %5799 = vmatpush1.msra.mxu0 0.0
        %5800 = vmatprep.subr.mxu0 0.0
        %5801 = vmatpush1.msra.mxu0 0.0
        %5802 = vmatprep.subr.mxu0 0.0
        %5803 = vmatpush1.msra.mxu0 0.0
        %5804 = vmatprep.subr.mxu0 0.0
        %5805 = vmatpush1.msra.mxu0 0.0
        %5806 = vmatprep.subr.mxu0 0.0
        %5807 = vmatpush1.msra.mxu0 0.0
        %5808 = vmatprep.subr.mxu0 0.0
        %5809 = vmatpush1.msra.mxu0 0.0
        %5810 = vmatprep.subr.mxu0 0.0
        %5811 = vmatpush1.msra.mxu0 0.0
        %5812 = vmatprep.subr.mxu0 0.0
        %5813 = vmatpush1.msra.mxu0 0.0
        %5814 = vmatprep.subr.mxu0 0.0
        %5815 = vmatpush1.msra.mxu0 0.0
        %5816 = vmatprep.subr.mxu0 0.0
        %5817 = vmatpush1.msra.mxu0 0.0
        %5818 = vmatprep.subr.mxu0 0.0
        %5819 = vmatpush1.msra.mxu0 0.0
        %5820 = vmatprep.subr.mxu0 0.0
        %5821 = vmatpush1.msra.mxu0 0.0
        %5822 = vmatprep.subr.mxu0 0.0
        %5823 = vmatpush1.msra.mxu0 0.0
        %5824 = vmatprep.subr.mxu0 0.0
        %5825 = vmatpush1.msra.mxu0 0.0
        %5826 = vmatprep.mubr.f32.mxu0 0.0
        %5827 = vmatmul.mubr.f32.gmra.mrb[0].mxu0 %v5754
        %v5828 = vpop.f32.mrb[0].mxu0
        %v5829 = vadd.f32 %v5740, %v5828
        %v5830 = vpop.f32.mrb[0].mxu0
        %5831 = vmatprep.mubr.f32.mxu0 0.0
        %5832 = vmatmul.mubr.f32.gmra.mrb[0].mxu0 %v5757
        %v5833 = vpop.f32.mrb[0].mxu0
        %v5834 = vadd.f32 %v5745, %v5833
        %v5835 = vpop.f32.mrb[0].mxu0
        %5836 = vmatprep.mubr.f32.mxu0 0.0
        %5837 = vmatmul.mubr.f32.gmra.mrb[0].mxu0 %v5760
        %v5838 = vpop.f32.mrb[0].mxu0
        %v5839 = vadd.f32 %v5750, %v5838
        %v5840 = vpop.f32.mrb[0].mxu0
        %5841 = vdwg.mxu0
        %s5842 = scalar_lea.vmem %s55, 64
        %v5843 = vld [vmem:[%s5842] sm:$0xff]
        %v5844 = vld [vmem:[%s5842 + $0x8] sm:$0xff]
        %v5845 = vld [vmem:[%s5842 + $0x10] sm:$0xff]
        %v5846 = vld [vmem:[%s5842 + $0x18] sm:$0xff]
        %s5847 = scalar_lea.vmem %s57, 2
        %v5848 = vld [vmem:[%s5847] sm:$0x1]
        %v5850 = vlaneseq
        %v5851 = vshrl.u32 %v5850, 7
        %v5852 = vsub.s32 0, %v5851
        %v5853 = vrot.slane %v5848, %v5852
        %5855 = vmatprep.subr.mxu0 0.0
        %5856 = vmatpush1.msra.mxu0 %v5843
        %5857 = vmatprep.subr.mxu0 0.0
        %5858 = vmatpush1.msra.mxu0 %v5844
        %5859 = vmatprep.subr.mxu0 0.0
        %5860 = vmatpush1.msra.mxu0 %v5845
        %5861 = vmatprep.subr.mxu0 0.0
        %5862 = vmatpush1.msra.mxu0 %v5846
        %5863 = vmatprep.subr.mxu0 0.0
        %5864 = vmatpush1.msra.mxu0 0.0
        %5865 = vmatprep.subr.mxu0 0.0
        %5866 = vmatpush1.msra.mxu0 0.0
        %5867 = vmatprep.subr.mxu0 0.0
        %5868 = vmatpush1.msra.mxu0 0.0
        %5869 = vmatprep.subr.mxu0 0.0
        %5870 = vmatpush1.msra.mxu0 0.0
        %5871 = vmatprep.subr.mxu0 0.0
        %5872 = vmatpush1.msra.mxu0 0.0
        %5873 = vmatprep.subr.mxu0 0.0
        %5874 = vmatpush1.msra.mxu0 0.0
        %5875 = vmatprep.subr.mxu0 0.0
        %5876 = vmatpush1.msra.mxu0 0.0
        %5877 = vmatprep.subr.mxu0 0.0
        %5878 = vmatpush1.msra.mxu0 0.0
        %5879 = vmatprep.subr.mxu0 0.0
        %5880 = vmatpush1.msra.mxu0 0.0
        %5881 = vmatprep.subr.mxu0 0.0
        %5882 = vmatpush1.msra.mxu0 0.0
        %5883 = vmatprep.subr.mxu0 0.0
        %5884 = vmatpush1.msra.mxu0 0.0
        %5885 = vmatprep.subr.mxu0 0.0
        %5886 = vmatpush1.msra.mxu0 0.0
        %5887 = vmatprep.subr.mxu0 0.0
        %5888 = vmatpush1.msra.mxu0 0.0
        %5889 = vmatprep.subr.mxu0 0.0
        %5890 = vmatpush1.msra.mxu0 0.0
        %5891 = vmatprep.subr.mxu0 0.0
        %5892 = vmatpush1.msra.mxu0 0.0
        %5893 = vmatprep.subr.mxu0 0.0
        %5894 = vmatpush1.msra.mxu0 0.0
        %5895 = vmatprep.subr.mxu0 0.0
        %5896 = vmatpush1.msra.mxu0 0.0
        %5897 = vmatprep.subr.mxu0 0.0
        %5898 = vmatpush1.msra.mxu0 0.0
        %5899 = vmatprep.subr.mxu0 0.0
        %5900 = vmatpush1.msra.mxu0 0.0
        %5901 = vmatprep.subr.mxu0 0.0
        %5902 = vmatpush1.msra.mxu0 0.0
        %5903 = vmatprep.subr.mxu0 0.0
        %5904 = vmatpush1.msra.mxu0 0.0
        %5905 = vmatprep.subr.mxu0 0.0
        %5906 = vmatpush1.msra.mxu0 0.0
        %5907 = vmatprep.subr.mxu0 0.0
        %5908 = vmatpush1.msra.mxu0 0.0
        %5909 = vmatprep.subr.mxu0 0.0
        %5910 = vmatpush1.msra.mxu0 0.0
        %5911 = vmatprep.subr.mxu0 0.0
        %5912 = vmatpush1.msra.mxu0 0.0
        %5913 = vmatprep.subr.mxu0 0.0
        %5914 = vmatpush1.msra.mxu0 0.0
        %5915 = vmatprep.subr.mxu0 0.0
        %5916 = vmatpush1.msra.mxu0 0.0
        %5917 = vmatprep.subr.mxu0 0.0
        %5918 = vmatpush1.msra.mxu0 0.0
        %5919 = vmatprep.mubr.f32.mxu0 0.0
        %5920 = vmatmul.mubr.f32.gmra.mrb[0].mxu0 %v4660
        %v5921 = vpop.f32.mrb[0].mxu0
        %v5922 = vadd.f32 %v5853, %v5921
        %v5923 = vpop.f32.mrb[0].mxu0
        %5924 = vmatprep.mubr.f32.mxu0 0.0
        %5925 = vmatmul.mubr.f32.gmra.mrb[0].mxu0 %v4663
        %v5926 = vpop.f32.mrb[0].mxu0
        %v5927 = vadd.f32 %v5853, %v5926
        %v5928 = vpop.f32.mrb[0].mxu0
        %5929 = vmatprep.mubr.f32.mxu0 0.0
        %5930 = vmatmul.mubr.f32.gmra.mrb[0].mxu0 %v4666
        %v5931 = vpop.f32.mrb[0].mxu0
        %v5932 = vadd.f32 %v5853, %v5931
        %v5933 = vpop.f32.mrb[0].mxu0
        %5934 = vdwg.mxu0
        %s5935 = scalar_lea.vmem %s59, 64
        %v5936 = vld [vmem:[%s5935] sm:$0xff]
        %v5937 = vld [vmem:[%s5935 + $0x8] sm:$0xff]
        %v5938 = vld [vmem:[%s5935 + $0x10] sm:$0xff]
        %v5939 = vld [vmem:[%s5935 + $0x18] sm:$0xff]
        %s5940 = scalar_lea.vmem %s61, 2
        %v5941 = vld [vmem:[%s5940] sm:$0x1]
        %v5943 = vlaneseq
        %v5944 = vshrl.u32 %v5943, 7
        %v5945 = vsub.s32 0, %v5944
        %v5946 = vrot.slane %v5941, %v5945
        %5948 = vmatprep.subr.mxu0 0.0
        %5949 = vmatpush1.msra.mxu0 %v5936
        %5950 = vmatprep.subr.mxu0 0.0
        %5951 = vmatpush1.msra.mxu0 %v5937
        %5952 = vmatprep.subr.mxu0 0.0
        %5953 = vmatpush1.msra.mxu0 %v5938
        %5954 = vmatprep.subr.mxu0 0.0
        %5955 = vmatpush1.msra.mxu0 %v5939
        %5956 = vmatprep.subr.mxu0 0.0
        %5957 = vmatpush1.msra.mxu0 0.0
        %5958 = vmatprep.subr.mxu0 0.0
        %5959 = vmatpush1.msra.mxu0 0.0
        %5960 = vmatprep.subr.mxu0 0.0
        %5961 = vmatpush1.msra.mxu0 0.0
        %5962 = vmatprep.subr.mxu0 0.0
        %5963 = vmatpush1.msra.mxu0 0.0
        %5964 = vmatprep.subr.mxu0 0.0
        %5965 = vmatpush1.msra.mxu0 0.0
        %5966 = vmatprep.subr.mxu0 0.0
        %5967 = vmatpush1.msra.mxu0 0.0
        %5968 = vmatprep.subr.mxu0 0.0
        %5969 = vmatpush1.msra.mxu0 0.0
        %5970 = vmatprep.subr.mxu0 0.0
        %5971 = vmatpush1.msra.mxu0 0.0
        %5972 = vmatprep.subr.mxu0 0.0
        %5973 = vmatpush1.msra.mxu0 0.0
        %5974 = vmatprep.subr.mxu0 0.0
        %5975 = vmatpush1.msra.mxu0 0.0
        %5976 = vmatprep.subr.mxu0 0.0
        %5977 = vmatpush1.msra.mxu0 0.0
        %5978 = vmatprep.subr.mxu0 0.0
        %5979 = vmatpush1.msra.mxu0 0.0
        %5980 = vmatprep.subr.mxu0 0.0
        %5981 = vmatpush1.msra.mxu0 0.0
        %5982 = vmatprep.subr.mxu0 0.0
        %5983 = vmatpush1.msra.mxu0 0.0
        %5984 = vmatprep.subr.mxu0 0.0
        %5985 = vmatpush1.msra.mxu0 0.0
        %5986 = vmatprep.subr.mxu0 0.0
        %5987 = vmatpush1.msra.mxu0 0.0
        %5988 = vmatprep.subr.mxu0 0.0
        %5989 = vmatpush1.msra.mxu0 0.0
        %5990 = vmatprep.subr.mxu0 0.0
        %5991 = vmatpush1.msra.mxu0 0.0
        %5992 = vmatprep.subr.mxu0 0.0
        %5993 = vmatpush1.msra.mxu0 0.0
        %5994 = vmatprep.subr.mxu0 0.0
        %5995 = vmatpush1.msra.mxu0 0.0
        %5996 = vmatprep.subr.mxu0 0.0
        %5997 = vmatpush1.msra.mxu0 0.0
        %5998 = vmatprep.subr.mxu0 0.0
        %5999 = vmatpush1.msra.mxu0 0.0
        %6000 = vmatprep.subr.mxu0 0.0
        %6001 = vmatpush1.msra.mxu0 0.0
        %6002 = vmatprep.subr.mxu0 0.0
        %6003 = vmatpush1.msra.mxu0 0.0
        %6004 = vmatprep.subr.mxu0 0.0
        %6005 = vmatpush1.msra.mxu0 0.0
        %6006 = vmatprep.subr.mxu0 0.0
        %6007 = vmatpush1.msra.mxu0 0.0
        %6008 = vmatprep.subr.mxu0 0.0
        %6009 = vmatpush1.msra.mxu0 0.0
        %6010 = vmatprep.subr.mxu0 0.0
        %6011 = vmatpush1.msra.mxu0 0.0
        %6012 = vmatprep.mubr.f32.mxu0 0.0
        %6013 = vmatmul.mubr.f32.gmra.mrb[0].mxu0 %v4660
        %v6014 = vpop.f32.mrb[0].mxu0
        %v6015 = vadd.f32 %v5946, %v6014
        %v6016 = vpop.f32.mrb[0].mxu0
        %6017 = vmatprep.mubr.f32.mxu0 0.0
        %6018 = vmatmul.mubr.f32.gmra.mrb[0].mxu0 %v4663
        %v6019 = vpop.f32.mrb[0].mxu0
        %v6020 = vadd.f32 %v5946, %v6019
        %v6021 = vpop.f32.mrb[0].mxu0
        %6022 = vmatprep.mubr.f32.mxu0 0.0
        %6023 = vmatmul.mubr.f32.gmra.mrb[0].mxu0 %v4666
        %v6024 = vpop.f32.mrb[0].mxu0
        %v6025 = vadd.f32 %v5946, %v6024
        %v6026 = vpop.f32.mrb[0].mxu0
        %6027 = vdwg.mxu0
        %s6028 = scalar_lea.vmem %s63, 64
        %v6029 = vld [vmem:[%s6028] sm:$0xff]
        %v6030 = vld [vmem:[%s6028 + $0x8] sm:$0xff]
        %v6031 = vld [vmem:[%s6028 + $0x10] sm:$0xff]
        %v6032 = vld [vmem:[%s6028 + $0x18] sm:$0xff]
        %s6033 = scalar_lea.vmem %s65, 2
        %v6034 = vld [vmem:[%s6033] sm:$0x1]
        %v6036 = vlaneseq
        %v6037 = vshrl.u32 %v6036, 7
        %v6038 = vsub.s32 0, %v6037
        %v6039 = vrot.slane %v6034, %v6038
        %6041 = vmatprep.subr.mxu0 0.0
        %6042 = vmatpush1.msra.mxu0 %v6029
        %6043 = vmatprep.subr.mxu0 0.0
        %6044 = vmatpush1.msra.mxu0 %v6030
        %6045 = vmatprep.subr.mxu0 0.0
        %6046 = vmatpush1.msra.mxu0 %v6031
        %6047 = vmatprep.subr.mxu0 0.0
        %6048 = vmatpush1.msra.mxu0 %v6032
        %6049 = vmatprep.subr.mxu0 0.0
        %6050 = vmatpush1.msra.mxu0 0.0
        %6051 = vmatprep.subr.mxu0 0.0
        %6052 = vmatpush1.msra.mxu0 0.0
        %6053 = vmatprep.subr.mxu0 0.0
        %6054 = vmatpush1.msra.mxu0 0.0
        %6055 = vmatprep.subr.mxu0 0.0
        %6056 = vmatpush1.msra.mxu0 0.0
        %6057 = vmatprep.subr.mxu0 0.0
        %6058 = vmatpush1.msra.mxu0 0.0
        %6059 = vmatprep.subr.mxu0 0.0
        %6060 = vmatpush1.msra.mxu0 0.0
        %6061 = vmatprep.subr.mxu0 0.0
        %6062 = vmatpush1.msra.mxu0 0.0
        %6063 = vmatprep.subr.mxu0 0.0
        %6064 = vmatpush1.msra.mxu0 0.0
        %6065 = vmatprep.subr.mxu0 0.0
        %6066 = vmatpush1.msra.mxu0 0.0
        %6067 = vmatprep.subr.mxu0 0.0
        %6068 = vmatpush1.msra.mxu0 0.0
        %6069 = vmatprep.subr.mxu0 0.0
        %6070 = vmatpush1.msra.mxu0 0.0
        %6071 = vmatprep.subr.mxu0 0.0
        %6072 = vmatpush1.msra.mxu0 0.0
        %6073 = vmatprep.subr.mxu0 0.0
        %6074 = vmatpush1.msra.mxu0 0.0
        %6075 = vmatprep.subr.mxu0 0.0
        %6076 = vmatpush1.msra.mxu0 0.0
        %6077 = vmatprep.subr.mxu0 0.0
        %6078 = vmatpush1.msra.mxu0 0.0
        %6079 = vmatprep.subr.mxu0 0.0
        %6080 = vmatpush1.msra.mxu0 0.0
        %6081 = vmatprep.subr.mxu0 0.0
        %6082 = vmatpush1.msra.mxu0 0.0
        %6083 = vmatprep.subr.mxu0 0.0
        %6084 = vmatpush1.msra.mxu0 0.0
        %6085 = vmatprep.subr.mxu0 0.0
        %6086 = vmatpush1.msra.mxu0 0.0
        %6087 = vmatprep.subr.mxu0 0.0
        %6088 = vmatpush1.msra.mxu0 0.0
        %6089 = vmatprep.subr.mxu0 0.0
        %6090 = vmatpush1.msra.mxu0 0.0
        %6091 = vmatprep.subr.mxu0 0.0
        %6092 = vmatpush1.msra.mxu0 0.0
        %6093 = vmatprep.subr.mxu0 0.0
        %6094 = vmatpush1.msra.mxu0 0.0
        %6095 = vmatprep.subr.mxu0 0.0
        %6096 = vmatpush1.msra.mxu0 0.0
        %6097 = vmatprep.subr.mxu0 0.0
        %6098 = vmatpush1.msra.mxu0 0.0
        %6099 = vmatprep.subr.mxu0 0.0
        %6100 = vmatpush1.msra.mxu0 0.0
        %6101 = vmatprep.subr.mxu0 0.0
        %6102 = vmatpush1.msra.mxu0 0.0
        %6103 = vmatprep.subr.mxu0 0.0
        %6104 = vmatpush1.msra.mxu0 0.0
        %6105 = vmatprep.mubr.f32.mxu0 0.0
        %6106 = vmatmul.mubr.f32.gmra.mrb[0].mxu0 %v4660
        %v6107 = vpop.f32.mrb[0].mxu0
        %v6108 = vadd.f32 %v6039, %v6107
        %v6109 = vpop.f32.mrb[0].mxu0
        %6110 = vmatprep.mubr.f32.mxu0 0.0
        %6111 = vmatmul.mubr.f32.gmra.mrb[0].mxu0 %v4663
        %v6112 = vpop.f32.mrb[0].mxu0
        %v6113 = vadd.f32 %v6039, %v6112
        %v6114 = vpop.f32.mrb[0].mxu0
        %6115 = vmatprep.mubr.f32.mxu0 0.0
        %6116 = vmatmul.mubr.f32.gmra.mrb[0].mxu0 %v4666
        %v6117 = vpop.f32.mrb[0].mxu0
        %v6118 = vadd.f32 %v6039, %v6117
        %v6119 = vpop.f32.mrb[0].mxu0
        %6120 = vdwg.mxu0
        %v6122 = vsel %vm1635, %v5922, 0
        %v6125 = vsel %vm1635, %v5927, 0
        %v6128 = vsel %vm1635, %v5932, 0
        %v6131 = vsel %vm1635, %v6015, 0
        %v6134 = vsel %vm1635, %v6020, 0
        %v6137 = vsel %vm1635, %v6025, 0
        %6139 = vmatprep.subr.mxu0 0.0
        %6140 = vmatpush1.xpose.msra.mxu0 %v6131
        %6141 = vmatprep.subr.mxu0 0.0
        %6142 = vmatpush1.xpose.msra.mxu0 %v6134
        %6143 = vmatprep.subr.mxu0 0.0
        %6144 = vmatpush1.xpose.msra.mxu0 %v6137
        %6145 = vmatprep.subr.mxu0 0.0
        %6146 = vmatpush1.xpose.msra.mxu0 0.0
        %6147 = vmatprep.subr.mxu0 0.0
        %6148 = vmatpush1.xpose.msra.mxu0 0.0
        %6149 = vmatprep.subr.mxu0 0.0
        %6150 = vmatpush1.xpose.msra.mxu0 0.0
        %6151 = vmatprep.subr.mxu0 0.0
        %6152 = vmatpush1.xpose.msra.mxu0 0.0
        %6153 = vmatprep.subr.mxu0 0.0
        %6154 = vmatpush1.xpose.msra.mxu0 0.0
        %6155 = vmatprep.subr.mxu0 0.0
        %6156 = vmatpush1.xpose.msra.mxu0 0.0
        %6157 = vmatprep.subr.mxu0 0.0
        %6158 = vmatpush1.xpose.msra.mxu0 0.0
        %6159 = vmatprep.subr.mxu0 0.0
        %6160 = vmatpush1.xpose.msra.mxu0 0.0
        %6161 = vmatprep.subr.mxu0 0.0
        %6162 = vmatpush1.xpose.msra.mxu0 0.0
        %6163 = vmatprep.subr.mxu0 0.0
        %6164 = vmatpush1.xpose.msra.mxu0 0.0
        %6165 = vmatprep.subr.mxu0 0.0
        %6166 = vmatpush1.xpose.msra.mxu0 0.0
        %6167 = vmatprep.subr.mxu0 0.0
        %6168 = vmatpush1.xpose.msra.mxu0 0.0
        %6169 = vmatprep.subr.mxu0 0.0
        %6170 = vmatpush1.xpose.msra.mxu0 0.0
        %6171 = vmatprep.subr.mxu0 0.0
        %6172 = vmatpush1.xpose.msra.mxu0 0.0
        %6173 = vmatprep.subr.mxu0 0.0
        %6174 = vmatpush1.xpose.msra.mxu0 0.0
        %6175 = vmatprep.subr.mxu0 0.0
        %6176 = vmatpush1.xpose.msra.mxu0 0.0
        %6177 = vmatprep.subr.mxu0 0.0
        %6178 = vmatpush1.xpose.msra.mxu0 0.0
        %6179 = vmatprep.subr.mxu0 0.0
        %6180 = vmatpush1.xpose.msra.mxu0 0.0
        %6181 = vmatprep.subr.mxu0 0.0
        %6182 = vmatpush1.xpose.msra.mxu0 0.0
        %6183 = vmatprep.subr.mxu0 0.0
        %6184 = vmatpush1.xpose.msra.mxu0 0.0
        %6185 = vmatprep.subr.mxu0 0.0
        %6186 = vmatpush1.xpose.msra.mxu0 0.0
        %6187 = vmatprep.subr.mxu0 0.0
        %6188 = vmatpush1.xpose.msra.mxu0 0.0
        %6189 = vmatprep.subr.mxu0 0.0
        %6190 = vmatpush1.xpose.msra.mxu0 0.0
        %6191 = vmatprep.subr.mxu0 0.0
        %6192 = vmatpush1.xpose.msra.mxu0 0.0
        %6193 = vmatprep.subr.mxu0 0.0
        %6194 = vmatpush1.xpose.msra.mxu0 0.0
        %6195 = vmatprep.subr.mxu0 0.0
        %6196 = vmatpush1.xpose.msra.mxu0 0.0
        %6197 = vmatprep.subr.mxu0 0.0
        %6198 = vmatpush1.xpose.msra.mxu0 0.0
        %6199 = vmatprep.subr.mxu0 0.0
        %6200 = vmatpush1.xpose.msra.mxu0 0.0
        %6201 = vmatprep.subr.mxu0 0.0
        %6202 = vmatpush1.xpose.msra.mxu0 0.0
        %6203 = vmatprep.mubr.f32.mxu0 0.0
        %6204 = vmatmul.mubr.f32.gmra.mrb[0].mxu0 %v6122
        %v6205 = vpop.f32.mrb[0].mxu0
        %v6206 = vadd.f32 0.0, %v6205
        %v6207 = vpop.f32.mrb[0].mxu0
        %6208 = vmatprep.mubr.f32.mxu0 0.0
        %6209 = vmatmul.mubr.f32.gmra.mrb[0].mxu0 %v6125
        %v6210 = vpop.f32.mrb[0].mxu0
        %v6211 = vadd.f32 0.0, %v6210
        %v6212 = vpop.f32.mrb[0].mxu0
        %6213 = vmatprep.mubr.f32.mxu0 0.0
        %6214 = vmatmul.mubr.f32.gmra.mrb[0].mxu0 %v6128
        %v6215 = vpop.f32.mrb[0].mxu0
        %v6216 = vadd.f32 0.0, %v6215
        %v6217 = vpop.f32.mrb[0].mxu0
        %6218 = vdwg.mxu0
        %v6219 = vmul.f32 %v6206, 0.35355338
        %v6220 = vmul.f32 %v6211, 0.35355338
        %v6221 = vmul.f32 %v6216, 0.35355338
        %v6222 = vsel %vm1913, %v6219, -1e+30
        %v6223 = vsel %vm1913, %v6220, -1e+30
        %v6224 = vsel %vm1913, %v6221, -1e+30
        %v6225 = vsel %vm2300, %v6222, -inf
        %6226 = vmax.xlane.f32.xlu0 %v6225
        %v6227 = vpop.xlane.xlu0 %6226
        %v6228 = vsel %vm2300, %v6223, -inf
        %6229 = vmax.xlane.f32.xlu0 %v6228
        %v6230 = vpop.xlane.xlu0 %6229
        %v6231 = vsel %vm2300, %v6224, -inf
        %6232 = vmax.xlane.f32.xlu0 %v6231
        %v6233 = vpop.xlane.xlu0 %6232
        %v6234 = vsub.f32 %v6222, %v6227
        %v6235 = vsub.f32 %v6223, %v6230
        %v6236 = vsub.f32 %v6224, %v6233
        %v6237 = vmul.f32 %v6234, 1.442695
        %v6238 = vpow.pop %v6237
        %v6239 = vmul.f32 %v6235, 1.442695
        %v6240 = vpow.pop %v6239
        %v6241 = vmul.f32 %v6236, 1.442695
        %v6242 = vpow.pop %v6241
        %v6243 = vsel %vm2300, %v6238, 0.0
        %6244 = vadd.xlane.f32.xlu0 %v6243
        %v6245 = vpop.xlane.xlu0 %6244
        %v6246 = vsel %vm2300, %v6240, 0.0
        %6247 = vadd.xlane.f32.xlu0 %v6246
        %v6248 = vpop.xlane.xlu0 %6247
        %v6249 = vsel %vm2300, %v6242, 0.0
        %6250 = vadd.xlane.f32.xlu0 %v6249
        %v6251 = vpop.xlane.xlu0 %6250
        %v6252 = vrcp.pop %v6245
        %v6253 = vrcp.pop %v6248
        %v6254 = vrcp.pop %v6251
        %v6255 = vmul.f32 %v6238, %v6252
        %v6256 = vmul.f32 %v6240, %v6253
        %v6257 = vmul.f32 %v6242, %v6254
        %v6259 = vsel %vm2300, %v6255, 0
        %v6262 = vsel %vm2300, %v6256, 0
        %v6265 = vsel %vm2300, %v6257, 0
        %6267 = vmatprep.subr.mxu0 0.0
        %6268 = vmatpush1.msra.mxu0 %v6108
        %6269 = vmatprep.subr.mxu0 0.0
        %6270 = vmatpush1.msra.mxu0 %v6113
        %6271 = vmatprep.subr.mxu0 0.0
        %6272 = vmatpush1.msra.mxu0 %v6118
        %6273 = vmatprep.subr.mxu0 0.0
        %6274 = vmatpush1.msra.mxu0 0.0
        %6275 = vmatprep.subr.mxu0 0.0
        %6276 = vmatpush1.msra.mxu0 0.0
        %6277 = vmatprep.subr.mxu0 0.0
        %6278 = vmatpush1.msra.mxu0 0.0
        %6279 = vmatprep.subr.mxu0 0.0
        %6280 = vmatpush1.msra.mxu0 0.0
        %6281 = vmatprep.subr.mxu0 0.0
        %6282 = vmatpush1.msra.mxu0 0.0
        %6283 = vmatprep.subr.mxu0 0.0
        %6284 = vmatpush1.msra.mxu0 0.0
        %6285 = vmatprep.subr.mxu0 0.0
        %6286 = vmatpush1.msra.mxu0 0.0
        %6287 = vmatprep.subr.mxu0 0.0
        %6288 = vmatpush1.msra.mxu0 0.0
        %6289 = vmatprep.subr.mxu0 0.0
        %6290 = vmatpush1.msra.mxu0 0.0
        %6291 = vmatprep.subr.mxu0 0.0
        %6292 = vmatpush1.msra.mxu0 0.0
        %6293 = vmatprep.subr.mxu0 0.0
        %6294 = vmatpush1.msra.mxu0 0.0
        %6295 = vmatprep.subr.mxu0 0.0
        %6296 = vmatpush1.msra.mxu0 0.0
        %6297 = vmatprep.subr.mxu0 0.0
        %6298 = vmatpush1.msra.mxu0 0.0
        %6299 = vmatprep.subr.mxu0 0.0
        %6300 = vmatpush1.msra.mxu0 0.0
        %6301 = vmatprep.subr.mxu0 0.0
        %6302 = vmatpush1.msra.mxu0 0.0
        %6303 = vmatprep.subr.mxu0 0.0
        %6304 = vmatpush1.msra.mxu0 0.0
        %6305 = vmatprep.subr.mxu0 0.0
        %6306 = vmatpush1.msra.mxu0 0.0
        %6307 = vmatprep.subr.mxu0 0.0
        %6308 = vmatpush1.msra.mxu0 0.0
        %6309 = vmatprep.subr.mxu0 0.0
        %6310 = vmatpush1.msra.mxu0 0.0
        %6311 = vmatprep.subr.mxu0 0.0
        %6312 = vmatpush1.msra.mxu0 0.0
        %6313 = vmatprep.subr.mxu0 0.0
        %6314 = vmatpush1.msra.mxu0 0.0
        %6315 = vmatprep.subr.mxu0 0.0
        %6316 = vmatpush1.msra.mxu0 0.0
        %6317 = vmatprep.subr.mxu0 0.0
        %6318 = vmatpush1.msra.mxu0 0.0
        %6319 = vmatprep.subr.mxu0 0.0
        %6320 = vmatpush1.msra.mxu0 0.0
        %6321 = vmatprep.subr.mxu0 0.0
        %6322 = vmatpush1.msra.mxu0 0.0
        %6323 = vmatprep.subr.mxu0 0.0
        %6324 = vmatpush1.msra.mxu0 0.0
        %6325 = vmatprep.subr.mxu0 0.0
        %6326 = vmatpush1.msra.mxu0 0.0
        %6327 = vmatprep.subr.mxu0 0.0
        %6328 = vmatpush1.msra.mxu0 0.0
        %6329 = vmatprep.subr.mxu0 0.0
        %6330 = vmatpush1.msra.mxu0 0.0
        %6331 = vmatprep.mubr.f32.mxu0 0.0
        %6332 = vmatmul.mubr.f32.gmra.mrb[0].mxu0 %v6259
        %v6333 = vpop.f32.mrb[0].mxu0
        %v6334 = vadd.f32 0.0, %v6333
        %v6335 = vpop.f32.mrb[0].mxu0
        %6336 = vmatprep.mubr.f32.mxu0 0.0
        %6337 = vmatmul.mubr.f32.gmra.mrb[0].mxu0 %v6262
        %v6338 = vpop.f32.mrb[0].mxu0
        %v6339 = vadd.f32 0.0, %v6338
        %v6340 = vpop.f32.mrb[0].mxu0
        %6341 = vmatprep.mubr.f32.mxu0 0.0
        %6342 = vmatmul.mubr.f32.gmra.mrb[0].mxu0 %v6265
        %v6343 = vpop.f32.mrb[0].mxu0
        %v6344 = vadd.f32 0.0, %v6343
        %v6345 = vpop.f32.mrb[0].mxu0
        %6346 = vdwg.mxu0
        %s6347 = scalar_lea.vmem %s67, 16
        %v6348 = vld [vmem:[%s6347] sm:$0xff]
        %v6350 = vsel %vm1635, %v6334, 0
        %v6353 = vsel %vm1635, %v6339, 0
        %v6356 = vsel %vm1635, %v6344, 0
        %6358 = vmatprep.subr.mxu0 0.0
        %6359 = vmatpush1.msra.mxu0 %v6348
        %6360 = vmatprep.subr.mxu0 0.0
        %6361 = vmatpush1.msra.mxu0 0.0
        %6362 = vmatprep.subr.mxu0 0.0
        %6363 = vmatpush1.msra.mxu0 0.0
        %6364 = vmatprep.subr.mxu0 0.0
        %6365 = vmatpush1.msra.mxu0 0.0
        %6366 = vmatprep.subr.mxu0 0.0
        %6367 = vmatpush1.msra.mxu0 0.0
        %6368 = vmatprep.subr.mxu0 0.0
        %6369 = vmatpush1.msra.mxu0 0.0
        %6370 = vmatprep.subr.mxu0 0.0
        %6371 = vmatpush1.msra.mxu0 0.0
        %6372 = vmatprep.subr.mxu0 0.0
        %6373 = vmatpush1.msra.mxu0 0.0
        %6374 = vmatprep.subr.mxu0 0.0
        %6375 = vmatpush1.msra.mxu0 0.0
        %6376 = vmatprep.subr.mxu0 0.0
        %6377 = vmatpush1.msra.mxu0 0.0
        %6378 = vmatprep.subr.mxu0 0.0
        %6379 = vmatpush1.msra.mxu0 0.0
        %6380 = vmatprep.subr.mxu0 0.0
        %6381 = vmatpush1.msra.mxu0 0.0
        %6382 = vmatprep.subr.mxu0 0.0
        %6383 = vmatpush1.msra.mxu0 0.0
        %6384 = vmatprep.subr.mxu0 0.0
        %6385 = vmatpush1.msra.mxu0 0.0
        %6386 = vmatprep.subr.mxu0 0.0
        %6387 = vmatpush1.msra.mxu0 0.0
        %6388 = vmatprep.subr.mxu0 0.0
        %6389 = vmatpush1.msra.mxu0 0.0
        %6390 = vmatprep.subr.mxu0 0.0
        %6391 = vmatpush1.msra.mxu0 0.0
        %6392 = vmatprep.subr.mxu0 0.0
        %6393 = vmatpush1.msra.mxu0 0.0
        %6394 = vmatprep.subr.mxu0 0.0
        %6395 = vmatpush1.msra.mxu0 0.0
        %6396 = vmatprep.subr.mxu0 0.0
        %6397 = vmatpush1.msra.mxu0 0.0
        %6398 = vmatprep.subr.mxu0 0.0
        %6399 = vmatpush1.msra.mxu0 0.0
        %6400 = vmatprep.subr.mxu0 0.0
        %6401 = vmatpush1.msra.mxu0 0.0
        %6402 = vmatprep.subr.mxu0 0.0
        %6403 = vmatpush1.msra.mxu0 0.0
        %6404 = vmatprep.subr.mxu0 0.0
        %6405 = vmatpush1.msra.mxu0 0.0
        %6406 = vmatprep.subr.mxu0 0.0
        %6407 = vmatpush1.msra.mxu0 0.0
        %6408 = vmatprep.subr.mxu0 0.0
        %6409 = vmatpush1.msra.mxu0 0.0
        %6410 = vmatprep.subr.mxu0 0.0
        %6411 = vmatpush1.msra.mxu0 0.0
        %6412 = vmatprep.subr.mxu0 0.0
        %6413 = vmatpush1.msra.mxu0 0.0
        %6414 = vmatprep.subr.mxu0 0.0
        %6415 = vmatpush1.msra.mxu0 0.0
        %6416 = vmatprep.subr.mxu0 0.0
        %6417 = vmatpush1.msra.mxu0 0.0
        %6418 = vmatprep.subr.mxu0 0.0
        %6419 = vmatpush1.msra.mxu0 0.0
        %6420 = vmatprep.subr.mxu0 0.0
        %6421 = vmatpush1.msra.mxu0 0.0
        %6422 = vmatprep.mubr.f32.mxu0 0.0
        %6423 = vmatmul.mubr.f32.gmra.mrb[0].mxu0 %v6350
        %v6424 = vpop.f32.mrb[0].mxu0
        %v6425 = vadd.f32 0.0, %v6424
        %v6426 = vpop.f32.mrb[0].mxu0
        %6427 = vmatprep.mubr.f32.mxu0 0.0
        %6428 = vmatmul.mubr.f32.gmra.mrb[0].mxu0 %v6353
        %v6429 = vpop.f32.mrb[0].mxu0
        %v6430 = vadd.f32 0.0, %v6429
        %v6431 = vpop.f32.mrb[0].mxu0
        %6432 = vmatprep.mubr.f32.mxu0 0.0
        %6433 = vmatmul.mubr.f32.gmra.mrb[0].mxu0 %v6356
        %v6434 = vpop.f32.mrb[0].mxu0
        %v6435 = vadd.f32 0.0, %v6434
        %v6436 = vpop.f32.mrb[0].mxu0
        %6437 = vdwg.mxu0
        %v6438 = vadd.f32 %v5829, %v6425
        %v6439 = vadd.f32 %v5834, %v6430
        %v6440 = vadd.f32 %v5839, %v6435
        %s6441 = scalar_lea.vmem %s55, 96
        %v6442 = vld [vmem:[%s6441] sm:$0xff]
        %v6443 = vld [vmem:[%s6441 + $0x8] sm:$0xff]
        %v6444 = vld [vmem:[%s6441 + $0x10] sm:$0xff]
        %v6445 = vld [vmem:[%s6441 + $0x18] sm:$0xff]
        %s6446 = scalar_lea.vmem %s57, 3
        %v6447 = vld [vmem:[%s6446] sm:$0x1]
        %v6449 = vlaneseq
        %v6450 = vshrl.u32 %v6449, 7
        %v6451 = vsub.s32 0, %v6450
        %v6452 = vrot.slane %v6447, %v6451
        %6454 = vmatprep.subr.mxu0 0.0
        %6455 = vmatpush1.msra.mxu0 %v6442
        %6456 = vmatprep.subr.mxu0 0.0
        %6457 = vmatpush1.msra.mxu0 %v6443
        %6458 = vmatprep.subr.mxu0 0.0
        %6459 = vmatpush1.msra.mxu0 %v6444
        %6460 = vmatprep.subr.mxu0 0.0
        %6461 = vmatpush1.msra.mxu0 %v6445
        %6462 = vmatprep.subr.mxu0 0.0
        %6463 = vmatpush1.msra.mxu0 0.0
        %6464 = vmatprep.subr.mxu0 0.0
        %6465 = vmatpush1.msra.mxu0 0.0
        %6466 = vmatprep.subr.mxu0 0.0
        %6467 = vmatpush1.msra.mxu0 0.0
        %6468 = vmatprep.subr.mxu0 0.0
        %6469 = vmatpush1.msra.mxu0 0.0
        %6470 = vmatprep.subr.mxu0 0.0
        %6471 = vmatpush1.msra.mxu0 0.0
        %6472 = vmatprep.subr.mxu0 0.0
        %6473 = vmatpush1.msra.mxu0 0.0
        %6474 = vmatprep.subr.mxu0 0.0
        %6475 = vmatpush1.msra.mxu0 0.0
        %6476 = vmatprep.subr.mxu0 0.0
        %6477 = vmatpush1.msra.mxu0 0.0
        %6478 = vmatprep.subr.mxu0 0.0
        %6479 = vmatpush1.msra.mxu0 0.0
        %6480 = vmatprep.subr.mxu0 0.0
        %6481 = vmatpush1.msra.mxu0 0.0
        %6482 = vmatprep.subr.mxu0 0.0
        %6483 = vmatpush1.msra.mxu0 0.0
        %6484 = vmatprep.subr.mxu0 0.0
        %6485 = vmatpush1.msra.mxu0 0.0
        %6486 = vmatprep.subr.mxu0 0.0
        %6487 = vmatpush1.msra.mxu0 0.0
        %6488 = vmatprep.subr.mxu0 0.0
        %6489 = vmatpush1.msra.mxu0 0.0
        %6490 = vmatprep.subr.mxu0 0.0
        %6491 = vmatpush1.msra.mxu0 0.0
        %6492 = vmatprep.subr.mxu0 0.0
        %6493 = vmatpush1.msra.mxu0 0.0
        %6494 = vmatprep.subr.mxu0 0.0
        %6495 = vmatpush1.msra.mxu0 0.0
        %6496 = vmatprep.subr.mxu0 0.0
        %6497 = vmatpush1.msra.mxu0 0.0
        %6498 = vmatprep.subr.mxu0 0.0
        %6499 = vmatpush1.msra.mxu0 0.0
        %6500 = vmatprep.subr.mxu0 0.0
        %6501 = vmatpush1.msra.mxu0 0.0
        %6502 = vmatprep.subr.mxu0 0.0
        %6503 = vmatpush1.msra.mxu0 0.0
        %6504 = vmatprep.subr.mxu0 0.0
        %6505 = vmatpush1.msra.mxu0 0.0
        %6506 = vmatprep.subr.mxu0 0.0
        %6507 = vmatpush1.msra.mxu0 0.0
        %6508 = vmatprep.subr.mxu0 0.0
        %6509 = vmatpush1.msra.mxu0 0.0
        %6510 = vmatprep.subr.mxu0 0.0
        %6511 = vmatpush1.msra.mxu0 0.0
        %6512 = vmatprep.subr.mxu0 0.0
        %6513 = vmatpush1.msra.mxu0 0.0
        %6514 = vmatprep.subr.mxu0 0.0
        %6515 = vmatpush1.msra.mxu0 0.0
        %6516 = vmatprep.subr.mxu0 0.0
        %6517 = vmatpush1.msra.mxu0 0.0
        %6518 = vmatprep.mubr.f32.mxu0 0.0
        %6519 = vmatmul.mubr.f32.gmra.mrb[0].mxu0 %v4660
        %v6520 = vpop.f32.mrb[0].mxu0
        %v6521 = vadd.f32 %v6452, %v6520
        %v6522 = vpop.f32.mrb[0].mxu0
        %6523 = vmatprep.mubr.f32.mxu0 0.0
        %6524 = vmatmul.mubr.f32.gmra.mrb[0].mxu0 %v4663
        %v6525 = vpop.f32.mrb[0].mxu0
        %v6526 = vadd.f32 %v6452, %v6525
        %v6527 = vpop.f32.mrb[0].mxu0
        %6528 = vmatprep.mubr.f32.mxu0 0.0
        %6529 = vmatmul.mubr.f32.gmra.mrb[0].mxu0 %v4666
        %v6530 = vpop.f32.mrb[0].mxu0
        %v6531 = vadd.f32 %v6452, %v6530
        %v6532 = vpop.f32.mrb[0].mxu0
        %6533 = vdwg.mxu0
        %s6534 = scalar_lea.vmem %s59, 96
        %v6535 = vld [vmem:[%s6534] sm:$0xff]
        %v6536 = vld [vmem:[%s6534 + $0x8] sm:$0xff]
        %v6537 = vld [vmem:[%s6534 + $0x10] sm:$0xff]
        %v6538 = vld [vmem:[%s6534 + $0x18] sm:$0xff]
        %s6539 = scalar_lea.vmem %s61, 3
        %v6540 = vld [vmem:[%s6539] sm:$0x1]
        %v6542 = vlaneseq
        %v6543 = vshrl.u32 %v6542, 7
        %v6544 = vsub.s32 0, %v6543
        %v6545 = vrot.slane %v6540, %v6544
        %6547 = vmatprep.subr.mxu0 0.0
        %6548 = vmatpush1.msra.mxu0 %v6535
        %6549 = vmatprep.subr.mxu0 0.0
        %6550 = vmatpush1.msra.mxu0 %v6536
        %6551 = vmatprep.subr.mxu0 0.0
        %6552 = vmatpush1.msra.mxu0 %v6537
        %6553 = vmatprep.subr.mxu0 0.0
        %6554 = vmatpush1.msra.mxu0 %v6538
        %6555 = vmatprep.subr.mxu0 0.0
        %6556 = vmatpush1.msra.mxu0 0.0
        %6557 = vmatprep.subr.mxu0 0.0
        %6558 = vmatpush1.msra.mxu0 0.0
        %6559 = vmatprep.subr.mxu0 0.0
        %6560 = vmatpush1.msra.mxu0 0.0
        %6561 = vmatprep.subr.mxu0 0.0
        %6562 = vmatpush1.msra.mxu0 0.0
        %6563 = vmatprep.subr.mxu0 0.0
        %6564 = vmatpush1.msra.mxu0 0.0
        %6565 = vmatprep.subr.mxu0 0.0
        %6566 = vmatpush1.msra.mxu0 0.0
        %6567 = vmatprep.subr.mxu0 0.0
        %6568 = vmatpush1.msra.mxu0 0.0
        %6569 = vmatprep.subr.mxu0 0.0
        %6570 = vmatpush1.msra.mxu0 0.0
        %6571 = vmatprep.subr.mxu0 0.0
        %6572 = vmatpush1.msra.mxu0 0.0
        %6573 = vmatprep.subr.mxu0 0.0
        %6574 = vmatpush1.msra.mxu0 0.0
        %6575 = vmatprep.subr.mxu0 0.0
        %6576 = vmatpush1.msra.mxu0 0.0
        %6577 = vmatprep.subr.mxu0 0.0
        %6578 = vmatpush1.msra.mxu0 0.0
        %6579 = vmatprep.subr.mxu0 0.0
        %6580 = vmatpush1.msra.mxu0 0.0
        %6581 = vmatprep.subr.mxu0 0.0
        %6582 = vmatpush1.msra.mxu0 0.0
        %6583 = vmatprep.subr.mxu0 0.0
        %6584 = vmatpush1.msra.mxu0 0.0
        %6585 = vmatprep.subr.mxu0 0.0
        %6586 = vmatpush1.msra.mxu0 0.0
        %6587 = vmatprep.subr.mxu0 0.0
        %6588 = vmatpush1.msra.mxu0 0.0
        %6589 = vmatprep.subr.mxu0 0.0
        %6590 = vmatpush1.msra.mxu0 0.0
        %6591 = vmatprep.subr.mxu0 0.0
        %6592 = vmatpush1.msra.mxu0 0.0
        %6593 = vmatprep.subr.mxu0 0.0
        %6594 = vmatpush1.msra.mxu0 0.0
        %6595 = vmatprep.subr.mxu0 0.0
        %6596 = vmatpush1.msra.mxu0 0.0
        %6597 = vmatprep.subr.mxu0 0.0
        %6598 = vmatpush1.msra.mxu0 0.0
        %6599 = vmatprep.subr.mxu0 0.0
        %6600 = vmatpush1.msra.mxu0 0.0
        %6601 = vmatprep.subr.mxu0 0.0
        %6602 = vmatpush1.msra.mxu0 0.0
        %6603 = vmatprep.subr.mxu0 0.0
        %6604 = vmatpush1.msra.mxu0 0.0
        %6605 = vmatprep.subr.mxu0 0.0
        %6606 = vmatpush1.msra.mxu0 0.0
        %6607 = vmatprep.subr.mxu0 0.0
        %6608 = vmatpush1.msra.mxu0 0.0
        %6609 = vmatprep.subr.mxu0 0.0
        %6610 = vmatpush1.msra.mxu0 0.0
        %6611 = vmatprep.mubr.f32.mxu0 0.0
        %6612 = vmatmul.mubr.f32.gmra.mrb[0].mxu0 %v4660
        %v6613 = vpop.f32.mrb[0].mxu0
        %v6614 = vadd.f32 %v6545, %v6613
        %v6615 = vpop.f32.mrb[0].mxu0
        %6616 = vmatprep.mubr.f32.mxu0 0.0
        %6617 = vmatmul.mubr.f32.gmra.mrb[0].mxu0 %v4663
        %v6618 = vpop.f32.mrb[0].mxu0
        %v6619 = vadd.f32 %v6545, %v6618
        %v6620 = vpop.f32.mrb[0].mxu0
        %6621 = vmatprep.mubr.f32.mxu0 0.0
        %6622 = vmatmul.mubr.f32.gmra.mrb[0].mxu0 %v4666
        %v6623 = vpop.f32.mrb[0].mxu0
        %v6624 = vadd.f32 %v6545, %v6623
        %v6625 = vpop.f32.mrb[0].mxu0
        %6626 = vdwg.mxu0
        %s6627 = scalar_lea.vmem %s63, 96
        %v6628 = vld [vmem:[%s6627] sm:$0xff]
        %v6629 = vld [vmem:[%s6627 + $0x8] sm:$0xff]
        %v6630 = vld [vmem:[%s6627 + $0x10] sm:$0xff]
        %v6631 = vld [vmem:[%s6627 + $0x18] sm:$0xff]
        %s6632 = scalar_lea.vmem %s65, 3
        %v6633 = vld [vmem:[%s6632] sm:$0x1]
        %v6635 = vlaneseq
        %v6636 = vshrl.u32 %v6635, 7
        %v6637 = vsub.s32 0, %v6636
        %v6638 = vrot.slane %v6633, %v6637
        %6640 = vmatprep.subr.mxu0 0.0
        %6641 = vmatpush1.msra.mxu0 %v6628
        %6642 = vmatprep.subr.mxu0 0.0
        %6643 = vmatpush1.msra.mxu0 %v6629
        %6644 = vmatprep.subr.mxu0 0.0
        %6645 = vmatpush1.msra.mxu0 %v6630
        %6646 = vmatprep.subr.mxu0 0.0
        %6647 = vmatpush1.msra.mxu0 %v6631
        %6648 = vmatprep.subr.mxu0 0.0
        %6649 = vmatpush1.msra.mxu0 0.0
        %6650 = vmatprep.subr.mxu0 0.0
        %6651 = vmatpush1.msra.mxu0 0.0
        %6652 = vmatprep.subr.mxu0 0.0
        %6653 = vmatpush1.msra.mxu0 0.0
        %6654 = vmatprep.subr.mxu0 0.0
        %6655 = vmatpush1.msra.mxu0 0.0
        %6656 = vmatprep.subr.mxu0 0.0
        %6657 = vmatpush1.msra.mxu0 0.0
        %6658 = vmatprep.subr.mxu0 0.0
        %6659 = vmatpush1.msra.mxu0 0.0
        %6660 = vmatprep.subr.mxu0 0.0
        %6661 = vmatpush1.msra.mxu0 0.0
        %6662 = vmatprep.subr.mxu0 0.0
        %6663 = vmatpush1.msra.mxu0 0.0
        %6664 = vmatprep.subr.mxu0 0.0
        %6665 = vmatpush1.msra.mxu0 0.0
        %6666 = vmatprep.subr.mxu0 0.0
        %6667 = vmatpush1.msra.mxu0 0.0
        %6668 = vmatprep.subr.mxu0 0.0
        %6669 = vmatpush1.msra.mxu0 0.0
        %6670 = vmatprep.subr.mxu0 0.0
        %6671 = vmatpush1.msra.mxu0 0.0
        %6672 = vmatprep.subr.mxu0 0.0
        %6673 = vmatpush1.msra.mxu0 0.0
        %6674 = vmatprep.subr.mxu0 0.0
        %6675 = vmatpush1.msra.mxu0 0.0
        %6676 = vmatprep.subr.mxu0 0.0
        %6677 = vmatpush1.msra.mxu0 0.0
        %6678 = vmatprep.subr.mxu0 0.0
        %6679 = vmatpush1.msra.mxu0 0.0
        %6680 = vmatprep.subr.mxu0 0.0
        %6681 = vmatpush1.msra.mxu0 0.0
        %6682 = vmatprep.subr.mxu0 0.0
        %6683 = vmatpush1.msra.mxu0 0.0
        %6684 = vmatprep.subr.mxu0 0.0
        %6685 = vmatpush1.msra.mxu0 0.0
        %6686 = vmatprep.subr.mxu0 0.0
        %6687 = vmatpush1.msra.mxu0 0.0
        %6688 = vmatprep.subr.mxu0 0.0
        %6689 = vmatpush1.msra.mxu0 0.0
        %6690 = vmatprep.subr.mxu0 0.0
        %6691 = vmatpush1.msra.mxu0 0.0
        %6692 = vmatprep.subr.mxu0 0.0
        %6693 = vmatpush1.msra.mxu0 0.0
        %6694 = vmatprep.subr.mxu0 0.0
        %6695 = vmatpush1.msra.mxu0 0.0
        %6696 = vmatprep.subr.mxu0 0.0
        %6697 = vmatpush1.msra.mxu0 0.0
        %6698 = vmatprep.subr.mxu0 0.0
        %6699 = vmatpush1.msra.mxu0 0.0
        %6700 = vmatprep.subr.mxu0 0.0
        %6701 = vmatpush1.msra.mxu0 0.0
        %6702 = vmatprep.subr.mxu0 0.0
        %6703 = vmatpush1.msra.mxu0 0.0
        %6704 = vmatprep.mubr.f32.mxu0 0.0
        %6705 = vmatmul.mubr.f32.gmra.mrb[0].mxu0 %v4660
        %v6706 = vpop.f32.mrb[0].mxu0
        %v6707 = vadd.f32 %v6638, %v6706
        %v6708 = vpop.f32.mrb[0].mxu0
        %6709 = vmatprep.mubr.f32.mxu0 0.0
        %6710 = vmatmul.mubr.f32.gmra.mrb[0].mxu0 %v4663
        %v6711 = vpop.f32.mrb[0].mxu0
        %v6712 = vadd.f32 %v6638, %v6711
        %v6713 = vpop.f32.mrb[0].mxu0
        %6714 = vmatprep.mubr.f32.mxu0 0.0
        %6715 = vmatmul.mubr.f32.gmra.mrb[0].mxu0 %v4666
        %v6716 = vpop.f32.mrb[0].mxu0
        %v6717 = vadd.f32 %v6638, %v6716
        %v6718 = vpop.f32.mrb[0].mxu0
        %6719 = vdwg.mxu0
        %v6721 = vsel %vm1635, %v6521, 0
        %v6724 = vsel %vm1635, %v6526, 0
        %v6727 = vsel %vm1635, %v6531, 0
        %v6730 = vsel %vm1635, %v6614, 0
        %v6733 = vsel %vm1635, %v6619, 0
        %v6736 = vsel %vm1635, %v6624, 0
        %6738 = vmatprep.subr.mxu0 0.0
        %6739 = vmatpush1.xpose.msra.mxu0 %v6730
        %6740 = vmatprep.subr.mxu0 0.0
        %6741 = vmatpush1.xpose.msra.mxu0 %v6733
        %6742 = vmatprep.subr.mxu0 0.0
        %6743 = vmatpush1.xpose.msra.mxu0 %v6736
        %6744 = vmatprep.subr.mxu0 0.0
        %6745 = vmatpush1.xpose.msra.mxu0 0.0
        %6746 = vmatprep.subr.mxu0 0.0
        %6747 = vmatpush1.xpose.msra.mxu0 0.0
        %6748 = vmatprep.subr.mxu0 0.0
        %6749 = vmatpush1.xpose.msra.mxu0 0.0
        %6750 = vmatprep.subr.mxu0 0.0
        %6751 = vmatpush1.xpose.msra.mxu0 0.0
        %6752 = vmatprep.subr.mxu0 0.0
        %6753 = vmatpush1.xpose.msra.mxu0 0.0
        %6754 = vmatprep.subr.mxu0 0.0
        %6755 = vmatpush1.xpose.msra.mxu0 0.0
        %6756 = vmatprep.subr.mxu0 0.0
        %6757 = vmatpush1.xpose.msra.mxu0 0.0
        %6758 = vmatprep.subr.mxu0 0.0
        %6759 = vmatpush1.xpose.msra.mxu0 0.0
        %6760 = vmatprep.subr.mxu0 0.0
        %6761 = vmatpush1.xpose.msra.mxu0 0.0
        %6762 = vmatprep.subr.mxu0 0.0
        %6763 = vmatpush1.xpose.msra.mxu0 0.0
        %6764 = vmatprep.subr.mxu0 0.0
        %6765 = vmatpush1.xpose.msra.mxu0 0.0
        %6766 = vmatprep.subr.mxu0 0.0
        %6767 = vmatpush1.xpose.msra.mxu0 0.0
        %6768 = vmatprep.subr.mxu0 0.0
        %6769 = vmatpush1.xpose.msra.mxu0 0.0
        %6770 = vmatprep.subr.mxu0 0.0
        %6771 = vmatpush1.xpose.msra.mxu0 0.0
        %6772 = vmatprep.subr.mxu0 0.0
        %6773 = vmatpush1.xpose.msra.mxu0 0.0
        %6774 = vmatprep.subr.mxu0 0.0
        %6775 = vmatpush1.xpose.msra.mxu0 0.0
        %6776 = vmatprep.subr.mxu0 0.0
        %6777 = vmatpush1.xpose.msra.mxu0 0.0
        %6778 = vmatprep.subr.mxu0 0.0
        %6779 = vmatpush1.xpose.msra.mxu0 0.0
        %6780 = vmatprep.subr.mxu0 0.0
        %6781 = vmatpush1.xpose.msra.mxu0 0.0
        %6782 = vmatprep.subr.mxu0 0.0
        %6783 = vmatpush1.xpose.msra.mxu0 0.0
        %6784 = vmatprep.subr.mxu0 0.0
        %6785 = vmatpush1.xpose.msra.mxu0 0.0
        %6786 = vmatprep.subr.mxu0 0.0
        %6787 = vmatpush1.xpose.msra.mxu0 0.0
        %6788 = vmatprep.subr.mxu0 0.0
        %6789 = vmatpush1.xpose.msra.mxu0 0.0
        %6790 = vmatprep.subr.mxu0 0.0
        %6791 = vmatpush1.xpose.msra.mxu0 0.0
        %6792 = vmatprep.subr.mxu0 0.0
        %6793 = vmatpush1.xpose.msra.mxu0 0.0
        %6794 = vmatprep.subr.mxu0 0.0
        %6795 = vmatpush1.xpose.msra.mxu0 0.0
        %6796 = vmatprep.subr.mxu0 0.0
        %6797 = vmatpush1.xpose.msra.mxu0 0.0
        %6798 = vmatprep.subr.mxu0 0.0
        %6799 = vmatpush1.xpose.msra.mxu0 0.0
        %6800 = vmatprep.subr.mxu0 0.0
        %6801 = vmatpush1.xpose.msra.mxu0 0.0
        %6802 = vmatprep.mubr.f32.mxu0 0.0
        %6803 = vmatmul.mubr.f32.gmra.mrb[0].mxu0 %v6721
        %v6804 = vpop.f32.mrb[0].mxu0
        %v6805 = vadd.f32 0.0, %v6804
        %v6806 = vpop.f32.mrb[0].mxu0
        %6807 = vmatprep.mubr.f32.mxu0 0.0
        %6808 = vmatmul.mubr.f32.gmra.mrb[0].mxu0 %v6724
        %v6809 = vpop.f32.mrb[0].mxu0
        %v6810 = vadd.f32 0.0, %v6809
        %v6811 = vpop.f32.mrb[0].mxu0
        %6812 = vmatprep.mubr.f32.mxu0 0.0
        %6813 = vmatmul.mubr.f32.gmra.mrb[0].mxu0 %v6727
        %v6814 = vpop.f32.mrb[0].mxu0
        %v6815 = vadd.f32 0.0, %v6814
        %v6816 = vpop.f32.mrb[0].mxu0
        %6817 = vdwg.mxu0
        %v6818 = vmul.f32 %v6805, 0.35355338
        %v6819 = vmul.f32 %v6810, 0.35355338
        %v6820 = vmul.f32 %v6815, 0.35355338
        %v6821 = vsel %vm1913, %v6818, -1e+30
        %v6822 = vsel %vm1913, %v6819, -1e+30
        %v6823 = vsel %vm1913, %v6820, -1e+30
        %v6824 = vsel %vm2300, %v6821, -inf
        %6825 = vmax.xlane.f32.xlu0 %v6824
        %v6826 = vpop.xlane.xlu0 %6825
        %v6827 = vsel %vm2300, %v6822, -inf
        %6828 = vmax.xlane.f32.xlu0 %v6827
        %v6829 = vpop.xlane.xlu0 %6828
        %v6830 = vsel %vm2300, %v6823, -inf
        %6831 = vmax.xlane.f32.xlu0 %v6830
        %v6832 = vpop.xlane.xlu0 %6831
        %v6833 = vsub.f32 %v6821, %v6826
        %v6834 = vsub.f32 %v6822, %v6829
        %v6835 = vsub.f32 %v6823, %v6832
        %v6836 = vmul.f32 %v6833, 1.442695
        %v6837 = vpow.pop %v6836
        %v6838 = vmul.f32 %v6834, 1.442695
        %v6839 = vpow.pop %v6838
        %v6840 = vmul.f32 %v6835, 1.442695
        %v6841 = vpow.pop %v6840
        %v6842 = vsel %vm2300, %v6837, 0.0
        %6843 = vadd.xlane.f32.xlu0 %v6842
        %v6844 = vpop.xlane.xlu0 %6843
        %v6845 = vsel %vm2300, %v6839, 0.0
        %6846 = vadd.xlane.f32.xlu0 %v6845
        %v6847 = vpop.xlane.xlu0 %6846
        %v6848 = vsel %vm2300, %v6841, 0.0
        %6849 = vadd.xlane.f32.xlu0 %v6848
        %v6850 = vpop.xlane.xlu0 %6849
        %v6851 = vrcp.pop %v6844
        %v6852 = vrcp.pop %v6847
        %v6853 = vrcp.pop %v6850
        %v6854 = vmul.f32 %v6837, %v6851
        %v6855 = vmul.f32 %v6839, %v6852
        %v6856 = vmul.f32 %v6841, %v6853
        %v6858 = vsel %vm2300, %v6854, 0
        %v6861 = vsel %vm2300, %v6855, 0
        %v6864 = vsel %vm2300, %v6856, 0
        %6866 = vmatprep.subr.mxu0 0.0
        %6867 = vmatpush1.msra.mxu0 %v6707
        %6868 = vmatprep.subr.mxu0 0.0
        %6869 = vmatpush1.msra.mxu0 %v6712
        %6870 = vmatprep.subr.mxu0 0.0
        %6871 = vmatpush1.msra.mxu0 %v6717
        %6872 = vmatprep.subr.mxu0 0.0
        %6873 = vmatpush1.msra.mxu0 0.0
        %6874 = vmatprep.subr.mxu0 0.0
        %6875 = vmatpush1.msra.mxu0 0.0
        %6876 = vmatprep.subr.mxu0 0.0
        %6877 = vmatpush1.msra.mxu0 0.0
        %6878 = vmatprep.subr.mxu0 0.0
        %6879 = vmatpush1.msra.mxu0 0.0
        %6880 = vmatprep.subr.mxu0 0.0
        %6881 = vmatpush1.msra.mxu0 0.0
        %6882 = vmatprep.subr.mxu0 0.0
        %6883 = vmatpush1.msra.mxu0 0.0
        %6884 = vmatprep.subr.mxu0 0.0
        %6885 = vmatpush1.msra.mxu0 0.0
        %6886 = vmatprep.subr.mxu0 0.0
        %6887 = vmatpush1.msra.mxu0 0.0
        %6888 = vmatprep.subr.mxu0 0.0
        %6889 = vmatpush1.msra.mxu0 0.0
        %6890 = vmatprep.subr.mxu0 0.0
        %6891 = vmatpush1.msra.mxu0 0.0
        %6892 = vmatprep.subr.mxu0 0.0
        %6893 = vmatpush1.msra.mxu0 0.0
        %6894 = vmatprep.subr.mxu0 0.0
        %6895 = vmatpush1.msra.mxu0 0.0
        %6896 = vmatprep.subr.mxu0 0.0
        %6897 = vmatpush1.msra.mxu0 0.0
        %6898 = vmatprep.subr.mxu0 0.0
        %6899 = vmatpush1.msra.mxu0 0.0
        %6900 = vmatprep.subr.mxu0 0.0
        %6901 = vmatpush1.msra.mxu0 0.0
        %6902 = vmatprep.subr.mxu0 0.0
        %6903 = vmatpush1.msra.mxu0 0.0
        %6904 = vmatprep.subr.mxu0 0.0
        %6905 = vmatpush1.msra.mxu0 0.0
        %6906 = vmatprep.subr.mxu0 0.0
        %6907 = vmatpush1.msra.mxu0 0.0
        %6908 = vmatprep.subr.mxu0 0.0
        %6909 = vmatpush1.msra.mxu0 0.0
        %6910 = vmatprep.subr.mxu0 0.0
        %6911 = vmatpush1.msra.mxu0 0.0
        %6912 = vmatprep.subr.mxu0 0.0
        %6913 = vmatpush1.msra.mxu0 0.0
        %6914 = vmatprep.subr.mxu0 0.0
        %6915 = vmatpush1.msra.mxu0 0.0
        %6916 = vmatprep.subr.mxu0 0.0
        %6917 = vmatpush1.msra.mxu0 0.0
        %6918 = vmatprep.subr.mxu0 0.0
        %6919 = vmatpush1.msra.mxu0 0.0
        %6920 = vmatprep.subr.mxu0 0.0
        %6921 = vmatpush1.msra.mxu0 0.0
        %6922 = vmatprep.subr.mxu0 0.0
        %6923 = vmatpush1.msra.mxu0 0.0
        %6924 = vmatprep.subr.mxu0 0.0
        %6925 = vmatpush1.msra.mxu0 0.0
        %6926 = vmatprep.subr.mxu0 0.0
        %6927 = vmatpush1.msra.mxu0 0.0
        %6928 = vmatprep.subr.mxu0 0.0
        %6929 = vmatpush1.msra.mxu0 0.0
        %6930 = vmatprep.mubr.f32.mxu0 0.0
        %6931 = vmatmul.mubr.f32.gmra.mrb[0].mxu0 %v6858
        %v6932 = vpop.f32.mrb[0].mxu0
        %v6933 = vadd.f32 0.0, %v6932
        %v6934 = vpop.f32.mrb[0].mxu0
        %6935 = vmatprep.mubr.f32.mxu0 0.0
        %6936 = vmatmul.mubr.f32.gmra.mrb[0].mxu0 %v6861
        %v6937 = vpop.f32.mrb[0].mxu0
        %v6938 = vadd.f32 0.0, %v6937
        %v6939 = vpop.f32.mrb[0].mxu0
        %6940 = vmatprep.mubr.f32.mxu0 0.0
        %6941 = vmatmul.mubr.f32.gmra.mrb[0].mxu0 %v6864
        %v6942 = vpop.f32.mrb[0].mxu0
        %v6943 = vadd.f32 0.0, %v6942
        %v6944 = vpop.f32.mrb[0].mxu0
        %6945 = vdwg.mxu0
        %s6946 = scalar_lea.vmem %s67, 24
        %v6947 = vld [vmem:[%s6946] sm:$0xff]
        %v6949 = vsel %vm1635, %v6933, 0
        %v6952 = vsel %vm1635, %v6938, 0
        %v6955 = vsel %vm1635, %v6943, 0
        %6957 = vmatprep.subr.mxu0 0.0
        %6958 = vmatpush1.msra.mxu0 %v6947
        %6959 = vmatprep.subr.mxu0 0.0
        %6960 = vmatpush1.msra.mxu0 0.0
        %6961 = vmatprep.subr.mxu0 0.0
        %6962 = vmatpush1.msra.mxu0 0.0
        %6963 = vmatprep.subr.mxu0 0.0
        %6964 = vmatpush1.msra.mxu0 0.0
        %6965 = vmatprep.subr.mxu0 0.0
        %6966 = vmatpush1.msra.mxu0 0.0
        %6967 = vmatprep.subr.mxu0 0.0
        %6968 = vmatpush1.msra.mxu0 0.0
        %6969 = vmatprep.subr.mxu0 0.0
        %6970 = vmatpush1.msra.mxu0 0.0
        %6971 = vmatprep.subr.mxu0 0.0
        %6972 = vmatpush1.msra.mxu0 0.0
        %6973 = vmatprep.subr.mxu0 0.0
        %6974 = vmatpush1.msra.mxu0 0.0
        %6975 = vmatprep.subr.mxu0 0.0
        %6976 = vmatpush1.msra.mxu0 0.0
        %6977 = vmatprep.subr.mxu0 0.0
        %6978 = vmatpush1.msra.mxu0 0.0
        %6979 = vmatprep.subr.mxu0 0.0
        %6980 = vmatpush1.msra.mxu0 0.0
        %6981 = vmatprep.subr.mxu0 0.0
        %6982 = vmatpush1.msra.mxu0 0.0
        %6983 = vmatprep.subr.mxu0 0.0
        %6984 = vmatpush1.msra.mxu0 0.0
        %6985 = vmatprep.subr.mxu0 0.0
        %6986 = vmatpush1.msra.mxu0 0.0
        %6987 = vmatprep.subr.mxu0 0.0
        %6988 = vmatpush1.msra.mxu0 0.0
        %6989 = vmatprep.subr.mxu0 0.0
        %6990 = vmatpush1.msra.mxu0 0.0
        %6991 = vmatprep.subr.mxu0 0.0
        %6992 = vmatpush1.msra.mxu0 0.0
        %6993 = vmatprep.subr.mxu0 0.0
        %6994 = vmatpush1.msra.mxu0 0.0
        %6995 = vmatprep.subr.mxu0 0.0
        %6996 = vmatpush1.msra.mxu0 0.0
        %6997 = vmatprep.subr.mxu0 0.0
        %6998 = vmatpush1.msra.mxu0 0.0
        %6999 = vmatprep.subr.mxu0 0.0
        %7000 = vmatpush1.msra.mxu0 0.0
        %7001 = vmatprep.subr.mxu0 0.0
        %7002 = vmatpush1.msra.mxu0 0.0
        %7003 = vmatprep.subr.mxu0 0.0
        %7004 = vmatpush1.msra.mxu0 0.0
        %7005 = vmatprep.subr.mxu0 0.0
        %7006 = vmatpush1.msra.mxu0 0.0
        %7007 = vmatprep.subr.mxu0 0.0
        %7008 = vmatpush1.msra.mxu0 0.0
        %7009 = vmatprep.subr.mxu0 0.0
        %7010 = vmatpush1.msra.mxu0 0.0
        %7011 = vmatprep.subr.mxu0 0.0
        %7012 = vmatpush1.msra.mxu0 0.0
        %7013 = vmatprep.subr.mxu0 0.0
        %7014 = vmatpush1.msra.mxu0 0.0
        %7015 = vmatprep.subr.mxu0 0.0
        %7016 = vmatpush1.msra.mxu0 0.0
        %7017 = vmatprep.subr.mxu0 0.0
        %7018 = vmatpush1.msra.mxu0 0.0
        %7019 = vmatprep.subr.mxu0 0.0
        %7020 = vmatpush1.msra.mxu0 0.0
        %7021 = vmatprep.mubr.f32.mxu0 0.0
        %7022 = vmatmul.mubr.f32.gmra.mrb[0].mxu0 %v6949
        %v7023 = vpop.f32.mrb[0].mxu0
        %v7024 = vadd.f32 0.0, %v7023
        %v7025 = vpop.f32.mrb[0].mxu0
        %7026 = vmatprep.mubr.f32.mxu0 0.0
        %7027 = vmatmul.mubr.f32.gmra.mrb[0].mxu0 %v6952
        %v7028 = vpop.f32.mrb[0].mxu0
        %v7029 = vadd.f32 0.0, %v7028
        %v7030 = vpop.f32.mrb[0].mxu0
        %7031 = vmatprep.mubr.f32.mxu0 0.0
        %7032 = vmatmul.mubr.f32.gmra.mrb[0].mxu0 %v6955
        %v7033 = vpop.f32.mrb[0].mxu0
        %v7034 = vadd.f32 0.0, %v7033
        %v7035 = vpop.f32.mrb[0].mxu0
        %7036 = vdwg.mxu0
        %v7037 = vadd.f32 %v6438, %v7024
        %v7038 = vadd.f32 %v6439, %v7029
        %v7039 = vadd.f32 %v6440, %v7034
        %v7040 = vld [vmem:[%s69] sm:$0x1]
        %v7042 = vlaneseq
        %v7043 = vshrl.u32 %v7042, 7
        %v7044 = vsub.s32 0, %v7043
        %v7045 = vrot.slane %v7040, %v7044
        %v7047 = vadd.f32 %v7037, %v7045
        %v7048 = vadd.f32 %v7038, %v7045
        %v7049 = vadd.f32 %v7039, %v7045
        %v7050 = vadd.f32 %v4645, %v7047
        %v7051 = vadd.f32 %v4646, %v7048
        %v7052 = vadd.f32 %v4647, %v7049
        %v7053 = vsel %vm1850, %v7050, 0.0
        %7054 = vadd.xlane.f32.xlu0 %v7053
        %v7055 = vpop.xlane.xlu0 %7054
        %v7056 = vsel %vm1850, %v7051, 0.0
        %7057 = vadd.xlane.f32.xlu0 %v7056
        %v7058 = vpop.xlane.xlu0 %7057
        %v7059 = vsel %vm1850, %v7052, 0.0
        %7060 = vadd.xlane.f32.xlu0 %v7059
        %v7061 = vpop.xlane.xlu0 %7060
        %v7062 = vmul.f32 %v7055, %v1860
        %v7063 = vmul.f32 %v7058, %v1860
        %v7064 = vmul.f32 %v7061, %v1860
        %v7065 = vsub.f32 %v7050, %v7062
        %v7066 = vsub.f32 %v7051, %v7063
        %v7067 = vsub.f32 %v7052, %v7064
        %v7068 = vmul.f32 %v7065, %v7065
        %v7069 = vmul.f32 %v7066, %v7066
        %v7070 = vmul.f32 %v7067, %v7067
        %v7071 = vsel %vm1850, %v7068, 0.0
        %7072 = vadd.xlane.f32.xlu0 %v7071
        %v7073 = vpop.xlane.xlu0 %7072
        %v7074 = vsel %vm1850, %v7069, 0.0
        %7075 = vadd.xlane.f32.xlu0 %v7074
        %v7076 = vpop.xlane.xlu0 %7075
        %v7077 = vsel %vm1850, %v7070, 0.0
        %7078 = vadd.xlane.f32.xlu0 %v7077
        %v7079 = vpop.xlane.xlu0 %7078
        %v7080 = vmul.f32 %v7073, %v1860
        %v7081 = vmul.f32 %v7076, %v1860
        %v7082 = vmul.f32 %v7079, %v1860
        %v7083 = vadd.f32 %v7080, 1e-05
        %v7084 = vadd.f32 %v7081, 1e-05
        %v7085 = vadd.f32 %v7082, 1e-05
        %v7086 = vrsqrt.pop %v7083
        %v7087 = vrsqrt.pop %v7084
        %v7088 = vrsqrt.pop %v7085
        %v7089 = vmul.f32 %v7065, %v7086
        %v7090 = vmul.f32 %v7066, %v7087
        %v7091 = vmul.f32 %v7067, %v7088
        %v7092 = vld [vmem:[%s71] sm:$0x1]
        %v7094 = vlaneseq
        %v7095 = vshrl.u32 %v7094, 7
        %v7096 = vsub.s32 0, %v7095
        %v7097 = vrot.slane %v7092, %v7096
        %v7099 = vmul.f32 %v7089, %v7097
        %v7100 = vmul.f32 %v7090, %v7097
        %v7101 = vmul.f32 %v7091, %v7097
        %v7102 = vld [vmem:[%s73] sm:$0x1]
        %v7104 = vlaneseq
        %v7105 = vshrl.u32 %v7104, 7
        %v7106 = vsub.s32 0, %v7105
        %v7107 = vrot.slane %v7102, %v7106
        %v7109 = vadd.f32 %v7099, %v7107
        %v7110 = vadd.f32 %v7100, %v7107
        %v7111 = vadd.f32 %v7101, %v7107
        %v7112 = vld [vmem:[%s75] sm:$0xff]
        %v7113 = vld [vmem:[%s75 + $0x8] sm:$0xff]
        %v7114 = vld [vmem:[%s75 + $0x10] sm:$0xff]
        %v7115 = vld [vmem:[%s75 + $0x18] sm:$0xff]
        %v7116 = vld [vmem:[%s77] sm:$0x1]
        %v7118 = vlaneseq
        %v7119 = vshrl.u32 %v7118, 7
        %v7120 = vsub.s32 0, %v7119
        %v7121 = vrot.slane %v7116, %v7120
        %v7124 = vsel %vm1850, %v7109, 0
        %v7127 = vsel %vm1850, %v7110, 0
        %v7130 = vsel %vm1850, %v7111, 0
        %7132 = vmatprep.subr.mxu0 0.0
        %7133 = vmatpush1.msra.mxu0 %v7112
        %7134 = vmatprep.subr.mxu0 0.0
        %7135 = vmatpush1.msra.mxu0 %v7113
        %7136 = vmatprep.subr.mxu0 0.0
        %7137 = vmatpush1.msra.mxu0 %v7114
        %7138 = vmatprep.subr.mxu0 0.0
        %7139 = vmatpush1.msra.mxu0 %v7115
        %7140 = vmatprep.subr.mxu0 0.0
        %7141 = vmatpush1.msra.mxu0 0.0
        %7142 = vmatprep.subr.mxu0 0.0
        %7143 = vmatpush1.msra.mxu0 0.0
        %7144 = vmatprep.subr.mxu0 0.0
        %7145 = vmatpush1.msra.mxu0 0.0
        %7146 = vmatprep.subr.mxu0 0.0
        %7147 = vmatpush1.msra.mxu0 0.0
        %7148 = vmatprep.subr.mxu0 0.0
        %7149 = vmatpush1.msra.mxu0 0.0
        %7150 = vmatprep.subr.mxu0 0.0
        %7151 = vmatpush1.msra.mxu0 0.0
        %7152 = vmatprep.subr.mxu0 0.0
        %7153 = vmatpush1.msra.mxu0 0.0
        %7154 = vmatprep.subr.mxu0 0.0
        %7155 = vmatpush1.msra.mxu0 0.0
        %7156 = vmatprep.subr.mxu0 0.0
        %7157 = vmatpush1.msra.mxu0 0.0
        %7158 = vmatprep.subr.mxu0 0.0
        %7159 = vmatpush1.msra.mxu0 0.0
        %7160 = vmatprep.subr.mxu0 0.0
        %7161 = vmatpush1.msra.mxu0 0.0
        %7162 = vmatprep.subr.mxu0 0.0
        %7163 = vmatpush1.msra.mxu0 0.0
        %7164 = vmatprep.subr.mxu0 0.0
        %7165 = vmatpush1.msra.mxu0 0.0
        %7166 = vmatprep.subr.mxu0 0.0
        %7167 = vmatpush1.msra.mxu0 0.0
        %7168 = vmatprep.subr.mxu0 0.0
        %7169 = vmatpush1.msra.mxu0 0.0
        %7170 = vmatprep.subr.mxu0 0.0
        %7171 = vmatpush1.msra.mxu0 0.0
        %7172 = vmatprep.subr.mxu0 0.0
        %7173 = vmatpush1.msra.mxu0 0.0
        %7174 = vmatprep.subr.mxu0 0.0
        %7175 = vmatpush1.msra.mxu0 0.0
        %7176 = vmatprep.subr.mxu0 0.0
        %7177 = vmatpush1.msra.mxu0 0.0
        %7178 = vmatprep.subr.mxu0 0.0
        %7179 = vmatpush1.msra.mxu0 0.0
        %7180 = vmatprep.subr.mxu0 0.0
        %7181 = vmatpush1.msra.mxu0 0.0
        %7182 = vmatprep.subr.mxu0 0.0
        %7183 = vmatpush1.msra.mxu0 0.0
        %7184 = vmatprep.subr.mxu0 0.0
        %7185 = vmatpush1.msra.mxu0 0.0
        %7186 = vmatprep.subr.mxu0 0.0
        %7187 = vmatpush1.msra.mxu0 0.0
        %7188 = vmatprep.subr.mxu0 0.0
        %7189 = vmatpush1.msra.mxu0 0.0
        %7190 = vmatprep.subr.mxu0 0.0
        %7191 = vmatpush1.msra.mxu0 0.0
        %7192 = vmatprep.subr.mxu0 0.0
        %7193 = vmatpush1.msra.mxu0 0.0
        %7194 = vmatprep.subr.mxu0 0.0
        %7195 = vmatpush1.msra.mxu0 0.0
        %7196 = vmatprep.mubr.f32.mxu0 0.0
        %7197 = vmatmul.mubr.f32.gmra.mrb[0].mxu0 %v7124
        %v7198 = vpop.f32.mrb[0].mxu0
        %v7199 = vadd.f32 %v7121, %v7198
        %v7200 = vpop.f32.mrb[0].mxu0
        %7201 = vmatprep.mubr.f32.mxu0 0.0
        %7202 = vmatmul.mubr.f32.gmra.mrb[0].mxu0 %v7127
        %v7203 = vpop.f32.mrb[0].mxu0
        %v7204 = vadd.f32 %v7121, %v7203
        %v7205 = vpop.f32.mrb[0].mxu0
        %7206 = vmatprep.mubr.f32.mxu0 0.0
        %7207 = vmatmul.mubr.f32.gmra.mrb[0].mxu0 %v7130
        %v7208 = vpop.f32.mrb[0].mxu0
        %v7209 = vadd.f32 %v7121, %v7208
        %v7210 = vpop.f32.mrb[0].mxu0
        %7211 = vdwg.mxu0
        %v7212 = vmax.f32 %v7199, 0.0
        %v7213 = vmax.f32 %v7204, 0.0
        %v7214 = vmax.f32 %v7209, 0.0
        %v7215 = vld [vmem:[%s79] sm:$0xff]
        %v7216 = vld [vmem:[%s79 + $0x8] sm:$0xff]
        %v7217 = vld [vmem:[%s79 + $0x10] sm:$0xff]
        %v7218 = vld [vmem:[%s79 + $0x18] sm:$0xff]
        %v7219 = vld [vmem:[%s79 + $0x20] sm:$0xff]
        %v7220 = vld [vmem:[%s79 + $0x28] sm:$0xff]
        %v7221 = vld [vmem:[%s79 + $0x30] sm:$0xff]
        %v7222 = vld [vmem:[%s79 + $0x38] sm:$0xff]
        %v7223 = vld [vmem:[%s81] sm:$0x1]
        %v7225 = vlaneseq
        %v7226 = vshrl.u32 %v7225, 7
        %v7227 = vsub.s32 0, %v7226
        %v7228 = vrot.slane %v7223, %v7227
        %v7231 = vsel %vm1534, %v7212, 0
        %v7234 = vsel %vm1534, %v7213, 0
        %v7237 = vsel %vm1534, %v7214, 0
        %7239 = vmatprep.subr.mxu0 0.0
        %7240 = vmatpush1.msra.mxu0 %v7215
        %7241 = vmatprep.subr.mxu0 0.0
        %7242 = vmatpush1.msra.mxu0 %v7216
        %7243 = vmatprep.subr.mxu0 0.0
        %7244 = vmatpush1.msra.mxu0 %v7217
        %7245 = vmatprep.subr.mxu0 0.0
        %7246 = vmatpush1.msra.mxu0 %v7218
        %7247 = vmatprep.subr.mxu0 0.0
        %7248 = vmatpush1.msra.mxu0 %v7219
        %7249 = vmatprep.subr.mxu0 0.0
        %7250 = vmatpush1.msra.mxu0 %v7220
        %7251 = vmatprep.subr.mxu0 0.0
        %7252 = vmatpush1.msra.mxu0 %v7221
        %7253 = vmatprep.subr.mxu0 0.0
        %7254 = vmatpush1.msra.mxu0 %v7222
        %7255 = vmatprep.subr.mxu0 0.0
        %7256 = vmatpush1.msra.mxu0 0.0
        %7257 = vmatprep.subr.mxu0 0.0
        %7258 = vmatpush1.msra.mxu0 0.0
        %7259 = vmatprep.subr.mxu0 0.0
        %7260 = vmatpush1.msra.mxu0 0.0
        %7261 = vmatprep.subr.mxu0 0.0
        %7262 = vmatpush1.msra.mxu0 0.0
        %7263 = vmatprep.subr.mxu0 0.0
        %7264 = vmatpush1.msra.mxu0 0.0
        %7265 = vmatprep.subr.mxu0 0.0
        %7266 = vmatpush1.msra.mxu0 0.0
        %7267 = vmatprep.subr.mxu0 0.0
        %7268 = vmatpush1.msra.mxu0 0.0
        %7269 = vmatprep.subr.mxu0 0.0
        %7270 = vmatpush1.msra.mxu0 0.0
        %7271 = vmatprep.subr.mxu0 0.0
        %7272 = vmatpush1.msra.mxu0 0.0
        %7273 = vmatprep.subr.mxu0 0.0
        %7274 = vmatpush1.msra.mxu0 0.0
        %7275 = vmatprep.subr.mxu0 0.0
        %7276 = vmatpush1.msra.mxu0 0.0
        %7277 = vmatprep.subr.mxu0 0.0
        %7278 = vmatpush1.msra.mxu0 0.0
        %7279 = vmatprep.subr.mxu0 0.0
        %7280 = vmatpush1.msra.mxu0 0.0
        %7281 = vmatprep.subr.mxu0 0.0
        %7282 = vmatpush1.msra.mxu0 0.0
        %7283 = vmatprep.subr.mxu0 0.0
        %7284 = vmatpush1.msra.mxu0 0.0
        %7285 = vmatprep.subr.mxu0 0.0
        %7286 = vmatpush1.msra.mxu0 0.0
        %7287 = vmatprep.subr.mxu0 0.0
        %7288 = vmatpush1.msra.mxu0 0.0
        %7289 = vmatprep.subr.mxu0 0.0
        %7290 = vmatpush1.msra.mxu0 0.0
        %7291 = vmatprep.subr.mxu0 0.0
        %7292 = vmatpush1.msra.mxu0 0.0
        %7293 = vmatprep.subr.mxu0 0.0
        %7294 = vmatpush1.msra.mxu0 0.0
        %7295 = vmatprep.subr.mxu0 0.0
        %7296 = vmatpush1.msra.mxu0 0.0
        %7297 = vmatprep.subr.mxu0 0.0
        %7298 = vmatpush1.msra.mxu0 0.0
        %7299 = vmatprep.subr.mxu0 0.0
        %7300 = vmatpush1.msra.mxu0 0.0
        %7301 = vmatprep.subr.mxu0 0.0
        %7302 = vmatpush1.msra.mxu0 0.0
        %7303 = vmatprep.mubr.f32.mxu0 0.0
        %7304 = vmatmul.mubr.f32.gmra.mrb[0].mxu0 %v7231
        %v7305 = vpop.f32.mrb[0].mxu0
        %v7306 = vadd.f32 %v7228, %v7305
        %v7307 = vpop.f32.mrb[0].mxu0
        %7308 = vmatprep.mubr.f32.mxu0 0.0
        %7309 = vmatmul.mubr.f32.gmra.mrb[0].mxu0 %v7234
        %v7310 = vpop.f32.mrb[0].mxu0
        %v7311 = vpop.f32.mrb[0].mxu0
        %7312 = vmatprep.mubr.f32.mxu0 0.0
        %7313 = vmatmul.mubr.f32.gmra.mrb[0].mxu0 %v7237
        %v7314 = vpop.f32.mrb[0].mxu0
        %v7315 = vpop.f32.mrb[0].mxu0
        %7316 = vdwg.mxu0
        %v7317 = vadd.f32 %v7109, %v7306
        %v7318 = vsel %vm1850, %v7317, 0.0
        %7319 = vadd.xlane.f32.xlu0 %v7318
        %v7320 = vpop.xlane.xlu0 %7319
        %v7321 = vmul.f32 %v7320, %v1860
        %v7322 = vsub.f32 %v7317, %v7321
        %v7323 = vmul.f32 %v7322, %v7322
        %v7324 = vsel %vm1850, %v7323, 0.0
        %7325 = vadd.xlane.f32.xlu0 %v7324
        %v7326 = vpop.xlane.xlu0 %7325
        %v7327 = vmul.f32 %v7326, %v1860
        %v7328 = vadd.f32 %v7327, 1e-05
        %v7329 = vrsqrt.pop %v7328
        %v7330 = vmul.f32 %v7322, %v7329
        %v7331 = vld [vmem:[%s83] sm:$0x1]
        %v7333 = vlaneseq
        %v7334 = vshrl.u32 %v7333, 7
        %v7335 = vsub.s32 0, %v7334
        %v7336 = vrot.slane %v7331, %v7335
        %v7338 = vmul.f32 %v7330, %v7336
        %v7339 = vld [vmem:[%s85] sm:$0x1]
        %v7341 = vlaneseq
        %v7342 = vshrl.u32 %v7341, 7
        %v7343 = vsub.s32 0, %v7342
        %v7344 = vrot.slane %v7339, %v7343
        %v7346 = vadd.f32 %v7338, %v7344
        %vm7347 = vcmask 253952
        %v7348 = vsel %vm7347, %v7346, 0.0
        %7349 = vadd.xlane.f32.xlu0 %v7348
        %v7350 = vpop.xlane.xlu0 %7349
        %v7351 = vmul.f32 %v7350, %v1860
        %v7352 = vsub.f32 %v7346, %v7351
        %v7353 = vmul.f32 %v7352, %v7352
        %v7354 = vsel %vm7347, %v7353, 0.0
        %7355 = vadd.xlane.f32.xlu0 %v7354
        %v7356 = vpop.xlane.xlu0 %7355
        %v7357 = vmul.f32 %v7356, %v1860
        %v7358 = vadd.f32 %v7357, 1e-05
        %v7359 = vrsqrt.pop %v7358
        %v7360 = vmul.f32 %v7352, %v7359
        %v7361 = vld [vmem:[%s87] sm:$0x1]
        %v7362 = vmul.f32 %v7360, %v7361
        %v7363 = vld [vmem:[%s89] sm:$0x1]
        %v7364 = vadd.f32 %v7362, %v7363
        %v7365 = vld [vmem:[%s91] sm:$0xff]
        %v7366 = vld [vmem:[%s91 + $0x8] sm:$0xff]
        %v7367 = vld [vmem:[%s91 + $0x10] sm:$0xff]
        %v7368 = vld [vmem:[%s91 + $0x18] sm:$0xff]
        %v7369 = vld [vmem:[%s93] sm:$0x1]
        %v7371 = vsel %vm1850, %v7364, 0
        %7373 = vmatprep.subr.mxu0 0.0
        %7374 = vmatpush1.msra.mxu0 %v7365
        %7375 = vmatprep.subr.mxu0 0.0
        %7376 = vmatpush1.msra.mxu0 %v7366
        %7377 = vmatprep.subr.mxu0 0.0
        %7378 = vmatpush1.msra.mxu0 %v7367
        %7379 = vmatprep.subr.mxu0 0.0
        %7380 = vmatpush1.msra.mxu0 %v7368
        %7381 = vmatprep.subr.mxu0 0.0
        %7382 = vmatpush1.msra.mxu0 0.0
        %7383 = vmatprep.subr.mxu0 0.0
        %7384 = vmatpush1.msra.mxu0 0.0
        %7385 = vmatprep.subr.mxu0 0.0
        %7386 = vmatpush1.msra.mxu0 0.0
        %7387 = vmatprep.subr.mxu0 0.0
        %7388 = vmatpush1.msra.mxu0 0.0
        %7389 = vmatprep.subr.mxu0 0.0
        %7390 = vmatpush1.msra.mxu0 0.0
        %7391 = vmatprep.subr.mxu0 0.0
        %7392 = vmatpush1.msra.mxu0 0.0
        %7393 = vmatprep.subr.mxu0 0.0
        %7394 = vmatpush1.msra.mxu0 0.0
        %7395 = vmatprep.subr.mxu0 0.0
        %7396 = vmatpush1.msra.mxu0 0.0
        %7397 = vmatprep.subr.mxu0 0.0
        %7398 = vmatpush1.msra.mxu0 0.0
        %7399 = vmatprep.subr.mxu0 0.0
        %7400 = vmatpush1.msra.mxu0 0.0
        %7401 = vmatprep.subr.mxu0 0.0
        %7402 = vmatpush1.msra.mxu0 0.0
        %7403 = vmatprep.subr.mxu0 0.0
        %7404 = vmatpush1.msra.mxu0 0.0
        %7405 = vmatprep.subr.mxu0 0.0
        %7406 = vmatpush1.msra.mxu0 0.0
        %7407 = vmatprep.subr.mxu0 0.0
        %7408 = vmatpush1.msra.mxu0 0.0
        %7409 = vmatprep.subr.mxu0 0.0
        %7410 = vmatpush1.msra.mxu0 0.0
        %7411 = vmatprep.subr.mxu0 0.0
        %7412 = vmatpush1.msra.mxu0 0.0
        %7413 = vmatprep.subr.mxu0 0.0
        %7414 = vmatpush1.msra.mxu0 0.0
        %7415 = vmatprep.subr.mxu0 0.0
        %7416 = vmatpush1.msra.mxu0 0.0
        %7417 = vmatprep.subr.mxu0 0.0
        %7418 = vmatpush1.msra.mxu0 0.0
        %7419 = vmatprep.subr.mxu0 0.0
        %7420 = vmatpush1.msra.mxu0 0.0
        %7421 = vmatprep.subr.mxu0 0.0
        %7422 = vmatpush1.msra.mxu0 0.0
        %7423 = vmatprep.subr.mxu0 0.0
        %7424 = vmatpush1.msra.mxu0 0.0
        %7425 = vmatprep.subr.mxu0 0.0
        %7426 = vmatpush1.msra.mxu0 0.0
        %7427 = vmatprep.subr.mxu0 0.0
        %7428 = vmatpush1.msra.mxu0 0.0
        %7429 = vmatprep.subr.mxu0 0.0
        %7430 = vmatpush1.msra.mxu0 0.0
        %7431 = vmatprep.subr.mxu0 0.0
        %7432 = vmatpush1.msra.mxu0 0.0
        %7433 = vmatprep.subr.mxu0 0.0
        %7434 = vmatpush1.msra.mxu0 0.0
        %7435 = vmatprep.subr.mxu0 0.0
        %7436 = vmatpush1.msra.mxu0 0.0
        %7437 = vmatprep.mubr.f32.mxu0 0.0
        %7438 = vmatmul.mubr.f32.gmra.mrb[0].mxu0 %v7371
        %v7439 = vpop.f32.mrb[0].mxu0
        %v7440 = vadd.f32 %v7369, %v7439
        %v7441 = vpop.f32.mrb[0].mxu0
        %7442 = vdwg.mxu0
        %v7443 = vmax.f32 %v7440, 0.0
        %v7444 = vld [vmem:[%s95] sm:$0xff]
        %v7445 = vld [vmem:[%s95 + $0x8] sm:$0xff]
        %v7446 = vld [vmem:[%s97] sm:$0x1]
        %v7448 = vsel %vm1737, %v7443, 0
        %7450 = vmatprep.subr.mxu0 0.0
        %7451 = vmatpush1.msra.mxu0 %v7444
        %7452 = vmatprep.subr.mxu0 0.0
        %7453 = vmatpush1.msra.mxu0 %v7445
        %7454 = vmatprep.subr.mxu0 0.0
        %7455 = vmatpush1.msra.mxu0 0.0
        %7456 = vmatprep.subr.mxu0 0.0
        %7457 = vmatpush1.msra.mxu0 0.0
        %7458 = vmatprep.subr.mxu0 0.0
        %7459 = vmatpush1.msra.mxu0 0.0
        %7460 = vmatprep.subr.mxu0 0.0
        %7461 = vmatpush1.msra.mxu0 0.0
        %7462 = vmatprep.subr.mxu0 0.0
        %7463 = vmatpush1.msra.mxu0 0.0
        %7464 = vmatprep.subr.mxu0 0.0
        %7465 = vmatpush1.msra.mxu0 0.0
        %7466 = vmatprep.subr.mxu0 0.0
        %7467 = vmatpush1.msra.mxu0 0.0
        %7468 = vmatprep.subr.mxu0 0.0
        %7469 = vmatpush1.msra.mxu0 0.0
        %7470 = vmatprep.subr.mxu0 0.0
        %7471 = vmatpush1.msra.mxu0 0.0
        %7472 = vmatprep.subr.mxu0 0.0
        %7473 = vmatpush1.msra.mxu0 0.0
        %7474 = vmatprep.subr.mxu0 0.0
        %7475 = vmatpush1.msra.mxu0 0.0
        %7476 = vmatprep.subr.mxu0 0.0
        %7477 = vmatpush1.msra.mxu0 0.0
        %7478 = vmatprep.subr.mxu0 0.0
        %7479 = vmatpush1.msra.mxu0 0.0
        %7480 = vmatprep.subr.mxu0 0.0
        %7481 = vmatpush1.msra.mxu0 0.0
        %7482 = vmatprep.subr.mxu0 0.0
        %7483 = vmatpush1.msra.mxu0 0.0
        %7484 = vmatprep.subr.mxu0 0.0
        %7485 = vmatpush1.msra.mxu0 0.0
        %7486 = vmatprep.subr.mxu0 0.0
        %7487 = vmatpush1.msra.mxu0 0.0
        %7488 = vmatprep.subr.mxu0 0.0
        %7489 = vmatpush1.msra.mxu0 0.0
        %7490 = vmatprep.subr.mxu0 0.0
        %7491 = vmatpush1.msra.mxu0 0.0
        %7492 = vmatprep.subr.mxu0 0.0
        %7493 = vmatpush1.msra.mxu0 0.0
        %7494 = vmatprep.subr.mxu0 0.0
        %7495 = vmatpush1.msra.mxu0 0.0
        %7496 = vmatprep.subr.mxu0 0.0
        %7497 = vmatpush1.msra.mxu0 0.0
        %7498 = vmatprep.subr.mxu0 0.0
        %7499 = vmatpush1.msra.mxu0 0.0
        %7500 = vmatprep.subr.mxu0 0.0
        %7501 = vmatpush1.msra.mxu0 0.0
        %7502 = vmatprep.subr.mxu0 0.0
        %7503 = vmatpush1.msra.mxu0 0.0
        %7504 = vmatprep.subr.mxu0 0.0
        %7505 = vmatpush1.msra.mxu0 0.0
        %7506 = vmatprep.subr.mxu0 0.0
        %7507 = vmatpush1.msra.mxu0 0.0
        %7508 = vmatprep.subr.mxu0 0.0
        %7509 = vmatpush1.msra.mxu0 0.0
        %7510 = vmatprep.subr.mxu0 0.0
        %7511 = vmatpush1.msra.mxu0 0.0
        %7512 = vmatprep.subr.mxu0 0.0
        %7513 = vmatpush1.msra.mxu0 0.0
        %7514 = vmatprep.mubr.f32.mxu0 0.0
        %7515 = vmatmul.mubr.f32.gmra.mrb[0].mxu0 %v7448
        %v7516 = vpop.f32.mrb[0].mxu0
        %v7517 = vadd.f32 %v7446, %v7516
        %v7518 = vpop.f32.mrb[0].mxu0
        %7519 = vdwg.mxu0
        %v7520 = vmax.f32 %v7517, 0.0
        %v7521 = vld [vmem:[%s99] sm:$0xff]
        %v7522 = vld [vmem:[%s101] sm:$0x1]
        %v7524 = vsel %vm1635, %v7520, 0
        %7526 = vmatprep.subr.mxu0 0.0
        %7527 = vmatpush1.msra.mxu0 %v7521
        %7528 = vmatprep.subr.mxu0 0.0
        %7529 = vmatpush1.msra.mxu0 0.0
        %7530 = vmatprep.subr.mxu0 0.0
        %7531 = vmatpush1.msra.mxu0 0.0
        %7532 = vmatprep.subr.mxu0 0.0
        %7533 = vmatpush1.msra.mxu0 0.0
        %7534 = vmatprep.subr.mxu0 0.0
        %7535 = vmatpush1.msra.mxu0 0.0
        %7536 = vmatprep.subr.mxu0 0.0
        %7537 = vmatpush1.msra.mxu0 0.0
        %7538 = vmatprep.subr.mxu0 0.0
        %7539 = vmatpush1.msra.mxu0 0.0
        %7540 = vmatprep.subr.mxu0 0.0
        %7541 = vmatpush1.msra.mxu0 0.0
        %7542 = vmatprep.subr.mxu0 0.0
        %7543 = vmatpush1.msra.mxu0 0.0
        %7544 = vmatprep.subr.mxu0 0.0
        %7545 = vmatpush1.msra.mxu0 0.0
        %7546 = vmatprep.subr.mxu0 0.0
        %7547 = vmatpush1.msra.mxu0 0.0
        %7548 = vmatprep.subr.mxu0 0.0
        %7549 = vmatpush1.msra.mxu0 0.0
        %7550 = vmatprep.subr.mxu0 0.0
        %7551 = vmatpush1.msra.mxu0 0.0
        %7552 = vmatprep.subr.mxu0 0.0
        %7553 = vmatpush1.msra.mxu0 0.0
        %7554 = vmatprep.subr.mxu0 0.0
        %7555 = vmatpush1.msra.mxu0 0.0
        %7556 = vmatprep.subr.mxu0 0.0
        %7557 = vmatpush1.msra.mxu0 0.0
        %7558 = vmatprep.subr.mxu0 0.0
        %7559 = vmatpush1.msra.mxu0 0.0
        %7560 = vmatprep.subr.mxu0 0.0
        %7561 = vmatpush1.msra.mxu0 0.0
        %7562 = vmatprep.subr.mxu0 0.0
        %7563 = vmatpush1.msra.mxu0 0.0
        %7564 = vmatprep.subr.mxu0 0.0
        %7565 = vmatpush1.msra.mxu0 0.0
        %7566 = vmatprep.subr.mxu0 0.0
        %7567 = vmatpush1.msra.mxu0 0.0
        %7568 = vmatprep.subr.mxu0 0.0
        %7569 = vmatpush1.msra.mxu0 0.0
        %7570 = vmatprep.subr.mxu0 0.0
        %7571 = vmatpush1.msra.mxu0 0.0
        %7572 = vmatprep.subr.mxu0 0.0
        %7573 = vmatpush1.msra.mxu0 0.0
        %7574 = vmatprep.subr.mxu0 0.0
        %7575 = vmatpush1.msra.mxu0 0.0
        %7576 = vmatprep.subr.mxu0 0.0
        %7577 = vmatpush1.msra.mxu0 0.0
        %7578 = vmatprep.subr.mxu0 0.0
        %7579 = vmatpush1.msra.mxu0 0.0
        %7580 = vmatprep.subr.mxu0 0.0
        %7581 = vmatpush1.msra.mxu0 0.0
        %7582 = vmatprep.subr.mxu0 0.0
        %7583 = vmatpush1.msra.mxu0 0.0
        %7584 = vmatprep.subr.mxu0 0.0
        %7585 = vmatpush1.msra.mxu0 0.0
        %7586 = vmatprep.subr.mxu0 0.0
        %7587 = vmatpush1.msra.mxu0 0.0
        %7588 = vmatprep.subr.mxu0 0.0
        %7589 = vmatpush1.msra.mxu0 0.0
        %7590 = vmatprep.mubr.f32.mxu0 0.0
        %7591 = vmatmul.mubr.f32.gmra.mrb[0].mxu0 %v7524
        %v7592 = vpop.f32.mrb[0].mxu0
        %v7593 = vadd.f32 %v7522, %v7592
        %v7594 = vpop.f32.mrb[0].mxu0
        %7595 = vdwg.mxu0
        %vm7596 = vcmask 73728
        %7597 = vst.msk [vmem:[%s1510] sm:$0x1] %vm7596, %v7593
        %s7598 = sand.u32 %s1201, 1
        %s7599 = scalar_lea.sflag [#allocation3], %s7598
        %s7600 = sand.u32 %s1201, 1
        %s7601 = scalar_lea.vmem [#allocation2], %s7600
        // Predicated region
        $region225: #{_lambda_.1} parent=223 // pred_check
          %p7602 = pneg %p1211
        $region226: #{_lambda_.1} parent=223 // pred_check_branch
          %7604 = sbr.rel (%p7602) target = $region228
        $region227: #{_lambda_.1} parent=223 // pred_region
          %s7606 = ssub.s32 16, 16
          %7607 = vsyncadd %s7599, %s7606
          %s7608 = smul.addr %s117, 16
          %s7609 = scalar_lea.hbm %s103, %s7608
          %s7611 = sshll.u32 %s7601, 4
          %s7612 = int_to_ptr.vmem [resolvable:$true] %s7611
          %7614 = dma.vmem_to_hbm [thread:$0]  %s7612, 16, %s7609, %s7599
        $region228: #{_lambda_.1} parent=223 // pred_fallthru
          _
      $region224: #{_lambda_.1} parent=5 // pred_fallthru
        _
      %p7615 = scmp.le.s32.totalorder 2, %s112
      // Predicated region
      $region229: #{_lambda_.1} parent=5 // pred_check
        %p7616 = pneg %p7615
      $region230: #{_lambda_.1} parent=5 // pred_check_branch
        %7618 = sbr.rel (%p7616) target = $region232
      $region231: #{_lambda_.1} parent=5 // pred_region
        %s7619 = ssub.s32 %s112, 2
        // Predicated region
        $region233: #{_lambda_.1} parent=231 // pred_check
          %p7620 = pneg %p1217
        $region234: #{_lambda_.1} parent=231 // pred_check_branch
          %7622 = sbr.rel (%p7620) target = $region236
        $region235: #{_lambda_.1} parent=231 // pred_region
          %s7623 = sand.u32 %s1202, 1
          %s7624 = scalar_lea.sflag [#allocation3], %s7623
          %s7625 = sand.u32 %s1202, 1
          %s7626 = scalar_lea.vmem [#allocation2], %s7625
          %7627 = dma.done %s7624, 16
        $region236: #{_lambda_.1} parent=231 // pred_fallthru
          _
      $region232: #{_lambda_.1} parent=5 // pred_fallthru
        _
    $region6: #{_lambda_.1} parent=1 // loop_footer
      %s116 = sadd.s32 1, %s112
    $region7: #{_lambda_.1} parent=1 // loop_footer_branch
      %111 = sbr.rel target = $region3
    $region8: #{_lambda_.1} parent=1 // loop_exit
      _
    %7628 = vsyncpa [#allocation3], 1
    %s7629 = scalar_lea.sflag [#allocation3], 1
    %7630 = vsyncpa %s7629, 1

</llo_original>
